<compile_context>
chip_gen: v5e
topology: v5e:2x2
jax: 0.10.0
libtpu: 0.0.40
codegen_flags: <defaults>
</compile_context>

<pallas_src>
import math

import jax
import jax.numpy as jnp
import numpy as np
from jax import lax
from jax.experimental import pallas as pl
from jax.experimental.pallas import tpu as pltpu


def _round_up(x, m):
    return (x + m - 1) // m * m


def _channel_tile(c, target):
    """Largest lane-legal tile (multiple of 128) <= target that divides c; c itself if
    c <= target (full-dim blocks are always legal)."""
    if c <= target:
        return c
    t = (target // 128) * 128
    while t >= 128:
        if c % t == 0:
            return t
        t -= 128
    return c


# ----------------------------------------------------------------------------
# Kernel 1: fused 3x3 same-conv + BatchNorm affine + ReLU + 2x2 max-pool.
# Grid = (batch, Cout tile, Cin tile); the Cin axis is a reduction into an f32 VMEM
# accumulator holding the conv pre-activations for the whole image in flattened
# padded-row layout.  The finalize step (last Cin tile) applies the BN affine, ReLU
# and the 2x2 max-pool and writes the pooled rows in bf16.
# ----------------------------------------------------------------------------
def conv_bn_relu_pool_kernel(x_ref, w_ref, scale_ref, shift_ref, out_ref, acc_ref):
    # x_ref    : ((H+3)*(W+2), tcin)  bf16  spatially padded input, rows flattened
    # w_ref    : (9, tcin, tcout)     bf16  conv taps, index = 3*dy + dx
    # scale_ref: (1, tcout)  f32   gamma / sqrt(var + eps)
    # shift_ref: (1, tcout)  f32   beta + (conv_bias - mean) * scale
    # out_ref  : (Hp, Wp, tcout) bf16
    # acc_ref  : (H*(W+2), tcout) f32 scratch; conv output (h, w) lives at flat row
    #            h*(W+2)+w (columns W, W+1 of each row are wrap-around garbage).
    k = pl.program_id(2)
    nk = pl.num_programs(2)

    Hp, Wp, tcout = out_ref.shape
    H, W = 2 * Hp, 2 * Wp
    Wpad = W + 2
    M = H * Wpad

    @pl.when(k == 0)
    def _init():
        acc_ref[...] = jnp.zeros_like(acc_ref)

    # 9 shifted full-image matmuls (one per conv tap), f32 accumulation in VMEM.
    # Each tap's LHS is a contiguous M-row window of the flattened padded input.
    for t in range(9):
        dy, dx = divmod(t, 3)
        lhs = x_ref[pl.ds(dy * Wpad + dx, M), :]
        acc_ref[...] += jnp.dot(lhs, w_ref[t], preferred_element_type=jnp.float32)

    @pl.when(k == nk - 1)
    def _finalize():
        # Hoist the per-channel affine broadcasts out of the pooling loop.
        scale = jnp.broadcast_to(scale_ref[...], (Wp, tcout))
        shift = jnp.broadcast_to(shift_ref[...], (Wp, tcout))
        for i in range(Hp):
            b0 = (2 * i) * Wpad          # conv row 2i
            b1 = b0 + Wpad               # conv row 2i + 1
            # Even / odd output columns of the two conv rows (stride-2 sublane reads).
            e0 = acc_ref[pl.ds(b0, Wp, 2), :] * scale + shift
            o0 = acc_ref[pl.ds(b0 + 1, Wp, 2), :] * scale + shift
            e1 = acc_ref[pl.ds(b1, Wp, 2), :] * scale + shift
            o1 = acc_ref[pl.ds(b1 + 1, Wp, 2), :] * scale + shift
            # ReLU commutes with max, so relu(max(.)) == max(relu(.)) pooled value.
            pooled = jnp.maximum(
                jnp.maximum(jnp.maximum(e0, o0), jnp.maximum(e1, o1)), 0.0)
            out_ref[i] = pooled.astype(out_ref.dtype)


def conv_bn_relu_pool(x, w, conv_b, gamma, beta, mean, var, eps=1e-5,
                      compute_dtype=jnp.bfloat16):
    """x: (B, H, W, Cin) NHWC -> (B, H//2, W//2, Cout) bf16."""
    B, H, W, Cin = x.shape
    Cout = w.shape[-1]
    assert H % 2 == 0 and W % 2 == 0
    Hp, Wp = H // 2, W // 2
    Wpad = W + 2

    # Fold conv bias + BN running stats into a per-channel affine (inference mode).
    scale = (gamma / jnp.sqrt(var + eps)).astype(jnp.float32)
    shift = (beta + (conv_b - mean) * (gamma / jnp.sqrt(var + eps))).astype(jnp.float32)

    # Pad Cin to a lane-friendly multiple of 128 so the reduction axis can be tiled
    # (2000 -> 2048 at production sizes).  Zero channels contribute nothing.
    Cin_pad = Cin if Cin < 128 else _round_up(Cin, 128)
    tcin = _channel_tile(Cin_pad, 512)     # keep <= 512 -> fits v7x's 64 MiB VMEM
    tcout = _channel_tile(Cout, 256)       # 2 Cout tiles at production layer 1

    # Spatial pad (top 1, bottom 2, sides 1 -- the extra bottom row only feeds discarded
    # wrap-around columns), flatten rows, cast to bf16.  Pure pad+reshape: no extra copy.
    xp = jnp.pad(x.astype(compute_dtype),
                 ((0, 0), (1, 2), (1, 1), (0, Cin_pad - Cin)))
    xflat = xp.reshape(B, (H + 3) * Wpad, Cin_pad)

    wp = jnp.pad(w.astype(compute_dtype), ((0, 0), (0, 0), (0, Cin_pad - Cin), (0, 0)))
    wflat = wp.reshape(9, Cin_pad, Cout)

    return pl.pallas_call(
        conv_bn_relu_pool_kernel,
        out_shape=jax.ShapeDtypeStruct((B, Hp, Wp, Cout), compute_dtype),
        grid=(B, Cout // tcout, Cin_pad // tcin),
        in_specs=[
            pl.BlockSpec((None, (H + 3) * Wpad, tcin), lambda b, j, k: (b, 0, k)),
            pl.BlockSpec((9, tcin, tcout), lambda b, j, k: (0, k, j)),
            pl.BlockSpec((1, tcout), lambda b, j, k: (0, j)),
            pl.BlockSpec((1, tcout), lambda b, j, k: (0, j)),
        ],
        out_specs=pl.BlockSpec((None, Hp, Wp, tcout), lambda b, j, k: (b, 0, 0, j)),
        scratch_shapes=[pltpu.VMEM((H * Wpad, tcout), jnp.float32)],
        compiler_params=pltpu.CompilerParams(
            dimension_semantics=("parallel", "parallel", "arbitrary"),
            vmem_limit_bytes=40 * 1024 * 1024),
    )(xflat, wflat, scale.reshape(1, Cout), shift.reshape(1, Cout))


# ----------------------------------------------------------------------------
# Kernel 2: classifier  Linear -> ReLU -> Linear -> ReLU -> Linear -> sigmoid.
# fc1 (the big weight stream) is pipelined over a short reduction grid along the
# feature dim with an f32 accumulator; fc2/fc3/sigmoid run in the last step.
# (Dropout layers are identity in inference mode.)
# ----------------------------------------------------------------------------
def classifier_kernel(x_ref, w1_ref, b1_ref, w2_ref, b2_ref, w3_ref, b3_ref,
                      out_ref, acc_ref):
    k = pl.program_id(0)
    nk = pl.num_programs(0)

    @pl.when(k == 0)
    def _init():
        acc_ref[...] = jnp.zeros_like(acc_ref)

    acc_ref[...] += jnp.dot(x_ref[...], w1_ref[...],
                            preferred_element_type=jnp.float32)

    @pl.when(k == nk - 1)
    def _finalize():
        h = jnp.maximum(acc_ref[...] + b1_ref[...], 0.0)
        h = jnp.dot(h.astype(w2_ref.dtype), w2_ref[...],
                    preferred_element_type=jnp.float32) + b2_ref[...]
        h = jnp.maximum(h, 0.0)
        y = jnp.dot(h.astype(w3_ref.dtype), w3_ref[...],
                    preferred_element_type=jnp.float32) + b3_ref[...]
        out_ref[...] = (1.0 / (1.0 + jnp.exp(-y))).astype(out_ref.dtype)


def _fc_reduction_tile(f, target=9216):
    """Large reduction tile -> 1-4 grid steps at production F=36864 (per-step overhead
    would otherwise dominate this tiny MLP)."""
    if f <= target:
        return f
    t = (target // 128) * 128
    while t >= 128:
        if f % t == 0:
            return t
        t -= 128
    return f


def classifier(x, w1, b1, w2, b2, w3, b3, compute_dtype=jnp.bfloat16):
    B, F = x.shape
    H1, H2, O = w1.shape[1], w2.shape[1], w3.shape[1]
    tf = _fc_reduction_tile(F)
    f32 = jnp.float32

    return pl.pallas_call(
        classifier_kernel,
        out_shape=jax.ShapeDtypeStruct((B, O), f32),
        grid=(F // tf,),
        in_specs=[
            pl.BlockSpec((B, tf), lambda k: (0, k)),
            pl.BlockSpec((tf, H1), lambda k: (k, 0)),
            pl.BlockSpec((1, H1), lambda k: (0, 0)),
            pl.BlockSpec((H1, H2), lambda k: (0, 0)),
            pl.BlockSpec((1, H2), lambda k: (0, 0)),
            pl.BlockSpec((H2, O), lambda k: (0, 0)),
            pl.BlockSpec((1, O), lambda k: (0, 0)),
        ],
        out_specs=pl.BlockSpec((B, O), lambda k: (0, 0)),
        scratch_shapes=[pltpu.VMEM((B, H1), f32)],
        compiler_params=pltpu.CompilerParams(
            dimension_semantics=("arbitrary",)),
    )(x.astype(compute_dtype), w1.astype(compute_dtype),
      b1.reshape(1, -1).astype(f32),
      w2.astype(compute_dtype), b2.reshape(1, -1).astype(f32),
      w3.astype(compute_dtype), b3.reshape(1, -1).astype(f32))


# ----------------------------------------------------------------------------
# Glue: embedding lookup + src/trg "outer product" feature map construction (bf16).
# ----------------------------------------------------------------------------
def build_features(emb_src, src_tokens, trg_tokens, compute_dtype=jnp.bfloat16):
    emb = emb_src.astype(compute_dtype)      # cast once; halves feature-map HBM bytes
    src_out = emb[src_tokens]                # (B, Ts, E)
    trg_out = emb[trg_tokens]                # (B, Tt, E)  (same table, as in reference)
    B, Ts, E = src_out.shape
    Tt = trg_out.shape[1]
    src_rep = jnp.broadcast_to(src_out[:, :, None, :], (B, Ts, Tt, E))
    trg_rep = jnp.broadcast_to(trg_out[:, None, :, :], (B, Ts, Tt, E))
    return jnp.concatenate([src_rep, trg_rep], axis=-1)   # (B, Ts, Tt, 2E)  NHWC


def discriminator_forward(params, src_tokens, trg_tokens):
    feat = build_features(params["emb_src"], src_tokens, trg_tokens)
    h = conv_bn_relu_pool(feat, params["conv1_w"], params["conv1_b"], *params["bn1"])
    h = conv_bn_relu_pool(h, params["conv2_w"], params["conv2_b"], *params["bn2"])
    flat = h.reshape(h.shape[0], -1)         # (h, w, c) order == permute(0,2,3,1).view
    return classifier(flat, params["fc1_w"], params["fc1_b"],
                      params["fc2_w"], params["fc2_b"],
                      params["fc3_w"], params["fc3_b"])


# ----------------------------------------------------------------------------
# Pure-JAX reference (correctness check; same bf16 matmul operands, f32 accumulate).
# ----------------------------------------------------------------------------
def conv_block_ref(x, w, conv_b, gamma, beta, mean, var, eps=1e-5,
                   compute_dtype=jnp.bfloat16):
    scale = gamma / jnp.sqrt(var + eps)
    shift = beta + (conv_b - mean) * scale
    y = lax.conv_general_dilated(
        x.astype(compute_dtype), w.astype(compute_dtype), (1, 1), ((1, 1), (1, 1)),
        dimension_numbers=("NHWC", "HWIO", "NHWC"),
        preferred_element_type=jnp.float32)
    y = jnp.maximum(y * scale + shift, 0.0)
    B, H, W, C = y.shape
    return y.reshape(B, H // 2, 2, W // 2, 2, C).max(axis=(2, 4))


def reference_forward(params, src_tokens, trg_tokens, compute_dtype=jnp.bfloat16):
    feat = build_features(params["emb_src"], src_tokens, trg_tokens)
    h = conv_block_ref(feat, params["conv1_w"], params["conv1_b"], *params["bn1"])
    h = conv_block_ref(h, params["conv2_w"], params["conv2_b"], *params["bn2"])
    flat = h.reshape(h.shape[0], -1)
    h1 = jnp.maximum(jnp.dot(flat.astype(compute_dtype),
                             params["fc1_w"].astype(compute_dtype),
                             preferred_element_type=jnp.float32) + params["fc1_b"], 0.0)
    h2 = jnp.maximum(jnp.dot(h1.astype(compute_dtype),
                             params["fc2_w"].astype(compute_dtype),
                             preferred_element_type=jnp.float32) + params["fc2_b"], 0.0)
    y = jnp.dot(h2.astype(compute_dtype), params["fc3_w"].astype(compute_dtype),
                preferred_element_type=jnp.float32) + params["fc3_b"]
    return jax.nn.sigmoid(y)


# ----------------------------------------------------------------------------
# Deterministic parameter init (mirrors the reference inits: kaiming-uniform weights,
# zero biases, BN defaults, uniform(-0.1, 0.1) embeddings).
# ----------------------------------------------------------------------------
def kaiming_uniform(key, shape, fan_in):
    bound = math.sqrt(6.0 / fan_in)
    return jax.random.uniform(key, shape, jnp.float32, minval=-bound, maxval=bound)


def init_params(key, vocab, embed, c1, c2, feat_dim, hidden):
    keys = jax.random.split(key, 6)
    cin1 = 2 * embed
    p = {}
    p["emb_src"] = jax.random.uniform(keys[0], (vocab, embed), jnp.float32, -0.1, 0.1)
    p["conv1_w"] = kaiming_uniform(keys[1], (3, 3, cin1, c1), fan_in=cin1 * 9)
    p["conv1_b"] = jnp.zeros((c1,), jnp.float32)
    p["bn1"] = (jnp.ones((c1,), jnp.float32), jnp.zeros((c1,), jnp.float32),
                jnp.zeros((c1,), jnp.float32), jnp.ones((c1,), jnp.float32))
    p["conv2_w"] = kaiming_uniform(keys[2], (3, 3, c1, c2), fan_in=c1 * 9)
    p["conv2_b"] = jnp.zeros((c2,), jnp.float32)
    p["bn2"] = (jnp.ones((c2,), jnp.float32), jnp.zeros((c2,), jnp.float32),
                jnp.zeros((c2,), jnp.float32), jnp.ones((c2,), jnp.float32))
    p["fc1_w"] = kaiming_uniform(keys[3], (feat_dim, hidden), fan_in=feat_dim)
    p["fc1_b"] = jnp.zeros((hidden,), jnp.float32)
    p["fc2_w"] = kaiming_uniform(keys[4], (hidden, hidden), fan_in=hidden)
    p["fc2_b"] = jnp.zeros((hidden,), jnp.float32)
    p["fc3_w"] = kaiming_uniform(keys[5], (hidden, 1), fan_in=hidden)
    p["fc3_b"] = jnp.zeros((1,), jnp.float32)
    return p


if __name__ == "__main__":
    # Small, self-consistent configuration
    # (original: embed=1000 -> 2000 conv channels, fixed_max_len=48, 512/256 channels).
    B, L, VOCAB, EMBED = 2, 16, 50, 8     # L = fixed_max_len (src and trg length)
    C1, C2, HIDDEN = 32, 16, 20
    FEAT_DIM = C2 * (L // 4) * (L // 4)   # 16 * 4 * 4 = 256

    key = jax.random.PRNGKey(0)
    kp, ks, kt = jax.random.split(key, 3)
    params = init_params(kp, VOCAB, EMBED, C1, C2, FEAT_DIM, HIDDEN)
    src_tokens = jax.random.randint(ks, (B, L), 0, VOCAB)
    trg_tokens = jax.random.randint(kt, (B, L), 0, VOCAB)

    fwd = jax.jit(discriminator_forward)
    out = jax.block_until_ready(fwd(params, src_tokens, trg_tokens))
    ref = jax.block_until_ready(jax.jit(reference_forward)(params, src_tokens, trg_tokens))

    assert out.shape == (B, 1), out.shape
    np.testing.assert_allclose(np.asarray(out, dtype=np.float32),
                               np.asarray(ref, dtype=np.float32),
                               rtol=5e-3, atol=5e-3)
    print("KERNEL_OK")
</pallas_src>

<mosaic_0001>
module attributes {stable_mosaic.version = 11 : i64} {
  func.func @conv_bn_relu_pool_kernel(%arg0: i32, %arg1: i32, %arg2: i32, %arg3: memref<1x342x16xbf16, #tpu.memory_space<vmem>>, %arg4: memref<9x16x32xbf16, #tpu.memory_space<vmem>>, %arg5: memref<1x32xf32, #tpu.memory_space<vmem>>, %arg6: memref<1x32xf32, #tpu.memory_space<vmem>>, %arg7: memref<1x8x8x32xbf16, #tpu.memory_space<vmem>>, %arg8: memref<288x32xf32, #tpu.memory_space<vmem>>) attributes {dimension_semantics = [#tpu.dimension_semantics<parallel>, #tpu.dimension_semantics<parallel>, #tpu.dimension_semantics<arbitrary>], iteration_bounds = array<i64: 2, 1, 1>, scalar_prefetch = 0 : i64, scratch_operands = 1 : i64, tpu.core_type = #tpu.core_type<tc>, window_params = [{transform_indices = @transform_0, window_bounds = array<i64: 1, 342, 16>}, {transform_indices = @transform_1, window_bounds = array<i64: 9, 16, 32>}, {transform_indices = @transform_2, window_bounds = array<i64: 1, 32>}, {transform_indices = @transform_3, window_bounds = array<i64: 1, 32>}, {transform_indices = @transform_4, window_bounds = array<i64: 1, 8, 8, 32>}]} {
    %c0_i32 = arith.constant 0 : i32
    %0 = arith.cmpi eq, %arg2, %c0_i32 : i32
    %1 = arith.extui %0 : i1 to i32
    %c0_i32_0 = arith.constant 0 : i32
    %2 = arith.cmpi ne, %1, %c0_i32_0 : i32
    scf.if %2 {
      %cst_86 = arith.constant 0.000000e+00 : f32
      %78 = vector.broadcast %cst_86 : f32 to vector<288x32xf32>
      %c0_87 = arith.constant 0 : index
      %c0_88 = arith.constant 0 : index
      %79 = vector.load %arg8[%c0_87, %c0_88] : memref<288x32xf32, #tpu.memory_space<vmem>>, vector<288x32xf32>
      tpu.vector_store %arg8[%c0_87, %c0_88], %78 {strides = array<i32>} : memref<288x32xf32, #tpu.memory_space<vmem>>, vector<288x32xf32>,
    } else {
    }
    %c0 = arith.constant 0 : index
    %c0_1 = arith.constant 0 : index
    %c0_2 = arith.constant 0 : index
    %3 = vector.load %arg3[%c0, %c0_1, %c0_2] : memref<1x342x16xbf16, #tpu.memory_space<vmem>>, vector<1x288x16xbf16>
    %4 = vector.shape_cast %3 : vector<1x288x16xbf16> to vector<288x16xbf16>
    %c0_3 = arith.constant 0 : index
    %c0_4 = arith.constant 0 : index
    %5 = vector.load %arg8[%c0_3, %c0_4] : memref<288x32xf32, #tpu.memory_space<vmem>>, vector<288x32xf32>
    %c0_5 = arith.constant 0 : index
    %c0_6 = arith.constant 0 : index
    %c0_7 = arith.constant 0 : index
    %6 = vector.load %arg4[%c0_5, %c0_6, %c0_7] : memref<9x16x32xbf16, #tpu.memory_space<vmem>>, vector<1x16x32xbf16>
    %7 = vector.shape_cast %6 : vector<1x16x32xbf16> to vector<16x32xbf16>
    %cst = arith.constant dense<0.000000e+00> : vector<288x32xf32>
    %8 = tpu.matmul %4, %7, %cst {dimension_numbers = #tpu.dot_dimension_numbers<[1], [0], [0], [1], [0, 0, 1, 1], [], []>} : vector<288x16xbf16>, vector<16x32xbf16>, vector<288x32xf32> -> vector<288x32xf32>
    %9 = arith.addf %5, %8 : vector<288x32xf32>
    %c0_8 = arith.constant 0 : index
    %c0_9 = arith.constant 0 : index
    %10 = vector.load %arg8[%c0_8, %c0_9] : memref<288x32xf32, #tpu.memory_space<vmem>>, vector<288x32xf32>
    tpu.vector_store %arg8[%c0_8, %c0_9], %9 {strides = array<i32>} : memref<288x32xf32, #tpu.memory_space<vmem>>, vector<288x32xf32>,
    %c0_10 = arith.constant 0 : index
    %c1 = arith.constant 1 : index
    %c0_11 = arith.constant 0 : index
    %11 = vector.load %arg3[%c0_10, %c1, %c0_11] : memref<1x342x16xbf16, #tpu.memory_space<vmem>>, vector<1x288x16xbf16>
    %12 = vector.shape_cast %11 : vector<1x288x16xbf16> to vector<288x16xbf16>
    %c0_12 = arith.constant 0 : index
    %c0_13 = arith.constant 0 : index
    %13 = vector.load %arg8[%c0_12, %c0_13] : memref<288x32xf32, #tpu.memory_space<vmem>>, vector<288x32xf32>
    %c1_14 = arith.constant 1 : index
    %c0_15 = arith.constant 0 : index
    %c0_16 = arith.constant 0 : index
    %14 = vector.load %arg4[%c1_14, %c0_15, %c0_16] : memref<9x16x32xbf16, #tpu.memory_space<vmem>>, vector<1x16x32xbf16>
    %15 = vector.shape_cast %14 : vector<1x16x32xbf16> to vector<16x32xbf16>
    %cst_17 = arith.constant dense<0.000000e+00> : vector<288x32xf32>
    %16 = tpu.matmul %12, %15, %cst_17 {dimension_numbers = #tpu.dot_dimension_numbers<[1], [0], [0], [1], [0, 0, 1, 1], [], []>} : vector<288x16xbf16>, vector<16x32xbf16>, vector<288x32xf32> -> vector<288x32xf32>
    %17 = arith.addf %13, %16 : vector<288x32xf32>
    %c0_18 = arith.constant 0 : index
    %c0_19 = arith.constant 0 : index
    %18 = vector.load %arg8[%c0_18, %c0_19] : memref<288x32xf32, #tpu.memory_space<vmem>>, vector<288x32xf32>
    tpu.vector_store %arg8[%c0_18, %c0_19], %17 {strides = array<i32>} : memref<288x32xf32, #tpu.memory_space<vmem>>, vector<288x32xf32>,
    %c0_20 = arith.constant 0 : index
    %c2 = arith.constant 2 : index
    %c0_21 = arith.constant 0 : index
    %19 = vector.load %arg3[%c0_20, %c2, %c0_21] : memref<1x342x16xbf16, #tpu.memory_space<vmem>>, vector<1x288x16xbf16>
    %20 = vector.shape_cast %19 : vector<1x288x16xbf16> to vector<288x16xbf16>
    %c0_22 = arith.constant 0 : index
    %c0_23 = arith.constant 0 : index
    %21 = vector.load %arg8[%c0_22, %c0_23] : memref<288x32xf32, #tpu.memory_space<vmem>>, vector<288x32xf32>
    %c2_24 = arith.constant 2 : index
    %c0_25 = arith.constant 0 : index
    %c0_26 = arith.constant 0 : index
    %22 = vector.load %arg4[%c2_24, %c0_25, %c0_26] : memref<9x16x32xbf16, #tpu.memory_space<vmem>>, vector<1x16x32xbf16>
    %23 = vector.shape_cast %22 : vector<1x16x32xbf16> to vector<16x32xbf16>
    %cst_27 = arith.constant dense<0.000000e+00> : vector<288x32xf32>
    %24 = tpu.matmul %20, %23, %cst_27 {dimension_numbers = #tpu.dot_dimension_numbers<[1], [0], [0], [1], [0, 0, 1, 1], [], []>} : vector<288x16xbf16>, vector<16x32xbf16>, vector<288x32xf32> -> vector<288x32xf32>
    %25 = arith.addf %21, %24 : vector<288x32xf32>
    %c0_28 = arith.constant 0 : index
    %c0_29 = arith.constant 0 : index
    %26 = vector.load %arg8[%c0_28, %c0_29] : memref<288x32xf32, #tpu.memory_space<vmem>>, vector<288x32xf32>
    tpu.vector_store %arg8[%c0_28, %c0_29], %25 {strides = array<i32>} : memref<288x32xf32, #tpu.memory_space<vmem>>, vector<288x32xf32>,
    %c0_30 = arith.constant 0 : index
    %c18 = arith.constant 18 : index
    %c0_31 = arith.constant 0 : index
    %27 = vector.load %arg3[%c0_30, %c18, %c0_31] : memref<1x342x16xbf16, #tpu.memory_space<vmem>>, vector<1x288x16xbf16>
    %28 = vector.shape_cast %27 : vector<1x288x16xbf16> to vector<288x16xbf16>
    %c0_32 = arith.constant 0 : index
    %c0_33 = arith.constant 0 : index
    %29 = vector.load %arg8[%c0_32, %c0_33] : memref<288x32xf32, #tpu.memory_space<vmem>>, vector<288x32xf32>
    %c3 = arith.constant 3 : index
    %c0_34 = arith.constant 0 : index
    %c0_35 = arith.constant 0 : index
    %30 = vector.load %arg4[%c3, %c0_34, %c0_35] : memref<9x16x32xbf16, #tpu.memory_space<vmem>>, vector<1x16x32xbf16>
    %31 = vector.shape_cast %30 : vector<1x16x32xbf16> to vector<16x32xbf16>
    %cst_36 = arith.constant dense<0.000000e+00> : vector<288x32xf32>
    %32 = tpu.matmul %28, %31, %cst_36 {dimension_numbers = #tpu.dot_dimension_numbers<[1], [0], [0], [1], [0, 0, 1, 1], [], []>} : vector<288x16xbf16>, vector<16x32xbf16>, vector<288x32xf32> -> vector<288x32xf32>
    %33 = arith.addf %29, %32 : vector<288x32xf32>
    %c0_37 = arith.constant 0 : index
    %c0_38 = arith.constant 0 : index
    %34 = vector.load %arg8[%c0_37, %c0_38] : memref<288x32xf32, #tpu.memory_space<vmem>>, vector<288x32xf32>
    tpu.vector_store %arg8[%c0_37, %c0_38], %33 {strides = array<i32>} : memref<288x32xf32, #tpu.memory_space<vmem>>, vector<288x32xf32>,
    %c0_39 = arith.constant 0 : index
    %c19 = arith.constant 19 : index
    %c0_40 = arith.constant 0 : index
    %35 = vector.load %arg3[%c0_39, %c19, %c0_40] : memref<1x342x16xbf16, #tpu.memory_space<vmem>>, vector<1x288x16xbf16>
    %36 = vector.shape_cast %35 : vector<1x288x16xbf16> to vector<288x16xbf16>
    %c0_41 = arith.constant 0 : index
    %c0_42 = arith.constant 0 : index
    %37 = vector.load %arg8[%c0_41, %c0_42] : memref<288x32xf32, #tpu.memory_space<vmem>>, vector<288x32xf32>
    %c4 = arith.constant 4 : index
    %c0_43 = arith.constant 0 : index
    %c0_44 = arith.constant 0 : index
    %38 = vector.load %arg4[%c4, %c0_43, %c0_44] : memref<9x16x32xbf16, #tpu.memory_space<vmem>>, vector<1x16x32xbf16>
    %39 = vector.shape_cast %38 : vector<1x16x32xbf16> to vector<16x32xbf16>
    %cst_45 = arith.constant dense<0.000000e+00> : vector<288x32xf32>
    %40 = tpu.matmul %36, %39, %cst_45 {dimension_numbers = #tpu.dot_dimension_numbers<[1], [0], [0], [1], [0, 0, 1, 1], [], []>} : vector<288x16xbf16>, vector<16x32xbf16>, vector<288x32xf32> -> vector<288x32xf32>
    %41 = arith.addf %37, %40 : vector<288x32xf32>
    %c0_46 = arith.constant 0 : index
    %c0_47 = arith.constant 0 : index
    %42 = vector.load %arg8[%c0_46, %c0_47] : memref<288x32xf32, #tpu.memory_space<vmem>>, vector<288x32xf32>
    tpu.vector_store %arg8[%c0_46, %c0_47], %41 {strides = array<i32>} : memref<288x32xf32, #tpu.memory_space<vmem>>, vector<288x32xf32>,
    %c0_48 = arith.constant 0 : index
    %c20 = arith.constant 20 : index
    %c0_49 = arith.constant 0 : index
    %43 = vector.load %arg3[%c0_48, %c20, %c0_49] : memref<1x342x16xbf16, #tpu.memory_space<vmem>>, vector<1x288x16xbf16>
    %44 = vector.shape_cast %43 : vector<1x288x16xbf16> to vector<288x16xbf16>
    %c0_50 = arith.constant 0 : index
    %c0_51 = arith.constant 0 : index
    %45 = vector.load %arg8[%c0_50, %c0_51] : memref<288x32xf32, #tpu.memory_space<vmem>>, vector<288x32xf32>
    %c5 = arith.constant 5 : index
    %c0_52 = arith.constant 0 : index
    %c0_53 = arith.constant 0 : index
    %46 = vector.load %arg4[%c5, %c0_52, %c0_53] : memref<9x16x32xbf16, #tpu.memory_space<vmem>>, vector<1x16x32xbf16>
    %47 = vector.shape_cast %46 : vector<1x16x32xbf16> to vector<16x32xbf16>
    %cst_54 = arith.constant dense<0.000000e+00> : vector<288x32xf32>
    %48 = tpu.matmul %44, %47, %cst_54 {dimension_numbers = #tpu.dot_dimension_numbers<[1], [0], [0], [1], [0, 0, 1, 1], [], []>} : vector<288x16xbf16>, vector<16x32xbf16>, vector<288x32xf32> -> vector<288x32xf32>
    %49 = arith.addf %45, %48 : vector<288x32xf32>
    %c0_55 = arith.constant 0 : index
    %c0_56 = arith.constant 0 : index
    %50 = vector.load %arg8[%c0_55, %c0_56] : memref<288x32xf32, #tpu.memory_space<vmem>>, vector<288x32xf32>
    tpu.vector_store %arg8[%c0_55, %c0_56], %49 {strides = array<i32>} : memref<288x32xf32, #tpu.memory_space<vmem>>, vector<288x32xf32>,
    %c0_57 = arith.constant 0 : index
    %c36 = arith.constant 36 : index
    %c0_58 = arith.constant 0 : index
    %51 = vector.load %arg3[%c0_57, %c36, %c0_58] : memref<1x342x16xbf16, #tpu.memory_space<vmem>>, vector<1x288x16xbf16>
    %52 = vector.shape_cast %51 : vector<1x288x16xbf16> to vector<288x16xbf16>
    %c0_59 = arith.constant 0 : index
    %c0_60 = arith.constant 0 : index
    %53 = vector.load %arg8[%c0_59, %c0_60] : memref<288x32xf32, #tpu.memory_space<vmem>>, vector<288x32xf32>
    %c6 = arith.constant 6 : index
    %c0_61 = arith.constant 0 : index
    %c0_62 = arith.constant 0 : index
    %54 = vector.load %arg4[%c6, %c0_61, %c0_62] : memref<9x16x32xbf16, #tpu.memory_space<vmem>>, vector<1x16x32xbf16>
    %55 = vector.shape_cast %54 : vector<1x16x32xbf16> to vector<16x32xbf16>
    %cst_63 = arith.constant dense<0.000000e+00> : vector<288x32xf32>
    %56 = tpu.matmul %52, %55, %cst_63 {dimension_numbers = #tpu.dot_dimension_numbers<[1], [0], [0], [1], [0, 0, 1, 1], [], []>} : vector<288x16xbf16>, vector<16x32xbf16>, vector<288x32xf32> -> vector<288x32xf32>
    %57 = arith.addf %53, %56 : vector<288x32xf32>
    %c0_64 = arith.constant 0 : index
    %c0_65 = arith.constant 0 : index
    %58 = vector.load %arg8[%c0_64, %c0_65] : memref<288x32xf32, #tpu.memory_space<vmem>>, vector<288x32xf32>
    tpu.vector_store %arg8[%c0_64, %c0_65], %57 {strides = array<i32>} : memref<288x32xf32, #tpu.memory_space<vmem>>, vector<288x32xf32>,
    %c0_66 = arith.constant 0 : index
    %c37 = arith.constant 37 : index
    %c0_67 = arith.constant 0 : index
    %59 = vector.load %arg3[%c0_66, %c37, %c0_67] : memref<1x342x16xbf16, #tpu.memory_space<vmem>>, vector<1x288x16xbf16>
    %60 = vector.shape_cast %59 : vector<1x288x16xbf16> to vector<288x16xbf16>
    %c0_68 = arith.constant 0 : index
    %c0_69 = arith.constant 0 : index
    %61 = vector.load %arg8[%c0_68, %c0_69] : memref<288x32xf32, #tpu.memory_space<vmem>>, vector<288x32xf32>
    %c7 = arith.constant 7 : index
    %c0_70 = arith.constant 0 : index
    %c0_71 = arith.constant 0 : index
    %62 = vector.load %arg4[%c7, %c0_70, %c0_71] : memref<9x16x32xbf16, #tpu.memory_space<vmem>>, vector<1x16x32xbf16>
    %63 = vector.shape_cast %62 : vector<1x16x32xbf16> to vector<16x32xbf16>
    %cst_72 = arith.constant dense<0.000000e+00> : vector<288x32xf32>
    %64 = tpu.matmul %60, %63, %cst_72 {dimension_numbers = #tpu.dot_dimension_numbers<[1], [0], [0], [1], [0, 0, 1, 1], [], []>} : vector<288x16xbf16>, vector<16x32xbf16>, vector<288x32xf32> -> vector<288x32xf32>
    %65 = arith.addf %61, %64 : vector<288x32xf32>
    %c0_73 = arith.constant 0 : index
    %c0_74 = arith.constant 0 : index
    %66 = vector.load %arg8[%c0_73, %c0_74] : memref<288x32xf32, #tpu.memory_space<vmem>>, vector<288x32xf32>
    tpu.vector_store %arg8[%c0_73, %c0_74], %65 {strides = array<i32>} : memref<288x32xf32, #tpu.memory_space<vmem>>, vector<288x32xf32>,
    %c0_75 = arith.constant 0 : index
    %c38 = arith.constant 38 : index
    %c0_76 = arith.constant 0 : index
    %67 = vector.load %arg3[%c0_75, %c38, %c0_76] : memref<1x342x16xbf16, #tpu.memory_space<vmem>>, vector<1x288x16xbf16>
    %68 = vector.shape_cast %67 : vector<1x288x16xbf16> to vector<288x16xbf16>
    %c0_77 = arith.constant 0 : index
    %c0_78 = arith.constant 0 : index
    %69 = vector.load %arg8[%c0_77, %c0_78] : memref<288x32xf32, #tpu.memory_space<vmem>>, vector<288x32xf32>
    %c8 = arith.constant 8 : index
    %c0_79 = arith.constant 0 : index
    %c0_80 = arith.constant 0 : index
    %70 = vector.load %arg4[%c8, %c0_79, %c0_80] : memref<9x16x32xbf16, #tpu.memory_space<vmem>>, vector<1x16x32xbf16>
    %71 = vector.shape_cast %70 : vector<1x16x32xbf16> to vector<16x32xbf16>
    %cst_81 = arith.constant dense<0.000000e+00> : vector<288x32xf32>
    %72 = tpu.matmul %68, %71, %cst_81 {dimension_numbers = #tpu.dot_dimension_numbers<[1], [0], [0], [1], [0, 0, 1, 1], [], []>} : vector<288x16xbf16>, vector<16x32xbf16>, vector<288x32xf32> -> vector<288x32xf32>
    %73 = arith.addf %69, %72 : vector<288x32xf32>
    %c0_82 = arith.constant 0 : index
    %c0_83 = arith.constant 0 : index
    %74 = vector.load %arg8[%c0_82, %c0_83] : memref<288x32xf32, #tpu.memory_space<vmem>>, vector<288x32xf32>
    tpu.vector_store %arg8[%c0_82, %c0_83], %73 {strides = array<i32>} : memref<288x32xf32, #tpu.memory_space<vmem>>, vector<288x32xf32>,
    %c0_i32_84 = arith.constant 0 : i32
    %75 = arith.cmpi eq, %arg2, %c0_i32_84 : i32
    %76 = arith.extui %75 : i1 to i32
    %c0_i32_85 = arith.constant 0 : i32
    %77 = arith.cmpi ne, %76, %c0_i32_85 : i32
    scf.if %77 {
      %c0_86 = arith.constant 0 : index
      %c0_87 = arith.constant 0 : index
      %78 = vector.load %arg5[%c0_86, %c0_87] : memref<1x32xf32, #tpu.memory_space<vmem>>, vector<1x32xf32>
      %79 = vector.shape_cast %78 : vector<1x32xf32> to vector<1x32xf32>
      %80 = vector.broadcast %79 : vector<1x32xf32> to vector<8x32xf32>
      %c0_88 = arith.constant 0 : index
      %c0_89 = arith.constant 0 : index
      %81 = vector.load %arg6[%c0_88, %c0_89] : memref<1x32xf32, #tpu.memory_space<vmem>>, vector<1x32xf32>
      %82 = vector.shape_cast %81 : vector<1x32xf32> to vector<1x32xf32>
      %83 = vector.broadcast %82 : vector<1x32xf32> to vector<8x32xf32>
      %c0_90 = arith.constant 0 : index
      %c0_91 = arith.constant 0 : index
      %84 = tpu.strided_load %arg8[%c0_90, %c0_91] {strides = array<i32: 2, 1>} : memref<288x32xf32, #tpu.memory_space<vmem>>, vector<8x32xf32>
      %85 = arith.mulf %84, %80 : vector<8x32xf32>
      %86 = arith.addf %85, %83 : vector<8x32xf32>
      %c1_92 = arith.constant 1 : index
      %c0_93 = arith.constant 0 : index
      %87 = tpu.strided_load %arg8[%c1_92, %c0_93] {strides = array<i32: 2, 1>} : memref<288x32xf32, #tpu.memory_space<vmem>>, vector<8x32xf32>
      %88 = arith.mulf %87, %80 : vector<8x32xf32>
      %89 = arith.addf %88, %83 : vector<8x32xf32>
      %c18_94 = arith.constant 18 : index
      %c0_95 = arith.constant 0 : index
      %90 = tpu.strided_load %arg8[%c18_94, %c0_95] {strides = array<i32: 2, 1>} : memref<288x32xf32, #tpu.memory_space<vmem>>, vector<8x32xf32>
      %91 = arith.mulf %90, %80 : vector<8x32xf32>
      %92 = arith.addf %91, %83 : vector<8x32xf32>
      %c19_96 = arith.constant 19 : index
      %c0_97 = arith.constant 0 : index
      %93 = tpu.strided_load %arg8[%c19_96, %c0_97] {strides = array<i32: 2, 1>} : memref<288x32xf32, #tpu.memory_space<vmem>>, vector<8x32xf32>
      %94 = arith.mulf %93, %80 : vector<8x32xf32>
      %95 = arith.addf %94, %83 : vector<8x32xf32>
      %96 = arith.maximumf %86, %89 : vector<8x32xf32>
      %97 = arith.maximumf %92, %95 : vector<8x32xf32>
      %98 = arith.maximumf %96, %97 : vector<8x32xf32>
      %cst_98 = arith.constant 0.000000e+00 : f32
      %99 = vector.broadcast %cst_98 : f32 to vector<8x32xf32>
      %100 = arith.maximumf %98, %99 : vector<8x32xf32>
      %101 = arith.truncf %100 : vector<8x32xf32> to vector<8x32xbf16>
      %c0_99 = arith.constant 0 : index
      %c0_100 = arith.constant 0 : index
      %c0_101 = arith.constant 0 : index
      %c0_102 = arith.constant 0 : index
      %102 = vector.load %arg7[%c0_99, %c0_100, %c0_101, %c0_102] : memref<1x8x8x32xbf16, #tpu.memory_space<vmem>>, vector<1x1x8x32xbf16>
      %103 = vector.shape_cast %102 : vector<1x1x8x32xbf16> to vector<8x32xbf16>
      %104 = vector.shape_cast %101 : vector<8x32xbf16> to vector<1x1x8x32xbf16>
      tpu.vector_store %arg7[%c0_99, %c0_100, %c0_101, %c0_102], %104 {strides = array<i32>} : memref<1x8x8x32xbf16, #tpu.memory_space<vmem>>, vector<1x1x8x32xbf16>,
      %c36_103 = arith.constant 36 : index
      %c0_104 = arith.constant 0 : index
      %105 = tpu.strided_load %arg8[%c36_103, %c0_104] {strides = array<i32: 2, 1>} : memref<288x32xf32, #tpu.memory_space<vmem>>, vector<8x32xf32>
      %106 = arith.mulf %105, %80 : vector<8x32xf32>
      %107 = arith.addf %106, %83 : vector<8x32xf32>
      %c37_105 = arith.constant 37 : index
      %c0_106 = arith.constant 0 : index
      %108 = tpu.strided_load %arg8[%c37_105, %c0_106] {strides = array<i32: 2, 1>} : memref<288x32xf32, #tpu.memory_space<vmem>>, vector<8x32xf32>
      %109 = arith.mulf %108, %80 : vector<8x32xf32>
      %110 = arith.addf %109, %83 : vector<8x32xf32>
      %c54 = arith.constant 54 : index
      %c0_107 = arith.constant 0 : index
      %111 = tpu.strided_load %arg8[%c54, %c0_107] {strides = array<i32: 2, 1>} : memref<288x32xf32, #tpu.memory_space<vmem>>, vector<8x32xf32>
      %112 = arith.mulf %111, %80 : vector<8x32xf32>
      %113 = arith.addf %112, %83 : vector<8x32xf32>
      %c55 = arith.constant 55 : index
      %c0_108 = arith.constant 0 : index
      %114 = tpu.strided_load %arg8[%c55, %c0_108] {strides = array<i32: 2, 1>} : memref<288x32xf32, #tpu.memory_space<vmem>>, vector<8x32xf32>
      %115 = arith.mulf %114, %80 : vector<8x32xf32>
      %116 = arith.addf %115, %83 : vector<8x32xf32>
      %117 = arith.maximumf %107, %110 : vector<8x32xf32>
      %118 = arith.maximumf %113, %116 : vector<8x32xf32>
      %119 = arith.maximumf %117, %118 : vector<8x32xf32>
      %cst_109 = arith.constant 0.000000e+00 : f32
      %120 = vector.broadcast %cst_109 : f32 to vector<8x32xf32>
      %121 = arith.maximumf %119, %120 : vector<8x32xf32>
      %122 = arith.truncf %121 : vector<8x32xf32> to vector<8x32xbf16>
      %c0_110 = arith.constant 0 : index
      %c1_111 = arith.constant 1 : index
      %c0_112 = arith.constant 0 : index
      %c0_113 = arith.constant 0 : index
      %123 = vector.load %arg7[%c0_110, %c1_111, %c0_112, %c0_113] : memref<1x8x8x32xbf16, #tpu.memory_space<vmem>>, vector<1x1x8x32xbf16>
      %124 = vector.shape_cast %123 : vector<1x1x8x32xbf16> to vector<8x32xbf16>
      %125 = vector.shape_cast %122 : vector<8x32xbf16> to vector<1x1x8x32xbf16>
      tpu.vector_store %arg7[%c0_110, %c1_111, %c0_112, %c0_113], %125 {strides = array<i32>} : memref<1x8x8x32xbf16, #tpu.memory_space<vmem>>, vector<1x1x8x32xbf16>,
      %c72 = arith.constant 72 : index
      %c0_114 = arith.constant 0 : index
      %126 = tpu.strided_load %arg8[%c72, %c0_114] {strides = array<i32: 2, 1>} : memref<288x32xf32, #tpu.memory_space<vmem>>, vector<8x32xf32>
      %127 = arith.mulf %126, %80 : vector<8x32xf32>
      %128 = arith.addf %127, %83 : vector<8x32xf32>
      %c73 = arith.constant 73 : index
      %c0_115 = arith.constant 0 : index
      %129 = tpu.strided_load %arg8[%c73, %c0_115] {strides = array<i32: 2, 1>} : memref<288x32xf32, #tpu.memory_space<vmem>>, vector<8x32xf32>
      %130 = arith.mulf %129, %80 : vector<8x32xf32>
      %131 = arith.addf %130, %83 : vector<8x32xf32>
      %c90 = arith.constant 90 : index
      %c0_116 = arith.constant 0 : index
      %132 = tpu.strided_load %arg8[%c90, %c0_116] {strides = array<i32: 2, 1>} : memref<288x32xf32, #tpu.memory_space<vmem>>, vector<8x32xf32>
      %133 = arith.mulf %132, %80 : vector<8x32xf32>
      %134 = arith.addf %133, %83 : vector<8x32xf32>
      %c91 = arith.constant 91 : index
      %c0_117 = arith.constant 0 : index
      %135 = tpu.strided_load %arg8[%c91, %c0_117] {strides = array<i32: 2, 1>} : memref<288x32xf32, #tpu.memory_space<vmem>>, vector<8x32xf32>
      %136 = arith.mulf %135, %80 : vector<8x32xf32>
      %137 = arith.addf %136, %83 : vector<8x32xf32>
      %138 = arith.maximumf %128, %131 : vector<8x32xf32>
      %139 = arith.maximumf %134, %137 : vector<8x32xf32>
      %140 = arith.maximumf %138, %139 : vector<8x32xf32>
      %cst_118 = arith.constant 0.000000e+00 : f32
      %141 = vector.broadcast %cst_118 : f32 to vector<8x32xf32>
      %142 = arith.maximumf %140, %141 : vector<8x32xf32>
      %143 = arith.truncf %142 : vector<8x32xf32> to vector<8x32xbf16>
      %c0_119 = arith.constant 0 : index
      %c2_120 = arith.constant 2 : index
      %c0_121 = arith.constant 0 : index
      %c0_122 = arith.constant 0 : index
      %144 = vector.load %arg7[%c0_119, %c2_120, %c0_121, %c0_122] : memref<1x8x8x32xbf16, #tpu.memory_space<vmem>>, vector<1x1x8x32xbf16>
      %145 = vector.shape_cast %144 : vector<1x1x8x32xbf16> to vector<8x32xbf16>
      %146 = vector.shape_cast %143 : vector<8x32xbf16> to vector<1x1x8x32xbf16>
      tpu.vector_store %arg7[%c0_119, %c2_120, %c0_121, %c0_122], %146 {strides = array<i32>} : memref<1x8x8x32xbf16, #tpu.memory_space<vmem>>, vector<1x1x8x32xbf16>,
      %c108 = arith.constant 108 : index
      %c0_123 = arith.constant 0 : index
      %147 = tpu.strided_load %arg8[%c108, %c0_123] {strides = array<i32: 2, 1>} : memref<288x32xf32, #tpu.memory_space<vmem>>, vector<8x32xf32>
      %148 = arith.mulf %147, %80 : vector<8x32xf32>
      %149 = arith.addf %148, %83 : vector<8x32xf32>
      %c109 = arith.constant 109 : index
      %c0_124 = arith.constant 0 : index
      %150 = tpu.strided_load %arg8[%c109, %c0_124] {strides = array<i32: 2, 1>} : memref<288x32xf32, #tpu.memory_space<vmem>>, vector<8x32xf32>
      %151 = arith.mulf %150, %80 : vector<8x32xf32>
      %152 = arith.addf %151, %83 : vector<8x32xf32>
      %c126 = arith.constant 126 : index
      %c0_125 = arith.constant 0 : index
      %153 = tpu.strided_load %arg8[%c126, %c0_125] {strides = array<i32: 2, 1>} : memref<288x32xf32, #tpu.memory_space<vmem>>, vector<8x32xf32>
      %154 = arith.mulf %153, %80 : vector<8x32xf32>
      %155 = arith.addf %154, %83 : vector<8x32xf32>
      %c127 = arith.constant 127 : index
      %c0_126 = arith.constant 0 : index
      %156 = tpu.strided_load %arg8[%c127, %c0_126] {strides = array<i32: 2, 1>} : memref<288x32xf32, #tpu.memory_space<vmem>>, vector<8x32xf32>
      %157 = arith.mulf %156, %80 : vector<8x32xf32>
      %158 = arith.addf %157, %83 : vector<8x32xf32>
      %159 = arith.maximumf %149, %152 : vector<8x32xf32>
      %160 = arith.maximumf %155, %158 : vector<8x32xf32>
      %161 = arith.maximumf %159, %160 : vector<8x32xf32>
      %cst_127 = arith.constant 0.000000e+00 : f32
      %162 = vector.broadcast %cst_127 : f32 to vector<8x32xf32>
      %163 = arith.maximumf %161, %162 : vector<8x32xf32>
      %164 = arith.truncf %163 : vector<8x32xf32> to vector<8x32xbf16>
      %c0_128 = arith.constant 0 : index
      %c3_129 = arith.constant 3 : index
      %c0_130 = arith.constant 0 : index
      %c0_131 = arith.constant 0 : index
      %165 = vector.load %arg7[%c0_128, %c3_129, %c0_130, %c0_131] : memref<1x8x8x32xbf16, #tpu.memory_space<vmem>>, vector<1x1x8x32xbf16>
      %166 = vector.shape_cast %165 : vector<1x1x8x32xbf16> to vector<8x32xbf16>
      %167 = vector.shape_cast %164 : vector<8x32xbf16> to vector<1x1x8x32xbf16>
      tpu.vector_store %arg7[%c0_128, %c3_129, %c0_130, %c0_131], %167 {strides = array<i32>} : memref<1x8x8x32xbf16, #tpu.memory_space<vmem>>, vector<1x1x8x32xbf16>,
      %c144 = arith.constant 144 : index
      %c0_132 = arith.constant 0 : index
      %168 = tpu.strided_load %arg8[%c144, %c0_132] {strides = array<i32: 2, 1>} : memref<288x32xf32, #tpu.memory_space<vmem>>, vector<8x32xf32>
      %169 = arith.mulf %168, %80 : vector<8x32xf32>
      %170 = arith.addf %169, %83 : vector<8x32xf32>
      %c145 = arith.constant 145 : index
      %c0_133 = arith.constant 0 : index
      %171 = tpu.strided_load %arg8[%c145, %c0_133] {strides = array<i32: 2, 1>} : memref<288x32xf32, #tpu.memory_space<vmem>>, vector<8x32xf32>
      %172 = arith.mulf %171, %80 : vector<8x32xf32>
      %173 = arith.addf %172, %83 : vector<8x32xf32>
      %c162 = arith.constant 162 : index
      %c0_134 = arith.constant 0 : index
      %174 = tpu.strided_load %arg8[%c162, %c0_134] {strides = array<i32: 2, 1>} : memref<288x32xf32, #tpu.memory_space<vmem>>, vector<8x32xf32>
      %175 = arith.mulf %174, %80 : vector<8x32xf32>
      %176 = arith.addf %175, %83 : vector<8x32xf32>
      %c163 = arith.constant 163 : index
      %c0_135 = arith.constant 0 : index
      %177 = tpu.strided_load %arg8[%c163, %c0_135] {strides = array<i32: 2, 1>} : memref<288x32xf32, #tpu.memory_space<vmem>>, vector<8x32xf32>
      %178 = arith.mulf %177, %80 : vector<8x32xf32>
      %179 = arith.addf %178, %83 : vector<8x32xf32>
      %180 = arith.maximumf %170, %173 : vector<8x32xf32>
      %181 = arith.maximumf %176, %179 : vector<8x32xf32>
      %182 = arith.maximumf %180, %181 : vector<8x32xf32>
      %cst_136 = arith.constant 0.000000e+00 : f32
      %183 = vector.broadcast %cst_136 : f32 to vector<8x32xf32>
      %184 = arith.maximumf %182, %183 : vector<8x32xf32>
      %185 = arith.truncf %184 : vector<8x32xf32> to vector<8x32xbf16>
      %c0_137 = arith.constant 0 : index
      %c4_138 = arith.constant 4 : index
      %c0_139 = arith.constant 0 : index
      %c0_140 = arith.constant 0 : index
      %186 = vector.load %arg7[%c0_137, %c4_138, %c0_139, %c0_140] : memref<1x8x8x32xbf16, #tpu.memory_space<vmem>>, vector<1x1x8x32xbf16>
      %187 = vector.shape_cast %186 : vector<1x1x8x32xbf16> to vector<8x32xbf16>
      %188 = vector.shape_cast %185 : vector<8x32xbf16> to vector<1x1x8x32xbf16>
      tpu.vector_store %arg7[%c0_137, %c4_138, %c0_139, %c0_140], %188 {strides = array<i32>} : memref<1x8x8x32xbf16, #tpu.memory_space<vmem>>, vector<1x1x8x32xbf16>,
      %c180 = arith.constant 180 : index
      %c0_141 = arith.constant 0 : index
      %189 = tpu.strided_load %arg8[%c180, %c0_141] {strides = array<i32: 2, 1>} : memref<288x32xf32, #tpu.memory_space<vmem>>, vector<8x32xf32>
      %190 = arith.mulf %189, %80 : vector<8x32xf32>
      %191 = arith.addf %190, %83 : vector<8x32xf32>
      %c181 = arith.constant 181 : index
      %c0_142 = arith.constant 0 : index
      %192 = tpu.strided_load %arg8[%c181, %c0_142] {strides = array<i32: 2, 1>} : memref<288x32xf32, #tpu.memory_space<vmem>>, vector<8x32xf32>
      %193 = arith.mulf %192, %80 : vector<8x32xf32>
      %194 = arith.addf %193, %83 : vector<8x32xf32>
      %c198 = arith.constant 198 : index
      %c0_143 = arith.constant 0 : index
      %195 = tpu.strided_load %arg8[%c198, %c0_143] {strides = array<i32: 2, 1>} : memref<288x32xf32, #tpu.memory_space<vmem>>, vector<8x32xf32>
      %196 = arith.mulf %195, %80 : vector<8x32xf32>
      %197 = arith.addf %196, %83 : vector<8x32xf32>
      %c199 = arith.constant 199 : index
      %c0_144 = arith.constant 0 : index
      %198 = tpu.strided_load %arg8[%c199, %c0_144] {strides = array<i32: 2, 1>} : memref<288x32xf32, #tpu.memory_space<vmem>>, vector<8x32xf32>
      %199 = arith.mulf %198, %80 : vector<8x32xf32>
      %200 = arith.addf %199, %83 : vector<8x32xf32>
      %201 = arith.maximumf %191, %194 : vector<8x32xf32>
      %202 = arith.maximumf %197, %200 : vector<8x32xf32>
      %203 = arith.maximumf %201, %202 : vector<8x32xf32>
      %cst_145 = arith.constant 0.000000e+00 : f32
      %204 = vector.broadcast %cst_145 : f32 to vector<8x32xf32>
      %205 = arith.maximumf %203, %204 : vector<8x32xf32>
      %206 = arith.truncf %205 : vector<8x32xf32> to vector<8x32xbf16>
      %c0_146 = arith.constant 0 : index
      %c5_147 = arith.constant 5 : index
      %c0_148 = arith.constant 0 : index
      %c0_149 = arith.constant 0 : index
      %207 = vector.load %arg7[%c0_146, %c5_147, %c0_148, %c0_149] : memref<1x8x8x32xbf16, #tpu.memory_space<vmem>>, vector<1x1x8x32xbf16>
      %208 = vector.shape_cast %207 : vector<1x1x8x32xbf16> to vector<8x32xbf16>
      %209 = vector.shape_cast %206 : vector<8x32xbf16> to vector<1x1x8x32xbf16>
      tpu.vector_store %arg7[%c0_146, %c5_147, %c0_148, %c0_149], %209 {strides = array<i32>} : memref<1x8x8x32xbf16, #tpu.memory_space<vmem>>, vector<1x1x8x32xbf16>,
      %c216 = arith.constant 216 : index
      %c0_150 = arith.constant 0 : index
      %210 = tpu.strided_load %arg8[%c216, %c0_150] {strides = array<i32: 2, 1>} : memref<288x32xf32, #tpu.memory_space<vmem>>, vector<8x32xf32>
      %211 = arith.mulf %210, %80 : vector<8x32xf32>
      %212 = arith.addf %211, %83 : vector<8x32xf32>
      %c217 = arith.constant 217 : index
      %c0_151 = arith.constant 0 : index
      %213 = tpu.strided_load %arg8[%c217, %c0_151] {strides = array<i32: 2, 1>} : memref<288x32xf32, #tpu.memory_space<vmem>>, vector<8x32xf32>
      %214 = arith.mulf %213, %80 : vector<8x32xf32>
      %215 = arith.addf %214, %83 : vector<8x32xf32>
      %c234 = arith.constant 234 : index
      %c0_152 = arith.constant 0 : index
      %216 = tpu.strided_load %arg8[%c234, %c0_152] {strides = array<i32: 2, 1>} : memref<288x32xf32, #tpu.memory_space<vmem>>, vector<8x32xf32>
      %217 = arith.mulf %216, %80 : vector<8x32xf32>
      %218 = arith.addf %217, %83 : vector<8x32xf32>
      %c235 = arith.constant 235 : index
      %c0_153 = arith.constant 0 : index
      %219 = tpu.strided_load %arg8[%c235, %c0_153] {strides = array<i32: 2, 1>} : memref<288x32xf32, #tpu.memory_space<vmem>>, vector<8x32xf32>
      %220 = arith.mulf %219, %80 : vector<8x32xf32>
      %221 = arith.addf %220, %83 : vector<8x32xf32>
      %222 = arith.maximumf %212, %215 : vector<8x32xf32>
      %223 = arith.maximumf %218, %221 : vector<8x32xf32>
      %224 = arith.maximumf %222, %223 : vector<8x32xf32>
      %cst_154 = arith.constant 0.000000e+00 : f32
      %225 = vector.broadcast %cst_154 : f32 to vector<8x32xf32>
      %226 = arith.maximumf %224, %225 : vector<8x32xf32>
      %227 = arith.truncf %226 : vector<8x32xf32> to vector<8x32xbf16>
      %c0_155 = arith.constant 0 : index
      %c6_156 = arith.constant 6 : index
      %c0_157 = arith.constant 0 : index
      %c0_158 = arith.constant 0 : index
      %228 = vector.load %arg7[%c0_155, %c6_156, %c0_157, %c0_158] : memref<1x8x8x32xbf16, #tpu.memory_space<vmem>>, vector<1x1x8x32xbf16>
      %229 = vector.shape_cast %228 : vector<1x1x8x32xbf16> to vector<8x32xbf16>
      %230 = vector.shape_cast %227 : vector<8x32xbf16> to vector<1x1x8x32xbf16>
      tpu.vector_store %arg7[%c0_155, %c6_156, %c0_157, %c0_158], %230 {strides = array<i32>} : memref<1x8x8x32xbf16, #tpu.memory_space<vmem>>, vector<1x1x8x32xbf16>,
      %c252 = arith.constant 252 : index
      %c0_159 = arith.constant 0 : index
      %231 = tpu.strided_load %arg8[%c252, %c0_159] {strides = array<i32: 2, 1>} : memref<288x32xf32, #tpu.memory_space<vmem>>, vector<8x32xf32>
      %232 = arith.mulf %231, %80 : vector<8x32xf32>
      %233 = arith.addf %232, %83 : vector<8x32xf32>
      %c253 = arith.constant 253 : index
      %c0_160 = arith.constant 0 : index
      %234 = tpu.strided_load %arg8[%c253, %c0_160] {strides = array<i32: 2, 1>} : memref<288x32xf32, #tpu.memory_space<vmem>>, vector<8x32xf32>
      %235 = arith.mulf %234, %80 : vector<8x32xf32>
      %236 = arith.addf %235, %83 : vector<8x32xf32>
      %c270 = arith.constant 270 : index
      %c0_161 = arith.constant 0 : index
      %237 = tpu.strided_load %arg8[%c270, %c0_161] {strides = array<i32: 2, 1>} : memref<288x32xf32, #tpu.memory_space<vmem>>, vector<8x32xf32>
      %238 = arith.mulf %237, %80 : vector<8x32xf32>
      %239 = arith.addf %238, %83 : vector<8x32xf32>
      %c271 = arith.constant 271 : index
      %c0_162 = arith.constant 0 : index
      %240 = tpu.strided_load %arg8[%c271, %c0_162] {strides = array<i32: 2, 1>} : memref<288x32xf32, #tpu.memory_space<vmem>>, vector<8x32xf32>
      %241 = arith.mulf %240, %80 : vector<8x32xf32>
      %242 = arith.addf %241, %83 : vector<8x32xf32>
      %243 = arith.maximumf %233, %236 : vector<8x32xf32>
      %244 = arith.maximumf %239, %242 : vector<8x32xf32>
      %245 = arith.maximumf %243, %244 : vector<8x32xf32>
      %cst_163 = arith.constant 0.000000e+00 : f32
      %246 = vector.broadcast %cst_163 : f32 to vector<8x32xf32>
      %247 = arith.maximumf %245, %246 : vector<8x32xf32>
      %248 = arith.truncf %247 : vector<8x32xf32> to vector<8x32xbf16>
      %c0_164 = arith.constant 0 : index
      %c7_165 = arith.constant 7 : index
      %c0_166 = arith.constant 0 : index
      %c0_167 = arith.constant 0 : index
      %249 = vector.load %arg7[%c0_164, %c7_165, %c0_166, %c0_167] : memref<1x8x8x32xbf16, #tpu.memory_space<vmem>>, vector<1x1x8x32xbf16>
      %250 = vector.shape_cast %249 : vector<1x1x8x32xbf16> to vector<8x32xbf16>
      %251 = vector.shape_cast %248 : vector<8x32xbf16> to vector<1x1x8x32xbf16>
      tpu.vector_store %arg7[%c0_164, %c7_165, %c0_166, %c0_167], %251 {strides = array<i32>} : memref<1x8x8x32xbf16, #tpu.memory_space<vmem>>, vector<1x1x8x32xbf16>,
    } else {
    }
    return
  }
  func.func @transform_0(%arg0: i32, %arg1: i32, %arg2: i32) -> (i32, i32, i32) {
    %c0_i32 = arith.constant 0 : i32
    %c0_i32_0 = arith.constant 0 : i32
    return %arg0, %c0_i32, %arg2 : i32, i32, i32
  }
  func.func @transform_1(%arg0: i32, %arg1: i32, %arg2: i32) -> (i32, i32, i32) {
    %c0_i32 = arith.constant 0 : i32
    %c0_i32_0 = arith.constant 0 : i32
    return %c0_i32, %arg2, %arg1 : i32, i32, i32
  }
  func.func @transform_2(%arg0: i32, %arg1: i32, %arg2: i32) -> (i32, i32) {
    %c0_i32 = arith.constant 0 : i32
    %c0_i32_0 = arith.constant 0 : i32
    return %c0_i32, %arg1 : i32, i32
  }
  func.func @transform_3(%arg0: i32, %arg1: i32, %arg2: i32) -> (i32, i32) {
    %c0_i32 = arith.constant 0 : i32
    %c0_i32_0 = arith.constant 0 : i32
    return %c0_i32, %arg1 : i32, i32
  }
  func.func @transform_4(%arg0: i32, %arg1: i32, %arg2: i32) -> (i32, i32, i32, i32) {
    %c0_i32 = arith.constant 0 : i32
    %c0_i32_0 = arith.constant 0 : i32
    %c0_i32_1 = arith.constant 0 : i32
    return %arg0, %c0_i32, %c0_i32_0, %arg1 : i32, i32, i32, i32
  }
}

module attributes {stable_mosaic.version = 11 : i64} {
  func.func @classifier_kernel(%arg0: i32, %arg1: memref<2x256xbf16, #tpu.memory_space<vmem>>, %arg2: memref<256x20xbf16, #tpu.memory_space<vmem>>, %arg3: memref<1x20xf32, #tpu.memory_space<vmem>>, %arg4: memref<20x20xbf16, #tpu.memory_space<vmem>>, %arg5: memref<1x20xf32, #tpu.memory_space<vmem>>, %arg6: memref<20x1xbf16, #tpu.memory_space<vmem>>, %arg7: memref<1x1xf32, #tpu.memory_space<vmem>>, %arg8: memref<2x1xf32, #tpu.memory_space<vmem>>, %arg9: memref<2x20xf32, #tpu.memory_space<vmem>>) attributes {dimension_semantics = [#tpu.dimension_semantics<arbitrary>], iteration_bounds = array<i64: 1>, scalar_prefetch = 0 : i64, scratch_operands = 1 : i64, tpu.core_type = #tpu.core_type<tc>, window_params = [{transform_indices = @transform_0, window_bounds = array<i64: 2, 256>}, {transform_indices = @transform_1, window_bounds = array<i64: 256, 20>}, {pipeline_mode = #tpu.pipeline_mode<synchronous>, transform_indices = @transform_2, window_bounds = array<i64: 1, 20>}, {pipeline_mode = #tpu.pipeline_mode<synchronous>, transform_indices = @transform_3, window_bounds = array<i64: 20, 20>}, {pipeline_mode = #tpu.pipeline_mode<synchronous>, transform_indices = @transform_4, window_bounds = array<i64: 1, 20>}, {pipeline_mode = #tpu.pipeline_mode<synchronous>, transform_indices = @transform_5, window_bounds = array<i64: 20, 1>}, {pipeline_mode = #tpu.pipeline_mode<synchronous>, transform_indices = @transform_6, window_bounds = array<i64: 1, 1>}, {pipeline_mode = #tpu.pipeline_mode<synchronous>, transform_indices = @transform_7, window_bounds = array<i64: 2, 1>}]} {
    %c0_i32 = arith.constant 0 : i32
    %0 = arith.cmpi eq, %arg0, %c0_i32 : i32
    %1 = arith.extui %0 : i1 to i32
    %c0_i32_0 = arith.constant 0 : i32
    %2 = arith.cmpi ne, %1, %c0_i32_0 : i32
    scf.if %2 {
      %cst_10 = arith.constant 0.000000e+00 : f32
      %12 = vector.broadcast %cst_10 : f32 to vector<2x20xf32>
      %c0_11 = arith.constant 0 : index
      %c0_12 = arith.constant 0 : index
      %13 = vector.load %arg9[%c0_11, %c0_12] : memref<2x20xf32, #tpu.memory_space<vmem>>, vector<2x20xf32>
      tpu.vector_store %arg9[%c0_11, %c0_12], %12 {strides = array<i32>} : memref<2x20xf32, #tpu.memory_space<vmem>>, vector<2x20xf32>,
    } else {
    }
    %c0 = arith.constant 0 : index
    %c0_1 = arith.constant 0 : index
    %3 = vector.load %arg9[%c0, %c0_1] : memref<2x20xf32, #tpu.memory_space<vmem>>, vector<2x20xf32>
    %c0_2 = arith.constant 0 : index
    %c0_3 = arith.constant 0 : index
    %4 = vector.load %arg1[%c0_2, %c0_3] : memref<2x256xbf16, #tpu.memory_space<vmem>>, vector<2x256xbf16>
    %c0_4 = arith.constant 0 : index
    %c0_5 = arith.constant 0 : index
    %5 = vector.load %arg2[%c0_4, %c0_5] : memref<256x20xbf16, #tpu.memory_space<vmem>>, vector<256x20xbf16>
    %cst = arith.constant dense<0.000000e+00> : vector<2x20xf32>
    %6 = tpu.matmul %4, %5, %cst {dimension_numbers = #tpu.dot_dimension_numbers<[1], [0], [0], [1], [0, 0, 1, 1], [], []>} : vector<2x256xbf16>, vector<256x20xbf16>, vector<2x20xf32> -> vector<2x20xf32>
    %7 = arith.addf %3, %6 : vector<2x20xf32>
    %c0_6 = arith.constant 0 : index
    %c0_7 = arith.constant 0 : index
    %8 = vector.load %arg9[%c0_6, %c0_7] : memref<2x20xf32, #tpu.memory_space<vmem>>, vector<2x20xf32>
    tpu.vector_store %arg9[%c0_6, %c0_7], %7 {strides = array<i32>} : memref<2x20xf32, #tpu.memory_space<vmem>>, vector<2x20xf32>,
    %c0_i32_8 = arith.constant 0 : i32
    %9 = arith.cmpi eq, %arg0, %c0_i32_8 : i32
    %10 = arith.extui %9 : i1 to i32
    %c0_i32_9 = arith.constant 0 : i32
    %11 = arith.cmpi ne, %10, %c0_i32_9 : i32
    scf.if %11 {
      %c0_10 = arith.constant 0 : index
      %c0_11 = arith.constant 0 : index
      %12 = vector.load %arg9[%c0_10, %c0_11] : memref<2x20xf32, #tpu.memory_space<vmem>>, vector<2x20xf32>
      %c0_12 = arith.constant 0 : index
      %c0_13 = arith.constant 0 : index
      %13 = vector.load %arg3[%c0_12, %c0_13] : memref<1x20xf32, #tpu.memory_space<vmem>>, vector<1x20xf32>
      %14 = vector.broadcast %13 : vector<1x20xf32> to vector<2x20xf32>
      %15 = arith.addf %12, %14 : vector<2x20xf32>
      %cst_14 = arith.constant 0.000000e+00 : f32
      %16 = vector.broadcast %cst_14 : f32 to vector<2x20xf32>
      %17 = arith.maximumf %15, %16 : vector<2x20xf32>
      %18 = arith.truncf %17 : vector<2x20xf32> to vector<2x20xbf16>
      %c0_15 = arith.constant 0 : index
      %c0_16 = arith.constant 0 : index
      %19 = vector.load %arg4[%c0_15, %c0_16] : memref<20x20xbf16, #tpu.memory_space<vmem>>, vector<20x20xbf16>
      %cst_17 = arith.constant dense<0.000000e+00> : vector<2x20xf32>
      %20 = tpu.matmul %18, %19, %cst_17 {dimension_numbers = #tpu.dot_dimension_numbers<[1], [0], [0], [1], [0, 0, 1, 1], [], []>} : vector<2x20xbf16>, vector<20x20xbf16>, vector<2x20xf32> -> vector<2x20xf32>
      %c0_18 = arith.constant 0 : index
      %c0_19 = arith.constant 0 : index
      %21 = vector.load %arg5[%c0_18, %c0_19] : memref<1x20xf32, #tpu.memory_space<vmem>>, vector<1x20xf32>
      %22 = vector.broadcast %21 : vector<1x20xf32> to vector<2x20xf32>
      %23 = arith.addf %20, %22 : vector<2x20xf32>
      %cst_20 = arith.constant 0.000000e+00 : f32
      %24 = vector.broadcast %cst_20 : f32 to vector<2x20xf32>
      %25 = arith.maximumf %23, %24 : vector<2x20xf32>
      %26 = arith.truncf %25 : vector<2x20xf32> to vector<2x20xbf16>
      %c0_21 = arith.constant 0 : index
      %c0_22 = arith.constant 0 : index
      %27 = vector.load %arg6[%c0_21, %c0_22] : memref<20x1xbf16, #tpu.memory_space<vmem>>, vector<20x1xbf16>
      %cst_23 = arith.constant dense<0.000000e+00> : vector<2x1xf32>
      %28 = tpu.matmul %26, %27, %cst_23 {dimension_numbers = #tpu.dot_dimension_numbers<[1], [0], [0], [1], [0, 0, 1, 1], [], []>} : vector<2x20xbf16>, vector<20x1xbf16>, vector<2x1xf32> -> vector<2x1xf32>
      %c0_24 = arith.constant 0 : index
      %c0_25 = arith.constant 0 : index
      %29 = vector.load %arg7[%c0_24, %c0_25] : memref<1x1xf32, #tpu.memory_space<vmem>>, vector<1x1xf32>
      %30 = vector.broadcast %29 : vector<1x1xf32> to vector<2x1xf32>
      %31 = arith.addf %28, %30 : vector<2x1xf32>
      %cst_26 = arith.constant 0.000000e+00 : f32
      %32 = vector.broadcast %cst_26 : f32 to vector<2x1xf32>
      %33 = arith.subf %32, %31 : vector<2x1xf32>
      %34 = math.exp %33 : vector<2x1xf32>
      %cst_27 = arith.constant 1.000000e+00 : f32
      %35 = vector.broadcast %cst_27 : f32 to vector<2x1xf32>
      %36 = arith.addf %35, %34 : vector<2x1xf32>
      %cst_28 = arith.constant 1.000000e+00 : f32
      %37 = vector.broadcast %cst_28 : f32 to vector<2x1xf32>
      %38 = arith.divf %37, %36 : vector<2x1xf32>
      %c0_29 = arith.constant 0 : index
      %c0_30 = arith.constant 0 : index
      %39 = vector.load %arg8[%c0_29, %c0_30] : memref<2x1xf32, #tpu.memory_space<vmem>>, vector<2x1xf32>
      tpu.vector_store %arg8[%c0_29, %c0_30], %38 {strides = array<i32>} : memref<2x1xf32, #tpu.memory_space<vmem>>, vector<2x1xf32>,
    } else {
    }
    return
  }
  func.func @transform_0(%arg0: i32) -> (i32, i32) {
    %c0_i32 = arith.constant 0 : i32
    %c0_i32_0 = arith.constant 0 : i32
    return %c0_i32, %arg0 : i32, i32
  }
  func.func @transform_1(%arg0: i32) -> (i32, i32) {
    %c0_i32 = arith.constant 0 : i32
    %c0_i32_0 = arith.constant 0 : i32
    return %arg0, %c0_i32 : i32, i32
  }
  func.func @transform_2(%arg0: i32) -> (i32, i32) {
    %c0_i32 = arith.constant 0 : i32
    %c0_i32_0 = arith.constant 0 : i32
    %c0_i32_1 = arith.constant 0 : i32
    return %c0_i32, %c0_i32_0 : i32, i32
  }
  func.func @transform_3(%arg0: i32) -> (i32, i32) {
    %c0_i32 = arith.constant 0 : i32
    %c0_i32_0 = arith.constant 0 : i32
    %c0_i32_1 = arith.constant 0 : i32
    return %c0_i32, %c0_i32_0 : i32, i32
  }
  func.func @transform_4(%arg0: i32) -> (i32, i32) {
    %c0_i32 = arith.constant 0 : i32
    %c0_i32_0 = arith.constant 0 : i32
    %c0_i32_1 = arith.constant 0 : i32
    return %c0_i32, %c0_i32_0 : i32, i32
  }
  func.func @transform_5(%arg0: i32) -> (i32, i32) {
    %c0_i32 = arith.constant 0 : i32
    %c0_i32_0 = arith.constant 0 : i32
    %c0_i32_1 = arith.constant 0 : i32
    return %c0_i32, %c0_i32_0 : i32, i32
  }
  func.func @transform_6(%arg0: i32) -> (i32, i32) {
    %c0_i32 = arith.constant 0 : i32
    %c0_i32_0 = arith.constant 0 : i32
    %c0_i32_1 = arith.constant 0 : i32
    return %c0_i32, %c0_i32_0 : i32, i32
  }
  func.func @transform_7(%arg0: i32) -> (i32, i32) {
    %c0_i32 = arith.constant 0 : i32
    %c0_i32_0 = arith.constant 0 : i32
    %c0_i32_1 = arith.constant 0 : i32
    return %c0_i32, %c0_i32_0 : i32, i32
  }
}

module attributes {stable_mosaic.version = 11 : i64} {
  func.func @conv_bn_relu_pool_kernel(%arg0: i32, %arg1: i32, %arg2: i32, %arg3: memref<1x110x32xbf16, #tpu.memory_space<vmem>>, %arg4: memref<9x32x16xbf16, #tpu.memory_space<vmem>>, %arg5: memref<1x16xf32, #tpu.memory_space<vmem>>, %arg6: memref<1x16xf32, #tpu.memory_space<vmem>>, %arg7: memref<1x4x4x16xbf16, #tpu.memory_space<vmem>>, %arg8: memref<80x16xf32, #tpu.memory_space<vmem>>) attributes {dimension_semantics = [#tpu.dimension_semantics<parallel>, #tpu.dimension_semantics<parallel>, #tpu.dimension_semantics<arbitrary>], iteration_bounds = array<i64: 2, 1, 1>, scalar_prefetch = 0 : i64, scratch_operands = 1 : i64, tpu.core_type = #tpu.core_type<tc>, window_params = [{transform_indices = @transform_0, window_bounds = array<i64: 1, 110, 32>}, {transform_indices = @transform_1, window_bounds = array<i64: 9, 32, 16>}, {transform_indices = @transform_2, window_bounds = array<i64: 1, 16>}, {transform_indices = @transform_3, window_bounds = array<i64: 1, 16>}, {transform_indices = @transform_4, window_bounds = array<i64: 1, 4, 4, 16>}]} {
    %c0_i32 = arith.constant 0 : i32
    %0 = arith.cmpi eq, %arg2, %c0_i32 : i32
    %1 = arith.extui %0 : i1 to i32
    %c0_i32_0 = arith.constant 0 : i32
    %2 = arith.cmpi ne, %1, %c0_i32_0 : i32
    scf.if %2 {
      %cst_86 = arith.constant 0.000000e+00 : f32
      %78 = vector.broadcast %cst_86 : f32 to vector<80x16xf32>
      %c0_87 = arith.constant 0 : index
      %c0_88 = arith.constant 0 : index
      %79 = vector.load %arg8[%c0_87, %c0_88] : memref<80x16xf32, #tpu.memory_space<vmem>>, vector<80x16xf32>
      tpu.vector_store %arg8[%c0_87, %c0_88], %78 {strides = array<i32>} : memref<80x16xf32, #tpu.memory_space<vmem>>, vector<80x16xf32>,
    } else {
    }
    %c0 = arith.constant 0 : index
    %c0_1 = arith.constant 0 : index
    %c0_2 = arith.constant 0 : index
    %3 = vector.load %arg3[%c0, %c0_1, %c0_2] : memref<1x110x32xbf16, #tpu.memory_space<vmem>>, vector<1x80x32xbf16>
    %4 = vector.shape_cast %3 : vector<1x80x32xbf16> to vector<80x32xbf16>
    %c0_3 = arith.constant 0 : index
    %c0_4 = arith.constant 0 : index
    %5 = vector.load %arg8[%c0_3, %c0_4] : memref<80x16xf32, #tpu.memory_space<vmem>>, vector<80x16xf32>
    %c0_5 = arith.constant 0 : index
    %c0_6 = arith.constant 0 : index
    %c0_7 = arith.constant 0 : index
    %6 = vector.load %arg4[%c0_5, %c0_6, %c0_7] : memref<9x32x16xbf16, #tpu.memory_space<vmem>>, vector<1x32x16xbf16>
    %7 = vector.shape_cast %6 : vector<1x32x16xbf16> to vector<32x16xbf16>
    %cst = arith.constant dense<0.000000e+00> : vector<80x16xf32>
    %8 = tpu.matmul %4, %7, %cst {dimension_numbers = #tpu.dot_dimension_numbers<[1], [0], [0], [1], [0, 0, 1, 1], [], []>} : vector<80x32xbf16>, vector<32x16xbf16>, vector<80x16xf32> -> vector<80x16xf32>
    %9 = arith.addf %5, %8 : vector<80x16xf32>
    %c0_8 = arith.constant 0 : index
    %c0_9 = arith.constant 0 : index
    %10 = vector.load %arg8[%c0_8, %c0_9] : memref<80x16xf32, #tpu.memory_space<vmem>>, vector<80x16xf32>
    tpu.vector_store %arg8[%c0_8, %c0_9], %9 {strides = array<i32>} : memref<80x16xf32, #tpu.memory_space<vmem>>, vector<80x16xf32>,
    %c0_10 = arith.constant 0 : index
    %c1 = arith.constant 1 : index
    %c0_11 = arith.constant 0 : index
    %11 = vector.load %arg3[%c0_10, %c1, %c0_11] : memref<1x110x32xbf16, #tpu.memory_space<vmem>>, vector<1x80x32xbf16>
    %12 = vector.shape_cast %11 : vector<1x80x32xbf16> to vector<80x32xbf16>
    %c0_12 = arith.constant 0 : index
    %c0_13 = arith.constant 0 : index
    %13 = vector.load %arg8[%c0_12, %c0_13] : memref<80x16xf32, #tpu.memory_space<vmem>>, vector<80x16xf32>
    %c1_14 = arith.constant 1 : index
    %c0_15 = arith.constant 0 : index
    %c0_16 = arith.constant 0 : index
    %14 = vector.load %arg4[%c1_14, %c0_15, %c0_16] : memref<9x32x16xbf16, #tpu.memory_space<vmem>>, vector<1x32x16xbf16>
    %15 = vector.shape_cast %14 : vector<1x32x16xbf16> to vector<32x16xbf16>
    %cst_17 = arith.constant dense<0.000000e+00> : vector<80x16xf32>
    %16 = tpu.matmul %12, %15, %cst_17 {dimension_numbers = #tpu.dot_dimension_numbers<[1], [0], [0], [1], [0, 0, 1, 1], [], []>} : vector<80x32xbf16>, vector<32x16xbf16>, vector<80x16xf32> -> vector<80x16xf32>
    %17 = arith.addf %13, %16 : vector<80x16xf32>
    %c0_18 = arith.constant 0 : index
    %c0_19 = arith.constant 0 : index
    %18 = vector.load %arg8[%c0_18, %c0_19] : memref<80x16xf32, #tpu.memory_space<vmem>>, vector<80x16xf32>
    tpu.vector_store %arg8[%c0_18, %c0_19], %17 {strides = array<i32>} : memref<80x16xf32, #tpu.memory_space<vmem>>, vector<80x16xf32>,
    %c0_20 = arith.constant 0 : index
    %c2 = arith.constant 2 : index
    %c0_21 = arith.constant 0 : index
    %19 = vector.load %arg3[%c0_20, %c2, %c0_21] : memref<1x110x32xbf16, #tpu.memory_space<vmem>>, vector<1x80x32xbf16>
    %20 = vector.shape_cast %19 : vector<1x80x32xbf16> to vector<80x32xbf16>
    %c0_22 = arith.constant 0 : index
    %c0_23 = arith.constant 0 : index
    %21 = vector.load %arg8[%c0_22, %c0_23] : memref<80x16xf32, #tpu.memory_space<vmem>>, vector<80x16xf32>
    %c2_24 = arith.constant 2 : index
    %c0_25 = arith.constant 0 : index
    %c0_26 = arith.constant 0 : index
    %22 = vector.load %arg4[%c2_24, %c0_25, %c0_26] : memref<9x32x16xbf16, #tpu.memory_space<vmem>>, vector<1x32x16xbf16>
    %23 = vector.shape_cast %22 : vector<1x32x16xbf16> to vector<32x16xbf16>
    %cst_27 = arith.constant dense<0.000000e+00> : vector<80x16xf32>
    %24 = tpu.matmul %20, %23, %cst_27 {dimension_numbers = #tpu.dot_dimension_numbers<[1], [0], [0], [1], [0, 0, 1, 1], [], []>} : vector<80x32xbf16>, vector<32x16xbf16>, vector<80x16xf32> -> vector<80x16xf32>
    %25 = arith.addf %21, %24 : vector<80x16xf32>
    %c0_28 = arith.constant 0 : index
    %c0_29 = arith.constant 0 : index
    %26 = vector.load %arg8[%c0_28, %c0_29] : memref<80x16xf32, #tpu.memory_space<vmem>>, vector<80x16xf32>
    tpu.vector_store %arg8[%c0_28, %c0_29], %25 {strides = array<i32>} : memref<80x16xf32, #tpu.memory_space<vmem>>, vector<80x16xf32>,
    %c0_30 = arith.constant 0 : index
    %c10 = arith.constant 10 : index
    %c0_31 = arith.constant 0 : index
    %27 = vector.load %arg3[%c0_30, %c10, %c0_31] : memref<1x110x32xbf16, #tpu.memory_space<vmem>>, vector<1x80x32xbf16>
    %28 = vector.shape_cast %27 : vector<1x80x32xbf16> to vector<80x32xbf16>
    %c0_32 = arith.constant 0 : index
    %c0_33 = arith.constant 0 : index
    %29 = vector.load %arg8[%c0_32, %c0_33] : memref<80x16xf32, #tpu.memory_space<vmem>>, vector<80x16xf32>
    %c3 = arith.constant 3 : index
    %c0_34 = arith.constant 0 : index
    %c0_35 = arith.constant 0 : index
    %30 = vector.load %arg4[%c3, %c0_34, %c0_35] : memref<9x32x16xbf16, #tpu.memory_space<vmem>>, vector<1x32x16xbf16>
    %31 = vector.shape_cast %30 : vector<1x32x16xbf16> to vector<32x16xbf16>
    %cst_36 = arith.constant dense<0.000000e+00> : vector<80x16xf32>
    %32 = tpu.matmul %28, %31, %cst_36 {dimension_numbers = #tpu.dot_dimension_numbers<[1], [0], [0], [1], [0, 0, 1, 1], [], []>} : vector<80x32xbf16>, vector<32x16xbf16>, vector<80x16xf32> -> vector<80x16xf32>
    %33 = arith.addf %29, %32 : vector<80x16xf32>
    %c0_37 = arith.constant 0 : index
    %c0_38 = arith.constant 0 : index
    %34 = vector.load %arg8[%c0_37, %c0_38] : memref<80x16xf32, #tpu.memory_space<vmem>>, vector<80x16xf32>
    tpu.vector_store %arg8[%c0_37, %c0_38], %33 {strides = array<i32>} : memref<80x16xf32, #tpu.memory_space<vmem>>, vector<80x16xf32>,
    %c0_39 = arith.constant 0 : index
    %c11 = arith.constant 11 : index
    %c0_40 = arith.constant 0 : index
    %35 = vector.load %arg3[%c0_39, %c11, %c0_40] : memref<1x110x32xbf16, #tpu.memory_space<vmem>>, vector<1x80x32xbf16>
    %36 = vector.shape_cast %35 : vector<1x80x32xbf16> to vector<80x32xbf16>
    %c0_41 = arith.constant 0 : index
    %c0_42 = arith.constant 0 : index
    %37 = vector.load %arg8[%c0_41, %c0_42] : memref<80x16xf32, #tpu.memory_space<vmem>>, vector<80x16xf32>
    %c4 = arith.constant 4 : index
    %c0_43 = arith.constant 0 : index
    %c0_44 = arith.constant 0 : index
    %38 = vector.load %arg4[%c4, %c0_43, %c0_44] : memref<9x32x16xbf16, #tpu.memory_space<vmem>>, vector<1x32x16xbf16>
    %39 = vector.shape_cast %38 : vector<1x32x16xbf16> to vector<32x16xbf16>
    %cst_45 = arith.constant dense<0.000000e+00> : vector<80x16xf32>
    %40 = tpu.matmul %36, %39, %cst_45 {dimension_numbers = #tpu.dot_dimension_numbers<[1], [0], [0], [1], [0, 0, 1, 1], [], []>} : vector<80x32xbf16>, vector<32x16xbf16>, vector<80x16xf32> -> vector<80x16xf32>
    %41 = arith.addf %37, %40 : vector<80x16xf32>
    %c0_46 = arith.constant 0 : index
    %c0_47 = arith.constant 0 : index
    %42 = vector.load %arg8[%c0_46, %c0_47] : memref<80x16xf32, #tpu.memory_space<vmem>>, vector<80x16xf32>
    tpu.vector_store %arg8[%c0_46, %c0_47], %41 {strides = array<i32>} : memref<80x16xf32, #tpu.memory_space<vmem>>, vector<80x16xf32>,
    %c0_48 = arith.constant 0 : index
    %c12 = arith.constant 12 : index
    %c0_49 = arith.constant 0 : index
    %43 = vector.load %arg3[%c0_48, %c12, %c0_49] : memref<1x110x32xbf16, #tpu.memory_space<vmem>>, vector<1x80x32xbf16>
    %44 = vector.shape_cast %43 : vector<1x80x32xbf16> to vector<80x32xbf16>
    %c0_50 = arith.constant 0 : index
    %c0_51 = arith.constant 0 : index
    %45 = vector.load %arg8[%c0_50, %c0_51] : memref<80x16xf32, #tpu.memory_space<vmem>>, vector<80x16xf32>
    %c5 = arith.constant 5 : index
    %c0_52 = arith.constant 0 : index
    %c0_53 = arith.constant 0 : index
    %46 = vector.load %arg4[%c5, %c0_52, %c0_53] : memref<9x32x16xbf16, #tpu.memory_space<vmem>>, vector<1x32x16xbf16>
    %47 = vector.shape_cast %46 : vector<1x32x16xbf16> to vector<32x16xbf16>
    %cst_54 = arith.constant dense<0.000000e+00> : vector<80x16xf32>
    %48 = tpu.matmul %44, %47, %cst_54 {dimension_numbers = #tpu.dot_dimension_numbers<[1], [0], [0], [1], [0, 0, 1, 1], [], []>} : vector<80x32xbf16>, vector<32x16xbf16>, vector<80x16xf32> -> vector<80x16xf32>
    %49 = arith.addf %45, %48 : vector<80x16xf32>
    %c0_55 = arith.constant 0 : index
    %c0_56 = arith.constant 0 : index
    %50 = vector.load %arg8[%c0_55, %c0_56] : memref<80x16xf32, #tpu.memory_space<vmem>>, vector<80x16xf32>
    tpu.vector_store %arg8[%c0_55, %c0_56], %49 {strides = array<i32>} : memref<80x16xf32, #tpu.memory_space<vmem>>, vector<80x16xf32>,
    %c0_57 = arith.constant 0 : index
    %c20 = arith.constant 20 : index
    %c0_58 = arith.constant 0 : index
    %51 = vector.load %arg3[%c0_57, %c20, %c0_58] : memref<1x110x32xbf16, #tpu.memory_space<vmem>>, vector<1x80x32xbf16>
    %52 = vector.shape_cast %51 : vector<1x80x32xbf16> to vector<80x32xbf16>
    %c0_59 = arith.constant 0 : index
    %c0_60 = arith.constant 0 : index
    %53 = vector.load %arg8[%c0_59, %c0_60] : memref<80x16xf32, #tpu.memory_space<vmem>>, vector<80x16xf32>
    %c6 = arith.constant 6 : index
    %c0_61 = arith.constant 0 : index
    %c0_62 = arith.constant 0 : index
    %54 = vector.load %arg4[%c6, %c0_61, %c0_62] : memref<9x32x16xbf16, #tpu.memory_space<vmem>>, vector<1x32x16xbf16>
    %55 = vector.shape_cast %54 : vector<1x32x16xbf16> to vector<32x16xbf16>
    %cst_63 = arith.constant dense<0.000000e+00> : vector<80x16xf32>
    %56 = tpu.matmul %52, %55, %cst_63 {dimension_numbers = #tpu.dot_dimension_numbers<[1], [0], [0], [1], [0, 0, 1, 1], [], []>} : vector<80x32xbf16>, vector<32x16xbf16>, vector<80x16xf32> -> vector<80x16xf32>
    %57 = arith.addf %53, %56 : vector<80x16xf32>
    %c0_64 = arith.constant 0 : index
    %c0_65 = arith.constant 0 : index
    %58 = vector.load %arg8[%c0_64, %c0_65] : memref<80x16xf32, #tpu.memory_space<vmem>>, vector<80x16xf32>
    tpu.vector_store %arg8[%c0_64, %c0_65], %57 {strides = array<i32>} : memref<80x16xf32, #tpu.memory_space<vmem>>, vector<80x16xf32>,
    %c0_66 = arith.constant 0 : index
    %c21 = arith.constant 21 : index
    %c0_67 = arith.constant 0 : index
    %59 = vector.load %arg3[%c0_66, %c21, %c0_67] : memref<1x110x32xbf16, #tpu.memory_space<vmem>>, vector<1x80x32xbf16>
    %60 = vector.shape_cast %59 : vector<1x80x32xbf16> to vector<80x32xbf16>
    %c0_68 = arith.constant 0 : index
    %c0_69 = arith.constant 0 : index
    %61 = vector.load %arg8[%c0_68, %c0_69] : memref<80x16xf32, #tpu.memory_space<vmem>>, vector<80x16xf32>
    %c7 = arith.constant 7 : index
    %c0_70 = arith.constant 0 : index
    %c0_71 = arith.constant 0 : index
    %62 = vector.load %arg4[%c7, %c0_70, %c0_71] : memref<9x32x16xbf16, #tpu.memory_space<vmem>>, vector<1x32x16xbf16>
    %63 = vector.shape_cast %62 : vector<1x32x16xbf16> to vector<32x16xbf16>
    %cst_72 = arith.constant dense<0.000000e+00> : vector<80x16xf32>
    %64 = tpu.matmul %60, %63, %cst_72 {dimension_numbers = #tpu.dot_dimension_numbers<[1], [0], [0], [1], [0, 0, 1, 1], [], []>} : vector<80x32xbf16>, vector<32x16xbf16>, vector<80x16xf32> -> vector<80x16xf32>
    %65 = arith.addf %61, %64 : vector<80x16xf32>
    %c0_73 = arith.constant 0 : index
    %c0_74 = arith.constant 0 : index
    %66 = vector.load %arg8[%c0_73, %c0_74] : memref<80x16xf32, #tpu.memory_space<vmem>>, vector<80x16xf32>
    tpu.vector_store %arg8[%c0_73, %c0_74], %65 {strides = array<i32>} : memref<80x16xf32, #tpu.memory_space<vmem>>, vector<80x16xf32>,
    %c0_75 = arith.constant 0 : index
    %c22 = arith.constant 22 : index
    %c0_76 = arith.constant 0 : index
    %67 = vector.load %arg3[%c0_75, %c22, %c0_76] : memref<1x110x32xbf16, #tpu.memory_space<vmem>>, vector<1x80x32xbf16>
    %68 = vector.shape_cast %67 : vector<1x80x32xbf16> to vector<80x32xbf16>
    %c0_77 = arith.constant 0 : index
    %c0_78 = arith.constant 0 : index
    %69 = vector.load %arg8[%c0_77, %c0_78] : memref<80x16xf32, #tpu.memory_space<vmem>>, vector<80x16xf32>
    %c8 = arith.constant 8 : index
    %c0_79 = arith.constant 0 : index
    %c0_80 = arith.constant 0 : index
    %70 = vector.load %arg4[%c8, %c0_79, %c0_80] : memref<9x32x16xbf16, #tpu.memory_space<vmem>>, vector<1x32x16xbf16>
    %71 = vector.shape_cast %70 : vector<1x32x16xbf16> to vector<32x16xbf16>
    %cst_81 = arith.constant dense<0.000000e+00> : vector<80x16xf32>
    %72 = tpu.matmul %68, %71, %cst_81 {dimension_numbers = #tpu.dot_dimension_numbers<[1], [0], [0], [1], [0, 0, 1, 1], [], []>} : vector<80x32xbf16>, vector<32x16xbf16>, vector<80x16xf32> -> vector<80x16xf32>
    %73 = arith.addf %69, %72 : vector<80x16xf32>
    %c0_82 = arith.constant 0 : index
    %c0_83 = arith.constant 0 : index
    %74 = vector.load %arg8[%c0_82, %c0_83] : memref<80x16xf32, #tpu.memory_space<vmem>>, vector<80x16xf32>
    tpu.vector_store %arg8[%c0_82, %c0_83], %73 {strides = array<i32>} : memref<80x16xf32, #tpu.memory_space<vmem>>, vector<80x16xf32>,
    %c0_i32_84 = arith.constant 0 : i32
    %75 = arith.cmpi eq, %arg2, %c0_i32_84 : i32
    %76 = arith.extui %75 : i1 to i32
    %c0_i32_85 = arith.constant 0 : i32
    %77 = arith.cmpi ne, %76, %c0_i32_85 : i32
    scf.if %77 {
      %c0_86 = arith.constant 0 : index
      %c0_87 = arith.constant 0 : index
      %78 = vector.load %arg5[%c0_86, %c0_87] : memref<1x16xf32, #tpu.memory_space<vmem>>, vector<1x16xf32>
      %79 = vector.shape_cast %78 : vector<1x16xf32> to vector<1x16xf32>
      %80 = vector.broadcast %79 : vector<1x16xf32> to vector<4x16xf32>
      %c0_88 = arith.constant 0 : index
      %c0_89 = arith.constant 0 : index
      %81 = vector.load %arg6[%c0_88, %c0_89] : memref<1x16xf32, #tpu.memory_space<vmem>>, vector<1x16xf32>
      %82 = vector.shape_cast %81 : vector<1x16xf32> to vector<1x16xf32>
      %83 = vector.broadcast %82 : vector<1x16xf32> to vector<4x16xf32>
      %c0_90 = arith.constant 0 : index
      %c0_91 = arith.constant 0 : index
      %84 = tpu.strided_load %arg8[%c0_90, %c0_91] {strides = array<i32: 2, 1>} : memref<80x16xf32, #tpu.memory_space<vmem>>, vector<4x16xf32>
      %85 = arith.mulf %84, %80 : vector<4x16xf32>
      %86 = arith.addf %85, %83 : vector<4x16xf32>
      %c1_92 = arith.constant 1 : index
      %c0_93 = arith.constant 0 : index
      %87 = tpu.strided_load %arg8[%c1_92, %c0_93] {strides = array<i32: 2, 1>} : memref<80x16xf32, #tpu.memory_space<vmem>>, vector<4x16xf32>
      %88 = arith.mulf %87, %80 : vector<4x16xf32>
      %89 = arith.addf %88, %83 : vector<4x16xf32>
      %c10_94 = arith.constant 10 : index
      %c0_95 = arith.constant 0 : index
      %90 = tpu.strided_load %arg8[%c10_94, %c0_95] {strides = array<i32: 2, 1>} : memref<80x16xf32, #tpu.memory_space<vmem>>, vector<4x16xf32>
      %91 = arith.mulf %90, %80 : vector<4x16xf32>
      %92 = arith.addf %91, %83 : vector<4x16xf32>
      %c11_96 = arith.constant 11 : index
      %c0_97 = arith.constant 0 : index
      %93 = tpu.strided_load %arg8[%c11_96, %c0_97] {strides = array<i32: 2, 1>} : memref<80x16xf32, #tpu.memory_space<vmem>>, vector<4x16xf32>
      %94 = arith.mulf %93, %80 : vector<4x16xf32>
      %95 = arith.addf %94, %83 : vector<4x16xf32>
      %96 = arith.maximumf %86, %89 : vector<4x16xf32>
      %97 = arith.maximumf %92, %95 : vector<4x16xf32>
      %98 = arith.maximumf %96, %97 : vector<4x16xf32>
      %cst_98 = arith.constant 0.000000e+00 : f32
      %99 = vector.broadcast %cst_98 : f32 to vector<4x16xf32>
      %100 = arith.maximumf %98, %99 : vector<4x16xf32>
      %101 = arith.truncf %100 : vector<4x16xf32> to vector<4x16xbf16>
      %c0_99 = arith.constant 0 : index
      %c0_100 = arith.constant 0 : index
      %c0_101 = arith.constant 0 : index
      %c0_102 = arith.constant 0 : index
      %102 = vector.load %arg7[%c0_99, %c0_100, %c0_101, %c0_102] : memref<1x4x4x16xbf16, #tpu.memory_space<vmem>>, vector<1x1x4x16xbf16>
      %103 = vector.shape_cast %102 : vector<1x1x4x16xbf16> to vector<4x16xbf16>
      %104 = vector.shape_cast %101 : vector<4x16xbf16> to vector<1x1x4x16xbf16>
      tpu.vector_store %arg7[%c0_99, %c0_100, %c0_101, %c0_102], %104 {strides = array<i32>} : memref<1x4x4x16xbf16, #tpu.memory_space<vmem>>, vector<1x1x4x16xbf16>,
      %c20_103 = arith.constant 20 : index
      %c0_104 = arith.constant 0 : index
      %105 = tpu.strided_load %arg8[%c20_103, %c0_104] {strides = array<i32: 2, 1>} : memref<80x16xf32, #tpu.memory_space<vmem>>, vector<4x16xf32>
      %106 = arith.mulf %105, %80 : vector<4x16xf32>
      %107 = arith.addf %106, %83 : vector<4x16xf32>
      %c21_105 = arith.constant 21 : index
      %c0_106 = arith.constant 0 : index
      %108 = tpu.strided_load %arg8[%c21_105, %c0_106] {strides = array<i32: 2, 1>} : memref<80x16xf32, #tpu.memory_space<vmem>>, vector<4x16xf32>
      %109 = arith.mulf %108, %80 : vector<4x16xf32>
      %110 = arith.addf %109, %83 : vector<4x16xf32>
      %c30 = arith.constant 30 : index
      %c0_107 = arith.constant 0 : index
      %111 = tpu.strided_load %arg8[%c30, %c0_107] {strides = array<i32: 2, 1>} : memref<80x16xf32, #tpu.memory_space<vmem>>, vector<4x16xf32>
      %112 = arith.mulf %111, %80 : vector<4x16xf32>
      %113 = arith.addf %112, %83 : vector<4x16xf32>
      %c31 = arith.constant 31 : index
      %c0_108 = arith.constant 0 : index
      %114 = tpu.strided_load %arg8[%c31, %c0_108] {strides = array<i32: 2, 1>} : memref<80x16xf32, #tpu.memory_space<vmem>>, vector<4x16xf32>
      %115 = arith.mulf %114, %80 : vector<4x16xf32>
      %116 = arith.addf %115, %83 : vector<4x16xf32>
      %117 = arith.maximumf %107, %110 : vector<4x16xf32>
      %118 = arith.maximumf %113, %116 : vector<4x16xf32>
      %119 = arith.maximumf %117, %118 : vector<4x16xf32>
      %cst_109 = arith.constant 0.000000e+00 : f32
      %120 = vector.broadcast %cst_109 : f32 to vector<4x16xf32>
      %121 = arith.maximumf %119, %120 : vector<4x16xf32>
      %122 = arith.truncf %121 : vector<4x16xf32> to vector<4x16xbf16>
      %c0_110 = arith.constant 0 : index
      %c1_111 = arith.constant 1 : index
      %c0_112 = arith.constant 0 : index
      %c0_113 = arith.constant 0 : index
      %123 = vector.load %arg7[%c0_110, %c1_111, %c0_112, %c0_113] : memref<1x4x4x16xbf16, #tpu.memory_space<vmem>>, vector<1x1x4x16xbf16>
      %124 = vector.shape_cast %123 : vector<1x1x4x16xbf16> to vector<4x16xbf16>
      %125 = vector.shape_cast %122 : vector<4x16xbf16> to vector<1x1x4x16xbf16>
      tpu.vector_store %arg7[%c0_110, %c1_111, %c0_112, %c0_113], %125 {strides = array<i32>} : memref<1x4x4x16xbf16, #tpu.memory_space<vmem>>, vector<1x1x4x16xbf16>,
      %c40 = arith.constant 40 : index
      %c0_114 = arith.constant 0 : index
      %126 = tpu.strided_load %arg8[%c40, %c0_114] {strides = array<i32: 2, 1>} : memref<80x16xf32, #tpu.memory_space<vmem>>, vector<4x16xf32>
      %127 = arith.mulf %126, %80 : vector<4x16xf32>
      %128 = arith.addf %127, %83 : vector<4x16xf32>
      %c41 = arith.constant 41 : index
      %c0_115 = arith.constant 0 : index
      %129 = tpu.strided_load %arg8[%c41, %c0_115] {strides = array<i32: 2, 1>} : memref<80x16xf32, #tpu.memory_space<vmem>>, vector<4x16xf32>
      %130 = arith.mulf %129, %80 : vector<4x16xf32>
      %131 = arith.addf %130, %83 : vector<4x16xf32>
      %c50 = arith.constant 50 : index
      %c0_116 = arith.constant 0 : index
      %132 = tpu.strided_load %arg8[%c50, %c0_116] {strides = array<i32: 2, 1>} : memref<80x16xf32, #tpu.memory_space<vmem>>, vector<4x16xf32>
      %133 = arith.mulf %132, %80 : vector<4x16xf32>
      %134 = arith.addf %133, %83 : vector<4x16xf32>
      %c51 = arith.constant 51 : index
      %c0_117 = arith.constant 0 : index
      %135 = tpu.strided_load %arg8[%c51, %c0_117] {strides = array<i32: 2, 1>} : memref<80x16xf32, #tpu.memory_space<vmem>>, vector<4x16xf32>
      %136 = arith.mulf %135, %80 : vector<4x16xf32>
      %137 = arith.addf %136, %83 : vector<4x16xf32>
      %138 = arith.maximumf %128, %131 : vector<4x16xf32>
      %139 = arith.maximumf %134, %137 : vector<4x16xf32>
      %140 = arith.maximumf %138, %139 : vector<4x16xf32>
      %cst_118 = arith.constant 0.000000e+00 : f32
      %141 = vector.broadcast %cst_118 : f32 to vector<4x16xf32>
      %142 = arith.maximumf %140, %141 : vector<4x16xf32>
      %143 = arith.truncf %142 : vector<4x16xf32> to vector<4x16xbf16>
      %c0_119 = arith.constant 0 : index
      %c2_120 = arith.constant 2 : index
      %c0_121 = arith.constant 0 : index
      %c0_122 = arith.constant 0 : index
      %144 = vector.load %arg7[%c0_119, %c2_120, %c0_121, %c0_122] : memref<1x4x4x16xbf16, #tpu.memory_space<vmem>>, vector<1x1x4x16xbf16>
      %145 = vector.shape_cast %144 : vector<1x1x4x16xbf16> to vector<4x16xbf16>
      %146 = vector.shape_cast %143 : vector<4x16xbf16> to vector<1x1x4x16xbf16>
      tpu.vector_store %arg7[%c0_119, %c2_120, %c0_121, %c0_122], %146 {strides = array<i32>} : memref<1x4x4x16xbf16, #tpu.memory_space<vmem>>, vector<1x1x4x16xbf16>,
      %c60 = arith.constant 60 : index
      %c0_123 = arith.constant 0 : index
      %147 = tpu.strided_load %arg8[%c60, %c0_123] {strides = array<i32: 2, 1>} : memref<80x16xf32, #tpu.memory_space<vmem>>, vector<4x16xf32>
      %148 = arith.mulf %147, %80 : vector<4x16xf32>
      %149 = arith.addf %148, %83 : vector<4x16xf32>
      %c61 = arith.constant 61 : index
      %c0_124 = arith.constant 0 : index
      %150 = tpu.strided_load %arg8[%c61, %c0_124] {strides = array<i32: 2, 1>} : memref<80x16xf32, #tpu.memory_space<vmem>>, vector<4x16xf32>
      %151 = arith.mulf %150, %80 : vector<4x16xf32>
      %152 = arith.addf %151, %83 : vector<4x16xf32>
      %c70 = arith.constant 70 : index
      %c0_125 = arith.constant 0 : index
      %153 = tpu.strided_load %arg8[%c70, %c0_125] {strides = array<i32: 2, 1>} : memref<80x16xf32, #tpu.memory_space<vmem>>, vector<4x16xf32>
      %154 = arith.mulf %153, %80 : vector<4x16xf32>
      %155 = arith.addf %154, %83 : vector<4x16xf32>
      %c71 = arith.constant 71 : index
      %c0_126 = arith.constant 0 : index
      %156 = tpu.strided_load %arg8[%c71, %c0_126] {strides = array<i32: 2, 1>} : memref<80x16xf32, #tpu.memory_space<vmem>>, vector<4x16xf32>
      %157 = arith.mulf %156, %80 : vector<4x16xf32>
      %158 = arith.addf %157, %83 : vector<4x16xf32>
      %159 = arith.maximumf %149, %152 : vector<4x16xf32>
      %160 = arith.maximumf %155, %158 : vector<4x16xf32>
      %161 = arith.maximumf %159, %160 : vector<4x16xf32>
      %cst_127 = arith.constant 0.000000e+00 : f32
      %162 = vector.broadcast %cst_127 : f32 to vector<4x16xf32>
      %163 = arith.maximumf %161, %162 : vector<4x16xf32>
      %164 = arith.truncf %163 : vector<4x16xf32> to vector<4x16xbf16>
      %c0_128 = arith.constant 0 : index
      %c3_129 = arith.constant 3 : index
      %c0_130 = arith.constant 0 : index
      %c0_131 = arith.constant 0 : index
      %165 = vector.load %arg7[%c0_128, %c3_129, %c0_130, %c0_131] : memref<1x4x4x16xbf16, #tpu.memory_space<vmem>>, vector<1x1x4x16xbf16>
      %166 = vector.shape_cast %165 : vector<1x1x4x16xbf16> to vector<4x16xbf16>
      %167 = vector.shape_cast %164 : vector<4x16xbf16> to vector<1x1x4x16xbf16>
      tpu.vector_store %arg7[%c0_128, %c3_129, %c0_130, %c0_131], %167 {strides = array<i32>} : memref<1x4x4x16xbf16, #tpu.memory_space<vmem>>, vector<1x1x4x16xbf16>,
    } else {
    }
    return
  }
  func.func @transform_0(%arg0: i32, %arg1: i32, %arg2: i32) -> (i32, i32, i32) {
    %c0_i32 = arith.constant 0 : i32
    %c0_i32_0 = arith.constant 0 : i32
    return %arg0, %c0_i32, %arg2 : i32, i32, i32
  }
  func.func @transform_1(%arg0: i32, %arg1: i32, %arg2: i32) -> (i32, i32, i32) {
    %c0_i32 = arith.constant 0 : i32
    %c0_i32_0 = arith.constant 0 : i32
    return %c0_i32, %arg2, %arg1 : i32, i32, i32
  }
  func.func @transform_2(%arg0: i32, %arg1: i32, %arg2: i32) -> (i32, i32) {
    %c0_i32 = arith.constant 0 : i32
    %c0_i32_0 = arith.constant 0 : i32
    return %c0_i32, %arg1 : i32, i32
  }
  func.func @transform_3(%arg0: i32, %arg1: i32, %arg2: i32) -> (i32, i32) {
    %c0_i32 = arith.constant 0 : i32
    %c0_i32_0 = arith.constant 0 : i32
    return %c0_i32, %arg1 : i32, i32
  }
  func.func @transform_4(%arg0: i32, %arg1: i32, %arg2: i32) -> (i32, i32, i32, i32) {
    %c0_i32 = arith.constant 0 : i32
    %c0_i32_0 = arith.constant 0 : i32
    %c0_i32_1 = arith.constant 0 : i32
    return %arg0, %c0_i32, %c0_i32_0, %arg1 : i32, i32, i32, i32
  }
}

</mosaic_0001>

<llo_original>
// kernel: discriminator_forward.5
$region0: #{discriminator_forward.5}
  #allocation0 [shape = 'u32[]', space=smem, size = 0x4, offset = 0x4, fixed_abs, tag = 'smem constant byte address 0x4 - core index']
  #allocation1 [shape = 'u32[72,128]{1,0:T(1,128)}', space=vmem, size = 0x9000, scoped, tag = 'internal scratch']
  #allocation2 [shape = 'f32[2,20]{1,0:T(2,128)}', space=vmem, size = 0x400, scoped, tag = 'scratch operand']
  #allocation3 [shape = 'f32[1,1]{1,0:T(1,128)S(1)}', space=vmem, size = 0x200, scoped, tag = 'scoped memory for discriminator_forward.5']
  %s0 = inlined_call_operand.vmem [shape: bf16[2,256], index: 0, kind: input, shape index: {}]
  %s1 = inlined_call_operand.vmem [shape: bf16[256,20], index: 1, kind: input, shape index: {}]
  %s2 = inlined_call_operand.vmem [shape: f32[1,20], index: 2, kind: input, shape index: {}]
  %s3 = inlined_call_operand.vmem [shape: bf16[20,20], index: 3, kind: input, shape index: {}]
  %s4 = inlined_call_operand.vmem [shape: f32[1,20], index: 4, kind: input, shape index: {}]
  %s5 = inlined_call_operand.vmem [shape: bf16[20,1], index: 5, kind: input, shape index: {}]
  %s6 = inlined_call_operand.<no memory space> [shape: f32[1,1], index: 6, kind: input, shape index: {}]
  %s7 = inlined_call_operand.vmem [shape: f32[2,1], index: 7, kind: output, shape index: {}]
  %s8 = sld [smem:[#allocation0]]
  $region46: #{discriminator_forward.5} parent=0
    _
  %s10 = ssub.s32 1, %s8
  %s11 = scalar_select 0, %s10, %s8
  %v12 = vstv %s6
  %13 = vst [vmem:[#allocation3] sm:$0x1] %v12
  // Predicated region
  $region2: #{discriminator_forward.5} parent=0 // pred_check
    _
  $region3: #{discriminator_forward.5} parent=0 // pred_check_branch
    %15 = sbr.rel (0) target = $region5
  $region4: #{discriminator_forward.5} parent=0 // pred_region
    _
  $region5: #{discriminator_forward.5} parent=0 // pred_fallthru
    _
  // Predicated region
  $region6: #{discriminator_forward.5} parent=0 // pred_check
    _
  $region7: #{discriminator_forward.5} parent=0 // pred_check_branch
    %17 = sbr.rel (0) target = $region9
  $region8: #{discriminator_forward.5} parent=0 // pred_region
    _
  $region9: #{discriminator_forward.5} parent=0 // pred_fallthru
    _
  // Predicated region
  $region10: #{discriminator_forward.5} parent=0 // pred_check
    _
  $region11: #{discriminator_forward.5} parent=0 // pred_check_branch
    %19 = sbr.rel (0) target = $region13
  $region12: #{discriminator_forward.5} parent=0 // pred_region
    _
  $region13: #{discriminator_forward.5} parent=0 // pred_fallthru
    _
  // Predicated region
  $region14: #{discriminator_forward.5} parent=0 // pred_check
    _
  $region15: #{discriminator_forward.5} parent=0 // pred_check_branch
    %21 = sbr.rel (0) target = $region17
  $region16: #{discriminator_forward.5} parent=0 // pred_region
    _
  $region17: #{discriminator_forward.5} parent=0 // pred_fallthru
    _
  // Predicated region
  $region18: #{discriminator_forward.5} parent=0 // pred_check
    _
  $region19: #{discriminator_forward.5} parent=0 // pred_check_branch
    %23 = sbr.rel (0) target = $region21
  $region20: #{discriminator_forward.5} parent=0 // pred_region
    _
  $region21: #{discriminator_forward.5} parent=0 // pred_fallthru
    _
  // Predicated region
  $region22: #{discriminator_forward.5} parent=0 // pred_check
    _
  $region23: #{discriminator_forward.5} parent=0 // pred_check_branch
    %25 = sbr.rel (0) target = $region25
  $region24: #{discriminator_forward.5} parent=0 // pred_region
    _
  $region25: #{discriminator_forward.5} parent=0 // pred_fallthru
    _
  // Predicated region
  $region26: #{discriminator_forward.5} parent=0 // pred_check
    _
  $region27: #{discriminator_forward.5} parent=0 // pred_check_branch
    %27 = sbr.rel (0) target = $region29
  $region28: #{discriminator_forward.5} parent=0 // pred_region
    _
  $region29: #{discriminator_forward.5} parent=0 // pred_fallthru
    _
  %p29 = scmp.eq.s32.totalorder 0, 0
  // Predicated region
  $region30: #{discriminator_forward.5} parent=0 // pred_check
    %p30 = pneg %p29
  $region31: #{discriminator_forward.5} parent=0 // pred_check_branch
    %32 = sbr.rel (%p30) target = $region33
  $region32: #{discriminator_forward.5} parent=0 // pred_region
    %vm33 = vcmask 156672
    %34 = vst.msk [vmem:[#allocation2] sm:$0x3] %vm33, 0.0
  $region33: #{discriminator_forward.5} parent=0 // pred_fallthru
    _
  %v35 = vld [vmem:[#allocation2] sm:$0x3]
  %v36 = vld [vmem:[%s0] sm:$0x3]
  %v37 = vld [vmem:[%s1] sm:$0xf]
  %v38 = vld [vmem:[%s1 + $0x4] sm:$0xf]
  %v39 = vld [vmem:[%s1 + $0x8] sm:$0xf]
  %v40 = vld [vmem:[%s1 + $0xc] sm:$0xf]
  %v41 = vld [vmem:[%s1 + $0x10] sm:$0xf]
  %v42 = vld [vmem:[%s1 + $0x14] sm:$0xf]
  %v43 = vld [vmem:[%s1 + $0x18] sm:$0xf]
  %v44 = vld [vmem:[%s1 + $0x1c] sm:$0xf]
  %v45 = vld [vmem:[%s1 + $0x20] sm:$0xf]
  %v46 = vld [vmem:[%s1 + $0x24] sm:$0xf]
  %v47 = vld [vmem:[%s1 + $0x28] sm:$0xf]
  %v48 = vld [vmem:[%s1 + $0x2c] sm:$0xf]
  %v49 = vld [vmem:[%s1 + $0x30] sm:$0xf]
  %v50 = vld [vmem:[%s1 + $0x34] sm:$0xf]
  %v51 = vld [vmem:[%s1 + $0x38] sm:$0xf]
  %v52 = vld [vmem:[%s1 + $0x3c] sm:$0xf]
  %v53 = vld [vmem:[%s1 + $0x40] sm:$0xf]
  %v54 = vld [vmem:[%s1 + $0x44] sm:$0xf]
  %v55 = vld [vmem:[%s1 + $0x48] sm:$0xf]
  %v56 = vld [vmem:[%s1 + $0x4c] sm:$0xf]
  %v57 = vld [vmem:[%s1 + $0x50] sm:$0xf]
  %v58 = vld [vmem:[%s1 + $0x54] sm:$0xf]
  %v59 = vld [vmem:[%s1 + $0x58] sm:$0xf]
  %v60 = vld [vmem:[%s1 + $0x5c] sm:$0xf]
  %v61 = vld [vmem:[%s1 + $0x60] sm:$0xf]
  %v62 = vld [vmem:[%s1 + $0x64] sm:$0xf]
  %v63 = vld [vmem:[%s1 + $0x68] sm:$0xf]
  %v64 = vld [vmem:[%s1 + $0x6c] sm:$0xf]
  %v65 = vld [vmem:[%s1 + $0x70] sm:$0xf]
  %v66 = vld [vmem:[%s1 + $0x74] sm:$0xf]
  %v67 = vld [vmem:[%s1 + $0x78] sm:$0xf]
  %v68 = vld [vmem:[%s1 + $0x7c] sm:$0xf]
  %70 = vst [vmem:[#allocation1] ss:$9 sm:$0xff] %v36
  %v71 = vld [vmem:[#allocation1] sm:$0xff]
  %v72 = vld [vmem:[#allocation1 + $0x9] sm:$0xff]
  %v107 = vunpack.c.l.b16 %v37
  %v108 = vunpack.c.l.b16 %v38
  %v109 = vunpack.c.l.b16 %v39
  %v110 = vunpack.c.l.b16 %v40
  %v111 = vunpack.c.l.b16 %v41
  %v112 = vunpack.c.l.b16 %v42
  %v113 = vunpack.c.l.b16 %v43
  %v114 = vunpack.c.l.b16 %v44
  %v115 = vunpack.c.l.b16 %v45
  %v116 = vunpack.c.l.b16 %v46
  %v117 = vunpack.c.l.b16 %v47
  %v118 = vunpack.c.l.b16 %v48
  %v119 = vunpack.c.l.b16 %v49
  %v120 = vunpack.c.l.b16 %v50
  %v121 = vunpack.c.l.b16 %v51
  %v122 = vunpack.c.l.b16 %v52
  %v123 = vunpack.c.l.b16 %v53
  %v124 = vunpack.c.l.b16 %v54
  %v125 = vunpack.c.l.b16 %v55
  %v126 = vunpack.c.l.b16 %v56
  %v127 = vunpack.c.l.b16 %v57
  %v128 = vunpack.c.l.b16 %v58
  %v129 = vunpack.c.l.b16 %v59
  %v130 = vunpack.c.l.b16 %v60
  %v131 = vunpack.c.l.b16 %v61
  %v132 = vunpack.c.l.b16 %v62
  %v133 = vunpack.c.l.b16 %v63
  %v134 = vunpack.c.l.b16 %v64
  %v135 = vunpack.c.l.b16 %v65
  %v136 = vunpack.c.l.b16 %v66
  %v137 = vunpack.c.l.b16 %v67
  %v138 = vunpack.c.l.b16 %v68
  %v139 = vpack.c.b16 %v108, %v107
  %v140 = vpack.c.b16 %v110, %v109
  %v141 = vpack.c.b16 %v112, %v111
  %v142 = vpack.c.b16 %v114, %v113
  %v143 = vpack.c.b16 %v116, %v115
  %v144 = vpack.c.b16 %v118, %v117
  %v145 = vpack.c.b16 %v120, %v119
  %v146 = vpack.c.b16 %v122, %v121
  %v147 = vpack.c.b16 %v124, %v123
  %v148 = vpack.c.b16 %v126, %v125
  %v149 = vpack.c.b16 %v128, %v127
  %v150 = vpack.c.b16 %v130, %v129
  %v151 = vpack.c.b16 %v132, %v131
  %v152 = vpack.c.b16 %v134, %v133
  %v153 = vpack.c.b16 %v136, %v135
  %v154 = vpack.c.b16 %v138, %v137
  %171 = vmatpush.bf16.msra.mxu0 %v146
  %172 = vmatpush.bf16.msra.mxu0 %v145
  %173 = vmatpush.bf16.msra.mxu0 %v144
  %174 = vmatpush.bf16.msra.mxu0 %v143
  %175 = vmatpush.bf16.msra.mxu0 %v142
  %176 = vmatpush.bf16.msra.mxu0 %v141
  %177 = vmatpush.bf16.msra.mxu0 %v140
  %178 = vmatpush.bf16.msra.mxu0 %v139
  %179 = vmatmul.bf16.gmra.mxu0 %v71
  %v180 = vpop.f32.mrf.mxu0
  %v181 = vadd.f32 0.0, %v180
  %v182 = vpop.f32.mrf.mxu0
  %183 = vdwg.mxu0
  %184 = vmatpush.bf16.msra.mxu0 %v154
  %185 = vmatpush.bf16.msra.mxu0 %v153
  %186 = vmatpush.bf16.msra.mxu0 %v152
  %187 = vmatpush.bf16.msra.mxu0 %v151
  %188 = vmatpush.bf16.msra.mxu0 %v150
  %189 = vmatpush.bf16.msra.mxu0 %v149
  %190 = vmatpush.bf16.msra.mxu0 %v148
  %191 = vmatpush.bf16.msra.mxu0 %v147
  %192 = vmatmul.bf16.gmra.mxu0 %v72
  %v193 = vpop.f32.mrf.mxu0
  %v194 = vadd.f32 %v181, %v193
  %v195 = vpop.f32.mrf.mxu0
  %196 = vdwg.mxu0
  %v197 = vadd.f32 %v35, %v194
  %vm198 = vcmask 156672
  %199 = vst.msk [vmem:[#allocation2] sm:$0x3] %vm198, %v197
  // Predicated region
  $region34: #{discriminator_forward.5} parent=0 // pred_check
    %p200 = pneg %p29
  $region35: #{discriminator_forward.5} parent=0 // pred_check_branch
    %202 = sbr.rel (%p200) target = $region37
  $region36: #{discriminator_forward.5} parent=0 // pred_region
    %v203 = vld [vmem:[#allocation2] sm:$0x3]
    %v204 = vld [vmem:[%s2] sm:$0x1]
    %v206 = vperm.slane %v204, 0
    %v208 = vadd.f32 %v203, %v206
    %v209 = vmax.f32 %v208, 0.0
    %v210 = vpack.c.bf16 %v209, %v209
    %v211 = vld [vmem:[%s3] sm:$0xf]
    %v212 = vld [vmem:[%s3 + $0x4] sm:$0xf]
    %v213 = vld [vmem:[%s3 + $0x8] sm:$0x3]
    %v214 = vld [vmem:[%s4] sm:$0x1]
    %v216 = vperm.slane %v214, 0
    %v221 = vunpack.c.l.b16 %v211
    %v222 = vunpack.c.l.b16 %v212
    %v223 = vunpack.c.l.b16 %v213
    %v224 = vpack.c.b16 %v222, %v221
    %v225 = vpack.c.b16 %v223, %v223
    %vm227 = vcmask 162816
    %v229 = vsel %vm227, %v210, 0
    %vm231 = vcmask 1041408
    %v233 = vsel %vm231, %v225, 0
    %235 = vmatpush.bf16.msra.mxu0 0
    %236 = vmatpush.bf16.msra.mxu0 0
    %237 = vmatpush.bf16.msra.mxu0 0
    %238 = vmatpush.bf16.msra.mxu0 0
    %239 = vmatpush.bf16.msra.mxu0 0
    %240 = vmatpush.bf16.msra.mxu0 0
    %241 = vmatpush.bf16.msra.mxu0 %v233
    %242 = vmatpush.bf16.msra.mxu0 %v224
    %243 = vmatmul.bf16.gmra.mxu0 %v229
    %v244 = vpop.f32.mrf.mxu0
    %v245 = vadd.f32 %v216, %v244
    %v246 = vpop.f32.mrf.mxu0
    %247 = vdwg.mxu0
    %v248 = vmax.f32 %v245, 0.0
    %v249 = vpack.c.bf16 %v248, %v248
    %v250 = vld [vmem:[%s5] sm:$0xf]
    %v251 = vld [vmem:[%s5 + $0x4] sm:$0xf]
    %v252 = vld [vmem:[%s5 + $0x8] sm:$0x3]
    %v253 = vld [vmem:[#allocation3] sm:$0x1]
    %v255 = vperm.slane %v253, 0
    %v260 = vunpack.c.l.b16 %v250
    %v261 = vunpack.c.l.b16 %v251
    %v262 = vunpack.c.l.b16 %v252
    %v263 = vpack.c.b16 %v261, %v260
    %v264 = vpack.c.b16 %v262, %v262
    %v267 = vsel %vm227, %v249, 0
    %v270 = vsel %vm231, %v264, 0
    %272 = vmatpush.bf16.msra.mxu0 0
    %273 = vmatpush.bf16.msra.mxu0 0
    %274 = vmatpush.bf16.msra.mxu0 0
    %275 = vmatpush.bf16.msra.mxu0 0
    %276 = vmatpush.bf16.msra.mxu0 0
    %277 = vmatpush.bf16.msra.mxu0 0
    %278 = vmatpush.bf16.msra.mxu0 %v270
    %279 = vmatpush.bf16.msra.mxu0 %v263
    %280 = vmatmul.bf16.gmra.mxu0 %v267
    %v281 = vpop.f32.mrf.mxu0
    %v282 = vadd.f32 %v255, %v281
    %v283 = vpop.f32.mrf.mxu0
    %284 = vdwg.mxu0
    %v285 = vsub.f32 0.0, %v282
    %v286 = vmul.f32 %v285, 1.442695
    %v287 = vpow.pop %v286
    %v288 = vadd.f32 %v287, 1.0
    %v289 = vrcp.pop %v288
    %v290 = vmul.f32 %v288, %v289
    %v291 = vsub.f32 1.0, %v290
    %v292 = vmul.f32 %v289, %v291
    %v293 = vadd.f32 %v289, %v292
    %vm294 = vweird.f32 %v288
    %vm295 = vweird.f32 %v289
    %vm296 = vmor %vm294, %vm295
    %v297 = vsel %vm296, %v289, %v293
    %v298 = vand.u32 2147483647, %v288
    %vm299 = vcmp.eq.f32.partialorder %v298, 8.507059e+37
    %v300 = vand.u32 %v288, 2147483648
    %v301 = vor.u32 1.1754944e-38, %v300
    %v302 = vsel %vm299, %v301, %v297
    %v303 = vmul.f32 1.0, %v302
    %vm304 = vcmask 1024
    %305 = vst.msk [vmem:[%s7] sm:$0x3] %vm304, %v303
  $region37: #{discriminator_forward.5} parent=0 // pred_fallthru
    _
  // Predicated region
  $region38: #{discriminator_forward.5} parent=0 // pred_check
    _
  $region39: #{discriminator_forward.5} parent=0 // pred_check_branch
    %307 = sbr.rel (0) target = $region41
  $region40: #{discriminator_forward.5} parent=0 // pred_region
    _
  $region41: #{discriminator_forward.5} parent=0 // pred_fallthru
    _
  // Predicated region
  $region42: #{discriminator_forward.5} parent=0 // pred_check
    _
  $region43: #{discriminator_forward.5} parent=0 // pred_check_branch
    %309 = sbr.rel (0) target = $region45
  $region44: #{discriminator_forward.5} parent=0 // pred_region
    _
  $region45: #{discriminator_forward.5} parent=0 // pred_fallthru
    _

// kernel: discriminator_forward.4
$region0: #{discriminator_forward.4}
  #allocation0 [shape = 'u32[]', space=smem, size = 0x4, offset = 0x4, fixed_abs, tag = 'smem constant byte address 0x4 - core index']
  #allocation1 [shape = 'u32[72,128]{1,0:T(1,128)}', space=vmem, size = 0x9000, scoped, tag = 'internal scratch']
  #allocation2 [shape = 'f32[80,16]{1,0:T(8,128)}', space=vmem, size = 0xa000, scoped, tag = 'scratch operand']
  %s0 = inlined_call_operand.vmem [shape: bf16[2,110,32], index: 0, kind: input, shape index: {}]
  %s1 = inlined_call_operand.vmem [shape: bf16[9,32,16], index: 1, kind: input, shape index: {}]
  %s2 = inlined_call_operand.vmem [shape: f32[1,16], index: 2, kind: input, shape index: {}]
  %s3 = inlined_call_operand.vmem [shape: f32[1,16], index: 3, kind: input, shape index: {}]
  %s4 = inlined_call_operand.vmem [shape: bf16[2,4,4,16], index: 4, kind: output, shape index: {}]
  %s5 = sld [smem:[#allocation0]]
  $region57: #{discriminator_forward.4} parent=0
    _
  %s7 = ssub.s32 1, %s5
  %s8 = scalar_select 0, %s7, %s5
  loop: start=0, step=1, limit=4
  $region2: #{discriminator_forward.4} parent=0 // loop_pre_header
    _
  $region3: #{discriminator_forward.4} parent=0 // loop_header
    %s10 = sphi 0, %s14
    %p11 = scmp.ge.s32.totalorder %s10, 4
    %s17 = sphi 0, %s36
    %s18 = sphi 0, %s32
    %s19 = sphi 0, %s28
    %s20 = sphi 0, %s17
    %s21 = sphi 0, %s18
    %s22 = sphi 0, %s19
    %s23 = sphi 0, %s20
    %s24 = sphi 0, %s21
    %s25 = sphi 0, %s22
    %s41 = sphi 0, %s43
    %s44 = sphi 0, %s41
    %s45 = sphi 0, %s44
    %s61 = sphi 0, %s45
    %s69 = sphi 0, %s71
    %s72 = sphi 0, %s69
    %s73 = sphi 0, %s72
    %s89 = sphi 0, %s73
    %s95 = sphi 0, %s97
    %s98 = sphi 0, %s95
    %s99 = sphi 0, %s98
    %s115 = sphi 0, %s99
    %s121 = sphi 0, %s123
    %s124 = sphi 0, %s121
    %s125 = sphi 0, %s124
    %s141 = sphi 0, %s125
    %s149 = sphi 0, %s151
    %s152 = sphi 0, %s149
    %s153 = sphi 0, %s152
    %s169 = sphi 0, %s153
  $region4: #{discriminator_forward.4} parent=0 // loop_header_branch
    %13 = sbr.rel (%p11) target = $region8
  $region5: #{discriminator_forward.4} parent=0 // loop_body
    %s15 = ssub.s32 %s10, 1
    %s16 = ssub.s32 %s10, 2
    %s26 = sadd.s32 1, %s19
    %p27 = scmp.ge.s32.totalorder %s26, 1
    %s28 = scalar_select %p27, 0, %s26
    %s29 = sadd.s32 1, %s18
    %s30 = scalar_select %p27, %s29, %s18
    %p31 = scmp.ge.s32.totalorder %s30, 1
    %s32 = scalar_select %p31, 0, %s30
    %s33 = sadd.s32 1, %s17
    %s34 = scalar_select %p31, %s33, %s17
    %p35 = scmp.ge.s32.totalorder %s34, 2
    %s36 = scalar_select %p35, 0, %s34
    %s37 = ssub.s32 %s17, %s36
    %s38 = ssub.s32 %s19, %s28
    %s39 = sor.u32 %s37, %s38
    %p40 = scmp.eq.s32.totalorder %s39, 0
    %s42 = sadd.s32 %s41, 1
    %s43 = scalar_select %p40, %s41, %s42
    %p46 = pneg %p40
    %p47 = scmp.eq.s32.totalorder %s10, 1
    %p48 = por %p46, %p47
    %p49 = scmp.ne.s32.totalorder %s41, %s44
    %p50 = scmp.eq.s32.totalorder %s10, 0
    %p51 = por %p49, %p50
    %p52 = scmp.ne.s32.totalorder %s41, %s44
    %p53 = scmp.eq.s32.totalorder %s15, 1
    %p54 = por %p52, %p53
    %p55 = scmp.ne.s32.totalorder %s44, %s45
    %p56 = scmp.eq.s32.totalorder %s15, 0
    %p57 = por %p55, %p56
    %p58 = scmp.ne.s32.totalorder %s44, %s45
    %p59 = scmp.eq.s32.totalorder %s16, 1
    %p60 = por %p58, %p59
    %p62 = scmp.ne.s32.totalorder %s45, %s61
    %p63 = scmp.eq.s32.totalorder %s16, 0
    %p64 = por %p62, %p63
    %s65 = ssub.s32 %s19, %s28
    %s66 = ssub.s32 %s18, %s32
    %s67 = sor.u32 %s65, %s66
    %p68 = scmp.eq.s32.totalorder %s67, 0
    %s70 = sadd.s32 %s69, 1
    %s71 = scalar_select %p68, %s69, %s70
    %p74 = pneg %p68
    %p75 = scmp.eq.s32.totalorder %s10, 1
    %p76 = por %p74, %p75
    %p77 = scmp.ne.s32.totalorder %s69, %s72
    %p78 = scmp.eq.s32.totalorder %s10, 0
    %p79 = por %p77, %p78
    %p80 = scmp.ne.s32.totalorder %s69, %s72
    %p81 = scmp.eq.s32.totalorder %s15, 1
    %p82 = por %p80, %p81
    %p83 = scmp.ne.s32.totalorder %s72, %s73
    %p84 = scmp.eq.s32.totalorder %s15, 0
    %p85 = por %p83, %p84
    %p86 = scmp.ne.s32.totalorder %s72, %s73
    %p87 = scmp.eq.s32.totalorder %s16, 1
    %p88 = por %p86, %p87
    %p90 = scmp.ne.s32.totalorder %s73, %s89
    %p91 = scmp.eq.s32.totalorder %s16, 0
    %p92 = por %p90, %p91
    %s93 = ssub.s32 %s18, %s32
    %p94 = scmp.eq.s32.totalorder %s93, 0
    %s96 = sadd.s32 %s95, 1
    %s97 = scalar_select %p94, %s95, %s96
    %p100 = pneg %p94
    %p101 = scmp.eq.s32.totalorder %s10, 1
    %p102 = por %p100, %p101
    %p103 = scmp.ne.s32.totalorder %s95, %s98
    %p104 = scmp.eq.s32.totalorder %s10, 0
    %p105 = por %p103, %p104
    %p106 = scmp.ne.s32.totalorder %s95, %s98
    %p107 = scmp.eq.s32.totalorder %s15, 1
    %p108 = por %p106, %p107
    %p109 = scmp.ne.s32.totalorder %s98, %s99
    %p110 = scmp.eq.s32.totalorder %s15, 0
    %p111 = por %p109, %p110
    %p112 = scmp.ne.s32.totalorder %s98, %s99
    %p113 = scmp.eq.s32.totalorder %s16, 1
    %p114 = por %p112, %p113
    %p116 = scmp.ne.s32.totalorder %s99, %s115
    %p117 = scmp.eq.s32.totalorder %s16, 0
    %p118 = por %p116, %p117
    %s119 = ssub.s32 %s18, %s32
    %p120 = scmp.eq.s32.totalorder %s119, 0
    %s122 = sadd.s32 %s121, 1
    %s123 = scalar_select %p120, %s121, %s122
    %p126 = pneg %p120
    %p127 = scmp.eq.s32.totalorder %s10, 1
    %p128 = por %p126, %p127
    %p129 = scmp.ne.s32.totalorder %s121, %s124
    %p130 = scmp.eq.s32.totalorder %s10, 0
    %p131 = por %p129, %p130
    %p132 = scmp.ne.s32.totalorder %s121, %s124
    %p133 = scmp.eq.s32.totalorder %s15, 1
    %p134 = por %p132, %p133
    %p135 = scmp.ne.s32.totalorder %s124, %s125
    %p136 = scmp.eq.s32.totalorder %s15, 0
    %p137 = por %p135, %p136
    %p138 = scmp.ne.s32.totalorder %s124, %s125
    %p139 = scmp.eq.s32.totalorder %s16, 1
    %p140 = por %p138, %p139
    %p142 = scmp.ne.s32.totalorder %s125, %s141
    %p143 = scmp.eq.s32.totalorder %s16, 0
    %p144 = por %p142, %p143
    %s145 = ssub.s32 %s17, %s36
    %s146 = ssub.s32 %s18, %s32
    %s147 = sor.u32 %s145, %s146
    %p148 = scmp.eq.s32.totalorder %s147, 0
    %s150 = sadd.s32 %s149, 1
    %s151 = scalar_select %p148, %s149, %s150
    %p154 = pneg %p148
    %p155 = scmp.eq.s32.totalorder %s10, 1
    %p156 = por %p154, %p155
    %p157 = scmp.ne.s32.totalorder %s149, %s152
    %p158 = scmp.eq.s32.totalorder %s10, 0
    %p159 = por %p157, %p158
    %p160 = scmp.ne.s32.totalorder %s149, %s152
    %p161 = scmp.eq.s32.totalorder %s15, 1
    %p162 = por %p160, %p161
    %p163 = scmp.ne.s32.totalorder %s152, %s153
    %p164 = scmp.eq.s32.totalorder %s15, 0
    %p165 = por %p163, %p164
    %p166 = scmp.ne.s32.totalorder %s152, %s153
    %p167 = scmp.eq.s32.totalorder %s16, 1
    %p168 = por %p166, %p167
    %p170 = scmp.ne.s32.totalorder %s153, %s169
    %p171 = scmp.eq.s32.totalorder %s16, 0
    %p172 = por %p170, %p171
    %p173 = scmp.le.s32.totalorder 1, %s10
    %p174 = scmp.lt.s32.totalorder %s10, 3
    %p175 = pnand %p173, %p174
    %p176 = pneg %p175
    // Predicated region
    $region9: #{discriminator_forward.4} parent=5 // pred_check
      _
    $region10: #{discriminator_forward.4} parent=5 // pred_check_branch
      %178 = sbr.rel (%p175) target = $region12
    $region11: #{discriminator_forward.4} parent=5 // pred_region
      %s179 = ssub.s32 %s10, 1
      // Predicated region
      $region13: #{discriminator_forward.4} parent=11 // pred_check
        %p180 = pneg %p85
      $region14: #{discriminator_forward.4} parent=11 // pred_check_branch
        %182 = sbr.rel (%p180) target = $region16
      $region15: #{discriminator_forward.4} parent=11 // pred_region
        %s183 = smul.u32 4, %s22
        %p184 = scmp.lt.s32.totalorder %s183, 3
        %s185 = scalar_select %p184, %s183, 3
        %p186 = scmp.lt.s32.totalorder %s21, 0
        %s187 = scalar_select %p186, %s21, 0
        %s188 = sadd.s32 %s187, %s185
        %s189 = smul.addr %s188, 4
        %s190 = scalar_lea.vmem %s1, %s189
        %s191 = smul.u32 4, %s22
      $region16: #{discriminator_forward.4} parent=11 // pred_fallthru
        _
      // Predicated region
      $region17: #{discriminator_forward.4} parent=11 // pred_check
        %p192 = pneg %p111
      $region18: #{discriminator_forward.4} parent=11 // pred_check_branch
        %194 = sbr.rel (%p192) target = $region20
      $region19: #{discriminator_forward.4} parent=11 // pred_region
        %p195 = scmp.lt.s32.totalorder %s21, 0
        %s196 = scalar_select %p195, %s21, 0
        %s197 = scalar_lea.vmem %s2, %s196
      $region20: #{discriminator_forward.4} parent=11 // pred_fallthru
        _
      // Predicated region
      $region21: #{discriminator_forward.4} parent=11 // pred_check
        %p198 = pneg %p137
      $region22: #{discriminator_forward.4} parent=11 // pred_check_branch
        %200 = sbr.rel (%p198) target = $region24
      $region23: #{discriminator_forward.4} parent=11 // pred_region
        %p201 = scmp.lt.s32.totalorder %s21, 0
        %s202 = scalar_select %p201, %s21, 0
        %s203 = scalar_lea.vmem %s3, %s202
      $region24: #{discriminator_forward.4} parent=11 // pred_fallthru
        _
    $region12: #{discriminator_forward.4} parent=5 // pred_fallthru
      _
    %p204 = scmp.lt.s32.totalorder %s10, 2
    // Predicated region
    $region25: #{discriminator_forward.4} parent=5 // pred_check
      %p205 = pneg %p204
    $region26: #{discriminator_forward.4} parent=5 // pred_check_branch
      %207 = sbr.rel (%p205) target = $region28
    $region27: #{discriminator_forward.4} parent=5 // pred_region
      // Predicated region
      $region29: #{discriminator_forward.4} parent=27 // pred_check
        %p208 = pneg %p51
      $region30: #{discriminator_forward.4} parent=27 // pred_check_branch
        %210 = sbr.rel (%p208) target = $region32
      $region31: #{discriminator_forward.4} parent=27 // pred_region
        %p211 = scmp.lt.s32.totalorder %s17, 1
        %s212 = scalar_select %p211, %s17, 1
        %p213 = scmp.lt.s32.totalorder %s19, 0
        %s214 = scalar_select %p213, %s19, 0
        %s215 = smul.addr %s212, 14
        %s216 = sadd.s32 %s214, %s215
        %s217 = smul.addr %s216, 4
        %s218 = scalar_lea.vmem %s0, %s217
      $region32: #{discriminator_forward.4} parent=27 // pred_fallthru
        _
    $region28: #{discriminator_forward.4} parent=5 // pred_fallthru
      _
    %p219 = scmp.le.s32.totalorder 1, %s10
    %p220 = scmp.lt.s32.totalorder %s10, 3
    %p221 = pnand %p219, %p220
    %p222 = pneg %p221
    // Predicated region
    $region33: #{discriminator_forward.4} parent=5 // pred_check
      _
    $region34: #{discriminator_forward.4} parent=5 // pred_check_branch
      %224 = sbr.rel (%p221) target = $region36
    $region35: #{discriminator_forward.4} parent=5 // pred_region
      %s225 = ssub.s32 %s10, 1
      %p226 = scmp.lt.s32.totalorder %s20, 1
      %s227 = scalar_select %p226, %s20, 1
      %p228 = scmp.lt.s32.totalorder %s22, 0
      %s229 = scalar_select %p228, %s22, 0
      %s230 = smul.addr %s227, 14
      %s231 = sadd.s32 %s229, %s230
      %s232 = smul.addr %s231, 4
      %s233 = scalar_lea.vmem %s0, %s232
      %p234 = pneg %p57
      %p235 = pneg %p54
      %s236 = smul.u32 4, %s22
      %p237 = scmp.lt.s32.totalorder %s236, 3
      %s238 = scalar_select %p237, %s236, 3
      %p239 = scmp.lt.s32.totalorder %s21, 0
      %s240 = scalar_select %p239, %s21, 0
      %s241 = sadd.s32 %s240, %s238
      %s242 = smul.addr %s241, 4
      %s243 = scalar_lea.vmem %s1, %s242
      %p244 = pneg %p85
      %p245 = pneg %p82
      %p246 = scmp.lt.s32.totalorder %s21, 0
      %s247 = scalar_select %p246, %s21, 0
      %s248 = scalar_lea.vmem %s2, %s247
      %p249 = pneg %p111
      %p250 = pneg %p108
      %p251 = scmp.lt.s32.totalorder %s21, 0
      %s252 = scalar_select %p251, %s21, 0
      %s253 = scalar_lea.vmem %s3, %s252
      %p254 = pneg %p137
      %p255 = pneg %p134
      %p256 = pneg %p165
      %p257 = pneg %p162
      %p258 = scmp.lt.s32.totalorder %s20, 1
      %s259 = scalar_select %p258, %s20, 1
      %p260 = scmp.lt.s32.totalorder %s21, 0
      %s261 = scalar_select %p260, %s21, 0
      %s262 = smul.addr %s259, 4
      %s263 = sadd.s32 %s261, %s262
      %s264 = smul.addr %s263, 2
      %s265 = scalar_lea.vmem %s4, %s264
      %p266 = scmp.lt.s32.totalorder %s20, 1
      %s267 = scalar_select %p266, %s20, 1
      %p268 = scmp.lt.s32.totalorder %s22, 0
      %s269 = scalar_select %p268, %s22, 0
      %s270 = smul.addr %s267, 14
      %s271 = sadd.s32 %s269, %s270
      %s272 = smul.addr %s271, 4
      %s273 = scalar_lea.vmem %s0, %s272
      %s274 = smul.u32 4, %s22
      %p275 = scmp.lt.s32.totalorder %s274, 3
      %s276 = scalar_select %p275, %s274, 3
      %p277 = scmp.lt.s32.totalorder %s21, 0
      %s278 = scalar_select %p277, %s21, 0
      %s279 = sadd.s32 %s278, %s276
      %s280 = smul.addr %s279, 4
      %s281 = scalar_lea.vmem %s1, %s280
      %s282 = smul.u32 4, %s22
      %p283 = scmp.lt.s32.totalorder %s21, 0
      %s284 = scalar_select %p283, %s21, 0
      %s285 = scalar_lea.vmem %s2, %s284
      %p286 = scmp.lt.s32.totalorder %s21, 0
      %s287 = scalar_select %p286, %s21, 0
      %s288 = scalar_lea.vmem %s3, %s287
      %p289 = scmp.lt.s32.totalorder %s20, 1
      %s290 = scalar_select %p289, %s20, 1
      %p291 = scmp.lt.s32.totalorder %s21, 0
      %s292 = scalar_select %p291, %s21, 0
      %s293 = smul.addr %s290, 4
      %s294 = sadd.s32 %s292, %s293
      %s295 = smul.addr %s294, 2
      %s296 = scalar_lea.vmem %s4, %s295
      %p298 = scmp.eq.s32.totalorder %s22, 0
      // Predicated region
      $region37: #{discriminator_forward.4} parent=35 // pred_check
        %p299 = pneg %p298
      $region38: #{discriminator_forward.4} parent=35 // pred_check_branch
        %301 = sbr.rel (%p299) target = $region40
      $region39: #{discriminator_forward.4} parent=35 // pred_region
        %vm302 = vcmask 130048
        %303 = vst.msk [vmem:[#allocation2] sm:$0xff] %vm302, 0.0
        %304 = vst.msk [vmem:[#allocation2 + $0x8] sm:$0xff] %vm302, 0.0
        %305 = vst.msk [vmem:[#allocation2 + $0x10] sm:$0xff] %vm302, 0.0
        %306 = vst.msk [vmem:[#allocation2 + $0x18] sm:$0xff] %vm302, 0.0
        %307 = vst.msk [vmem:[#allocation2 + $0x20] sm:$0xff] %vm302, 0.0
        %308 = vst.msk [vmem:[#allocation2 + $0x28] sm:$0xff] %vm302, 0.0
        %309 = vst.msk [vmem:[#allocation2 + $0x30] sm:$0xff] %vm302, 0.0
        %310 = vst.msk [vmem:[#allocation2 + $0x38] sm:$0xff] %vm302, 0.0
        %311 = vst.msk [vmem:[#allocation2 + $0x40] sm:$0xff] %vm302, 0.0
        %312 = vst.msk [vmem:[#allocation2 + $0x48] sm:$0xff] %vm302, 0.0
      $region40: #{discriminator_forward.4} parent=35 // pred_fallthru
        _
      %v313 = vld [vmem:[%s273] sm:$0xf]
      %v314 = vld [vmem:[%s273 + $0x4] sm:$0xf]
      %v315 = vld [vmem:[%s273 + $0x8] sm:$0xf]
      %v316 = vld [vmem:[%s273 + $0xc] sm:$0xf]
      %v317 = vld [vmem:[%s273 + $0x10] sm:$0xf]
      %v318 = vld [vmem:[%s273 + $0x14] sm:$0xf]
      %v319 = vld [vmem:[%s273 + $0x18] sm:$0xf]
      %v320 = vld [vmem:[%s273 + $0x1c] sm:$0xf]
      %v321 = vld [vmem:[%s273 + $0x20] sm:$0xf]
      %v322 = vld [vmem:[%s273 + $0x24] sm:$0xf]
      %v323 = vld [vmem:[#allocation2] sm:$0xff]
      %v324 = vld [vmem:[#allocation2 + $0x8] sm:$0xff]
      %v325 = vld [vmem:[#allocation2 + $0x10] sm:$0xff]
      %v326 = vld [vmem:[#allocation2 + $0x18] sm:$0xff]
      %v327 = vld [vmem:[#allocation2 + $0x20] sm:$0xff]
      %v328 = vld [vmem:[#allocation2 + $0x28] sm:$0xff]
      %v329 = vld [vmem:[#allocation2 + $0x30] sm:$0xff]
      %v330 = vld [vmem:[#allocation2 + $0x38] sm:$0xff]
      %v331 = vld [vmem:[#allocation2 + $0x40] sm:$0xff]
      %v332 = vld [vmem:[#allocation2 + $0x48] sm:$0xff]
      %v333 = vld [vmem:[%s281] sm:$0xf]
      %v334 = vld [vmem:[%s281 + $0x4] sm:$0xf]
      %v335 = vld [vmem:[%s281 + $0x8] sm:$0xf]
      %v336 = vld [vmem:[%s281 + $0xc] sm:$0xf]
      %v347 = vunpack.c.l.b16 %v313
      %v348 = vunpack.c.l.b16 %v314
      %v349 = vunpack.c.l.b16 %v315
      %v350 = vunpack.c.l.b16 %v316
      %v351 = vunpack.c.l.b16 %v317
      %v352 = vunpack.c.l.b16 %v318
      %v353 = vunpack.c.l.b16 %v319
      %v354 = vunpack.c.l.b16 %v320
      %v355 = vunpack.c.l.b16 %v321
      %v356 = vunpack.c.l.b16 %v322
      %v357 = vpack.c.b16 %v348, %v347
      %v358 = vpack.c.b16 %v350, %v349
      %v359 = vpack.c.b16 %v352, %v351
      %v360 = vpack.c.b16 %v354, %v353
      %v361 = vpack.c.b16 %v356, %v355
      %v366 = vunpack.c.l.b16 %v333
      %v367 = vunpack.c.l.b16 %v334
      %v368 = vunpack.c.l.b16 %v335
      %v369 = vunpack.c.l.b16 %v336
      %v370 = vpack.c.b16 %v367, %v366
      %v371 = vpack.c.b16 %v369, %v368
      %vm374 = vcmask 261120
      %v376 = vsel %vm374, %v357, 0
      %v379 = vsel %vm374, %v358, 0
      %v382 = vsel %vm374, %v359, 0
      %v385 = vsel %vm374, %v360, 0
      %v388 = vsel %vm374, %v361, 0
      %390 = vmatpush.bf16.msra.mxu0 0
      %391 = vmatpush.bf16.msra.mxu0 0
      %392 = vmatpush.bf16.msra.mxu0 0
      %393 = vmatpush.bf16.msra.mxu0 0
      %394 = vmatpush.bf16.msra.mxu0 0
      %395 = vmatpush.bf16.msra.mxu0 0
      %396 = vmatpush.bf16.msra.mxu0 %v371
      %397 = vmatpush.bf16.msra.mxu0 %v370
      %398 = vmatmul.bf16.gmra.mxu0 %v376
      %v399 = vpop.f32.mrf.mxu0
      %v400 = vadd.f32 0.0, %v399
      %v401 = vpop.f32.mrf.mxu0
      %v402 = vadd.f32 0.0, %v401
      %403 = vmatmul.bf16.gmra.mxu0 %v379
      %v404 = vpop.f32.mrf.mxu0
      %v405 = vadd.f32 0.0, %v404
      %v406 = vpop.f32.mrf.mxu0
      %v407 = vadd.f32 0.0, %v406
      %408 = vmatmul.bf16.gmra.mxu0 %v382
      %v409 = vpop.f32.mrf.mxu0
      %v410 = vadd.f32 0.0, %v409
      %v411 = vpop.f32.mrf.mxu0
      %v412 = vadd.f32 0.0, %v411
      %413 = vmatmul.bf16.gmra.mxu0 %v385
      %v414 = vpop.f32.mrf.mxu0
      %v415 = vadd.f32 0.0, %v414
      %v416 = vpop.f32.mrf.mxu0
      %v417 = vadd.f32 0.0, %v416
      %418 = vmatmul.bf16.gmra.mxu0 %v388
      %v419 = vpop.f32.mrf.mxu0
      %v420 = vadd.f32 0.0, %v419
      %v421 = vpop.f32.mrf.mxu0
      %v422 = vadd.f32 0.0, %v421
      %423 = vdwg.mxu0
      %v424 = vadd.f32 %v323, %v400
      %v425 = vadd.f32 %v324, %v402
      %v426 = vadd.f32 %v325, %v405
      %v427 = vadd.f32 %v326, %v407
      %v428 = vadd.f32 %v327, %v410
      %v429 = vadd.f32 %v328, %v412
      %v430 = vadd.f32 %v329, %v415
      %v431 = vadd.f32 %v330, %v417
      %v432 = vadd.f32 %v331, %v420
      %v433 = vadd.f32 %v332, %v422
      %vm434 = vcmask 130048
      %435 = vst.msk [vmem:[#allocation2] sm:$0xff] %vm434, %v424
      %436 = vst.msk [vmem:[#allocation2 + $0x8] sm:$0xff] %vm434, %v425
      %437 = vst.msk [vmem:[#allocation2 + $0x10] sm:$0xff] %vm434, %v426
      %438 = vst.msk [vmem:[#allocation2 + $0x18] sm:$0xff] %vm434, %v427
      %439 = vst.msk [vmem:[#allocation2 + $0x20] sm:$0xff] %vm434, %v428
      %440 = vst.msk [vmem:[#allocation2 + $0x28] sm:$0xff] %vm434, %v429
      %441 = vst.msk [vmem:[#allocation2 + $0x30] sm:$0xff] %vm434, %v430
      %442 = vst.msk [vmem:[#allocation2 + $0x38] sm:$0xff] %vm434, %v431
      %443 = vst.msk [vmem:[#allocation2 + $0x40] sm:$0xff] %vm434, %v432
      %444 = vst.msk [vmem:[#allocation2 + $0x48] sm:$0xff] %vm434, %v433
      %v445 = vld [vmem:[%s273] sm:$0xf]
      %v446 = vld [vmem:[%s273 + $0x4] sm:$0xf]
      %v447 = vld [vmem:[%s273 + $0x8] sm:$0xf]
      %v448 = vld [vmem:[%s273 + $0xc] sm:$0xf]
      %v449 = vld [vmem:[%s273 + $0x10] sm:$0xf]
      %v450 = vld [vmem:[%s273 + $0x14] sm:$0xf]
      %v451 = vld [vmem:[%s273 + $0x18] sm:$0xf]
      %v452 = vld [vmem:[%s273 + $0x1c] sm:$0xf]
      %v453 = vld [vmem:[%s273 + $0x20] sm:$0xf]
      %v454 = vld [vmem:[%s273 + $0x24] sm:$0xf]
      %v455 = vld [vmem:[%s273 + $0x28] sm:$0x1]
      %v456 = vld [vmem:[#allocation2] sm:$0xff]
      %v457 = vld [vmem:[#allocation2 + $0x8] sm:$0xff]
      %v458 = vld [vmem:[#allocation2 + $0x10] sm:$0xff]
      %v459 = vld [vmem:[#allocation2 + $0x18] sm:$0xff]
      %v460 = vld [vmem:[#allocation2 + $0x20] sm:$0xff]
      %v461 = vld [vmem:[#allocation2 + $0x28] sm:$0xff]
      %v462 = vld [vmem:[#allocation2 + $0x30] sm:$0xff]
      %v463 = vld [vmem:[#allocation2 + $0x38] sm:$0xff]
      %v464 = vld [vmem:[#allocation2 + $0x40] sm:$0xff]
      %v465 = vld [vmem:[#allocation2 + $0x48] sm:$0xff]
      %s466 = scalar_lea.vmem %s281, 16
      %v467 = vld [vmem:[%s466] sm:$0xf]
      %v468 = vld [vmem:[%s466 + $0x4] sm:$0xf]
      %v469 = vld [vmem:[%s466 + $0x8] sm:$0xf]
      %v470 = vld [vmem:[%s466 + $0xc] sm:$0xf]
      %v482 = vunpack.c.l.b16 %v445
      %v483 = vunpack.c.l.b16 %v446
      %v484 = vunpack.c.l.b16 %v447
      %v485 = vunpack.c.l.b16 %v448
      %v486 = vunpack.c.l.b16 %v449
      %v487 = vunpack.c.l.b16 %v450
      %v488 = vunpack.c.l.b16 %v451
      %v489 = vunpack.c.l.b16 %v452
      %v490 = vunpack.c.l.b16 %v453
      %v491 = vunpack.c.l.b16 %v454
      %v492 = vunpack.c.l.b16 %v455
      %v493 = vpack.c.b16 %v483, %v482
      %v494 = vpack.c.b16 %v485, %v484
      %v495 = vpack.c.b16 %v487, %v486
      %v496 = vpack.c.b16 %v489, %v488
      %v497 = vpack.c.b16 %v491, %v490
      %v498 = vpack.c.b16 %v492, %v492
      %vm499 = vsmask.f32 7424
      %v501 = vshrl.u32 %v493, 16
      %v503 = vshll.u32 %v493, 16
      %v505 = vrot.slane %v503, 1
      %v506 = vor.u32 %v501, %v505
      %v508 = vshll.u32 %v494, 16
      %v510 = vrot.slane %v508, 1
      %v511 = vsel %vm499, %v506, %v510
      %v512 = vshrl.u32 %v494, 16
      %v514 = vor.u32 %v512, %v510
      %v516 = vshll.u32 %v495, 16
      %v518 = vrot.slane %v516, 1
      %v519 = vsel %vm499, %v514, %v518
      %v520 = vshrl.u32 %v495, 16
      %v522 = vor.u32 %v520, %v518
      %v524 = vshll.u32 %v496, 16
      %v526 = vrot.slane %v524, 1
      %v527 = vsel %vm499, %v522, %v526
      %v528 = vshrl.u32 %v496, 16
      %v530 = vor.u32 %v528, %v526
      %v532 = vshll.u32 %v497, 16
      %v534 = vrot.slane %v532, 1
      %v535 = vsel %vm499, %v530, %v534
      %v536 = vshrl.u32 %v497, 16
      %v538 = vor.u32 %v536, %v534
      %v540 = vshll.u32 %v498, 16
      %v542 = vrot.slane %v540, 1
      %v543 = vsel %vm499, %v538, %v542
      %v548 = vunpack.c.l.b16 %v467
      %v549 = vunpack.c.l.b16 %v468
      %v550 = vunpack.c.l.b16 %v469
      %v551 = vunpack.c.l.b16 %v470
      %v552 = vpack.c.b16 %v549, %v548
      %v553 = vpack.c.b16 %v551, %v550
      %v557 = vsel %vm374, %v511, 0
      %v560 = vsel %vm374, %v519, 0
      %v563 = vsel %vm374, %v527, 0
      %v566 = vsel %vm374, %v535, 0
      %v569 = vsel %vm374, %v543, 0
      %571 = vmatpush.bf16.msra.mxu0 0
      %572 = vmatpush.bf16.msra.mxu0 0
      %573 = vmatpush.bf16.msra.mxu0 0
      %574 = vmatpush.bf16.msra.mxu0 0
      %575 = vmatpush.bf16.msra.mxu0 0
      %576 = vmatpush.bf16.msra.mxu0 0
      %577 = vmatpush.bf16.msra.mxu0 %v553
      %578 = vmatpush.bf16.msra.mxu0 %v552
      %579 = vmatmul.bf16.gmra.mxu0 %v557
      %v580 = vpop.f32.mrf.mxu0
      %v581 = vadd.f32 0.0, %v580
      %v582 = vpop.f32.mrf.mxu0
      %v583 = vadd.f32 0.0, %v582
      %584 = vmatmul.bf16.gmra.mxu0 %v560
      %v585 = vpop.f32.mrf.mxu0
      %v586 = vadd.f32 0.0, %v585
      %v587 = vpop.f32.mrf.mxu0
      %v588 = vadd.f32 0.0, %v587
      %589 = vmatmul.bf16.gmra.mxu0 %v563
      %v590 = vpop.f32.mrf.mxu0
      %v591 = vadd.f32 0.0, %v590
      %v592 = vpop.f32.mrf.mxu0
      %v593 = vadd.f32 0.0, %v592
      %594 = vmatmul.bf16.gmra.mxu0 %v566
      %v595 = vpop.f32.mrf.mxu0
      %v596 = vadd.f32 0.0, %v595
      %v597 = vpop.f32.mrf.mxu0
      %v598 = vadd.f32 0.0, %v597
      %599 = vmatmul.bf16.gmra.mxu0 %v569
      %v600 = vpop.f32.mrf.mxu0
      %v601 = vadd.f32 0.0, %v600
      %v602 = vpop.f32.mrf.mxu0
      %v603 = vadd.f32 0.0, %v602
      %604 = vdwg.mxu0
      %v605 = vadd.f32 %v456, %v581
      %v606 = vadd.f32 %v457, %v583
      %v607 = vadd.f32 %v458, %v586
      %v608 = vadd.f32 %v459, %v588
      %v609 = vadd.f32 %v460, %v591
      %v610 = vadd.f32 %v461, %v593
      %v611 = vadd.f32 %v462, %v596
      %v612 = vadd.f32 %v463, %v598
      %v613 = vadd.f32 %v464, %v601
      %v614 = vadd.f32 %v465, %v603
      %615 = vst.msk [vmem:[#allocation2] sm:$0xff] %vm434, %v605
      %616 = vst.msk [vmem:[#allocation2 + $0x8] sm:$0xff] %vm434, %v606
      %617 = vst.msk [vmem:[#allocation2 + $0x10] sm:$0xff] %vm434, %v607
      %618 = vst.msk [vmem:[#allocation2 + $0x18] sm:$0xff] %vm434, %v608
      %619 = vst.msk [vmem:[#allocation2 + $0x20] sm:$0xff] %vm434, %v609
      %620 = vst.msk [vmem:[#allocation2 + $0x28] sm:$0xff] %vm434, %v610
      %621 = vst.msk [vmem:[#allocation2 + $0x30] sm:$0xff] %vm434, %v611
      %622 = vst.msk [vmem:[#allocation2 + $0x38] sm:$0xff] %vm434, %v612
      %623 = vst.msk [vmem:[#allocation2 + $0x40] sm:$0xff] %vm434, %v613
      %624 = vst.msk [vmem:[#allocation2 + $0x48] sm:$0xff] %vm434, %v614
      %v625 = vld [vmem:[%s273] sm:$0xe]
      %v626 = vld [vmem:[%s273 + $0x4] sm:$0xf]
      %v627 = vld [vmem:[%s273 + $0x8] sm:$0xf]
      %v628 = vld [vmem:[%s273 + $0xc] sm:$0xf]
      %v629 = vld [vmem:[%s273 + $0x10] sm:$0xf]
      %v630 = vld [vmem:[%s273 + $0x14] sm:$0xf]
      %v631 = vld [vmem:[%s273 + $0x18] sm:$0xf]
      %v632 = vld [vmem:[%s273 + $0x1c] sm:$0xf]
      %v633 = vld [vmem:[%s273 + $0x20] sm:$0xf]
      %v634 = vld [vmem:[%s273 + $0x24] sm:$0xf]
      %v635 = vld [vmem:[%s273 + $0x28] sm:$0x1]
      %v636 = vld [vmem:[#allocation2] sm:$0xff]
      %v637 = vld [vmem:[#allocation2 + $0x8] sm:$0xff]
      %v638 = vld [vmem:[#allocation2 + $0x10] sm:$0xff]
      %v639 = vld [vmem:[#allocation2 + $0x18] sm:$0xff]
      %v640 = vld [vmem:[#allocation2 + $0x20] sm:$0xff]
      %v641 = vld [vmem:[#allocation2 + $0x28] sm:$0xff]
      %v642 = vld [vmem:[#allocation2 + $0x30] sm:$0xff]
      %v643 = vld [vmem:[#allocation2 + $0x38] sm:$0xff]
      %v644 = vld [vmem:[#allocation2 + $0x40] sm:$0xff]
      %v645 = vld [vmem:[#allocation2 + $0x48] sm:$0xff]
      %s646 = scalar_lea.vmem %s281, 32
      %v647 = vld [vmem:[%s646] sm:$0xf]
      %v648 = vld [vmem:[%s646 + $0x4] sm:$0xf]
      %v649 = vld [vmem:[%s646 + $0x8] sm:$0xf]
      %v650 = vld [vmem:[%s646 + $0xc] sm:$0xf]
      %v662 = vunpack.c.l.b16 %v625
      %v663 = vunpack.c.l.b16 %v626
      %v664 = vunpack.c.l.b16 %v627
      %v665 = vunpack.c.l.b16 %v628
      %v666 = vunpack.c.l.b16 %v629
      %v667 = vunpack.c.l.b16 %v630
      %v668 = vunpack.c.l.b16 %v631
      %v669 = vunpack.c.l.b16 %v632
      %v670 = vunpack.c.l.b16 %v633
      %v671 = vunpack.c.l.b16 %v634
      %v672 = vunpack.c.l.b16 %v635
      %v673 = vpack.c.b16 %v663, %v662
      %v674 = vpack.c.b16 %v665, %v664
      %v675 = vpack.c.b16 %v667, %v666
      %v676 = vpack.c.b16 %v669, %v668
      %v677 = vpack.c.b16 %v671, %v670
      %v678 = vpack.c.b16 %v672, %v672
      %vm679 = vcmask 1046528
      %v680 = vrot.slane %v673, 1
      %v681 = vrot.slane %v674, 1
      %v682 = vsel %vm679, %v680, %v681
      %v683 = vrot.slane %v675, 1
      %v684 = vsel %vm679, %v681, %v683
      %v685 = vrot.slane %v676, 1
      %v686 = vsel %vm679, %v683, %v685
      %v687 = vrot.slane %v677, 1
      %v688 = vsel %vm679, %v685, %v687
      %v689 = vrot.slane %v678, 1
      %v690 = vsel %vm679, %v687, %v689
      %v695 = vunpack.c.l.b16 %v647
      %v696 = vunpack.c.l.b16 %v648
      %v697 = vunpack.c.l.b16 %v649
      %v698 = vunpack.c.l.b16 %v650
      %v699 = vpack.c.b16 %v696, %v695
      %v700 = vpack.c.b16 %v698, %v697
      %v704 = vsel %vm374, %v682, 0
      %v707 = vsel %vm374, %v684, 0
      %v710 = vsel %vm374, %v686, 0
      %v713 = vsel %vm374, %v688, 0
      %v716 = vsel %vm374, %v690, 0
      %718 = vmatpush.bf16.msra.mxu0 0
      %719 = vmatpush.bf16.msra.mxu0 0
      %720 = vmatpush.bf16.msra.mxu0 0
      %721 = vmatpush.bf16.msra.mxu0 0
      %722 = vmatpush.bf16.msra.mxu0 0
      %723 = vmatpush.bf16.msra.mxu0 0
      %724 = vmatpush.bf16.msra.mxu0 %v700
      %725 = vmatpush.bf16.msra.mxu0 %v699
      %726 = vmatmul.bf16.gmra.mxu0 %v704
      %v727 = vpop.f32.mrf.mxu0
      %v728 = vadd.f32 0.0, %v727
      %v729 = vpop.f32.mrf.mxu0
      %v730 = vadd.f32 0.0, %v729
      %731 = vmatmul.bf16.gmra.mxu0 %v707
      %v732 = vpop.f32.mrf.mxu0
      %v733 = vadd.f32 0.0, %v732
      %v734 = vpop.f32.mrf.mxu0
      %v735 = vadd.f32 0.0, %v734
      %736 = vmatmul.bf16.gmra.mxu0 %v710
      %v737 = vpop.f32.mrf.mxu0
      %v738 = vadd.f32 0.0, %v737
      %v739 = vpop.f32.mrf.mxu0
      %v740 = vadd.f32 0.0, %v739
      %741 = vmatmul.bf16.gmra.mxu0 %v713
      %v742 = vpop.f32.mrf.mxu0
      %v743 = vadd.f32 0.0, %v742
      %v744 = vpop.f32.mrf.mxu0
      %v745 = vadd.f32 0.0, %v744
      %746 = vmatmul.bf16.gmra.mxu0 %v716
      %v747 = vpop.f32.mrf.mxu0
      %v748 = vadd.f32 0.0, %v747
      %v749 = vpop.f32.mrf.mxu0
      %v750 = vadd.f32 0.0, %v749
      %751 = vdwg.mxu0
      %v752 = vadd.f32 %v636, %v728
      %v753 = vadd.f32 %v637, %v730
      %v754 = vadd.f32 %v638, %v733
      %v755 = vadd.f32 %v639, %v735
      %v756 = vadd.f32 %v640, %v738
      %v757 = vadd.f32 %v641, %v740
      %v758 = vadd.f32 %v642, %v743
      %v759 = vadd.f32 %v643, %v745
      %v760 = vadd.f32 %v644, %v748
      %v761 = vadd.f32 %v645, %v750
      %762 = vst.msk [vmem:[#allocation2] sm:$0xff] %vm434, %v752
      %763 = vst.msk [vmem:[#allocation2 + $0x8] sm:$0xff] %vm434, %v753
      %764 = vst.msk [vmem:[#allocation2 + $0x10] sm:$0xff] %vm434, %v754
      %765 = vst.msk [vmem:[#allocation2 + $0x18] sm:$0xff] %vm434, %v755
      %766 = vst.msk [vmem:[#allocation2 + $0x20] sm:$0xff] %vm434, %v756
      %767 = vst.msk [vmem:[#allocation2 + $0x28] sm:$0xff] %vm434, %v757
      %768 = vst.msk [vmem:[#allocation2 + $0x30] sm:$0xff] %vm434, %v758
      %769 = vst.msk [vmem:[#allocation2 + $0x38] sm:$0xff] %vm434, %v759
      %770 = vst.msk [vmem:[#allocation2 + $0x40] sm:$0xff] %vm434, %v760
      %771 = vst.msk [vmem:[#allocation2 + $0x48] sm:$0xff] %vm434, %v761
      %v772 = vld [vmem:[%s273 + $0x4] sm:$0xe]
      %v773 = vld [vmem:[%s273 + $0x8] sm:$0xf]
      %v774 = vld [vmem:[%s273 + $0xc] sm:$0xf]
      %v775 = vld [vmem:[%s273 + $0x10] sm:$0xf]
      %v776 = vld [vmem:[%s273 + $0x14] sm:$0xf]
      %v777 = vld [vmem:[%s273 + $0x18] sm:$0xf]
      %v778 = vld [vmem:[%s273 + $0x1c] sm:$0xf]
      %v779 = vld [vmem:[%s273 + $0x20] sm:$0xf]
      %v780 = vld [vmem:[%s273 + $0x24] sm:$0xf]
      %v781 = vld [vmem:[%s273 + $0x28] sm:$0xf]
      %v782 = vld [vmem:[%s273 + $0x2c] sm:$0x1]
      %v783 = vld [vmem:[#allocation2] sm:$0xff]
      %v784 = vld [vmem:[#allocation2 + $0x8] sm:$0xff]
      %v785 = vld [vmem:[#allocation2 + $0x10] sm:$0xff]
      %v786 = vld [vmem:[#allocation2 + $0x18] sm:$0xff]
      %v787 = vld [vmem:[#allocation2 + $0x20] sm:$0xff]
      %v788 = vld [vmem:[#allocation2 + $0x28] sm:$0xff]
      %v789 = vld [vmem:[#allocation2 + $0x30] sm:$0xff]
      %v790 = vld [vmem:[#allocation2 + $0x38] sm:$0xff]
      %v791 = vld [vmem:[#allocation2 + $0x40] sm:$0xff]
      %v792 = vld [vmem:[#allocation2 + $0x48] sm:$0xff]
      %s793 = scalar_lea.vmem %s281, 48
      %v794 = vld [vmem:[%s793] sm:$0xf]
      %v795 = vld [vmem:[%s793 + $0x4] sm:$0xf]
      %v796 = vld [vmem:[%s793 + $0x8] sm:$0xf]
      %v797 = vld [vmem:[%s793 + $0xc] sm:$0xf]
      %v809 = vunpack.c.l.b16 %v772
      %v810 = vunpack.c.l.b16 %v773
      %v811 = vunpack.c.l.b16 %v774
      %v812 = vunpack.c.l.b16 %v775
      %v813 = vunpack.c.l.b16 %v776
      %v814 = vunpack.c.l.b16 %v777
      %v815 = vunpack.c.l.b16 %v778
      %v816 = vunpack.c.l.b16 %v779
      %v817 = vunpack.c.l.b16 %v780
      %v818 = vunpack.c.l.b16 %v781
      %v819 = vunpack.c.l.b16 %v782
      %v820 = vpack.c.b16 %v810, %v809
      %v821 = vpack.c.b16 %v812, %v811
      %v822 = vpack.c.b16 %v814, %v813
      %v823 = vpack.c.b16 %v816, %v815
      %v824 = vpack.c.b16 %v818, %v817
      %v825 = vpack.c.b16 %v819, %v819
      %v826 = vrot.slane %v820, 1
      %v827 = vrot.slane %v821, 1
      %v828 = vsel %vm679, %v826, %v827
      %v829 = vrot.slane %v822, 1
      %v830 = vsel %vm679, %v827, %v829
      %v831 = vrot.slane %v823, 1
      %v832 = vsel %vm679, %v829, %v831
      %v833 = vrot.slane %v824, 1
      %v834 = vsel %vm679, %v831, %v833
      %v835 = vrot.slane %v825, 1
      %v836 = vsel %vm679, %v833, %v835
      %v841 = vunpack.c.l.b16 %v794
      %v842 = vunpack.c.l.b16 %v795
      %v843 = vunpack.c.l.b16 %v796
      %v844 = vunpack.c.l.b16 %v797
      %v845 = vpack.c.b16 %v842, %v841
      %v846 = vpack.c.b16 %v844, %v843
      %v850 = vsel %vm374, %v828, 0
      %v853 = vsel %vm374, %v830, 0
      %v856 = vsel %vm374, %v832, 0
      %v859 = vsel %vm374, %v834, 0
      %v862 = vsel %vm374, %v836, 0
      %864 = vmatpush.bf16.msra.mxu0 0
      %865 = vmatpush.bf16.msra.mxu0 0
      %866 = vmatpush.bf16.msra.mxu0 0
      %867 = vmatpush.bf16.msra.mxu0 0
      %868 = vmatpush.bf16.msra.mxu0 0
      %869 = vmatpush.bf16.msra.mxu0 0
      %870 = vmatpush.bf16.msra.mxu0 %v846
      %871 = vmatpush.bf16.msra.mxu0 %v845
      %872 = vmatmul.bf16.gmra.mxu0 %v850
      %v873 = vpop.f32.mrf.mxu0
      %v874 = vadd.f32 0.0, %v873
      %v875 = vpop.f32.mrf.mxu0
      %v876 = vadd.f32 0.0, %v875
      %877 = vmatmul.bf16.gmra.mxu0 %v853
      %v878 = vpop.f32.mrf.mxu0
      %v879 = vadd.f32 0.0, %v878
      %v880 = vpop.f32.mrf.mxu0
      %v881 = vadd.f32 0.0, %v880
      %882 = vmatmul.bf16.gmra.mxu0 %v856
      %v883 = vpop.f32.mrf.mxu0
      %v884 = vadd.f32 0.0, %v883
      %v885 = vpop.f32.mrf.mxu0
      %v886 = vadd.f32 0.0, %v885
      %887 = vmatmul.bf16.gmra.mxu0 %v859
      %v888 = vpop.f32.mrf.mxu0
      %v889 = vadd.f32 0.0, %v888
      %v890 = vpop.f32.mrf.mxu0
      %v891 = vadd.f32 0.0, %v890
      %892 = vmatmul.bf16.gmra.mxu0 %v862
      %v893 = vpop.f32.mrf.mxu0
      %v894 = vadd.f32 0.0, %v893
      %v895 = vpop.f32.mrf.mxu0
      %v896 = vadd.f32 0.0, %v895
      %897 = vdwg.mxu0
      %v898 = vadd.f32 %v783, %v874
      %v899 = vadd.f32 %v784, %v876
      %v900 = vadd.f32 %v785, %v879
      %v901 = vadd.f32 %v786, %v881
      %v902 = vadd.f32 %v787, %v884
      %v903 = vadd.f32 %v788, %v886
      %v904 = vadd.f32 %v789, %v889
      %v905 = vadd.f32 %v790, %v891
      %v906 = vadd.f32 %v791, %v894
      %v907 = vadd.f32 %v792, %v896
      %908 = vst.msk [vmem:[#allocation2] sm:$0xff] %vm434, %v898
      %909 = vst.msk [vmem:[#allocation2 + $0x8] sm:$0xff] %vm434, %v899
      %910 = vst.msk [vmem:[#allocation2 + $0x10] sm:$0xff] %vm434, %v900
      %911 = vst.msk [vmem:[#allocation2 + $0x18] sm:$0xff] %vm434, %v901
      %912 = vst.msk [vmem:[#allocation2 + $0x20] sm:$0xff] %vm434, %v902
      %913 = vst.msk [vmem:[#allocation2 + $0x28] sm:$0xff] %vm434, %v903
      %914 = vst.msk [vmem:[#allocation2 + $0x30] sm:$0xff] %vm434, %v904
      %915 = vst.msk [vmem:[#allocation2 + $0x38] sm:$0xff] %vm434, %v905
      %916 = vst.msk [vmem:[#allocation2 + $0x40] sm:$0xff] %vm434, %v906
      %917 = vst.msk [vmem:[#allocation2 + $0x48] sm:$0xff] %vm434, %v907
      %v918 = vld [vmem:[%s273 + $0x4] sm:$0xe]
      %v919 = vld [vmem:[%s273 + $0x8] sm:$0xf]
      %v920 = vld [vmem:[%s273 + $0xc] sm:$0xf]
      %v921 = vld [vmem:[%s273 + $0x10] sm:$0xf]
      %v922 = vld [vmem:[%s273 + $0x14] sm:$0xf]
      %v923 = vld [vmem:[%s273 + $0x18] sm:$0xf]
      %v924 = vld [vmem:[%s273 + $0x1c] sm:$0xf]
      %v925 = vld [vmem:[%s273 + $0x20] sm:$0xf]
      %v926 = vld [vmem:[%s273 + $0x24] sm:$0xf]
      %v927 = vld [vmem:[%s273 + $0x28] sm:$0xf]
      %v928 = vld [vmem:[%s273 + $0x2c] sm:$0x3]
      %v929 = vld [vmem:[#allocation2] sm:$0xff]
      %v930 = vld [vmem:[#allocation2 + $0x8] sm:$0xff]
      %v931 = vld [vmem:[#allocation2 + $0x10] sm:$0xff]
      %v932 = vld [vmem:[#allocation2 + $0x18] sm:$0xff]
      %v933 = vld [vmem:[#allocation2 + $0x20] sm:$0xff]
      %v934 = vld [vmem:[#allocation2 + $0x28] sm:$0xff]
      %v935 = vld [vmem:[#allocation2 + $0x30] sm:$0xff]
      %v936 = vld [vmem:[#allocation2 + $0x38] sm:$0xff]
      %v937 = vld [vmem:[#allocation2 + $0x40] sm:$0xff]
      %v938 = vld [vmem:[#allocation2 + $0x48] sm:$0xff]
      %s939 = scalar_lea.vmem %s281, 64
      %v940 = vld [vmem:[%s939] sm:$0xf]
      %v941 = vld [vmem:[%s939 + $0x4] sm:$0xf]
      %v942 = vld [vmem:[%s939 + $0x8] sm:$0xf]
      %v943 = vld [vmem:[%s939 + $0xc] sm:$0xf]
      %v955 = vunpack.c.l.b16 %v918
      %v956 = vunpack.c.l.b16 %v919
      %v957 = vunpack.c.l.b16 %v920
      %v958 = vunpack.c.l.b16 %v921
      %v959 = vunpack.c.l.b16 %v922
      %v960 = vunpack.c.l.b16 %v923
      %v961 = vunpack.c.l.b16 %v924
      %v962 = vunpack.c.l.b16 %v925
      %v963 = vunpack.c.l.b16 %v926
      %v964 = vunpack.c.l.b16 %v927
      %v965 = vunpack.c.l.b16 %v928
      %v966 = vpack.c.b16 %v956, %v955
      %v967 = vpack.c.b16 %v958, %v957
      %v968 = vpack.c.b16 %v960, %v959
      %v969 = vpack.c.b16 %v962, %v961
      %v970 = vpack.c.b16 %v964, %v963
      %v971 = vpack.c.b16 %v965, %v965
      %vm972 = vsmask.f32 6400
      %v974 = vshrl.u32 %v966, 16
      %v976 = vrot.slane %v974, 1
      %v977 = vshll.u32 %v966, 16
      %v979 = vrot.slane %v977, 2
      %v980 = vor.u32 %v976, %v979
      %v982 = vshrl.u32 %v967, 16
      %v984 = vrot.slane %v982, 1
      %v985 = vshll.u32 %v967, 16
      %v987 = vrot.slane %v985, 2
      %v988 = vor.u32 %v984, %v987
      %v989 = vsel %vm972, %v980, %v988
      %v991 = vshrl.u32 %v968, 16
      %v993 = vrot.slane %v991, 1
      %v994 = vshll.u32 %v968, 16
      %v996 = vrot.slane %v994, 2
      %v997 = vor.u32 %v993, %v996
      %v998 = vsel %vm972, %v988, %v997
      %v1000 = vshrl.u32 %v969, 16
      %v1002 = vrot.slane %v1000, 1
      %v1003 = vshll.u32 %v969, 16
      %v1005 = vrot.slane %v1003, 2
      %v1006 = vor.u32 %v1002, %v1005
      %v1007 = vsel %vm972, %v997, %v1006
      %v1009 = vshrl.u32 %v970, 16
      %v1011 = vrot.slane %v1009, 1
      %v1012 = vshll.u32 %v970, 16
      %v1014 = vrot.slane %v1012, 2
      %v1015 = vor.u32 %v1011, %v1014
      %v1016 = vsel %vm972, %v1006, %v1015
      %v1018 = vshrl.u32 %v971, 16
      %v1020 = vrot.slane %v1018, 1
      %v1021 = vshll.u32 %v971, 16
      %v1023 = vrot.slane %v1021, 2
      %v1024 = vor.u32 %v1020, %v1023
      %v1025 = vsel %vm972, %v1015, %v1024
      %v1030 = vunpack.c.l.b16 %v940
      %v1031 = vunpack.c.l.b16 %v941
      %v1032 = vunpack.c.l.b16 %v942
      %v1033 = vunpack.c.l.b16 %v943
      %v1034 = vpack.c.b16 %v1031, %v1030
      %v1035 = vpack.c.b16 %v1033, %v1032
      %v1039 = vsel %vm374, %v989, 0
      %v1042 = vsel %vm374, %v998, 0
      %v1045 = vsel %vm374, %v1007, 0
      %v1048 = vsel %vm374, %v1016, 0
      %v1051 = vsel %vm374, %v1025, 0
      %1053 = vmatpush.bf16.msra.mxu0 0
      %1054 = vmatpush.bf16.msra.mxu0 0
      %1055 = vmatpush.bf16.msra.mxu0 0
      %1056 = vmatpush.bf16.msra.mxu0 0
      %1057 = vmatpush.bf16.msra.mxu0 0
      %1058 = vmatpush.bf16.msra.mxu0 0
      %1059 = vmatpush.bf16.msra.mxu0 %v1035
      %1060 = vmatpush.bf16.msra.mxu0 %v1034
      %1061 = vmatmul.bf16.gmra.mxu0 %v1039
      %v1062 = vpop.f32.mrf.mxu0
      %v1063 = vadd.f32 0.0, %v1062
      %v1064 = vpop.f32.mrf.mxu0
      %v1065 = vadd.f32 0.0, %v1064
      %1066 = vmatmul.bf16.gmra.mxu0 %v1042
      %v1067 = vpop.f32.mrf.mxu0
      %v1068 = vadd.f32 0.0, %v1067
      %v1069 = vpop.f32.mrf.mxu0
      %v1070 = vadd.f32 0.0, %v1069
      %1071 = vmatmul.bf16.gmra.mxu0 %v1045
      %v1072 = vpop.f32.mrf.mxu0
      %v1073 = vadd.f32 0.0, %v1072
      %v1074 = vpop.f32.mrf.mxu0
      %v1075 = vadd.f32 0.0, %v1074
      %1076 = vmatmul.bf16.gmra.mxu0 %v1048
      %v1077 = vpop.f32.mrf.mxu0
      %v1078 = vadd.f32 0.0, %v1077
      %v1079 = vpop.f32.mrf.mxu0
      %v1080 = vadd.f32 0.0, %v1079
      %1081 = vmatmul.bf16.gmra.mxu0 %v1051
      %v1082 = vpop.f32.mrf.mxu0
      %v1083 = vadd.f32 0.0, %v1082
      %v1084 = vpop.f32.mrf.mxu0
      %v1085 = vadd.f32 0.0, %v1084
      %1086 = vdwg.mxu0
      %v1087 = vadd.f32 %v929, %v1063
      %v1088 = vadd.f32 %v930, %v1065
      %v1089 = vadd.f32 %v931, %v1068
      %v1090 = vadd.f32 %v932, %v1070
      %v1091 = vadd.f32 %v933, %v1073
      %v1092 = vadd.f32 %v934, %v1075
      %v1093 = vadd.f32 %v935, %v1078
      %v1094 = vadd.f32 %v936, %v1080
      %v1095 = vadd.f32 %v937, %v1083
      %v1096 = vadd.f32 %v938, %v1085
      %1097 = vst.msk [vmem:[#allocation2] sm:$0xff] %vm434, %v1087
      %1098 = vst.msk [vmem:[#allocation2 + $0x8] sm:$0xff] %vm434, %v1088
      %1099 = vst.msk [vmem:[#allocation2 + $0x10] sm:$0xff] %vm434, %v1089
      %1100 = vst.msk [vmem:[#allocation2 + $0x18] sm:$0xff] %vm434, %v1090
      %1101 = vst.msk [vmem:[#allocation2 + $0x20] sm:$0xff] %vm434, %v1091
      %1102 = vst.msk [vmem:[#allocation2 + $0x28] sm:$0xff] %vm434, %v1092
      %1103 = vst.msk [vmem:[#allocation2 + $0x30] sm:$0xff] %vm434, %v1093
      %1104 = vst.msk [vmem:[#allocation2 + $0x38] sm:$0xff] %vm434, %v1094
      %1105 = vst.msk [vmem:[#allocation2 + $0x40] sm:$0xff] %vm434, %v1095
      %1106 = vst.msk [vmem:[#allocation2 + $0x48] sm:$0xff] %vm434, %v1096
      %v1107 = vld [vmem:[%s273 + $0x4] sm:$0xc]
      %v1108 = vld [vmem:[%s273 + $0x8] sm:$0xf]
      %v1109 = vld [vmem:[%s273 + $0xc] sm:$0xf]
      %v1110 = vld [vmem:[%s273 + $0x10] sm:$0xf]
      %v1111 = vld [vmem:[%s273 + $0x14] sm:$0xf]
      %v1112 = vld [vmem:[%s273 + $0x18] sm:$0xf]
      %v1113 = vld [vmem:[%s273 + $0x1c] sm:$0xf]
      %v1114 = vld [vmem:[%s273 + $0x20] sm:$0xf]
      %v1115 = vld [vmem:[%s273 + $0x24] sm:$0xf]
      %v1116 = vld [vmem:[%s273 + $0x28] sm:$0xf]
      %v1117 = vld [vmem:[%s273 + $0x2c] sm:$0x3]
      %v1118 = vld [vmem:[#allocation2] sm:$0xff]
      %v1119 = vld [vmem:[#allocation2 + $0x8] sm:$0xff]
      %v1120 = vld [vmem:[#allocation2 + $0x10] sm:$0xff]
      %v1121 = vld [vmem:[#allocation2 + $0x18] sm:$0xff]
      %v1122 = vld [vmem:[#allocation2 + $0x20] sm:$0xff]
      %v1123 = vld [vmem:[#allocation2 + $0x28] sm:$0xff]
      %v1124 = vld [vmem:[#allocation2 + $0x30] sm:$0xff]
      %v1125 = vld [vmem:[#allocation2 + $0x38] sm:$0xff]
      %v1126 = vld [vmem:[#allocation2 + $0x40] sm:$0xff]
      %v1127 = vld [vmem:[#allocation2 + $0x48] sm:$0xff]
      %s1128 = scalar_lea.vmem %s281, 80
      %v1129 = vld [vmem:[%s1128] sm:$0xf]
      %v1130 = vld [vmem:[%s1128 + $0x4] sm:$0xf]
      %v1131 = vld [vmem:[%s1128 + $0x8] sm:$0xf]
      %v1132 = vld [vmem:[%s1128 + $0xc] sm:$0xf]
      %v1144 = vunpack.c.l.b16 %v1107
      %v1145 = vunpack.c.l.b16 %v1108
      %v1146 = vunpack.c.l.b16 %v1109
      %v1147 = vunpack.c.l.b16 %v1110
      %v1148 = vunpack.c.l.b16 %v1111
      %v1149 = vunpack.c.l.b16 %v1112
      %v1150 = vunpack.c.l.b16 %v1113
      %v1151 = vunpack.c.l.b16 %v1114
      %v1152 = vunpack.c.l.b16 %v1115
      %v1153 = vunpack.c.l.b16 %v1116
      %v1154 = vunpack.c.l.b16 %v1117
      %v1155 = vpack.c.b16 %v1145, %v1144
      %v1156 = vpack.c.b16 %v1147, %v1146
      %v1157 = vpack.c.b16 %v1149, %v1148
      %v1158 = vpack.c.b16 %v1151, %v1150
      %v1159 = vpack.c.b16 %v1153, %v1152
      %v1160 = vpack.c.b16 %v1154, %v1154
      %vm1161 = vcmask 1045504
      %v1162 = vrot.slane %v1155, 2
      %v1163 = vrot.slane %v1156, 2
      %v1164 = vsel %vm1161, %v1162, %v1163
      %v1165 = vrot.slane %v1157, 2
      %v1166 = vsel %vm1161, %v1163, %v1165
      %v1167 = vrot.slane %v1158, 2
      %v1168 = vsel %vm1161, %v1165, %v1167
      %v1169 = vrot.slane %v1159, 2
      %v1170 = vsel %vm1161, %v1167, %v1169
      %v1171 = vrot.slane %v1160, 2
      %v1172 = vsel %vm1161, %v1169, %v1171
      %v1177 = vunpack.c.l.b16 %v1129
      %v1178 = vunpack.c.l.b16 %v1130
      %v1179 = vunpack.c.l.b16 %v1131
      %v1180 = vunpack.c.l.b16 %v1132
      %v1181 = vpack.c.b16 %v1178, %v1177
      %v1182 = vpack.c.b16 %v1180, %v1179
      %v1186 = vsel %vm374, %v1164, 0
      %v1189 = vsel %vm374, %v1166, 0
      %v1192 = vsel %vm374, %v1168, 0
      %v1195 = vsel %vm374, %v1170, 0
      %v1198 = vsel %vm374, %v1172, 0
      %1200 = vmatpush.bf16.msra.mxu0 0
      %1201 = vmatpush.bf16.msra.mxu0 0
      %1202 = vmatpush.bf16.msra.mxu0 0
      %1203 = vmatpush.bf16.msra.mxu0 0
      %1204 = vmatpush.bf16.msra.mxu0 0
      %1205 = vmatpush.bf16.msra.mxu0 0
      %1206 = vmatpush.bf16.msra.mxu0 %v1182
      %1207 = vmatpush.bf16.msra.mxu0 %v1181
      %1208 = vmatmul.bf16.gmra.mxu0 %v1186
      %v1209 = vpop.f32.mrf.mxu0
      %v1210 = vadd.f32 0.0, %v1209
      %v1211 = vpop.f32.mrf.mxu0
      %v1212 = vadd.f32 0.0, %v1211
      %1213 = vmatmul.bf16.gmra.mxu0 %v1189
      %v1214 = vpop.f32.mrf.mxu0
      %v1215 = vadd.f32 0.0, %v1214
      %v1216 = vpop.f32.mrf.mxu0
      %v1217 = vadd.f32 0.0, %v1216
      %1218 = vmatmul.bf16.gmra.mxu0 %v1192
      %v1219 = vpop.f32.mrf.mxu0
      %v1220 = vadd.f32 0.0, %v1219
      %v1221 = vpop.f32.mrf.mxu0
      %v1222 = vadd.f32 0.0, %v1221
      %1223 = vmatmul.bf16.gmra.mxu0 %v1195
      %v1224 = vpop.f32.mrf.mxu0
      %v1225 = vadd.f32 0.0, %v1224
      %v1226 = vpop.f32.mrf.mxu0
      %v1227 = vadd.f32 0.0, %v1226
      %1228 = vmatmul.bf16.gmra.mxu0 %v1198
      %v1229 = vpop.f32.mrf.mxu0
      %v1230 = vadd.f32 0.0, %v1229
      %v1231 = vpop.f32.mrf.mxu0
      %v1232 = vadd.f32 0.0, %v1231
      %1233 = vdwg.mxu0
      %v1234 = vadd.f32 %v1118, %v1210
      %v1235 = vadd.f32 %v1119, %v1212
      %v1236 = vadd.f32 %v1120, %v1215
      %v1237 = vadd.f32 %v1121, %v1217
      %v1238 = vadd.f32 %v1122, %v1220
      %v1239 = vadd.f32 %v1123, %v1222
      %v1240 = vadd.f32 %v1124, %v1225
      %v1241 = vadd.f32 %v1125, %v1227
      %v1242 = vadd.f32 %v1126, %v1230
      %v1243 = vadd.f32 %v1127, %v1232
      %1244 = vst.msk [vmem:[#allocation2] sm:$0xff] %vm434, %v1234
      %1245 = vst.msk [vmem:[#allocation2 + $0x8] sm:$0xff] %vm434, %v1235
      %1246 = vst.msk [vmem:[#allocation2 + $0x10] sm:$0xff] %vm434, %v1236
      %1247 = vst.msk [vmem:[#allocation2 + $0x18] sm:$0xff] %vm434, %v1237
      %1248 = vst.msk [vmem:[#allocation2 + $0x20] sm:$0xff] %vm434, %v1238
      %1249 = vst.msk [vmem:[#allocation2 + $0x28] sm:$0xff] %vm434, %v1239
      %1250 = vst.msk [vmem:[#allocation2 + $0x30] sm:$0xff] %vm434, %v1240
      %1251 = vst.msk [vmem:[#allocation2 + $0x38] sm:$0xff] %vm434, %v1241
      %1252 = vst.msk [vmem:[#allocation2 + $0x40] sm:$0xff] %vm434, %v1242
      %1253 = vst.msk [vmem:[#allocation2 + $0x48] sm:$0xff] %vm434, %v1243
      %v1254 = vld [vmem:[%s273 + $0x8] sm:$0xc]
      %v1255 = vld [vmem:[%s273 + $0xc] sm:$0xf]
      %v1256 = vld [vmem:[%s273 + $0x10] sm:$0xf]
      %v1257 = vld [vmem:[%s273 + $0x14] sm:$0xf]
      %v1258 = vld [vmem:[%s273 + $0x18] sm:$0xf]
      %v1259 = vld [vmem:[%s273 + $0x1c] sm:$0xf]
      %v1260 = vld [vmem:[%s273 + $0x20] sm:$0xf]
      %v1261 = vld [vmem:[%s273 + $0x24] sm:$0xf]
      %v1262 = vld [vmem:[%s273 + $0x28] sm:$0xf]
      %v1263 = vld [vmem:[%s273 + $0x2c] sm:$0xf]
      %v1264 = vld [vmem:[%s273 + $0x30] sm:$0x3]
      %v1265 = vld [vmem:[#allocation2] sm:$0xff]
      %v1266 = vld [vmem:[#allocation2 + $0x8] sm:$0xff]
      %v1267 = vld [vmem:[#allocation2 + $0x10] sm:$0xff]
      %v1268 = vld [vmem:[#allocation2 + $0x18] sm:$0xff]
      %v1269 = vld [vmem:[#allocation2 + $0x20] sm:$0xff]
      %v1270 = vld [vmem:[#allocation2 + $0x28] sm:$0xff]
      %v1271 = vld [vmem:[#allocation2 + $0x30] sm:$0xff]
      %v1272 = vld [vmem:[#allocation2 + $0x38] sm:$0xff]
      %v1273 = vld [vmem:[#allocation2 + $0x40] sm:$0xff]
      %v1274 = vld [vmem:[#allocation2 + $0x48] sm:$0xff]
      %s1275 = scalar_lea.vmem %s281, 96
      %v1276 = vld [vmem:[%s1275] sm:$0xf]
      %v1277 = vld [vmem:[%s1275 + $0x4] sm:$0xf]
      %v1278 = vld [vmem:[%s1275 + $0x8] sm:$0xf]
      %v1279 = vld [vmem:[%s1275 + $0xc] sm:$0xf]
      %v1291 = vunpack.c.l.b16 %v1254
      %v1292 = vunpack.c.l.b16 %v1255
      %v1293 = vunpack.c.l.b16 %v1256
      %v1294 = vunpack.c.l.b16 %v1257
      %v1295 = vunpack.c.l.b16 %v1258
      %v1296 = vunpack.c.l.b16 %v1259
      %v1297 = vunpack.c.l.b16 %v1260
      %v1298 = vunpack.c.l.b16 %v1261
      %v1299 = vunpack.c.l.b16 %v1262
      %v1300 = vunpack.c.l.b16 %v1263
      %v1301 = vunpack.c.l.b16 %v1264
      %v1302 = vpack.c.b16 %v1292, %v1291
      %v1303 = vpack.c.b16 %v1294, %v1293
      %v1304 = vpack.c.b16 %v1296, %v1295
      %v1305 = vpack.c.b16 %v1298, %v1297
      %v1306 = vpack.c.b16 %v1300, %v1299
      %v1307 = vpack.c.b16 %v1301, %v1301
      %v1308 = vrot.slane %v1302, 2
      %v1309 = vrot.slane %v1303, 2
      %v1310 = vsel %vm1161, %v1308, %v1309
      %v1311 = vrot.slane %v1304, 2
      %v1312 = vsel %vm1161, %v1309, %v1311
      %v1313 = vrot.slane %v1305, 2
      %v1314 = vsel %vm1161, %v1311, %v1313
      %v1315 = vrot.slane %v1306, 2
      %v1316 = vsel %vm1161, %v1313, %v1315
      %v1317 = vrot.slane %v1307, 2
      %v1318 = vsel %vm1161, %v1315, %v1317
      %v1323 = vunpack.c.l.b16 %v1276
      %v1324 = vunpack.c.l.b16 %v1277
      %v1325 = vunpack.c.l.b16 %v1278
      %v1326 = vunpack.c.l.b16 %v1279
      %v1327 = vpack.c.b16 %v1324, %v1323
      %v1328 = vpack.c.b16 %v1326, %v1325
      %v1332 = vsel %vm374, %v1310, 0
      %v1335 = vsel %vm374, %v1312, 0
      %v1338 = vsel %vm374, %v1314, 0
      %v1341 = vsel %vm374, %v1316, 0
      %v1344 = vsel %vm374, %v1318, 0
      %1346 = vmatpush.bf16.msra.mxu0 0
      %1347 = vmatpush.bf16.msra.mxu0 0
      %1348 = vmatpush.bf16.msra.mxu0 0
      %1349 = vmatpush.bf16.msra.mxu0 0
      %1350 = vmatpush.bf16.msra.mxu0 0
      %1351 = vmatpush.bf16.msra.mxu0 0
      %1352 = vmatpush.bf16.msra.mxu0 %v1328
      %1353 = vmatpush.bf16.msra.mxu0 %v1327
      %1354 = vmatmul.bf16.gmra.mxu0 %v1332
      %v1355 = vpop.f32.mrf.mxu0
      %v1356 = vadd.f32 0.0, %v1355
      %v1357 = vpop.f32.mrf.mxu0
      %v1358 = vadd.f32 0.0, %v1357
      %1359 = vmatmul.bf16.gmra.mxu0 %v1335
      %v1360 = vpop.f32.mrf.mxu0
      %v1361 = vadd.f32 0.0, %v1360
      %v1362 = vpop.f32.mrf.mxu0
      %v1363 = vadd.f32 0.0, %v1362
      %1364 = vmatmul.bf16.gmra.mxu0 %v1338
      %v1365 = vpop.f32.mrf.mxu0
      %v1366 = vadd.f32 0.0, %v1365
      %v1367 = vpop.f32.mrf.mxu0
      %v1368 = vadd.f32 0.0, %v1367
      %1369 = vmatmul.bf16.gmra.mxu0 %v1341
      %v1370 = vpop.f32.mrf.mxu0
      %v1371 = vadd.f32 0.0, %v1370
      %v1372 = vpop.f32.mrf.mxu0
      %v1373 = vadd.f32 0.0, %v1372
      %1374 = vmatmul.bf16.gmra.mxu0 %v1344
      %v1375 = vpop.f32.mrf.mxu0
      %v1376 = vadd.f32 0.0, %v1375
      %v1377 = vpop.f32.mrf.mxu0
      %v1378 = vadd.f32 0.0, %v1377
      %1379 = vdwg.mxu0
      %v1380 = vadd.f32 %v1265, %v1356
      %v1381 = vadd.f32 %v1266, %v1358
      %v1382 = vadd.f32 %v1267, %v1361
      %v1383 = vadd.f32 %v1268, %v1363
      %v1384 = vadd.f32 %v1269, %v1366
      %v1385 = vadd.f32 %v1270, %v1368
      %v1386 = vadd.f32 %v1271, %v1371
      %v1387 = vadd.f32 %v1272, %v1373
      %v1388 = vadd.f32 %v1273, %v1376
      %v1389 = vadd.f32 %v1274, %v1378
      %1390 = vst.msk [vmem:[#allocation2] sm:$0xff] %vm434, %v1380
      %1391 = vst.msk [vmem:[#allocation2 + $0x8] sm:$0xff] %vm434, %v1381
      %1392 = vst.msk [vmem:[#allocation2 + $0x10] sm:$0xff] %vm434, %v1382
      %1393 = vst.msk [vmem:[#allocation2 + $0x18] sm:$0xff] %vm434, %v1383
      %1394 = vst.msk [vmem:[#allocation2 + $0x20] sm:$0xff] %vm434, %v1384
      %1395 = vst.msk [vmem:[#allocation2 + $0x28] sm:$0xff] %vm434, %v1385
      %1396 = vst.msk [vmem:[#allocation2 + $0x30] sm:$0xff] %vm434, %v1386
      %1397 = vst.msk [vmem:[#allocation2 + $0x38] sm:$0xff] %vm434, %v1387
      %1398 = vst.msk [vmem:[#allocation2 + $0x40] sm:$0xff] %vm434, %v1388
      %1399 = vst.msk [vmem:[#allocation2 + $0x48] sm:$0xff] %vm434, %v1389
      %v1400 = vld [vmem:[%s273 + $0x8] sm:$0xc]
      %v1401 = vld [vmem:[%s273 + $0xc] sm:$0xf]
      %v1402 = vld [vmem:[%s273 + $0x10] sm:$0xf]
      %v1403 = vld [vmem:[%s273 + $0x14] sm:$0xf]
      %v1404 = vld [vmem:[%s273 + $0x18] sm:$0xf]
      %v1405 = vld [vmem:[%s273 + $0x1c] sm:$0xf]
      %v1406 = vld [vmem:[%s273 + $0x20] sm:$0xf]
      %v1407 = vld [vmem:[%s273 + $0x24] sm:$0xf]
      %v1408 = vld [vmem:[%s273 + $0x28] sm:$0xf]
      %v1409 = vld [vmem:[%s273 + $0x2c] sm:$0xf]
      %v1410 = vld [vmem:[%s273 + $0x30] sm:$0x7]
      %v1411 = vld [vmem:[#allocation2] sm:$0xff]
      %v1412 = vld [vmem:[#allocation2 + $0x8] sm:$0xff]
      %v1413 = vld [vmem:[#allocation2 + $0x10] sm:$0xff]
      %v1414 = vld [vmem:[#allocation2 + $0x18] sm:$0xff]
      %v1415 = vld [vmem:[#allocation2 + $0x20] sm:$0xff]
      %v1416 = vld [vmem:[#allocation2 + $0x28] sm:$0xff]
      %v1417 = vld [vmem:[#allocation2 + $0x30] sm:$0xff]
      %v1418 = vld [vmem:[#allocation2 + $0x38] sm:$0xff]
      %v1419 = vld [vmem:[#allocation2 + $0x40] sm:$0xff]
      %v1420 = vld [vmem:[#allocation2 + $0x48] sm:$0xff]
      %s1421 = scalar_lea.vmem %s281, 112
      %v1422 = vld [vmem:[%s1421] sm:$0xf]
      %v1423 = vld [vmem:[%s1421 + $0x4] sm:$0xf]
      %v1424 = vld [vmem:[%s1421 + $0x8] sm:$0xf]
      %v1425 = vld [vmem:[%s1421 + $0xc] sm:$0xf]
      %v1437 = vunpack.c.l.b16 %v1400
      %v1438 = vunpack.c.l.b16 %v1401
      %v1439 = vunpack.c.l.b16 %v1402
      %v1440 = vunpack.c.l.b16 %v1403
      %v1441 = vunpack.c.l.b16 %v1404
      %v1442 = vunpack.c.l.b16 %v1405
      %v1443 = vunpack.c.l.b16 %v1406
      %v1444 = vunpack.c.l.b16 %v1407
      %v1445 = vunpack.c.l.b16 %v1408
      %v1446 = vunpack.c.l.b16 %v1409
      %v1447 = vunpack.c.l.b16 %v1410
      %v1448 = vpack.c.b16 %v1438, %v1437
      %v1449 = vpack.c.b16 %v1440, %v1439
      %v1450 = vpack.c.b16 %v1442, %v1441
      %v1451 = vpack.c.b16 %v1444, %v1443
      %v1452 = vpack.c.b16 %v1446, %v1445
      %v1453 = vpack.c.b16 %v1447, %v1447
      %vm1454 = vsmask.f32 5376
      %v1456 = vshrl.u32 %v1448, 16
      %v1458 = vrot.slane %v1456, 2
      %v1459 = vshll.u32 %v1448, 16
      %v1461 = vrot.slane %v1459, 3
      %v1462 = vor.u32 %v1458, %v1461
      %v1464 = vshrl.u32 %v1449, 16
      %v1466 = vrot.slane %v1464, 2
      %v1467 = vshll.u32 %v1449, 16
      %v1469 = vrot.slane %v1467, 3
      %v1470 = vor.u32 %v1466, %v1469
      %v1471 = vsel %vm1454, %v1462, %v1470
      %v1473 = vshrl.u32 %v1450, 16
      %v1475 = vrot.slane %v1473, 2
      %v1476 = vshll.u32 %v1450, 16
      %v1478 = vrot.slane %v1476, 3
      %v1479 = vor.u32 %v1475, %v1478
      %v1480 = vsel %vm1454, %v1470, %v1479
      %v1482 = vshrl.u32 %v1451, 16
      %v1484 = vrot.slane %v1482, 2
      %v1485 = vshll.u32 %v1451, 16
      %v1487 = vrot.slane %v1485, 3
      %v1488 = vor.u32 %v1484, %v1487
      %v1489 = vsel %vm1454, %v1479, %v1488
      %v1491 = vshrl.u32 %v1452, 16
      %v1493 = vrot.slane %v1491, 2
      %v1494 = vshll.u32 %v1452, 16
      %v1496 = vrot.slane %v1494, 3
      %v1497 = vor.u32 %v1493, %v1496
      %v1498 = vsel %vm1454, %v1488, %v1497
      %v1500 = vshrl.u32 %v1453, 16
      %v1502 = vrot.slane %v1500, 2
      %v1503 = vshll.u32 %v1453, 16
      %v1505 = vrot.slane %v1503, 3
      %v1506 = vor.u32 %v1502, %v1505
      %v1507 = vsel %vm1454, %v1497, %v1506
      %v1512 = vunpack.c.l.b16 %v1422
      %v1513 = vunpack.c.l.b16 %v1423
      %v1514 = vunpack.c.l.b16 %v1424
      %v1515 = vunpack.c.l.b16 %v1425
      %v1516 = vpack.c.b16 %v1513, %v1512
      %v1517 = vpack.c.b16 %v1515, %v1514
      %v1521 = vsel %vm374, %v1471, 0
      %v1524 = vsel %vm374, %v1480, 0
      %v1527 = vsel %vm374, %v1489, 0
      %v1530 = vsel %vm374, %v1498, 0
      %v1533 = vsel %vm374, %v1507, 0
      %1535 = vmatpush.bf16.msra.mxu0 0
      %1536 = vmatpush.bf16.msra.mxu0 0
      %1537 = vmatpush.bf16.msra.mxu0 0
      %1538 = vmatpush.bf16.msra.mxu0 0
      %1539 = vmatpush.bf16.msra.mxu0 0
      %1540 = vmatpush.bf16.msra.mxu0 0
      %1541 = vmatpush.bf16.msra.mxu0 %v1517
      %1542 = vmatpush.bf16.msra.mxu0 %v1516
      %1543 = vmatmul.bf16.gmra.mxu0 %v1521
      %v1544 = vpop.f32.mrf.mxu0
      %v1545 = vadd.f32 0.0, %v1544
      %v1546 = vpop.f32.mrf.mxu0
      %v1547 = vadd.f32 0.0, %v1546
      %1548 = vmatmul.bf16.gmra.mxu0 %v1524
      %v1549 = vpop.f32.mrf.mxu0
      %v1550 = vadd.f32 0.0, %v1549
      %v1551 = vpop.f32.mrf.mxu0
      %v1552 = vadd.f32 0.0, %v1551
      %1553 = vmatmul.bf16.gmra.mxu0 %v1527
      %v1554 = vpop.f32.mrf.mxu0
      %v1555 = vadd.f32 0.0, %v1554
      %v1556 = vpop.f32.mrf.mxu0
      %v1557 = vadd.f32 0.0, %v1556
      %1558 = vmatmul.bf16.gmra.mxu0 %v1530
      %v1559 = vpop.f32.mrf.mxu0
      %v1560 = vadd.f32 0.0, %v1559
      %v1561 = vpop.f32.mrf.mxu0
      %v1562 = vadd.f32 0.0, %v1561
      %1563 = vmatmul.bf16.gmra.mxu0 %v1533
      %v1564 = vpop.f32.mrf.mxu0
      %v1565 = vadd.f32 0.0, %v1564
      %v1566 = vpop.f32.mrf.mxu0
      %v1567 = vadd.f32 0.0, %v1566
      %1568 = vdwg.mxu0
      %v1569 = vadd.f32 %v1411, %v1545
      %v1570 = vadd.f32 %v1412, %v1547
      %v1571 = vadd.f32 %v1413, %v1550
      %v1572 = vadd.f32 %v1414, %v1552
      %v1573 = vadd.f32 %v1415, %v1555
      %v1574 = vadd.f32 %v1416, %v1557
      %v1575 = vadd.f32 %v1417, %v1560
      %v1576 = vadd.f32 %v1418, %v1562
      %v1577 = vadd.f32 %v1419, %v1565
      %v1578 = vadd.f32 %v1420, %v1567
      %1579 = vst.msk [vmem:[#allocation2] sm:$0xff] %vm434, %v1569
      %1580 = vst.msk [vmem:[#allocation2 + $0x8] sm:$0xff] %vm434, %v1570
      %1581 = vst.msk [vmem:[#allocation2 + $0x10] sm:$0xff] %vm434, %v1571
      %1582 = vst.msk [vmem:[#allocation2 + $0x18] sm:$0xff] %vm434, %v1572
      %1583 = vst.msk [vmem:[#allocation2 + $0x20] sm:$0xff] %vm434, %v1573
      %1584 = vst.msk [vmem:[#allocation2 + $0x28] sm:$0xff] %vm434, %v1574
      %1585 = vst.msk [vmem:[#allocation2 + $0x30] sm:$0xff] %vm434, %v1575
      %1586 = vst.msk [vmem:[#allocation2 + $0x38] sm:$0xff] %vm434, %v1576
      %1587 = vst.msk [vmem:[#allocation2 + $0x40] sm:$0xff] %vm434, %v1577
      %1588 = vst.msk [vmem:[#allocation2 + $0x48] sm:$0xff] %vm434, %v1578
      %v1589 = vld [vmem:[%s273 + $0x8] sm:$0x8]
      %v1590 = vld [vmem:[%s273 + $0xc] sm:$0xf]
      %v1591 = vld [vmem:[%s273 + $0x10] sm:$0xf]
      %v1592 = vld [vmem:[%s273 + $0x14] sm:$0xf]
      %v1593 = vld [vmem:[%s273 + $0x18] sm:$0xf]
      %v1594 = vld [vmem:[%s273 + $0x1c] sm:$0xf]
      %v1595 = vld [vmem:[%s273 + $0x20] sm:$0xf]
      %v1596 = vld [vmem:[%s273 + $0x24] sm:$0xf]
      %v1597 = vld [vmem:[%s273 + $0x28] sm:$0xf]
      %v1598 = vld [vmem:[%s273 + $0x2c] sm:$0xf]
      %v1599 = vld [vmem:[%s273 + $0x30] sm:$0x7]
      %v1600 = vld [vmem:[#allocation2] sm:$0xff]
      %v1601 = vld [vmem:[#allocation2 + $0x8] sm:$0xff]
      %v1602 = vld [vmem:[#allocation2 + $0x10] sm:$0xff]
      %v1603 = vld [vmem:[#allocation2 + $0x18] sm:$0xff]
      %v1604 = vld [vmem:[#allocation2 + $0x20] sm:$0xff]
      %v1605 = vld [vmem:[#allocation2 + $0x28] sm:$0xff]
      %v1606 = vld [vmem:[#allocation2 + $0x30] sm:$0xff]
      %v1607 = vld [vmem:[#allocation2 + $0x38] sm:$0xff]
      %v1608 = vld [vmem:[#allocation2 + $0x40] sm:$0xff]
      %v1609 = vld [vmem:[#allocation2 + $0x48] sm:$0xff]
      %s1610 = scalar_lea.vmem %s281, 128
      %v1611 = vld [vmem:[%s1610] sm:$0xf]
      %v1612 = vld [vmem:[%s1610 + $0x4] sm:$0xf]
      %v1613 = vld [vmem:[%s1610 + $0x8] sm:$0xf]
      %v1614 = vld [vmem:[%s1610 + $0xc] sm:$0xf]
      %v1626 = vunpack.c.l.b16 %v1589
      %v1627 = vunpack.c.l.b16 %v1590
      %v1628 = vunpack.c.l.b16 %v1591
      %v1629 = vunpack.c.l.b16 %v1592
      %v1630 = vunpack.c.l.b16 %v1593
      %v1631 = vunpack.c.l.b16 %v1594
      %v1632 = vunpack.c.l.b16 %v1595
      %v1633 = vunpack.c.l.b16 %v1596
      %v1634 = vunpack.c.l.b16 %v1597
      %v1635 = vunpack.c.l.b16 %v1598
      %v1636 = vunpack.c.l.b16 %v1599
      %v1637 = vpack.c.b16 %v1627, %v1626
      %v1638 = vpack.c.b16 %v1629, %v1628
      %v1639 = vpack.c.b16 %v1631, %v1630
      %v1640 = vpack.c.b16 %v1633, %v1632
      %v1641 = vpack.c.b16 %v1635, %v1634
      %v1642 = vpack.c.b16 %v1636, %v1636
      %vm1643 = vcmask 1044480
      %v1644 = vrot.slane %v1637, 3
      %v1645 = vrot.slane %v1638, 3
      %v1646 = vsel %vm1643, %v1644, %v1645
      %v1647 = vrot.slane %v1639, 3
      %v1648 = vsel %vm1643, %v1645, %v1647
      %v1649 = vrot.slane %v1640, 3
      %v1650 = vsel %vm1643, %v1647, %v1649
      %v1651 = vrot.slane %v1641, 3
      %v1652 = vsel %vm1643, %v1649, %v1651
      %v1653 = vrot.slane %v1642, 3
      %v1654 = vsel %vm1643, %v1651, %v1653
      %v1659 = vunpack.c.l.b16 %v1611
      %v1660 = vunpack.c.l.b16 %v1612
      %v1661 = vunpack.c.l.b16 %v1613
      %v1662 = vunpack.c.l.b16 %v1614
      %v1663 = vpack.c.b16 %v1660, %v1659
      %v1664 = vpack.c.b16 %v1662, %v1661
      %v1668 = vsel %vm374, %v1646, 0
      %v1671 = vsel %vm374, %v1648, 0
      %v1674 = vsel %vm374, %v1650, 0
      %v1677 = vsel %vm374, %v1652, 0
      %v1680 = vsel %vm374, %v1654, 0
      %1682 = vmatpush.bf16.msra.mxu0 0
      %1683 = vmatpush.bf16.msra.mxu0 0
      %1684 = vmatpush.bf16.msra.mxu0 0
      %1685 = vmatpush.bf16.msra.mxu0 0
      %1686 = vmatpush.bf16.msra.mxu0 0
      %1687 = vmatpush.bf16.msra.mxu0 0
      %1688 = vmatpush.bf16.msra.mxu0 %v1664
      %1689 = vmatpush.bf16.msra.mxu0 %v1663
      %1690 = vmatmul.bf16.gmra.mxu0 %v1668
      %v1691 = vpop.f32.mrf.mxu0
      %v1692 = vadd.f32 0.0, %v1691
      %v1693 = vpop.f32.mrf.mxu0
      %v1694 = vadd.f32 0.0, %v1693
      %1695 = vmatmul.bf16.gmra.mxu0 %v1671
      %v1696 = vpop.f32.mrf.mxu0
      %v1697 = vadd.f32 0.0, %v1696
      %v1698 = vpop.f32.mrf.mxu0
      %v1699 = vadd.f32 0.0, %v1698
      %1700 = vmatmul.bf16.gmra.mxu0 %v1674
      %v1701 = vpop.f32.mrf.mxu0
      %v1702 = vadd.f32 0.0, %v1701
      %v1703 = vpop.f32.mrf.mxu0
      %v1704 = vadd.f32 0.0, %v1703
      %1705 = vmatmul.bf16.gmra.mxu0 %v1677
      %v1706 = vpop.f32.mrf.mxu0
      %v1707 = vadd.f32 0.0, %v1706
      %v1708 = vpop.f32.mrf.mxu0
      %v1709 = vadd.f32 0.0, %v1708
      %1710 = vmatmul.bf16.gmra.mxu0 %v1680
      %v1711 = vpop.f32.mrf.mxu0
      %v1712 = vadd.f32 0.0, %v1711
      %v1713 = vpop.f32.mrf.mxu0
      %v1714 = vadd.f32 0.0, %v1713
      %1715 = vdwg.mxu0
      %v1716 = vadd.f32 %v1600, %v1692
      %v1717 = vadd.f32 %v1601, %v1694
      %v1718 = vadd.f32 %v1602, %v1697
      %v1719 = vadd.f32 %v1603, %v1699
      %v1720 = vadd.f32 %v1604, %v1702
      %v1721 = vadd.f32 %v1605, %v1704
      %v1722 = vadd.f32 %v1606, %v1707
      %v1723 = vadd.f32 %v1607, %v1709
      %v1724 = vadd.f32 %v1608, %v1712
      %v1725 = vadd.f32 %v1609, %v1714
      %1726 = vst.msk [vmem:[#allocation2] sm:$0xff] %vm434, %v1716
      %1727 = vst.msk [vmem:[#allocation2 + $0x8] sm:$0xff] %vm434, %v1717
      %1728 = vst.msk [vmem:[#allocation2 + $0x10] sm:$0xff] %vm434, %v1718
      %1729 = vst.msk [vmem:[#allocation2 + $0x18] sm:$0xff] %vm434, %v1719
      %1730 = vst.msk [vmem:[#allocation2 + $0x20] sm:$0xff] %vm434, %v1720
      %1731 = vst.msk [vmem:[#allocation2 + $0x28] sm:$0xff] %vm434, %v1721
      %1732 = vst.msk [vmem:[#allocation2 + $0x30] sm:$0xff] %vm434, %v1722
      %1733 = vst.msk [vmem:[#allocation2 + $0x38] sm:$0xff] %vm434, %v1723
      %1734 = vst.msk [vmem:[#allocation2 + $0x40] sm:$0xff] %vm434, %v1724
      %1735 = vst.msk [vmem:[#allocation2 + $0x48] sm:$0xff] %vm434, %v1725
      // Predicated region
      $region41: #{discriminator_forward.4} parent=35 // pred_check
        %p1736 = pneg %p298
      $region42: #{discriminator_forward.4} parent=35 // pred_check_branch
        %1738 = sbr.rel (%p1736) target = $region44
      $region43: #{discriminator_forward.4} parent=35 // pred_region
        %v1739 = vld [vmem:[%s285] sm:$0x1]
        %v1741 = vperm.slane %v1739, 0
        %v1743 = vld [vmem:[%s288] sm:$0x1]
        %v1745 = vperm.slane %v1743, 0
        %v1747 = vld [vmem:[#allocation2] ss:$2 sm:$0xf]
        %v1748 = vmul.f32 %v1747, %v1741
        %v1749 = vadd.f32 %v1748, %v1745
        %s1750 = scalar_lea.vmem [#allocation2], 1
        %v1751 = vld [vmem:[%s1750] ss:$2 sm:$0xf]
        %v1752 = vmul.f32 %v1751, %v1741
        %v1753 = vadd.f32 %v1752, %v1745
        %s1754 = scalar_lea.vmem [#allocation2], 10
        %v1755 = vld [vmem:[%s1754] ss:$2 sm:$0xf]
        %v1756 = vmul.f32 %v1755, %v1741
        %v1757 = vadd.f32 %v1756, %v1745
        %s1758 = scalar_lea.vmem [#allocation2], 11
        %v1759 = vld [vmem:[%s1758] ss:$2 sm:$0xf]
        %v1760 = vmul.f32 %v1759, %v1741
        %v1761 = vadd.f32 %v1760, %v1745
        %v1762 = vmax.f32 %v1749, %v1753
        %v1763 = vmax.f32 %v1757, %v1761
        %v1764 = vmax.f32 %v1762, %v1763
        %v1765 = vmax.f32 %v1764, 0.0
        %v1766 = vpack.c.bf16 %v1765, %v1765
        %vm1767 = vcmask 123904
        %1768 = vst.msk [vmem:[%s296] sm:$0x3] %vm1767, %v1766
        %s1769 = scalar_lea.vmem [#allocation2], 20
        %v1770 = vld [vmem:[%s1769] ss:$2 sm:$0xf]
        %v1771 = vmul.f32 %v1770, %v1741
        %v1772 = vadd.f32 %v1771, %v1745
        %s1773 = scalar_lea.vmem [#allocation2], 21
        %v1774 = vld [vmem:[%s1773] ss:$2 sm:$0xf]
        %v1775 = vmul.f32 %v1774, %v1741
        %v1776 = vadd.f32 %v1775, %v1745
        %s1777 = scalar_lea.vmem [#allocation2], 30
        %v1778 = vld [vmem:[%s1777] ss:$2 sm:$0xf]
        %v1779 = vmul.f32 %v1778, %v1741
        %v1780 = vadd.f32 %v1779, %v1745
        %s1781 = scalar_lea.vmem [#allocation2], 31
        %v1782 = vld [vmem:[%s1781] ss:$2 sm:$0xf]
        %v1783 = vmul.f32 %v1782, %v1741
        %v1784 = vadd.f32 %v1783, %v1745
        %v1785 = vmax.f32 %v1772, %v1776
        %v1786 = vmax.f32 %v1780, %v1784
        %v1787 = vmax.f32 %v1785, %v1786
        %v1788 = vmax.f32 %v1787, 0.0
        %v1789 = vpack.c.bf16 %v1788, %v1788
        %s1790 = scalar_lea.vmem %s296, 2
        %1791 = vst.msk [vmem:[%s1790] sm:$0x3] %vm1767, %v1789
        %s1792 = scalar_lea.vmem [#allocation2], 40
        %v1793 = vld [vmem:[%s1792] ss:$2 sm:$0xf]
        %v1794 = vmul.f32 %v1793, %v1741
        %v1795 = vadd.f32 %v1794, %v1745
        %s1796 = scalar_lea.vmem [#allocation2], 41
        %v1797 = vld [vmem:[%s1796] ss:$2 sm:$0xf]
        %v1798 = vmul.f32 %v1797, %v1741
        %v1799 = vadd.f32 %v1798, %v1745
        %s1800 = scalar_lea.vmem [#allocation2], 50
        %v1801 = vld [vmem:[%s1800] ss:$2 sm:$0xf]
        %v1802 = vmul.f32 %v1801, %v1741
        %v1803 = vadd.f32 %v1802, %v1745
        %s1804 = scalar_lea.vmem [#allocation2], 51
        %v1805 = vld [vmem:[%s1804] ss:$2 sm:$0xf]
        %v1806 = vmul.f32 %v1805, %v1741
        %v1807 = vadd.f32 %v1806, %v1745
        %v1808 = vmax.f32 %v1795, %v1799
        %v1809 = vmax.f32 %v1803, %v1807
        %v1810 = vmax.f32 %v1808, %v1809
        %v1811 = vmax.f32 %v1810, 0.0
        %v1812 = vpack.c.bf16 %v1811, %v1811
        %s1813 = scalar_lea.vmem %s296, 4
        %1814 = vst.msk [vmem:[%s1813] sm:$0x3] %vm1767, %v1812
        %s1815 = scalar_lea.vmem [#allocation2], 60
        %v1816 = vld [vmem:[%s1815] ss:$2 sm:$0xf]
        %v1817 = vmul.f32 %v1816, %v1741
        %v1818 = vadd.f32 %v1817, %v1745
        %s1819 = scalar_lea.vmem [#allocation2], 61
        %v1820 = vld [vmem:[%s1819] ss:$2 sm:$0xf]
        %v1821 = vmul.f32 %v1820, %v1741
        %v1822 = vadd.f32 %v1821, %v1745
        %s1823 = scalar_lea.vmem [#allocation2], 70
        %v1824 = vld [vmem:[%s1823] ss:$2 sm:$0xf]
        %v1825 = vmul.f32 %v1824, %v1741
        %v1826 = vadd.f32 %v1825, %v1745
        %s1827 = scalar_lea.vmem [#allocation2], 71
        %v1828 = vld [vmem:[%s1827] ss:$2 sm:$0xf]
        %v1829 = vmul.f32 %v1828, %v1741
        %v1830 = vadd.f32 %v1829, %v1745
        %v1831 = vmax.f32 %v1818, %v1822
        %v1832 = vmax.f32 %v1826, %v1830
        %v1833 = vmax.f32 %v1831, %v1832
        %v1834 = vmax.f32 %v1833, 0.0
        %v1835 = vpack.c.bf16 %v1834, %v1834
        %s1836 = scalar_lea.vmem %s296, 6
        %1837 = vst.msk [vmem:[%s1836] sm:$0x3] %vm1767, %v1835
      $region44: #{discriminator_forward.4} parent=35 // pred_fallthru
        _
      %p1838 = scmp.lt.s32.totalorder %s20, 1
      %s1839 = scalar_select %p1838, %s20, 1
      %p1840 = scmp.lt.s32.totalorder %s21, 0
      %s1841 = scalar_select %p1840, %s21, 0
      %s1842 = smul.addr %s1839, 4
      %s1843 = sadd.s32 %s1841, %s1842
      %s1844 = smul.addr %s1843, 2
      %s1845 = scalar_lea.vmem %s4, %s1844
      // Predicated region
      $region45: #{discriminator_forward.4} parent=35 // pred_check
        %p1846 = pneg %p162
      $region46: #{discriminator_forward.4} parent=35 // pred_check_branch
        %1848 = sbr.rel (%p1846) target = $region48
      $region47: #{discriminator_forward.4} parent=35 // pred_region
        _
      $region48: #{discriminator_forward.4} parent=35 // pred_fallthru
        _
    $region36: #{discriminator_forward.4} parent=5 // pred_fallthru
      _
    %p1849 = scmp.le.s32.totalorder 2, %s10
    // Predicated region
    $region49: #{discriminator_forward.4} parent=5 // pred_check
      %p1850 = pneg %p1849
    $region50: #{discriminator_forward.4} parent=5 // pred_check_branch
      %1852 = sbr.rel (%p1850) target = $region52
    $region51: #{discriminator_forward.4} parent=5 // pred_region
      %s1853 = ssub.s32 %s10, 2
      // Predicated region
      $region53: #{discriminator_forward.4} parent=51 // pred_check
        %p1854 = pneg %p168
      $region54: #{discriminator_forward.4} parent=51 // pred_check_branch
        %1856 = sbr.rel (%p1854) target = $region56
      $region55: #{discriminator_forward.4} parent=51 // pred_region
        %p1857 = scmp.lt.s32.totalorder %s23, 1
        %s1858 = scalar_select %p1857, %s23, 1
        %p1859 = scmp.lt.s32.totalorder %s24, 0
        %s1860 = scalar_select %p1859, %s24, 0
        %s1861 = smul.addr %s1858, 4
        %s1862 = sadd.s32 %s1860, %s1861
        %s1863 = smul.addr %s1862, 2
        %s1864 = scalar_lea.vmem %s4, %s1863
      $region56: #{discriminator_forward.4} parent=51 // pred_fallthru
        _
    $region52: #{discriminator_forward.4} parent=5 // pred_fallthru
      _
  $region6: #{discriminator_forward.4} parent=0 // loop_footer
    %s14 = sadd.s32 1, %s10
  $region7: #{discriminator_forward.4} parent=0 // loop_footer_branch
    %9 = sbr.rel target = $region3
  $region8: #{discriminator_forward.4} parent=0 // loop_exit
    _

// kernel: discriminator_forward.3
$region0: #{discriminator_forward.3}
  #allocation0 [shape = 'u32[]', space=smem, size = 0x4, offset = 0x4, fixed_abs, tag = 'smem constant byte address 0x4 - core index']
  #allocation1 [shape = 'u32[72,128]{1,0:T(1,128)}', space=vmem, size = 0x9000, scoped, tag = 'internal scratch']
  #allocation2 [shape = 'f32[288,32]{1,0:T(8,128)}', space=vmem, size = 0x24000, scoped, tag = 'scratch operand']
  %s0 = inlined_call_operand.vmem [shape: bf16[2,342,16], index: 0, kind: input, shape index: {}]
  %s1 = inlined_call_operand.vmem [shape: bf16[9,16,32], index: 1, kind: input, shape index: {}]
  %s2 = inlined_call_operand.vmem [shape: f32[1,32], index: 2, kind: input, shape index: {}]
  %s3 = inlined_call_operand.vmem [shape: f32[1,32], index: 3, kind: input, shape index: {}]
  %s4 = inlined_call_operand.vmem [shape: bf16[2,8,8,32], index: 4, kind: output, shape index: {}]
  %s5 = sld [smem:[#allocation0]]
  $region57: #{discriminator_forward.3} parent=0
    _
  %s7 = ssub.s32 1, %s5
  %s8 = scalar_select 0, %s7, %s5
  loop: start=0, step=1, limit=4
  $region2: #{discriminator_forward.3} parent=0 // loop_pre_header
    _
  $region3: #{discriminator_forward.3} parent=0 // loop_header
    %s10 = sphi 0, %s14
    %p11 = scmp.ge.s32.totalorder %s10, 4
    %s17 = sphi 0, %s36
    %s18 = sphi 0, %s32
    %s19 = sphi 0, %s28
    %s20 = sphi 0, %s17
    %s21 = sphi 0, %s18
    %s22 = sphi 0, %s19
    %s23 = sphi 0, %s20
    %s24 = sphi 0, %s21
    %s25 = sphi 0, %s22
    %s41 = sphi 0, %s43
    %s44 = sphi 0, %s41
    %s45 = sphi 0, %s44
    %s61 = sphi 0, %s45
    %s69 = sphi 0, %s71
    %s72 = sphi 0, %s69
    %s73 = sphi 0, %s72
    %s89 = sphi 0, %s73
    %s95 = sphi 0, %s97
    %s98 = sphi 0, %s95
    %s99 = sphi 0, %s98
    %s115 = sphi 0, %s99
    %s121 = sphi 0, %s123
    %s124 = sphi 0, %s121
    %s125 = sphi 0, %s124
    %s141 = sphi 0, %s125
    %s149 = sphi 0, %s151
    %s152 = sphi 0, %s149
    %s153 = sphi 0, %s152
    %s169 = sphi 0, %s153
  $region4: #{discriminator_forward.3} parent=0 // loop_header_branch
    %13 = sbr.rel (%p11) target = $region8
  $region5: #{discriminator_forward.3} parent=0 // loop_body
    %s15 = ssub.s32 %s10, 1
    %s16 = ssub.s32 %s10, 2
    %s26 = sadd.s32 1, %s19
    %p27 = scmp.ge.s32.totalorder %s26, 1
    %s28 = scalar_select %p27, 0, %s26
    %s29 = sadd.s32 1, %s18
    %s30 = scalar_select %p27, %s29, %s18
    %p31 = scmp.ge.s32.totalorder %s30, 1
    %s32 = scalar_select %p31, 0, %s30
    %s33 = sadd.s32 1, %s17
    %s34 = scalar_select %p31, %s33, %s17
    %p35 = scmp.ge.s32.totalorder %s34, 2
    %s36 = scalar_select %p35, 0, %s34
    %s37 = ssub.s32 %s17, %s36
    %s38 = ssub.s32 %s19, %s28
    %s39 = sor.u32 %s37, %s38
    %p40 = scmp.eq.s32.totalorder %s39, 0
    %s42 = sadd.s32 %s41, 1
    %s43 = scalar_select %p40, %s41, %s42
    %p46 = pneg %p40
    %p47 = scmp.eq.s32.totalorder %s10, 1
    %p48 = por %p46, %p47
    %p49 = scmp.ne.s32.totalorder %s41, %s44
    %p50 = scmp.eq.s32.totalorder %s10, 0
    %p51 = por %p49, %p50
    %p52 = scmp.ne.s32.totalorder %s41, %s44
    %p53 = scmp.eq.s32.totalorder %s15, 1
    %p54 = por %p52, %p53
    %p55 = scmp.ne.s32.totalorder %s44, %s45
    %p56 = scmp.eq.s32.totalorder %s15, 0
    %p57 = por %p55, %p56
    %p58 = scmp.ne.s32.totalorder %s44, %s45
    %p59 = scmp.eq.s32.totalorder %s16, 1
    %p60 = por %p58, %p59
    %p62 = scmp.ne.s32.totalorder %s45, %s61
    %p63 = scmp.eq.s32.totalorder %s16, 0
    %p64 = por %p62, %p63
    %s65 = ssub.s32 %s19, %s28
    %s66 = ssub.s32 %s18, %s32
    %s67 = sor.u32 %s65, %s66
    %p68 = scmp.eq.s32.totalorder %s67, 0
    %s70 = sadd.s32 %s69, 1
    %s71 = scalar_select %p68, %s69, %s70
    %p74 = pneg %p68
    %p75 = scmp.eq.s32.totalorder %s10, 1
    %p76 = por %p74, %p75
    %p77 = scmp.ne.s32.totalorder %s69, %s72
    %p78 = scmp.eq.s32.totalorder %s10, 0
    %p79 = por %p77, %p78
    %p80 = scmp.ne.s32.totalorder %s69, %s72
    %p81 = scmp.eq.s32.totalorder %s15, 1
    %p82 = por %p80, %p81
    %p83 = scmp.ne.s32.totalorder %s72, %s73
    %p84 = scmp.eq.s32.totalorder %s15, 0
    %p85 = por %p83, %p84
    %p86 = scmp.ne.s32.totalorder %s72, %s73
    %p87 = scmp.eq.s32.totalorder %s16, 1
    %p88 = por %p86, %p87
    %p90 = scmp.ne.s32.totalorder %s73, %s89
    %p91 = scmp.eq.s32.totalorder %s16, 0
    %p92 = por %p90, %p91
    %s93 = ssub.s32 %s18, %s32
    %p94 = scmp.eq.s32.totalorder %s93, 0
    %s96 = sadd.s32 %s95, 1
    %s97 = scalar_select %p94, %s95, %s96
    %p100 = pneg %p94
    %p101 = scmp.eq.s32.totalorder %s10, 1
    %p102 = por %p100, %p101
    %p103 = scmp.ne.s32.totalorder %s95, %s98
    %p104 = scmp.eq.s32.totalorder %s10, 0
    %p105 = por %p103, %p104
    %p106 = scmp.ne.s32.totalorder %s95, %s98
    %p107 = scmp.eq.s32.totalorder %s15, 1
    %p108 = por %p106, %p107
    %p109 = scmp.ne.s32.totalorder %s98, %s99
    %p110 = scmp.eq.s32.totalorder %s15, 0
    %p111 = por %p109, %p110
    %p112 = scmp.ne.s32.totalorder %s98, %s99
    %p113 = scmp.eq.s32.totalorder %s16, 1
    %p114 = por %p112, %p113
    %p116 = scmp.ne.s32.totalorder %s99, %s115
    %p117 = scmp.eq.s32.totalorder %s16, 0
    %p118 = por %p116, %p117
    %s119 = ssub.s32 %s18, %s32
    %p120 = scmp.eq.s32.totalorder %s119, 0
    %s122 = sadd.s32 %s121, 1
    %s123 = scalar_select %p120, %s121, %s122
    %p126 = pneg %p120
    %p127 = scmp.eq.s32.totalorder %s10, 1
    %p128 = por %p126, %p127
    %p129 = scmp.ne.s32.totalorder %s121, %s124
    %p130 = scmp.eq.s32.totalorder %s10, 0
    %p131 = por %p129, %p130
    %p132 = scmp.ne.s32.totalorder %s121, %s124
    %p133 = scmp.eq.s32.totalorder %s15, 1
    %p134 = por %p132, %p133
    %p135 = scmp.ne.s32.totalorder %s124, %s125
    %p136 = scmp.eq.s32.totalorder %s15, 0
    %p137 = por %p135, %p136
    %p138 = scmp.ne.s32.totalorder %s124, %s125
    %p139 = scmp.eq.s32.totalorder %s16, 1
    %p140 = por %p138, %p139
    %p142 = scmp.ne.s32.totalorder %s125, %s141
    %p143 = scmp.eq.s32.totalorder %s16, 0
    %p144 = por %p142, %p143
    %s145 = ssub.s32 %s17, %s36
    %s146 = ssub.s32 %s18, %s32
    %s147 = sor.u32 %s145, %s146
    %p148 = scmp.eq.s32.totalorder %s147, 0
    %s150 = sadd.s32 %s149, 1
    %s151 = scalar_select %p148, %s149, %s150
    %p154 = pneg %p148
    %p155 = scmp.eq.s32.totalorder %s10, 1
    %p156 = por %p154, %p155
    %p157 = scmp.ne.s32.totalorder %s149, %s152
    %p158 = scmp.eq.s32.totalorder %s10, 0
    %p159 = por %p157, %p158
    %p160 = scmp.ne.s32.totalorder %s149, %s152
    %p161 = scmp.eq.s32.totalorder %s15, 1
    %p162 = por %p160, %p161
    %p163 = scmp.ne.s32.totalorder %s152, %s153
    %p164 = scmp.eq.s32.totalorder %s15, 0
    %p165 = por %p163, %p164
    %p166 = scmp.ne.s32.totalorder %s152, %s153
    %p167 = scmp.eq.s32.totalorder %s16, 1
    %p168 = por %p166, %p167
    %p170 = scmp.ne.s32.totalorder %s153, %s169
    %p171 = scmp.eq.s32.totalorder %s16, 0
    %p172 = por %p170, %p171
    %p173 = scmp.le.s32.totalorder 1, %s10
    %p174 = scmp.lt.s32.totalorder %s10, 3
    %p175 = pnand %p173, %p174
    %p176 = pneg %p175
    // Predicated region
    $region9: #{discriminator_forward.3} parent=5 // pred_check
      _
    $region10: #{discriminator_forward.3} parent=5 // pred_check_branch
      %178 = sbr.rel (%p175) target = $region12
    $region11: #{discriminator_forward.3} parent=5 // pred_region
      %s179 = ssub.s32 %s10, 1
      // Predicated region
      $region13: #{discriminator_forward.3} parent=11 // pred_check
        %p180 = pneg %p85
      $region14: #{discriminator_forward.3} parent=11 // pred_check_branch
        %182 = sbr.rel (%p180) target = $region16
      $region15: #{discriminator_forward.3} parent=11 // pred_region
        %s183 = smul.u32 2, %s22
        %p184 = scmp.lt.s32.totalorder %s183, 1
        %s185 = scalar_select %p184, %s183, 1
        %p186 = scmp.lt.s32.totalorder %s21, 0
        %s187 = scalar_select %p186, %s21, 0
        %s188 = sadd.s32 %s187, %s185
        %s189 = smul.addr %s188, 4
        %s190 = scalar_lea.vmem %s1, %s189
        %s191 = smul.u32 2, %s22
      $region16: #{discriminator_forward.3} parent=11 // pred_fallthru
        _
      // Predicated region
      $region17: #{discriminator_forward.3} parent=11 // pred_check
        %p192 = pneg %p111
      $region18: #{discriminator_forward.3} parent=11 // pred_check_branch
        %194 = sbr.rel (%p192) target = $region20
      $region19: #{discriminator_forward.3} parent=11 // pred_region
        %p195 = scmp.lt.s32.totalorder %s21, 0
        %s196 = scalar_select %p195, %s21, 0
        %s197 = scalar_lea.vmem %s2, %s196
      $region20: #{discriminator_forward.3} parent=11 // pred_fallthru
        _
      // Predicated region
      $region21: #{discriminator_forward.3} parent=11 // pred_check
        %p198 = pneg %p137
      $region22: #{discriminator_forward.3} parent=11 // pred_check_branch
        %200 = sbr.rel (%p198) target = $region24
      $region23: #{discriminator_forward.3} parent=11 // pred_region
        %p201 = scmp.lt.s32.totalorder %s21, 0
        %s202 = scalar_select %p201, %s21, 0
        %s203 = scalar_lea.vmem %s3, %s202
      $region24: #{discriminator_forward.3} parent=11 // pred_fallthru
        _
    $region12: #{discriminator_forward.3} parent=5 // pred_fallthru
      _
    %p204 = scmp.lt.s32.totalorder %s10, 2
    // Predicated region
    $region25: #{discriminator_forward.3} parent=5 // pred_check
      %p205 = pneg %p204
    $region26: #{discriminator_forward.3} parent=5 // pred_check_branch
      %207 = sbr.rel (%p205) target = $region28
    $region27: #{discriminator_forward.3} parent=5 // pred_region
      // Predicated region
      $region29: #{discriminator_forward.3} parent=27 // pred_check
        %p208 = pneg %p51
      $region30: #{discriminator_forward.3} parent=27 // pred_check_branch
        %210 = sbr.rel (%p208) target = $region32
      $region31: #{discriminator_forward.3} parent=27 // pred_region
        %p211 = scmp.lt.s32.totalorder %s17, 1
        %s212 = scalar_select %p211, %s17, 1
        %p213 = scmp.lt.s32.totalorder %s19, 0
        %s214 = scalar_select %p213, %s19, 0
        %s215 = smul.addr %s212, 43
        %s216 = sadd.s32 %s214, %s215
        %s217 = smul.addr %s216, 4
        %s218 = scalar_lea.vmem %s0, %s217
      $region32: #{discriminator_forward.3} parent=27 // pred_fallthru
        _
    $region28: #{discriminator_forward.3} parent=5 // pred_fallthru
      _
    %p219 = scmp.le.s32.totalorder 1, %s10
    %p220 = scmp.lt.s32.totalorder %s10, 3
    %p221 = pnand %p219, %p220
    %p222 = pneg %p221
    // Predicated region
    $region33: #{discriminator_forward.3} parent=5 // pred_check
      _
    $region34: #{discriminator_forward.3} parent=5 // pred_check_branch
      %224 = sbr.rel (%p221) target = $region36
    $region35: #{discriminator_forward.3} parent=5 // pred_region
      %s225 = ssub.s32 %s10, 1
      %p226 = scmp.lt.s32.totalorder %s20, 1
      %s227 = scalar_select %p226, %s20, 1
      %p228 = scmp.lt.s32.totalorder %s22, 0
      %s229 = scalar_select %p228, %s22, 0
      %s230 = smul.addr %s227, 43
      %s231 = sadd.s32 %s229, %s230
      %s232 = smul.addr %s231, 4
      %s233 = scalar_lea.vmem %s0, %s232
      %p234 = pneg %p57
      %p235 = pneg %p54
      %s236 = smul.u32 2, %s22
      %p237 = scmp.lt.s32.totalorder %s236, 1
      %s238 = scalar_select %p237, %s236, 1
      %p239 = scmp.lt.s32.totalorder %s21, 0
      %s240 = scalar_select %p239, %s21, 0
      %s241 = sadd.s32 %s240, %s238
      %s242 = smul.addr %s241, 4
      %s243 = scalar_lea.vmem %s1, %s242
      %p244 = pneg %p85
      %p245 = pneg %p82
      %p246 = scmp.lt.s32.totalorder %s21, 0
      %s247 = scalar_select %p246, %s21, 0
      %s248 = scalar_lea.vmem %s2, %s247
      %p249 = pneg %p111
      %p250 = pneg %p108
      %p251 = scmp.lt.s32.totalorder %s21, 0
      %s252 = scalar_select %p251, %s21, 0
      %s253 = scalar_lea.vmem %s3, %s252
      %p254 = pneg %p137
      %p255 = pneg %p134
      %p256 = pneg %p165
      %p257 = pneg %p162
      %p258 = scmp.lt.s32.totalorder %s20, 1
      %s259 = scalar_select %p258, %s20, 1
      %p260 = scmp.lt.s32.totalorder %s21, 0
      %s261 = scalar_select %p260, %s21, 0
      %s262 = smul.addr %s259, 8
      %s263 = sadd.s32 %s261, %s262
      %s264 = smul.addr %s263, 4
      %s265 = scalar_lea.vmem %s4, %s264
      %p266 = scmp.lt.s32.totalorder %s20, 1
      %s267 = scalar_select %p266, %s20, 1
      %p268 = scmp.lt.s32.totalorder %s22, 0
      %s269 = scalar_select %p268, %s22, 0
      %s270 = smul.addr %s267, 43
      %s271 = sadd.s32 %s269, %s270
      %s272 = smul.addr %s271, 4
      %s273 = scalar_lea.vmem %s0, %s272
      %s274 = smul.u32 2, %s22
      %p275 = scmp.lt.s32.totalorder %s274, 1
      %s276 = scalar_select %p275, %s274, 1
      %p277 = scmp.lt.s32.totalorder %s21, 0
      %s278 = scalar_select %p277, %s21, 0
      %s279 = sadd.s32 %s278, %s276
      %s280 = smul.addr %s279, 4
      %s281 = scalar_lea.vmem %s1, %s280
      %s282 = smul.u32 2, %s22
      %p283 = scmp.lt.s32.totalorder %s21, 0
      %s284 = scalar_select %p283, %s21, 0
      %s285 = scalar_lea.vmem %s2, %s284
      %p286 = scmp.lt.s32.totalorder %s21, 0
      %s287 = scalar_select %p286, %s21, 0
      %s288 = scalar_lea.vmem %s3, %s287
      %p289 = scmp.lt.s32.totalorder %s20, 1
      %s290 = scalar_select %p289, %s20, 1
      %p291 = scmp.lt.s32.totalorder %s21, 0
      %s292 = scalar_select %p291, %s21, 0
      %s293 = smul.addr %s290, 8
      %s294 = sadd.s32 %s292, %s293
      %s295 = smul.addr %s294, 4
      %s296 = scalar_lea.vmem %s4, %s295
      %p298 = scmp.eq.s32.totalorder %s22, 0
      // Predicated region
      $region37: #{discriminator_forward.3} parent=35 // pred_check
        %p299 = pneg %p298
      $region38: #{discriminator_forward.3} parent=35 // pred_check_branch
        %301 = sbr.rel (%p299) target = $region40
      $region39: #{discriminator_forward.3} parent=35 // pred_region
        %vm302 = vcmask 261120
        %303 = vst.msk [vmem:[#allocation2] sm:$0xff] %vm302, 0.0
        %304 = vst.msk [vmem:[#allocation2 + $0x8] sm:$0xff] %vm302, 0.0
        %305 = vst.msk [vmem:[#allocation2 + $0x10] sm:$0xff] %vm302, 0.0
        %306 = vst.msk [vmem:[#allocation2 + $0x18] sm:$0xff] %vm302, 0.0
        %307 = vst.msk [vmem:[#allocation2 + $0x20] sm:$0xff] %vm302, 0.0
        %308 = vst.msk [vmem:[#allocation2 + $0x28] sm:$0xff] %vm302, 0.0
        %309 = vst.msk [vmem:[#allocation2 + $0x30] sm:$0xff] %vm302, 0.0
        %310 = vst.msk [vmem:[#allocation2 + $0x38] sm:$0xff] %vm302, 0.0
        %311 = vst.msk [vmem:[#allocation2 + $0x40] sm:$0xff] %vm302, 0.0
        %312 = vst.msk [vmem:[#allocation2 + $0x48] sm:$0xff] %vm302, 0.0
        %313 = vst.msk [vmem:[#allocation2 + $0x50] sm:$0xff] %vm302, 0.0
        %314 = vst.msk [vmem:[#allocation2 + $0x58] sm:$0xff] %vm302, 0.0
        %315 = vst.msk [vmem:[#allocation2 + $0x60] sm:$0xff] %vm302, 0.0
        %316 = vst.msk [vmem:[#allocation2 + $0x68] sm:$0xff] %vm302, 0.0
        %317 = vst.msk [vmem:[#allocation2 + $0x70] sm:$0xff] %vm302, 0.0
        %318 = vst.msk [vmem:[#allocation2 + $0x78] sm:$0xff] %vm302, 0.0
        %319 = vst.msk [vmem:[#allocation2 + $0x80] sm:$0xff] %vm302, 0.0
        %320 = vst.msk [vmem:[#allocation2 + $0x88] sm:$0xff] %vm302, 0.0
        %321 = vst.msk [vmem:[#allocation2 + $0x90] sm:$0xff] %vm302, 0.0
        %322 = vst.msk [vmem:[#allocation2 + $0x98] sm:$0xff] %vm302, 0.0
        %323 = vst.msk [vmem:[#allocation2 + $0xa0] sm:$0xff] %vm302, 0.0
        %324 = vst.msk [vmem:[#allocation2 + $0xa8] sm:$0xff] %vm302, 0.0
        %325 = vst.msk [vmem:[#allocation2 + $0xb0] sm:$0xff] %vm302, 0.0
        %326 = vst.msk [vmem:[#allocation2 + $0xb8] sm:$0xff] %vm302, 0.0
        %327 = vst.msk [vmem:[#allocation2 + $0xc0] sm:$0xff] %vm302, 0.0
        %328 = vst.msk [vmem:[#allocation2 + $0xc8] sm:$0xff] %vm302, 0.0
        %329 = vst.msk [vmem:[#allocation2 + $0xd0] sm:$0xff] %vm302, 0.0
        %330 = vst.msk [vmem:[#allocation2 + $0xd8] sm:$0xff] %vm302, 0.0
        %331 = vst.msk [vmem:[#allocation2 + $0xe0] sm:$0xff] %vm302, 0.0
        %332 = vst.msk [vmem:[#allocation2 + $0xe8] sm:$0xff] %vm302, 0.0
        %333 = vst.msk [vmem:[#allocation2 + $0xf0] sm:$0xff] %vm302, 0.0
        %334 = vst.msk [vmem:[#allocation2 + $0xf8] sm:$0xff] %vm302, 0.0
        %335 = vst.msk [vmem:[#allocation2 + $0x100] sm:$0xff] %vm302, 0.0
        %336 = vst.msk [vmem:[#allocation2 + $0x108] sm:$0xff] %vm302, 0.0
        %337 = vst.msk [vmem:[#allocation2 + $0x110] sm:$0xff] %vm302, 0.0
        %338 = vst.msk [vmem:[#allocation2 + $0x118] sm:$0xff] %vm302, 0.0
      $region40: #{discriminator_forward.3} parent=35 // pred_fallthru
        _
      %v339 = vld [vmem:[%s273] sm:$0xf]
      %v340 = vld [vmem:[%s273 + $0x4] sm:$0xf]
      %v341 = vld [vmem:[%s273 + $0x8] sm:$0xf]
      %v342 = vld [vmem:[%s273 + $0xc] sm:$0xf]
      %v343 = vld [vmem:[%s273 + $0x10] sm:$0xf]
      %v344 = vld [vmem:[%s273 + $0x14] sm:$0xf]
      %v345 = vld [vmem:[%s273 + $0x18] sm:$0xf]
      %v346 = vld [vmem:[%s273 + $0x1c] sm:$0xf]
      %v347 = vld [vmem:[%s273 + $0x20] sm:$0xf]
      %v348 = vld [vmem:[%s273 + $0x24] sm:$0xf]
      %v349 = vld [vmem:[%s273 + $0x28] sm:$0xf]
      %v350 = vld [vmem:[%s273 + $0x2c] sm:$0xf]
      %v351 = vld [vmem:[%s273 + $0x30] sm:$0xf]
      %v352 = vld [vmem:[%s273 + $0x34] sm:$0xf]
      %v353 = vld [vmem:[%s273 + $0x38] sm:$0xf]
      %v354 = vld [vmem:[%s273 + $0x3c] sm:$0xf]
      %v355 = vld [vmem:[%s273 + $0x40] sm:$0xf]
      %v356 = vld [vmem:[%s273 + $0x44] sm:$0xf]
      %v357 = vld [vmem:[%s273 + $0x48] sm:$0xf]
      %v358 = vld [vmem:[%s273 + $0x4c] sm:$0xf]
      %v359 = vld [vmem:[%s273 + $0x50] sm:$0xf]
      %v360 = vld [vmem:[%s273 + $0x54] sm:$0xf]
      %v361 = vld [vmem:[%s273 + $0x58] sm:$0xf]
      %v362 = vld [vmem:[%s273 + $0x5c] sm:$0xf]
      %v363 = vld [vmem:[%s273 + $0x60] sm:$0xf]
      %v364 = vld [vmem:[%s273 + $0x64] sm:$0xf]
      %v365 = vld [vmem:[%s273 + $0x68] sm:$0xf]
      %v366 = vld [vmem:[%s273 + $0x6c] sm:$0xf]
      %v367 = vld [vmem:[%s273 + $0x70] sm:$0xf]
      %v368 = vld [vmem:[%s273 + $0x74] sm:$0xf]
      %v369 = vld [vmem:[%s273 + $0x78] sm:$0xf]
      %v370 = vld [vmem:[%s273 + $0x7c] sm:$0xf]
      %v371 = vld [vmem:[%s273 + $0x80] sm:$0xf]
      %v372 = vld [vmem:[%s273 + $0x84] sm:$0xf]
      %v373 = vld [vmem:[%s273 + $0x88] sm:$0xf]
      %v374 = vld [vmem:[%s273 + $0x8c] sm:$0xf]
      %v375 = vld [vmem:[#allocation2] sm:$0xff]
      %v376 = vld [vmem:[#allocation2 + $0x8] sm:$0xff]
      %v377 = vld [vmem:[#allocation2 + $0x10] sm:$0xff]
      %v378 = vld [vmem:[#allocation2 + $0x18] sm:$0xff]
      %v379 = vld [vmem:[#allocation2 + $0x20] sm:$0xff]
      %v380 = vld [vmem:[#allocation2 + $0x28] sm:$0xff]
      %v381 = vld [vmem:[#allocation2 + $0x30] sm:$0xff]
      %v382 = vld [vmem:[#allocation2 + $0x38] sm:$0xff]
      %v383 = vld [vmem:[#allocation2 + $0x40] sm:$0xff]
      %v384 = vld [vmem:[#allocation2 + $0x48] sm:$0xff]
      %v385 = vld [vmem:[#allocation2 + $0x50] sm:$0xff]
      %v386 = vld [vmem:[#allocation2 + $0x58] sm:$0xff]
      %v387 = vld [vmem:[#allocation2 + $0x60] sm:$0xff]
      %v388 = vld [vmem:[#allocation2 + $0x68] sm:$0xff]
      %v389 = vld [vmem:[#allocation2 + $0x70] sm:$0xff]
      %v390 = vld [vmem:[#allocation2 + $0x78] sm:$0xff]
      %v391 = vld [vmem:[#allocation2 + $0x80] sm:$0xff]
      %v392 = vld [vmem:[#allocation2 + $0x88] sm:$0xff]
      %v393 = vld [vmem:[#allocation2 + $0x90] sm:$0xff]
      %v394 = vld [vmem:[#allocation2 + $0x98] sm:$0xff]
      %v395 = vld [vmem:[#allocation2 + $0xa0] sm:$0xff]
      %v396 = vld [vmem:[#allocation2 + $0xa8] sm:$0xff]
      %v397 = vld [vmem:[#allocation2 + $0xb0] sm:$0xff]
      %v398 = vld [vmem:[#allocation2 + $0xb8] sm:$0xff]
      %v399 = vld [vmem:[#allocation2 + $0xc0] sm:$0xff]
      %v400 = vld [vmem:[#allocation2 + $0xc8] sm:$0xff]
      %v401 = vld [vmem:[#allocation2 + $0xd0] sm:$0xff]
      %v402 = vld [vmem:[#allocation2 + $0xd8] sm:$0xff]
      %v403 = vld [vmem:[#allocation2 + $0xe0] sm:$0xff]
      %v404 = vld [vmem:[#allocation2 + $0xe8] sm:$0xff]
      %v405 = vld [vmem:[#allocation2 + $0xf0] sm:$0xff]
      %v406 = vld [vmem:[#allocation2 + $0xf8] sm:$0xff]
      %v407 = vld [vmem:[#allocation2 + $0x100] sm:$0xff]
      %v408 = vld [vmem:[#allocation2 + $0x108] sm:$0xff]
      %v409 = vld [vmem:[#allocation2 + $0x110] sm:$0xff]
      %v410 = vld [vmem:[#allocation2 + $0x118] sm:$0xff]
      %v411 = vld [vmem:[%s281] sm:$0xf]
      %v412 = vld [vmem:[%s281 + $0x4] sm:$0xf]
      %v449 = vunpack.c.l.b16 %v339
      %v450 = vunpack.c.l.b16 %v340
      %v451 = vunpack.c.l.b16 %v341
      %v452 = vunpack.c.l.b16 %v342
      %v453 = vunpack.c.l.b16 %v343
      %v454 = vunpack.c.l.b16 %v344
      %v455 = vunpack.c.l.b16 %v345
      %v456 = vunpack.c.l.b16 %v346
      %v457 = vunpack.c.l.b16 %v347
      %v458 = vunpack.c.l.b16 %v348
      %v459 = vunpack.c.l.b16 %v349
      %v460 = vunpack.c.l.b16 %v350
      %v461 = vunpack.c.l.b16 %v351
      %v462 = vunpack.c.l.b16 %v352
      %v463 = vunpack.c.l.b16 %v353
      %v464 = vunpack.c.l.b16 %v354
      %v465 = vunpack.c.l.b16 %v355
      %v466 = vunpack.c.l.b16 %v356
      %v467 = vunpack.c.l.b16 %v357
      %v468 = vunpack.c.l.b16 %v358
      %v469 = vunpack.c.l.b16 %v359
      %v470 = vunpack.c.l.b16 %v360
      %v471 = vunpack.c.l.b16 %v361
      %v472 = vunpack.c.l.b16 %v362
      %v473 = vunpack.c.l.b16 %v363
      %v474 = vunpack.c.l.b16 %v364
      %v475 = vunpack.c.l.b16 %v365
      %v476 = vunpack.c.l.b16 %v366
      %v477 = vunpack.c.l.b16 %v367
      %v478 = vunpack.c.l.b16 %v368
      %v479 = vunpack.c.l.b16 %v369
      %v480 = vunpack.c.l.b16 %v370
      %v481 = vunpack.c.l.b16 %v371
      %v482 = vunpack.c.l.b16 %v372
      %v483 = vunpack.c.l.b16 %v373
      %v484 = vunpack.c.l.b16 %v374
      %v485 = vpack.c.b16 %v450, %v449
      %v486 = vpack.c.b16 %v452, %v451
      %v487 = vpack.c.b16 %v454, %v453
      %v488 = vpack.c.b16 %v456, %v455
      %v489 = vpack.c.b16 %v458, %v457
      %v490 = vpack.c.b16 %v460, %v459
      %v491 = vpack.c.b16 %v462, %v461
      %v492 = vpack.c.b16 %v464, %v463
      %v493 = vpack.c.b16 %v466, %v465
      %v494 = vpack.c.b16 %v468, %v467
      %v495 = vpack.c.b16 %v470, %v469
      %v496 = vpack.c.b16 %v472, %v471
      %v497 = vpack.c.b16 %v474, %v473
      %v498 = vpack.c.b16 %v476, %v475
      %v499 = vpack.c.b16 %v478, %v477
      %v500 = vpack.c.b16 %v480, %v479
      %v501 = vpack.c.b16 %v482, %v481
      %v502 = vpack.c.b16 %v484, %v483
      %v505 = vunpack.c.l.b16 %v411
      %v506 = vunpack.c.l.b16 %v412
      %v507 = vpack.c.b16 %v506, %v505
      %vm509 = vcmask 130048
      %v511 = vsel %vm509, %v485, 0
      %v514 = vsel %vm509, %v486, 0
      %v517 = vsel %vm509, %v487, 0
      %v520 = vsel %vm509, %v488, 0
      %v523 = vsel %vm509, %v489, 0
      %v526 = vsel %vm509, %v490, 0
      %v529 = vsel %vm509, %v491, 0
      %v532 = vsel %vm509, %v492, 0
      %v535 = vsel %vm509, %v493, 0
      %v538 = vsel %vm509, %v494, 0
      %v541 = vsel %vm509, %v495, 0
      %v544 = vsel %vm509, %v496, 0
      %v547 = vsel %vm509, %v497, 0
      %v550 = vsel %vm509, %v498, 0
      %v553 = vsel %vm509, %v499, 0
      %v556 = vsel %vm509, %v500, 0
      %v559 = vsel %vm509, %v501, 0
      %v562 = vsel %vm509, %v502, 0
      %564 = vmatpush.bf16.msra.mxu0 0
      %565 = vmatpush.bf16.msra.mxu0 0
      %566 = vmatpush.bf16.msra.mxu0 0
      %567 = vmatpush.bf16.msra.mxu0 0
      %568 = vmatpush.bf16.msra.mxu0 0
      %569 = vmatpush.bf16.msra.mxu0 0
      %570 = vmatpush.bf16.msra.mxu0 0
      %571 = vmatpush.bf16.msra.mxu0 %v507
      %572 = vmatmul.bf16.gmra.mxu0 %v511
      %v573 = vpop.f32.mrf.mxu0
      %v574 = vadd.f32 0.0, %v573
      %v575 = vpop.f32.mrf.mxu0
      %v576 = vadd.f32 0.0, %v575
      %577 = vmatmul.bf16.gmra.mxu0 %v514
      %v578 = vpop.f32.mrf.mxu0
      %v579 = vadd.f32 0.0, %v578
      %v580 = vpop.f32.mrf.mxu0
      %v581 = vadd.f32 0.0, %v580
      %582 = vmatmul.bf16.gmra.mxu0 %v517
      %v583 = vpop.f32.mrf.mxu0
      %v584 = vadd.f32 0.0, %v583
      %v585 = vpop.f32.mrf.mxu0
      %v586 = vadd.f32 0.0, %v585
      %587 = vmatmul.bf16.gmra.mxu0 %v520
      %v588 = vpop.f32.mrf.mxu0
      %v589 = vadd.f32 0.0, %v588
      %v590 = vpop.f32.mrf.mxu0
      %v591 = vadd.f32 0.0, %v590
      %592 = vmatmul.bf16.gmra.mxu0 %v523
      %v593 = vpop.f32.mrf.mxu0
      %v594 = vadd.f32 0.0, %v593
      %v595 = vpop.f32.mrf.mxu0
      %v596 = vadd.f32 0.0, %v595
      %597 = vmatmul.bf16.gmra.mxu0 %v526
      %v598 = vpop.f32.mrf.mxu0
      %v599 = vadd.f32 0.0, %v598
      %v600 = vpop.f32.mrf.mxu0
      %v601 = vadd.f32 0.0, %v600
      %602 = vmatmul.bf16.gmra.mxu0 %v529
      %v603 = vpop.f32.mrf.mxu0
      %v604 = vadd.f32 0.0, %v603
      %v605 = vpop.f32.mrf.mxu0
      %v606 = vadd.f32 0.0, %v605
      %607 = vmatmul.bf16.gmra.mxu0 %v532
      %v608 = vpop.f32.mrf.mxu0
      %v609 = vadd.f32 0.0, %v608
      %v610 = vpop.f32.mrf.mxu0
      %v611 = vadd.f32 0.0, %v610
      %612 = vmatmul.bf16.gmra.mxu0 %v535
      %v613 = vpop.f32.mrf.mxu0
      %v614 = vadd.f32 0.0, %v613
      %v615 = vpop.f32.mrf.mxu0
      %v616 = vadd.f32 0.0, %v615
      %617 = vmatmul.bf16.gmra.mxu0 %v538
      %v618 = vpop.f32.mrf.mxu0
      %v619 = vadd.f32 0.0, %v618
      %v620 = vpop.f32.mrf.mxu0
      %v621 = vadd.f32 0.0, %v620
      %622 = vmatmul.bf16.gmra.mxu0 %v541
      %v623 = vpop.f32.mrf.mxu0
      %v624 = vadd.f32 0.0, %v623
      %v625 = vpop.f32.mrf.mxu0
      %v626 = vadd.f32 0.0, %v625
      %627 = vmatmul.bf16.gmra.mxu0 %v544
      %v628 = vpop.f32.mrf.mxu0
      %v629 = vadd.f32 0.0, %v628
      %v630 = vpop.f32.mrf.mxu0
      %v631 = vadd.f32 0.0, %v630
      %632 = vmatmul.bf16.gmra.mxu0 %v547
      %v633 = vpop.f32.mrf.mxu0
      %v634 = vadd.f32 0.0, %v633
      %v635 = vpop.f32.mrf.mxu0
      %v636 = vadd.f32 0.0, %v635
      %637 = vmatmul.bf16.gmra.mxu0 %v550
      %v638 = vpop.f32.mrf.mxu0
      %v639 = vadd.f32 0.0, %v638
      %v640 = vpop.f32.mrf.mxu0
      %v641 = vadd.f32 0.0, %v640
      %642 = vmatmul.bf16.gmra.mxu0 %v553
      %v643 = vpop.f32.mrf.mxu0
      %v644 = vadd.f32 0.0, %v643
      %v645 = vpop.f32.mrf.mxu0
      %v646 = vadd.f32 0.0, %v645
      %647 = vmatmul.bf16.gmra.mxu0 %v556
      %v648 = vpop.f32.mrf.mxu0
      %v649 = vadd.f32 0.0, %v648
      %v650 = vpop.f32.mrf.mxu0
      %v651 = vadd.f32 0.0, %v650
      %652 = vmatmul.bf16.gmra.mxu0 %v559
      %v653 = vpop.f32.mrf.mxu0
      %v654 = vadd.f32 0.0, %v653
      %v655 = vpop.f32.mrf.mxu0
      %v656 = vadd.f32 0.0, %v655
      %657 = vmatmul.bf16.gmra.mxu0 %v562
      %v658 = vpop.f32.mrf.mxu0
      %v659 = vadd.f32 0.0, %v658
      %v660 = vpop.f32.mrf.mxu0
      %v661 = vadd.f32 0.0, %v660
      %662 = vdwg.mxu0
      %v663 = vadd.f32 %v375, %v574
      %v664 = vadd.f32 %v376, %v576
      %v665 = vadd.f32 %v377, %v579
      %v666 = vadd.f32 %v378, %v581
      %v667 = vadd.f32 %v379, %v584
      %v668 = vadd.f32 %v380, %v586
      %v669 = vadd.f32 %v381, %v589
      %v670 = vadd.f32 %v382, %v591
      %v671 = vadd.f32 %v383, %v594
      %v672 = vadd.f32 %v384, %v596
      %v673 = vadd.f32 %v385, %v599
      %v674 = vadd.f32 %v386, %v601
      %v675 = vadd.f32 %v387, %v604
      %v676 = vadd.f32 %v388, %v606
      %v677 = vadd.f32 %v389, %v609
      %v678 = vadd.f32 %v390, %v611
      %v679 = vadd.f32 %v391, %v614
      %v680 = vadd.f32 %v392, %v616
      %v681 = vadd.f32 %v393, %v619
      %v682 = vadd.f32 %v394, %v621
      %v683 = vadd.f32 %v395, %v624
      %v684 = vadd.f32 %v396, %v626
      %v685 = vadd.f32 %v397, %v629
      %v686 = vadd.f32 %v398, %v631
      %v687 = vadd.f32 %v399, %v634
      %v688 = vadd.f32 %v400, %v636
      %v689 = vadd.f32 %v401, %v639
      %v690 = vadd.f32 %v402, %v641
      %v691 = vadd.f32 %v403, %v644
      %v692 = vadd.f32 %v404, %v646
      %v693 = vadd.f32 %v405, %v649
      %v694 = vadd.f32 %v406, %v651
      %v695 = vadd.f32 %v407, %v654
      %v696 = vadd.f32 %v408, %v656
      %v697 = vadd.f32 %v409, %v659
      %v698 = vadd.f32 %v410, %v661
      %vm699 = vcmask 261120
      %700 = vst.msk [vmem:[#allocation2] sm:$0xff] %vm699, %v663
      %701 = vst.msk [vmem:[#allocation2 + $0x8] sm:$0xff] %vm699, %v664
      %702 = vst.msk [vmem:[#allocation2 + $0x10] sm:$0xff] %vm699, %v665
      %703 = vst.msk [vmem:[#allocation2 + $0x18] sm:$0xff] %vm699, %v666
      %704 = vst.msk [vmem:[#allocation2 + $0x20] sm:$0xff] %vm699, %v667
      %705 = vst.msk [vmem:[#allocation2 + $0x28] sm:$0xff] %vm699, %v668
      %706 = vst.msk [vmem:[#allocation2 + $0x30] sm:$0xff] %vm699, %v669
      %707 = vst.msk [vmem:[#allocation2 + $0x38] sm:$0xff] %vm699, %v670
      %708 = vst.msk [vmem:[#allocation2 + $0x40] sm:$0xff] %vm699, %v671
      %709 = vst.msk [vmem:[#allocation2 + $0x48] sm:$0xff] %vm699, %v672
      %710 = vst.msk [vmem:[#allocation2 + $0x50] sm:$0xff] %vm699, %v673
      %711 = vst.msk [vmem:[#allocation2 + $0x58] sm:$0xff] %vm699, %v674
      %712 = vst.msk [vmem:[#allocation2 + $0x60] sm:$0xff] %vm699, %v675
      %713 = vst.msk [vmem:[#allocation2 + $0x68] sm:$0xff] %vm699, %v676
      %714 = vst.msk [vmem:[#allocation2 + $0x70] sm:$0xff] %vm699, %v677
      %715 = vst.msk [vmem:[#allocation2 + $0x78] sm:$0xff] %vm699, %v678
      %716 = vst.msk [vmem:[#allocation2 + $0x80] sm:$0xff] %vm699, %v679
      %717 = vst.msk [vmem:[#allocation2 + $0x88] sm:$0xff] %vm699, %v680
      %718 = vst.msk [vmem:[#allocation2 + $0x90] sm:$0xff] %vm699, %v681
      %719 = vst.msk [vmem:[#allocation2 + $0x98] sm:$0xff] %vm699, %v682
      %720 = vst.msk [vmem:[#allocation2 + $0xa0] sm:$0xff] %vm699, %v683
      %721 = vst.msk [vmem:[#allocation2 + $0xa8] sm:$0xff] %vm699, %v684
      %722 = vst.msk [vmem:[#allocation2 + $0xb0] sm:$0xff] %vm699, %v685
      %723 = vst.msk [vmem:[#allocation2 + $0xb8] sm:$0xff] %vm699, %v686
      %724 = vst.msk [vmem:[#allocation2 + $0xc0] sm:$0xff] %vm699, %v687
      %725 = vst.msk [vmem:[#allocation2 + $0xc8] sm:$0xff] %vm699, %v688
      %726 = vst.msk [vmem:[#allocation2 + $0xd0] sm:$0xff] %vm699, %v689
      %727 = vst.msk [vmem:[#allocation2 + $0xd8] sm:$0xff] %vm699, %v690
      %728 = vst.msk [vmem:[#allocation2 + $0xe0] sm:$0xff] %vm699, %v691
      %729 = vst.msk [vmem:[#allocation2 + $0xe8] sm:$0xff] %vm699, %v692
      %730 = vst.msk [vmem:[#allocation2 + $0xf0] sm:$0xff] %vm699, %v693
      %731 = vst.msk [vmem:[#allocation2 + $0xf8] sm:$0xff] %vm699, %v694
      %732 = vst.msk [vmem:[#allocation2 + $0x100] sm:$0xff] %vm699, %v695
      %733 = vst.msk [vmem:[#allocation2 + $0x108] sm:$0xff] %vm699, %v696
      %734 = vst.msk [vmem:[#allocation2 + $0x110] sm:$0xff] %vm699, %v697
      %735 = vst.msk [vmem:[#allocation2 + $0x118] sm:$0xff] %vm699, %v698
      %v736 = vld [vmem:[%s273] sm:$0xf]
      %v737 = vld [vmem:[%s273 + $0x4] sm:$0xf]
      %v738 = vld [vmem:[%s273 + $0x8] sm:$0xf]
      %v739 = vld [vmem:[%s273 + $0xc] sm:$0xf]
      %v740 = vld [vmem:[%s273 + $0x10] sm:$0xf]
      %v741 = vld [vmem:[%s273 + $0x14] sm:$0xf]
      %v742 = vld [vmem:[%s273 + $0x18] sm:$0xf]
      %v743 = vld [vmem:[%s273 + $0x1c] sm:$0xf]
      %v744 = vld [vmem:[%s273 + $0x20] sm:$0xf]
      %v745 = vld [vmem:[%s273 + $0x24] sm:$0xf]
      %v746 = vld [vmem:[%s273 + $0x28] sm:$0xf]
      %v747 = vld [vmem:[%s273 + $0x2c] sm:$0xf]
      %v748 = vld [vmem:[%s273 + $0x30] sm:$0xf]
      %v749 = vld [vmem:[%s273 + $0x34] sm:$0xf]
      %v750 = vld [vmem:[%s273 + $0x38] sm:$0xf]
      %v751 = vld [vmem:[%s273 + $0x3c] sm:$0xf]
      %v752 = vld [vmem:[%s273 + $0x40] sm:$0xf]
      %v753 = vld [vmem:[%s273 + $0x44] sm:$0xf]
      %v754 = vld [vmem:[%s273 + $0x48] sm:$0xf]
      %v755 = vld [vmem:[%s273 + $0x4c] sm:$0xf]
      %v756 = vld [vmem:[%s273 + $0x50] sm:$0xf]
      %v757 = vld [vmem:[%s273 + $0x54] sm:$0xf]
      %v758 = vld [vmem:[%s273 + $0x58] sm:$0xf]
      %v759 = vld [vmem:[%s273 + $0x5c] sm:$0xf]
      %v760 = vld [vmem:[%s273 + $0x60] sm:$0xf]
      %v761 = vld [vmem:[%s273 + $0x64] sm:$0xf]
      %v762 = vld [vmem:[%s273 + $0x68] sm:$0xf]
      %v763 = vld [vmem:[%s273 + $0x6c] sm:$0xf]
      %v764 = vld [vmem:[%s273 + $0x70] sm:$0xf]
      %v765 = vld [vmem:[%s273 + $0x74] sm:$0xf]
      %v766 = vld [vmem:[%s273 + $0x78] sm:$0xf]
      %v767 = vld [vmem:[%s273 + $0x7c] sm:$0xf]
      %v768 = vld [vmem:[%s273 + $0x80] sm:$0xf]
      %v769 = vld [vmem:[%s273 + $0x84] sm:$0xf]
      %v770 = vld [vmem:[%s273 + $0x88] sm:$0xf]
      %v771 = vld [vmem:[%s273 + $0x8c] sm:$0xf]
      %v772 = vld [vmem:[%s273 + $0x90] sm:$0x1]
      %v773 = vld [vmem:[#allocation2] sm:$0xff]
      %v774 = vld [vmem:[#allocation2 + $0x8] sm:$0xff]
      %v775 = vld [vmem:[#allocation2 + $0x10] sm:$0xff]
      %v776 = vld [vmem:[#allocation2 + $0x18] sm:$0xff]
      %v777 = vld [vmem:[#allocation2 + $0x20] sm:$0xff]
      %v778 = vld [vmem:[#allocation2 + $0x28] sm:$0xff]
      %v779 = vld [vmem:[#allocation2 + $0x30] sm:$0xff]
      %v780 = vld [vmem:[#allocation2 + $0x38] sm:$0xff]
      %v781 = vld [vmem:[#allocation2 + $0x40] sm:$0xff]
      %v782 = vld [vmem:[#allocation2 + $0x48] sm:$0xff]
      %v783 = vld [vmem:[#allocation2 + $0x50] sm:$0xff]
      %v784 = vld [vmem:[#allocation2 + $0x58] sm:$0xff]
      %v785 = vld [vmem:[#allocation2 + $0x60] sm:$0xff]
      %v786 = vld [vmem:[#allocation2 + $0x68] sm:$0xff]
      %v787 = vld [vmem:[#allocation2 + $0x70] sm:$0xff]
      %v788 = vld [vmem:[#allocation2 + $0x78] sm:$0xff]
      %v789 = vld [vmem:[#allocation2 + $0x80] sm:$0xff]
      %v790 = vld [vmem:[#allocation2 + $0x88] sm:$0xff]
      %v791 = vld [vmem:[#allocation2 + $0x90] sm:$0xff]
      %v792 = vld [vmem:[#allocation2 + $0x98] sm:$0xff]
      %v793 = vld [vmem:[#allocation2 + $0xa0] sm:$0xff]
      %v794 = vld [vmem:[#allocation2 + $0xa8] sm:$0xff]
      %v795 = vld [vmem:[#allocation2 + $0xb0] sm:$0xff]
      %v796 = vld [vmem:[#allocation2 + $0xb8] sm:$0xff]
      %v797 = vld [vmem:[#allocation2 + $0xc0] sm:$0xff]
      %v798 = vld [vmem:[#allocation2 + $0xc8] sm:$0xff]
      %v799 = vld [vmem:[#allocation2 + $0xd0] sm:$0xff]
      %v800 = vld [vmem:[#allocation2 + $0xd8] sm:$0xff]
      %v801 = vld [vmem:[#allocation2 + $0xe0] sm:$0xff]
      %v802 = vld [vmem:[#allocation2 + $0xe8] sm:$0xff]
      %v803 = vld [vmem:[#allocation2 + $0xf0] sm:$0xff]
      %v804 = vld [vmem:[#allocation2 + $0xf8] sm:$0xff]
      %v805 = vld [vmem:[#allocation2 + $0x100] sm:$0xff]
      %v806 = vld [vmem:[#allocation2 + $0x108] sm:$0xff]
      %v807 = vld [vmem:[#allocation2 + $0x110] sm:$0xff]
      %v808 = vld [vmem:[#allocation2 + $0x118] sm:$0xff]
      %s809 = scalar_lea.vmem %s281, 8
      %v810 = vld [vmem:[%s809] sm:$0xf]
      %v811 = vld [vmem:[%s809 + $0x4] sm:$0xf]
      %v849 = vunpack.c.l.b16 %v736
      %v850 = vunpack.c.l.b16 %v737
      %v851 = vunpack.c.l.b16 %v738
      %v852 = vunpack.c.l.b16 %v739
      %v853 = vunpack.c.l.b16 %v740
      %v854 = vunpack.c.l.b16 %v741
      %v855 = vunpack.c.l.b16 %v742
      %v856 = vunpack.c.l.b16 %v743
      %v857 = vunpack.c.l.b16 %v744
      %v858 = vunpack.c.l.b16 %v745
      %v859 = vunpack.c.l.b16 %v746
      %v860 = vunpack.c.l.b16 %v747
      %v861 = vunpack.c.l.b16 %v748
      %v862 = vunpack.c.l.b16 %v749
      %v863 = vunpack.c.l.b16 %v750
      %v864 = vunpack.c.l.b16 %v751
      %v865 = vunpack.c.l.b16 %v752
      %v866 = vunpack.c.l.b16 %v753
      %v867 = vunpack.c.l.b16 %v754
      %v868 = vunpack.c.l.b16 %v755
      %v869 = vunpack.c.l.b16 %v756
      %v870 = vunpack.c.l.b16 %v757
      %v871 = vunpack.c.l.b16 %v758
      %v872 = vunpack.c.l.b16 %v759
      %v873 = vunpack.c.l.b16 %v760
      %v874 = vunpack.c.l.b16 %v761
      %v875 = vunpack.c.l.b16 %v762
      %v876 = vunpack.c.l.b16 %v763
      %v877 = vunpack.c.l.b16 %v764
      %v878 = vunpack.c.l.b16 %v765
      %v879 = vunpack.c.l.b16 %v766
      %v880 = vunpack.c.l.b16 %v767
      %v881 = vunpack.c.l.b16 %v768
      %v882 = vunpack.c.l.b16 %v769
      %v883 = vunpack.c.l.b16 %v770
      %v884 = vunpack.c.l.b16 %v771
      %v885 = vunpack.c.l.b16 %v772
      %v886 = vpack.c.b16 %v850, %v849
      %v887 = vpack.c.b16 %v852, %v851
      %v888 = vpack.c.b16 %v854, %v853
      %v889 = vpack.c.b16 %v856, %v855
      %v890 = vpack.c.b16 %v858, %v857
      %v891 = vpack.c.b16 %v860, %v859
      %v892 = vpack.c.b16 %v862, %v861
      %v893 = vpack.c.b16 %v864, %v863
      %v894 = vpack.c.b16 %v866, %v865
      %v895 = vpack.c.b16 %v868, %v867
      %v896 = vpack.c.b16 %v870, %v869
      %v897 = vpack.c.b16 %v872, %v871
      %v898 = vpack.c.b16 %v874, %v873
      %v899 = vpack.c.b16 %v876, %v875
      %v900 = vpack.c.b16 %v878, %v877
      %v901 = vpack.c.b16 %v880, %v879
      %v902 = vpack.c.b16 %v882, %v881
      %v903 = vpack.c.b16 %v884, %v883
      %v904 = vpack.c.b16 %v885, %v885
      %vm905 = vsmask.f32 7424
      %v907 = vshrl.u32 %v886, 16
      %v909 = vshll.u32 %v886, 16
      %v911 = vrot.slane %v909, 1
      %v912 = vor.u32 %v907, %v911
      %v914 = vshll.u32 %v887, 16
      %v916 = vrot.slane %v914, 1
      %v917 = vsel %vm905, %v912, %v916
      %v918 = vshrl.u32 %v887, 16
      %v920 = vor.u32 %v918, %v916
      %v922 = vshll.u32 %v888, 16
      %v924 = vrot.slane %v922, 1
      %v925 = vsel %vm905, %v920, %v924
      %v926 = vshrl.u32 %v888, 16
      %v928 = vor.u32 %v926, %v924
      %v930 = vshll.u32 %v889, 16
      %v932 = vrot.slane %v930, 1
      %v933 = vsel %vm905, %v928, %v932
      %v934 = vshrl.u32 %v889, 16
      %v936 = vor.u32 %v934, %v932
      %v938 = vshll.u32 %v890, 16
      %v940 = vrot.slane %v938, 1
      %v941 = vsel %vm905, %v936, %v940
      %v942 = vshrl.u32 %v890, 16
      %v944 = vor.u32 %v942, %v940
      %v946 = vshll.u32 %v891, 16
      %v948 = vrot.slane %v946, 1
      %v949 = vsel %vm905, %v944, %v948
      %v950 = vshrl.u32 %v891, 16
      %v952 = vor.u32 %v950, %v948
      %v954 = vshll.u32 %v892, 16
      %v956 = vrot.slane %v954, 1
      %v957 = vsel %vm905, %v952, %v956
      %v958 = vshrl.u32 %v892, 16
      %v960 = vor.u32 %v958, %v956
      %v962 = vshll.u32 %v893, 16
      %v964 = vrot.slane %v962, 1
      %v965 = vsel %vm905, %v960, %v964
      %v966 = vshrl.u32 %v893, 16
      %v968 = vor.u32 %v966, %v964
      %v970 = vshll.u32 %v894, 16
      %v972 = vrot.slane %v970, 1
      %v973 = vsel %vm905, %v968, %v972
      %v974 = vshrl.u32 %v894, 16
      %v976 = vor.u32 %v974, %v972
      %v978 = vshll.u32 %v895, 16
      %v980 = vrot.slane %v978, 1
      %v981 = vsel %vm905, %v976, %v980
      %v982 = vshrl.u32 %v895, 16
      %v984 = vor.u32 %v982, %v980
      %v986 = vshll.u32 %v896, 16
      %v988 = vrot.slane %v986, 1
      %v989 = vsel %vm905, %v984, %v988
      %v990 = vshrl.u32 %v896, 16
      %v992 = vor.u32 %v990, %v988
      %v994 = vshll.u32 %v897, 16
      %v996 = vrot.slane %v994, 1
      %v997 = vsel %vm905, %v992, %v996
      %v998 = vshrl.u32 %v897, 16
      %v1000 = vor.u32 %v998, %v996
      %v1002 = vshll.u32 %v898, 16
      %v1004 = vrot.slane %v1002, 1
      %v1005 = vsel %vm905, %v1000, %v1004
      %v1006 = vshrl.u32 %v898, 16
      %v1008 = vor.u32 %v1006, %v1004
      %v1010 = vshll.u32 %v899, 16
      %v1012 = vrot.slane %v1010, 1
      %v1013 = vsel %vm905, %v1008, %v1012
      %v1014 = vshrl.u32 %v899, 16
      %v1016 = vor.u32 %v1014, %v1012
      %v1018 = vshll.u32 %v900, 16
      %v1020 = vrot.slane %v1018, 1
      %v1021 = vsel %vm905, %v1016, %v1020
      %v1022 = vshrl.u32 %v900, 16
      %v1024 = vor.u32 %v1022, %v1020
      %v1026 = vshll.u32 %v901, 16
      %v1028 = vrot.slane %v1026, 1
      %v1029 = vsel %vm905, %v1024, %v1028
      %v1030 = vshrl.u32 %v901, 16
      %v1032 = vor.u32 %v1030, %v1028
      %v1034 = vshll.u32 %v902, 16
      %v1036 = vrot.slane %v1034, 1
      %v1037 = vsel %vm905, %v1032, %v1036
      %v1038 = vshrl.u32 %v902, 16
      %v1040 = vor.u32 %v1038, %v1036
      %v1042 = vshll.u32 %v903, 16
      %v1044 = vrot.slane %v1042, 1
      %v1045 = vsel %vm905, %v1040, %v1044
      %v1046 = vshrl.u32 %v903, 16
      %v1048 = vor.u32 %v1046, %v1044
      %v1050 = vshll.u32 %v904, 16
      %v1052 = vrot.slane %v1050, 1
      %v1053 = vsel %vm905, %v1048, %v1052
      %v1056 = vunpack.c.l.b16 %v810
      %v1057 = vunpack.c.l.b16 %v811
      %v1058 = vpack.c.b16 %v1057, %v1056
      %v1061 = vsel %vm509, %v917, 0
      %v1064 = vsel %vm509, %v925, 0
      %v1067 = vsel %vm509, %v933, 0
      %v1070 = vsel %vm509, %v941, 0
      %v1073 = vsel %vm509, %v949, 0
      %v1076 = vsel %vm509, %v957, 0
      %v1079 = vsel %vm509, %v965, 0
      %v1082 = vsel %vm509, %v973, 0
      %v1085 = vsel %vm509, %v981, 0
      %v1088 = vsel %vm509, %v989, 0
      %v1091 = vsel %vm509, %v997, 0
      %v1094 = vsel %vm509, %v1005, 0
      %v1097 = vsel %vm509, %v1013, 0
      %v1100 = vsel %vm509, %v1021, 0
      %v1103 = vsel %vm509, %v1029, 0
      %v1106 = vsel %vm509, %v1037, 0
      %v1109 = vsel %vm509, %v1045, 0
      %v1112 = vsel %vm509, %v1053, 0
      %1114 = vmatpush.bf16.msra.mxu0 0
      %1115 = vmatpush.bf16.msra.mxu0 0
      %1116 = vmatpush.bf16.msra.mxu0 0
      %1117 = vmatpush.bf16.msra.mxu0 0
      %1118 = vmatpush.bf16.msra.mxu0 0
      %1119 = vmatpush.bf16.msra.mxu0 0
      %1120 = vmatpush.bf16.msra.mxu0 0
      %1121 = vmatpush.bf16.msra.mxu0 %v1058
      %1122 = vmatmul.bf16.gmra.mxu0 %v1061
      %v1123 = vpop.f32.mrf.mxu0
      %v1124 = vadd.f32 0.0, %v1123
      %v1125 = vpop.f32.mrf.mxu0
      %v1126 = vadd.f32 0.0, %v1125
      %1127 = vmatmul.bf16.gmra.mxu0 %v1064
      %v1128 = vpop.f32.mrf.mxu0
      %v1129 = vadd.f32 0.0, %v1128
      %v1130 = vpop.f32.mrf.mxu0
      %v1131 = vadd.f32 0.0, %v1130
      %1132 = vmatmul.bf16.gmra.mxu0 %v1067
      %v1133 = vpop.f32.mrf.mxu0
      %v1134 = vadd.f32 0.0, %v1133
      %v1135 = vpop.f32.mrf.mxu0
      %v1136 = vadd.f32 0.0, %v1135
      %1137 = vmatmul.bf16.gmra.mxu0 %v1070
      %v1138 = vpop.f32.mrf.mxu0
      %v1139 = vadd.f32 0.0, %v1138
      %v1140 = vpop.f32.mrf.mxu0
      %v1141 = vadd.f32 0.0, %v1140
      %1142 = vmatmul.bf16.gmra.mxu0 %v1073
      %v1143 = vpop.f32.mrf.mxu0
      %v1144 = vadd.f32 0.0, %v1143
      %v1145 = vpop.f32.mrf.mxu0
      %v1146 = vadd.f32 0.0, %v1145
      %1147 = vmatmul.bf16.gmra.mxu0 %v1076
      %v1148 = vpop.f32.mrf.mxu0
      %v1149 = vadd.f32 0.0, %v1148
      %v1150 = vpop.f32.mrf.mxu0
      %v1151 = vadd.f32 0.0, %v1150
      %1152 = vmatmul.bf16.gmra.mxu0 %v1079
      %v1153 = vpop.f32.mrf.mxu0
      %v1154 = vadd.f32 0.0, %v1153
      %v1155 = vpop.f32.mrf.mxu0
      %v1156 = vadd.f32 0.0, %v1155
      %1157 = vmatmul.bf16.gmra.mxu0 %v1082
      %v1158 = vpop.f32.mrf.mxu0
      %v1159 = vadd.f32 0.0, %v1158
      %v1160 = vpop.f32.mrf.mxu0
      %v1161 = vadd.f32 0.0, %v1160
      %1162 = vmatmul.bf16.gmra.mxu0 %v1085
      %v1163 = vpop.f32.mrf.mxu0
      %v1164 = vadd.f32 0.0, %v1163
      %v1165 = vpop.f32.mrf.mxu0
      %v1166 = vadd.f32 0.0, %v1165
      %1167 = vmatmul.bf16.gmra.mxu0 %v1088
      %v1168 = vpop.f32.mrf.mxu0
      %v1169 = vadd.f32 0.0, %v1168
      %v1170 = vpop.f32.mrf.mxu0
      %v1171 = vadd.f32 0.0, %v1170
      %1172 = vmatmul.bf16.gmra.mxu0 %v1091
      %v1173 = vpop.f32.mrf.mxu0
      %v1174 = vadd.f32 0.0, %v1173
      %v1175 = vpop.f32.mrf.mxu0
      %v1176 = vadd.f32 0.0, %v1175
      %1177 = vmatmul.bf16.gmra.mxu0 %v1094
      %v1178 = vpop.f32.mrf.mxu0
      %v1179 = vadd.f32 0.0, %v1178
      %v1180 = vpop.f32.mrf.mxu0
      %v1181 = vadd.f32 0.0, %v1180
      %1182 = vmatmul.bf16.gmra.mxu0 %v1097
      %v1183 = vpop.f32.mrf.mxu0
      %v1184 = vadd.f32 0.0, %v1183
      %v1185 = vpop.f32.mrf.mxu0
      %v1186 = vadd.f32 0.0, %v1185
      %1187 = vmatmul.bf16.gmra.mxu0 %v1100
      %v1188 = vpop.f32.mrf.mxu0
      %v1189 = vadd.f32 0.0, %v1188
      %v1190 = vpop.f32.mrf.mxu0
      %v1191 = vadd.f32 0.0, %v1190
      %1192 = vmatmul.bf16.gmra.mxu0 %v1103
      %v1193 = vpop.f32.mrf.mxu0
      %v1194 = vadd.f32 0.0, %v1193
      %v1195 = vpop.f32.mrf.mxu0
      %v1196 = vadd.f32 0.0, %v1195
      %1197 = vmatmul.bf16.gmra.mxu0 %v1106
      %v1198 = vpop.f32.mrf.mxu0
      %v1199 = vadd.f32 0.0, %v1198
      %v1200 = vpop.f32.mrf.mxu0
      %v1201 = vadd.f32 0.0, %v1200
      %1202 = vmatmul.bf16.gmra.mxu0 %v1109
      %v1203 = vpop.f32.mrf.mxu0
      %v1204 = vadd.f32 0.0, %v1203
      %v1205 = vpop.f32.mrf.mxu0
      %v1206 = vadd.f32 0.0, %v1205
      %1207 = vmatmul.bf16.gmra.mxu0 %v1112
      %v1208 = vpop.f32.mrf.mxu0
      %v1209 = vadd.f32 0.0, %v1208
      %v1210 = vpop.f32.mrf.mxu0
      %v1211 = vadd.f32 0.0, %v1210
      %1212 = vdwg.mxu0
      %v1213 = vadd.f32 %v773, %v1124
      %v1214 = vadd.f32 %v774, %v1126
      %v1215 = vadd.f32 %v775, %v1129
      %v1216 = vadd.f32 %v776, %v1131
      %v1217 = vadd.f32 %v777, %v1134
      %v1218 = vadd.f32 %v778, %v1136
      %v1219 = vadd.f32 %v779, %v1139
      %v1220 = vadd.f32 %v780, %v1141
      %v1221 = vadd.f32 %v781, %v1144
      %v1222 = vadd.f32 %v782, %v1146
      %v1223 = vadd.f32 %v783, %v1149
      %v1224 = vadd.f32 %v784, %v1151
      %v1225 = vadd.f32 %v785, %v1154
      %v1226 = vadd.f32 %v786, %v1156
      %v1227 = vadd.f32 %v787, %v1159
      %v1228 = vadd.f32 %v788, %v1161
      %v1229 = vadd.f32 %v789, %v1164
      %v1230 = vadd.f32 %v790, %v1166
      %v1231 = vadd.f32 %v791, %v1169
      %v1232 = vadd.f32 %v792, %v1171
      %v1233 = vadd.f32 %v793, %v1174
      %v1234 = vadd.f32 %v794, %v1176
      %v1235 = vadd.f32 %v795, %v1179
      %v1236 = vadd.f32 %v796, %v1181
      %v1237 = vadd.f32 %v797, %v1184
      %v1238 = vadd.f32 %v798, %v1186
      %v1239 = vadd.f32 %v799, %v1189
      %v1240 = vadd.f32 %v800, %v1191
      %v1241 = vadd.f32 %v801, %v1194
      %v1242 = vadd.f32 %v802, %v1196
      %v1243 = vadd.f32 %v803, %v1199
      %v1244 = vadd.f32 %v804, %v1201
      %v1245 = vadd.f32 %v805, %v1204
      %v1246 = vadd.f32 %v806, %v1206
      %v1247 = vadd.f32 %v807, %v1209
      %v1248 = vadd.f32 %v808, %v1211
      %1249 = vst.msk [vmem:[#allocation2] sm:$0xff] %vm699, %v1213
      %1250 = vst.msk [vmem:[#allocation2 + $0x8] sm:$0xff] %vm699, %v1214
      %1251 = vst.msk [vmem:[#allocation2 + $0x10] sm:$0xff] %vm699, %v1215
      %1252 = vst.msk [vmem:[#allocation2 + $0x18] sm:$0xff] %vm699, %v1216
      %1253 = vst.msk [vmem:[#allocation2 + $0x20] sm:$0xff] %vm699, %v1217
      %1254 = vst.msk [vmem:[#allocation2 + $0x28] sm:$0xff] %vm699, %v1218
      %1255 = vst.msk [vmem:[#allocation2 + $0x30] sm:$0xff] %vm699, %v1219
      %1256 = vst.msk [vmem:[#allocation2 + $0x38] sm:$0xff] %vm699, %v1220
      %1257 = vst.msk [vmem:[#allocation2 + $0x40] sm:$0xff] %vm699, %v1221
      %1258 = vst.msk [vmem:[#allocation2 + $0x48] sm:$0xff] %vm699, %v1222
      %1259 = vst.msk [vmem:[#allocation2 + $0x50] sm:$0xff] %vm699, %v1223
      %1260 = vst.msk [vmem:[#allocation2 + $0x58] sm:$0xff] %vm699, %v1224
      %1261 = vst.msk [vmem:[#allocation2 + $0x60] sm:$0xff] %vm699, %v1225
      %1262 = vst.msk [vmem:[#allocation2 + $0x68] sm:$0xff] %vm699, %v1226
      %1263 = vst.msk [vmem:[#allocation2 + $0x70] sm:$0xff] %vm699, %v1227
      %1264 = vst.msk [vmem:[#allocation2 + $0x78] sm:$0xff] %vm699, %v1228
      %1265 = vst.msk [vmem:[#allocation2 + $0x80] sm:$0xff] %vm699, %v1229
      %1266 = vst.msk [vmem:[#allocation2 + $0x88] sm:$0xff] %vm699, %v1230
      %1267 = vst.msk [vmem:[#allocation2 + $0x90] sm:$0xff] %vm699, %v1231
      %1268 = vst.msk [vmem:[#allocation2 + $0x98] sm:$0xff] %vm699, %v1232
      %1269 = vst.msk [vmem:[#allocation2 + $0xa0] sm:$0xff] %vm699, %v1233
      %1270 = vst.msk [vmem:[#allocation2 + $0xa8] sm:$0xff] %vm699, %v1234
      %1271 = vst.msk [vmem:[#allocation2 + $0xb0] sm:$0xff] %vm699, %v1235
      %1272 = vst.msk [vmem:[#allocation2 + $0xb8] sm:$0xff] %vm699, %v1236
      %1273 = vst.msk [vmem:[#allocation2 + $0xc0] sm:$0xff] %vm699, %v1237
      %1274 = vst.msk [vmem:[#allocation2 + $0xc8] sm:$0xff] %vm699, %v1238
      %1275 = vst.msk [vmem:[#allocation2 + $0xd0] sm:$0xff] %vm699, %v1239
      %1276 = vst.msk [vmem:[#allocation2 + $0xd8] sm:$0xff] %vm699, %v1240
      %1277 = vst.msk [vmem:[#allocation2 + $0xe0] sm:$0xff] %vm699, %v1241
      %1278 = vst.msk [vmem:[#allocation2 + $0xe8] sm:$0xff] %vm699, %v1242
      %1279 = vst.msk [vmem:[#allocation2 + $0xf0] sm:$0xff] %vm699, %v1243
      %1280 = vst.msk [vmem:[#allocation2 + $0xf8] sm:$0xff] %vm699, %v1244
      %1281 = vst.msk [vmem:[#allocation2 + $0x100] sm:$0xff] %vm699, %v1245
      %1282 = vst.msk [vmem:[#allocation2 + $0x108] sm:$0xff] %vm699, %v1246
      %1283 = vst.msk [vmem:[#allocation2 + $0x110] sm:$0xff] %vm699, %v1247
      %1284 = vst.msk [vmem:[#allocation2 + $0x118] sm:$0xff] %vm699, %v1248
      %v1285 = vld [vmem:[%s273] sm:$0xe]
      %v1286 = vld [vmem:[%s273 + $0x4] sm:$0xf]
      %v1287 = vld [vmem:[%s273 + $0x8] sm:$0xf]
      %v1288 = vld [vmem:[%s273 + $0xc] sm:$0xf]
      %v1289 = vld [vmem:[%s273 + $0x10] sm:$0xf]
      %v1290 = vld [vmem:[%s273 + $0x14] sm:$0xf]
      %v1291 = vld [vmem:[%s273 + $0x18] sm:$0xf]
      %v1292 = vld [vmem:[%s273 + $0x1c] sm:$0xf]
      %v1293 = vld [vmem:[%s273 + $0x20] sm:$0xf]
      %v1294 = vld [vmem:[%s273 + $0x24] sm:$0xf]
      %v1295 = vld [vmem:[%s273 + $0x28] sm:$0xf]
      %v1296 = vld [vmem:[%s273 + $0x2c] sm:$0xf]
      %v1297 = vld [vmem:[%s273 + $0x30] sm:$0xf]
      %v1298 = vld [vmem:[%s273 + $0x34] sm:$0xf]
      %v1299 = vld [vmem:[%s273 + $0x38] sm:$0xf]
      %v1300 = vld [vmem:[%s273 + $0x3c] sm:$0xf]
      %v1301 = vld [vmem:[%s273 + $0x40] sm:$0xf]
      %v1302 = vld [vmem:[%s273 + $0x44] sm:$0xf]
      %v1303 = vld [vmem:[%s273 + $0x48] sm:$0xf]
      %v1304 = vld [vmem:[%s273 + $0x4c] sm:$0xf]
      %v1305 = vld [vmem:[%s273 + $0x50] sm:$0xf]
      %v1306 = vld [vmem:[%s273 + $0x54] sm:$0xf]
      %v1307 = vld [vmem:[%s273 + $0x58] sm:$0xf]
      %v1308 = vld [vmem:[%s273 + $0x5c] sm:$0xf]
      %v1309 = vld [vmem:[%s273 + $0x60] sm:$0xf]
      %v1310 = vld [vmem:[%s273 + $0x64] sm:$0xf]
      %v1311 = vld [vmem:[%s273 + $0x68] sm:$0xf]
      %v1312 = vld [vmem:[%s273 + $0x6c] sm:$0xf]
      %v1313 = vld [vmem:[%s273 + $0x70] sm:$0xf]
      %v1314 = vld [vmem:[%s273 + $0x74] sm:$0xf]
      %v1315 = vld [vmem:[%s273 + $0x78] sm:$0xf]
      %v1316 = vld [vmem:[%s273 + $0x7c] sm:$0xf]
      %v1317 = vld [vmem:[%s273 + $0x80] sm:$0xf]
      %v1318 = vld [vmem:[%s273 + $0x84] sm:$0xf]
      %v1319 = vld [vmem:[%s273 + $0x88] sm:$0xf]
      %v1320 = vld [vmem:[%s273 + $0x8c] sm:$0xf]
      %v1321 = vld [vmem:[%s273 + $0x90] sm:$0x1]
      %v1322 = vld [vmem:[#allocation2] sm:$0xff]
      %v1323 = vld [vmem:[#allocation2 + $0x8] sm:$0xff]
      %v1324 = vld [vmem:[#allocation2 + $0x10] sm:$0xff]
      %v1325 = vld [vmem:[#allocation2 + $0x18] sm:$0xff]
      %v1326 = vld [vmem:[#allocation2 + $0x20] sm:$0xff]
      %v1327 = vld [vmem:[#allocation2 + $0x28] sm:$0xff]
      %v1328 = vld [vmem:[#allocation2 + $0x30] sm:$0xff]
      %v1329 = vld [vmem:[#allocation2 + $0x38] sm:$0xff]
      %v1330 = vld [vmem:[#allocation2 + $0x40] sm:$0xff]
      %v1331 = vld [vmem:[#allocation2 + $0x48] sm:$0xff]
      %v1332 = vld [vmem:[#allocation2 + $0x50] sm:$0xff]
      %v1333 = vld [vmem:[#allocation2 + $0x58] sm:$0xff]
      %v1334 = vld [vmem:[#allocation2 + $0x60] sm:$0xff]
      %v1335 = vld [vmem:[#allocation2 + $0x68] sm:$0xff]
      %v1336 = vld [vmem:[#allocation2 + $0x70] sm:$0xff]
      %v1337 = vld [vmem:[#allocation2 + $0x78] sm:$0xff]
      %v1338 = vld [vmem:[#allocation2 + $0x80] sm:$0xff]
      %v1339 = vld [vmem:[#allocation2 + $0x88] sm:$0xff]
      %v1340 = vld [vmem:[#allocation2 + $0x90] sm:$0xff]
      %v1341 = vld [vmem:[#allocation2 + $0x98] sm:$0xff]
      %v1342 = vld [vmem:[#allocation2 + $0xa0] sm:$0xff]
      %v1343 = vld [vmem:[#allocation2 + $0xa8] sm:$0xff]
      %v1344 = vld [vmem:[#allocation2 + $0xb0] sm:$0xff]
      %v1345 = vld [vmem:[#allocation2 + $0xb8] sm:$0xff]
      %v1346 = vld [vmem:[#allocation2 + $0xc0] sm:$0xff]
      %v1347 = vld [vmem:[#allocation2 + $0xc8] sm:$0xff]
      %v1348 = vld [vmem:[#allocation2 + $0xd0] sm:$0xff]
      %v1349 = vld [vmem:[#allocation2 + $0xd8] sm:$0xff]
      %v1350 = vld [vmem:[#allocation2 + $0xe0] sm:$0xff]
      %v1351 = vld [vmem:[#allocation2 + $0xe8] sm:$0xff]
      %v1352 = vld [vmem:[#allocation2 + $0xf0] sm:$0xff]
      %v1353 = vld [vmem:[#allocation2 + $0xf8] sm:$0xff]
      %v1354 = vld [vmem:[#allocation2 + $0x100] sm:$0xff]
      %v1355 = vld [vmem:[#allocation2 + $0x108] sm:$0xff]
      %v1356 = vld [vmem:[#allocation2 + $0x110] sm:$0xff]
      %v1357 = vld [vmem:[#allocation2 + $0x118] sm:$0xff]
      %s1358 = scalar_lea.vmem %s281, 16
      %v1359 = vld [vmem:[%s1358] sm:$0xf]
      %v1360 = vld [vmem:[%s1358 + $0x4] sm:$0xf]
      %v1398 = vunpack.c.l.b16 %v1285
      %v1399 = vunpack.c.l.b16 %v1286
      %v1400 = vunpack.c.l.b16 %v1287
      %v1401 = vunpack.c.l.b16 %v1288
      %v1402 = vunpack.c.l.b16 %v1289
      %v1403 = vunpack.c.l.b16 %v1290
      %v1404 = vunpack.c.l.b16 %v1291
      %v1405 = vunpack.c.l.b16 %v1292
      %v1406 = vunpack.c.l.b16 %v1293
      %v1407 = vunpack.c.l.b16 %v1294
      %v1408 = vunpack.c.l.b16 %v1295
      %v1409 = vunpack.c.l.b16 %v1296
      %v1410 = vunpack.c.l.b16 %v1297
      %v1411 = vunpack.c.l.b16 %v1298
      %v1412 = vunpack.c.l.b16 %v1299
      %v1413 = vunpack.c.l.b16 %v1300
      %v1414 = vunpack.c.l.b16 %v1301
      %v1415 = vunpack.c.l.b16 %v1302
      %v1416 = vunpack.c.l.b16 %v1303
      %v1417 = vunpack.c.l.b16 %v1304
      %v1418 = vunpack.c.l.b16 %v1305
      %v1419 = vunpack.c.l.b16 %v1306
      %v1420 = vunpack.c.l.b16 %v1307
      %v1421 = vunpack.c.l.b16 %v1308
      %v1422 = vunpack.c.l.b16 %v1309
      %v1423 = vunpack.c.l.b16 %v1310
      %v1424 = vunpack.c.l.b16 %v1311
      %v1425 = vunpack.c.l.b16 %v1312
      %v1426 = vunpack.c.l.b16 %v1313
      %v1427 = vunpack.c.l.b16 %v1314
      %v1428 = vunpack.c.l.b16 %v1315
      %v1429 = vunpack.c.l.b16 %v1316
      %v1430 = vunpack.c.l.b16 %v1317
      %v1431 = vunpack.c.l.b16 %v1318
      %v1432 = vunpack.c.l.b16 %v1319
      %v1433 = vunpack.c.l.b16 %v1320
      %v1434 = vunpack.c.l.b16 %v1321
      %v1435 = vpack.c.b16 %v1399, %v1398
      %v1436 = vpack.c.b16 %v1401, %v1400
      %v1437 = vpack.c.b16 %v1403, %v1402
      %v1438 = vpack.c.b16 %v1405, %v1404
      %v1439 = vpack.c.b16 %v1407, %v1406
      %v1440 = vpack.c.b16 %v1409, %v1408
      %v1441 = vpack.c.b16 %v1411, %v1410
      %v1442 = vpack.c.b16 %v1413, %v1412
      %v1443 = vpack.c.b16 %v1415, %v1414
      %v1444 = vpack.c.b16 %v1417, %v1416
      %v1445 = vpack.c.b16 %v1419, %v1418
      %v1446 = vpack.c.b16 %v1421, %v1420
      %v1447 = vpack.c.b16 %v1423, %v1422
      %v1448 = vpack.c.b16 %v1425, %v1424
      %v1449 = vpack.c.b16 %v1427, %v1426
      %v1450 = vpack.c.b16 %v1429, %v1428
      %v1451 = vpack.c.b16 %v1431, %v1430
      %v1452 = vpack.c.b16 %v1433, %v1432
      %v1453 = vpack.c.b16 %v1434, %v1434
      %vm1454 = vcmask 1046528
      %v1455 = vrot.slane %v1435, 1
      %v1456 = vrot.slane %v1436, 1
      %v1457 = vsel %vm1454, %v1455, %v1456
      %v1458 = vrot.slane %v1437, 1
      %v1459 = vsel %vm1454, %v1456, %v1458
      %v1460 = vrot.slane %v1438, 1
      %v1461 = vsel %vm1454, %v1458, %v1460
      %v1462 = vrot.slane %v1439, 1
      %v1463 = vsel %vm1454, %v1460, %v1462
      %v1464 = vrot.slane %v1440, 1
      %v1465 = vsel %vm1454, %v1462, %v1464
      %v1466 = vrot.slane %v1441, 1
      %v1467 = vsel %vm1454, %v1464, %v1466
      %v1468 = vrot.slane %v1442, 1
      %v1469 = vsel %vm1454, %v1466, %v1468
      %v1470 = vrot.slane %v1443, 1
      %v1471 = vsel %vm1454, %v1468, %v1470
      %v1472 = vrot.slane %v1444, 1
      %v1473 = vsel %vm1454, %v1470, %v1472
      %v1474 = vrot.slane %v1445, 1
      %v1475 = vsel %vm1454, %v1472, %v1474
      %v1476 = vrot.slane %v1446, 1
      %v1477 = vsel %vm1454, %v1474, %v1476
      %v1478 = vrot.slane %v1447, 1
      %v1479 = vsel %vm1454, %v1476, %v1478
      %v1480 = vrot.slane %v1448, 1
      %v1481 = vsel %vm1454, %v1478, %v1480
      %v1482 = vrot.slane %v1449, 1
      %v1483 = vsel %vm1454, %v1480, %v1482
      %v1484 = vrot.slane %v1450, 1
      %v1485 = vsel %vm1454, %v1482, %v1484
      %v1486 = vrot.slane %v1451, 1
      %v1487 = vsel %vm1454, %v1484, %v1486
      %v1488 = vrot.slane %v1452, 1
      %v1489 = vsel %vm1454, %v1486, %v1488
      %v1490 = vrot.slane %v1453, 1
      %v1491 = vsel %vm1454, %v1488, %v1490
      %v1494 = vunpack.c.l.b16 %v1359
      %v1495 = vunpack.c.l.b16 %v1360
      %v1496 = vpack.c.b16 %v1495, %v1494
      %v1499 = vsel %vm509, %v1457, 0
      %v1502 = vsel %vm509, %v1459, 0
      %v1505 = vsel %vm509, %v1461, 0
      %v1508 = vsel %vm509, %v1463, 0
      %v1511 = vsel %vm509, %v1465, 0
      %v1514 = vsel %vm509, %v1467, 0
      %v1517 = vsel %vm509, %v1469, 0
      %v1520 = vsel %vm509, %v1471, 0
      %v1523 = vsel %vm509, %v1473, 0
      %v1526 = vsel %vm509, %v1475, 0
      %v1529 = vsel %vm509, %v1477, 0
      %v1532 = vsel %vm509, %v1479, 0
      %v1535 = vsel %vm509, %v1481, 0
      %v1538 = vsel %vm509, %v1483, 0
      %v1541 = vsel %vm509, %v1485, 0
      %v1544 = vsel %vm509, %v1487, 0
      %v1547 = vsel %vm509, %v1489, 0
      %v1550 = vsel %vm509, %v1491, 0
      %1552 = vmatpush.bf16.msra.mxu0 0
      %1553 = vmatpush.bf16.msra.mxu0 0
      %1554 = vmatpush.bf16.msra.mxu0 0
      %1555 = vmatpush.bf16.msra.mxu0 0
      %1556 = vmatpush.bf16.msra.mxu0 0
      %1557 = vmatpush.bf16.msra.mxu0 0
      %1558 = vmatpush.bf16.msra.mxu0 0
      %1559 = vmatpush.bf16.msra.mxu0 %v1496
      %1560 = vmatmul.bf16.gmra.mxu0 %v1499
      %v1561 = vpop.f32.mrf.mxu0
      %v1562 = vadd.f32 0.0, %v1561
      %v1563 = vpop.f32.mrf.mxu0
      %v1564 = vadd.f32 0.0, %v1563
      %1565 = vmatmul.bf16.gmra.mxu0 %v1502
      %v1566 = vpop.f32.mrf.mxu0
      %v1567 = vadd.f32 0.0, %v1566
      %v1568 = vpop.f32.mrf.mxu0
      %v1569 = vadd.f32 0.0, %v1568
      %1570 = vmatmul.bf16.gmra.mxu0 %v1505
      %v1571 = vpop.f32.mrf.mxu0
      %v1572 = vadd.f32 0.0, %v1571
      %v1573 = vpop.f32.mrf.mxu0
      %v1574 = vadd.f32 0.0, %v1573
      %1575 = vmatmul.bf16.gmra.mxu0 %v1508
      %v1576 = vpop.f32.mrf.mxu0
      %v1577 = vadd.f32 0.0, %v1576
      %v1578 = vpop.f32.mrf.mxu0
      %v1579 = vadd.f32 0.0, %v1578
      %1580 = vmatmul.bf16.gmra.mxu0 %v1511
      %v1581 = vpop.f32.mrf.mxu0
      %v1582 = vadd.f32 0.0, %v1581
      %v1583 = vpop.f32.mrf.mxu0
      %v1584 = vadd.f32 0.0, %v1583
      %1585 = vmatmul.bf16.gmra.mxu0 %v1514
      %v1586 = vpop.f32.mrf.mxu0
      %v1587 = vadd.f32 0.0, %v1586
      %v1588 = vpop.f32.mrf.mxu0
      %v1589 = vadd.f32 0.0, %v1588
      %1590 = vmatmul.bf16.gmra.mxu0 %v1517
      %v1591 = vpop.f32.mrf.mxu0
      %v1592 = vadd.f32 0.0, %v1591
      %v1593 = vpop.f32.mrf.mxu0
      %v1594 = vadd.f32 0.0, %v1593
      %1595 = vmatmul.bf16.gmra.mxu0 %v1520
      %v1596 = vpop.f32.mrf.mxu0
      %v1597 = vadd.f32 0.0, %v1596
      %v1598 = vpop.f32.mrf.mxu0
      %v1599 = vadd.f32 0.0, %v1598
      %1600 = vmatmul.bf16.gmra.mxu0 %v1523
      %v1601 = vpop.f32.mrf.mxu0
      %v1602 = vadd.f32 0.0, %v1601
      %v1603 = vpop.f32.mrf.mxu0
      %v1604 = vadd.f32 0.0, %v1603
      %1605 = vmatmul.bf16.gmra.mxu0 %v1526
      %v1606 = vpop.f32.mrf.mxu0
      %v1607 = vadd.f32 0.0, %v1606
      %v1608 = vpop.f32.mrf.mxu0
      %v1609 = vadd.f32 0.0, %v1608
      %1610 = vmatmul.bf16.gmra.mxu0 %v1529
      %v1611 = vpop.f32.mrf.mxu0
      %v1612 = vadd.f32 0.0, %v1611
      %v1613 = vpop.f32.mrf.mxu0
      %v1614 = vadd.f32 0.0, %v1613
      %1615 = vmatmul.bf16.gmra.mxu0 %v1532
      %v1616 = vpop.f32.mrf.mxu0
      %v1617 = vadd.f32 0.0, %v1616
      %v1618 = vpop.f32.mrf.mxu0
      %v1619 = vadd.f32 0.0, %v1618
      %1620 = vmatmul.bf16.gmra.mxu0 %v1535
      %v1621 = vpop.f32.mrf.mxu0
      %v1622 = vadd.f32 0.0, %v1621
      %v1623 = vpop.f32.mrf.mxu0
      %v1624 = vadd.f32 0.0, %v1623
      %1625 = vmatmul.bf16.gmra.mxu0 %v1538
      %v1626 = vpop.f32.mrf.mxu0
      %v1627 = vadd.f32 0.0, %v1626
      %v1628 = vpop.f32.mrf.mxu0
      %v1629 = vadd.f32 0.0, %v1628
      %1630 = vmatmul.bf16.gmra.mxu0 %v1541
      %v1631 = vpop.f32.mrf.mxu0
      %v1632 = vadd.f32 0.0, %v1631
      %v1633 = vpop.f32.mrf.mxu0
      %v1634 = vadd.f32 0.0, %v1633
      %1635 = vmatmul.bf16.gmra.mxu0 %v1544
      %v1636 = vpop.f32.mrf.mxu0
      %v1637 = vadd.f32 0.0, %v1636
      %v1638 = vpop.f32.mrf.mxu0
      %v1639 = vadd.f32 0.0, %v1638
      %1640 = vmatmul.bf16.gmra.mxu0 %v1547
      %v1641 = vpop.f32.mrf.mxu0
      %v1642 = vadd.f32 0.0, %v1641
      %v1643 = vpop.f32.mrf.mxu0
      %v1644 = vadd.f32 0.0, %v1643
      %1645 = vmatmul.bf16.gmra.mxu0 %v1550
      %v1646 = vpop.f32.mrf.mxu0
      %v1647 = vadd.f32 0.0, %v1646
      %v1648 = vpop.f32.mrf.mxu0
      %v1649 = vadd.f32 0.0, %v1648
      %1650 = vdwg.mxu0
      %v1651 = vadd.f32 %v1322, %v1562
      %v1652 = vadd.f32 %v1323, %v1564
      %v1653 = vadd.f32 %v1324, %v1567
      %v1654 = vadd.f32 %v1325, %v1569
      %v1655 = vadd.f32 %v1326, %v1572
      %v1656 = vadd.f32 %v1327, %v1574
      %v1657 = vadd.f32 %v1328, %v1577
      %v1658 = vadd.f32 %v1329, %v1579
      %v1659 = vadd.f32 %v1330, %v1582
      %v1660 = vadd.f32 %v1331, %v1584
      %v1661 = vadd.f32 %v1332, %v1587
      %v1662 = vadd.f32 %v1333, %v1589
      %v1663 = vadd.f32 %v1334, %v1592
      %v1664 = vadd.f32 %v1335, %v1594
      %v1665 = vadd.f32 %v1336, %v1597
      %v1666 = vadd.f32 %v1337, %v1599
      %v1667 = vadd.f32 %v1338, %v1602
      %v1668 = vadd.f32 %v1339, %v1604
      %v1669 = vadd.f32 %v1340, %v1607
      %v1670 = vadd.f32 %v1341, %v1609
      %v1671 = vadd.f32 %v1342, %v1612
      %v1672 = vadd.f32 %v1343, %v1614
      %v1673 = vadd.f32 %v1344, %v1617
      %v1674 = vadd.f32 %v1345, %v1619
      %v1675 = vadd.f32 %v1346, %v1622
      %v1676 = vadd.f32 %v1347, %v1624
      %v1677 = vadd.f32 %v1348, %v1627
      %v1678 = vadd.f32 %v1349, %v1629
      %v1679 = vadd.f32 %v1350, %v1632
      %v1680 = vadd.f32 %v1351, %v1634
      %v1681 = vadd.f32 %v1352, %v1637
      %v1682 = vadd.f32 %v1353, %v1639
      %v1683 = vadd.f32 %v1354, %v1642
      %v1684 = vadd.f32 %v1355, %v1644
      %v1685 = vadd.f32 %v1356, %v1647
      %v1686 = vadd.f32 %v1357, %v1649
      %1687 = vst.msk [vmem:[#allocation2] sm:$0xff] %vm699, %v1651
      %1688 = vst.msk [vmem:[#allocation2 + $0x8] sm:$0xff] %vm699, %v1652
      %1689 = vst.msk [vmem:[#allocation2 + $0x10] sm:$0xff] %vm699, %v1653
      %1690 = vst.msk [vmem:[#allocation2 + $0x18] sm:$0xff] %vm699, %v1654
      %1691 = vst.msk [vmem:[#allocation2 + $0x20] sm:$0xff] %vm699, %v1655
      %1692 = vst.msk [vmem:[#allocation2 + $0x28] sm:$0xff] %vm699, %v1656
      %1693 = vst.msk [vmem:[#allocation2 + $0x30] sm:$0xff] %vm699, %v1657
      %1694 = vst.msk [vmem:[#allocation2 + $0x38] sm:$0xff] %vm699, %v1658
      %1695 = vst.msk [vmem:[#allocation2 + $0x40] sm:$0xff] %vm699, %v1659
      %1696 = vst.msk [vmem:[#allocation2 + $0x48] sm:$0xff] %vm699, %v1660
      %1697 = vst.msk [vmem:[#allocation2 + $0x50] sm:$0xff] %vm699, %v1661
      %1698 = vst.msk [vmem:[#allocation2 + $0x58] sm:$0xff] %vm699, %v1662
      %1699 = vst.msk [vmem:[#allocation2 + $0x60] sm:$0xff] %vm699, %v1663
      %1700 = vst.msk [vmem:[#allocation2 + $0x68] sm:$0xff] %vm699, %v1664
      %1701 = vst.msk [vmem:[#allocation2 + $0x70] sm:$0xff] %vm699, %v1665
      %1702 = vst.msk [vmem:[#allocation2 + $0x78] sm:$0xff] %vm699, %v1666
      %1703 = vst.msk [vmem:[#allocation2 + $0x80] sm:$0xff] %vm699, %v1667
      %1704 = vst.msk [vmem:[#allocation2 + $0x88] sm:$0xff] %vm699, %v1668
      %1705 = vst.msk [vmem:[#allocation2 + $0x90] sm:$0xff] %vm699, %v1669
      %1706 = vst.msk [vmem:[#allocation2 + $0x98] sm:$0xff] %vm699, %v1670
      %1707 = vst.msk [vmem:[#allocation2 + $0xa0] sm:$0xff] %vm699, %v1671
      %1708 = vst.msk [vmem:[#allocation2 + $0xa8] sm:$0xff] %vm699, %v1672
      %1709 = vst.msk [vmem:[#allocation2 + $0xb0] sm:$0xff] %vm699, %v1673
      %1710 = vst.msk [vmem:[#allocation2 + $0xb8] sm:$0xff] %vm699, %v1674
      %1711 = vst.msk [vmem:[#allocation2 + $0xc0] sm:$0xff] %vm699, %v1675
      %1712 = vst.msk [vmem:[#allocation2 + $0xc8] sm:$0xff] %vm699, %v1676
      %1713 = vst.msk [vmem:[#allocation2 + $0xd0] sm:$0xff] %vm699, %v1677
      %1714 = vst.msk [vmem:[#allocation2 + $0xd8] sm:$0xff] %vm699, %v1678
      %1715 = vst.msk [vmem:[#allocation2 + $0xe0] sm:$0xff] %vm699, %v1679
      %1716 = vst.msk [vmem:[#allocation2 + $0xe8] sm:$0xff] %vm699, %v1680
      %1717 = vst.msk [vmem:[#allocation2 + $0xf0] sm:$0xff] %vm699, %v1681
      %1718 = vst.msk [vmem:[#allocation2 + $0xf8] sm:$0xff] %vm699, %v1682
      %1719 = vst.msk [vmem:[#allocation2 + $0x100] sm:$0xff] %vm699, %v1683
      %1720 = vst.msk [vmem:[#allocation2 + $0x108] sm:$0xff] %vm699, %v1684
      %1721 = vst.msk [vmem:[#allocation2 + $0x110] sm:$0xff] %vm699, %v1685
      %1722 = vst.msk [vmem:[#allocation2 + $0x118] sm:$0xff] %vm699, %v1686
      %v1723 = vld [vmem:[%s273 + $0x8] sm:$0xe]
      %v1724 = vld [vmem:[%s273 + $0xc] sm:$0xf]
      %v1725 = vld [vmem:[%s273 + $0x10] sm:$0xf]
      %v1726 = vld [vmem:[%s273 + $0x14] sm:$0xf]
      %v1727 = vld [vmem:[%s273 + $0x18] sm:$0xf]
      %v1728 = vld [vmem:[%s273 + $0x1c] sm:$0xf]
      %v1729 = vld [vmem:[%s273 + $0x20] sm:$0xf]
      %v1730 = vld [vmem:[%s273 + $0x24] sm:$0xf]
      %v1731 = vld [vmem:[%s273 + $0x28] sm:$0xf]
      %v1732 = vld [vmem:[%s273 + $0x2c] sm:$0xf]
      %v1733 = vld [vmem:[%s273 + $0x30] sm:$0xf]
      %v1734 = vld [vmem:[%s273 + $0x34] sm:$0xf]
      %v1735 = vld [vmem:[%s273 + $0x38] sm:$0xf]
      %v1736 = vld [vmem:[%s273 + $0x3c] sm:$0xf]
      %v1737 = vld [vmem:[%s273 + $0x40] sm:$0xf]
      %v1738 = vld [vmem:[%s273 + $0x44] sm:$0xf]
      %v1739 = vld [vmem:[%s273 + $0x48] sm:$0xf]
      %v1740 = vld [vmem:[%s273 + $0x4c] sm:$0xf]
      %v1741 = vld [vmem:[%s273 + $0x50] sm:$0xf]
      %v1742 = vld [vmem:[%s273 + $0x54] sm:$0xf]
      %v1743 = vld [vmem:[%s273 + $0x58] sm:$0xf]
      %v1744 = vld [vmem:[%s273 + $0x5c] sm:$0xf]
      %v1745 = vld [vmem:[%s273 + $0x60] sm:$0xf]
      %v1746 = vld [vmem:[%s273 + $0x64] sm:$0xf]
      %v1747 = vld [vmem:[%s273 + $0x68] sm:$0xf]
      %v1748 = vld [vmem:[%s273 + $0x6c] sm:$0xf]
      %v1749 = vld [vmem:[%s273 + $0x70] sm:$0xf]
      %v1750 = vld [vmem:[%s273 + $0x74] sm:$0xf]
      %v1751 = vld [vmem:[%s273 + $0x78] sm:$0xf]
      %v1752 = vld [vmem:[%s273 + $0x7c] sm:$0xf]
      %v1753 = vld [vmem:[%s273 + $0x80] sm:$0xf]
      %v1754 = vld [vmem:[%s273 + $0x84] sm:$0xf]
      %v1755 = vld [vmem:[%s273 + $0x88] sm:$0xf]
      %v1756 = vld [vmem:[%s273 + $0x8c] sm:$0xf]
      %v1757 = vld [vmem:[%s273 + $0x90] sm:$0xf]
      %v1758 = vld [vmem:[%s273 + $0x94] sm:$0xf]
      %v1759 = vld [vmem:[%s273 + $0x98] sm:$0x1]
      %v1760 = vld [vmem:[#allocation2] sm:$0xff]
      %v1761 = vld [vmem:[#allocation2 + $0x8] sm:$0xff]
      %v1762 = vld [vmem:[#allocation2 + $0x10] sm:$0xff]
      %v1763 = vld [vmem:[#allocation2 + $0x18] sm:$0xff]
      %v1764 = vld [vmem:[#allocation2 + $0x20] sm:$0xff]
      %v1765 = vld [vmem:[#allocation2 + $0x28] sm:$0xff]
      %v1766 = vld [vmem:[#allocation2 + $0x30] sm:$0xff]
      %v1767 = vld [vmem:[#allocation2 + $0x38] sm:$0xff]
      %v1768 = vld [vmem:[#allocation2 + $0x40] sm:$0xff]
      %v1769 = vld [vmem:[#allocation2 + $0x48] sm:$0xff]
      %v1770 = vld [vmem:[#allocation2 + $0x50] sm:$0xff]
      %v1771 = vld [vmem:[#allocation2 + $0x58] sm:$0xff]
      %v1772 = vld [vmem:[#allocation2 + $0x60] sm:$0xff]
      %v1773 = vld [vmem:[#allocation2 + $0x68] sm:$0xff]
      %v1774 = vld [vmem:[#allocation2 + $0x70] sm:$0xff]
      %v1775 = vld [vmem:[#allocation2 + $0x78] sm:$0xff]
      %v1776 = vld [vmem:[#allocation2 + $0x80] sm:$0xff]
      %v1777 = vld [vmem:[#allocation2 + $0x88] sm:$0xff]
      %v1778 = vld [vmem:[#allocation2 + $0x90] sm:$0xff]
      %v1779 = vld [vmem:[#allocation2 + $0x98] sm:$0xff]
      %v1780 = vld [vmem:[#allocation2 + $0xa0] sm:$0xff]
      %v1781 = vld [vmem:[#allocation2 + $0xa8] sm:$0xff]
      %v1782 = vld [vmem:[#allocation2 + $0xb0] sm:$0xff]
      %v1783 = vld [vmem:[#allocation2 + $0xb8] sm:$0xff]
      %v1784 = vld [vmem:[#allocation2 + $0xc0] sm:$0xff]
      %v1785 = vld [vmem:[#allocation2 + $0xc8] sm:$0xff]
      %v1786 = vld [vmem:[#allocation2 + $0xd0] sm:$0xff]
      %v1787 = vld [vmem:[#allocation2 + $0xd8] sm:$0xff]
      %v1788 = vld [vmem:[#allocation2 + $0xe0] sm:$0xff]
      %v1789 = vld [vmem:[#allocation2 + $0xe8] sm:$0xff]
      %v1790 = vld [vmem:[#allocation2 + $0xf0] sm:$0xff]
      %v1791 = vld [vmem:[#allocation2 + $0xf8] sm:$0xff]
      %v1792 = vld [vmem:[#allocation2 + $0x100] sm:$0xff]
      %v1793 = vld [vmem:[#allocation2 + $0x108] sm:$0xff]
      %v1794 = vld [vmem:[#allocation2 + $0x110] sm:$0xff]
      %v1795 = vld [vmem:[#allocation2 + $0x118] sm:$0xff]
      %s1796 = scalar_lea.vmem %s281, 24
      %v1797 = vld [vmem:[%s1796] sm:$0xf]
      %v1798 = vld [vmem:[%s1796 + $0x4] sm:$0xf]
      %v1836 = vunpack.c.l.b16 %v1723
      %v1837 = vunpack.c.l.b16 %v1724
      %v1838 = vunpack.c.l.b16 %v1725
      %v1839 = vunpack.c.l.b16 %v1726
      %v1840 = vunpack.c.l.b16 %v1727
      %v1841 = vunpack.c.l.b16 %v1728
      %v1842 = vunpack.c.l.b16 %v1729
      %v1843 = vunpack.c.l.b16 %v1730
      %v1844 = vunpack.c.l.b16 %v1731
      %v1845 = vunpack.c.l.b16 %v1732
      %v1846 = vunpack.c.l.b16 %v1733
      %v1847 = vunpack.c.l.b16 %v1734
      %v1848 = vunpack.c.l.b16 %v1735
      %v1849 = vunpack.c.l.b16 %v1736
      %v1850 = vunpack.c.l.b16 %v1737
      %v1851 = vunpack.c.l.b16 %v1738
      %v1852 = vunpack.c.l.b16 %v1739
      %v1853 = vunpack.c.l.b16 %v1740
      %v1854 = vunpack.c.l.b16 %v1741
      %v1855 = vunpack.c.l.b16 %v1742
      %v1856 = vunpack.c.l.b16 %v1743
      %v1857 = vunpack.c.l.b16 %v1744
      %v1858 = vunpack.c.l.b16 %v1745
      %v1859 = vunpack.c.l.b16 %v1746
      %v1860 = vunpack.c.l.b16 %v1747
      %v1861 = vunpack.c.l.b16 %v1748
      %v1862 = vunpack.c.l.b16 %v1749
      %v1863 = vunpack.c.l.b16 %v1750
      %v1864 = vunpack.c.l.b16 %v1751
      %v1865 = vunpack.c.l.b16 %v1752
      %v1866 = vunpack.c.l.b16 %v1753
      %v1867 = vunpack.c.l.b16 %v1754
      %v1868 = vunpack.c.l.b16 %v1755
      %v1869 = vunpack.c.l.b16 %v1756
      %v1870 = vunpack.c.l.b16 %v1757
      %v1871 = vunpack.c.l.b16 %v1758
      %v1872 = vunpack.c.l.b16 %v1759
      %v1873 = vpack.c.b16 %v1837, %v1836
      %v1874 = vpack.c.b16 %v1839, %v1838
      %v1875 = vpack.c.b16 %v1841, %v1840
      %v1876 = vpack.c.b16 %v1843, %v1842
      %v1877 = vpack.c.b16 %v1845, %v1844
      %v1878 = vpack.c.b16 %v1847, %v1846
      %v1879 = vpack.c.b16 %v1849, %v1848
      %v1880 = vpack.c.b16 %v1851, %v1850
      %v1881 = vpack.c.b16 %v1853, %v1852
      %v1882 = vpack.c.b16 %v1855, %v1854
      %v1883 = vpack.c.b16 %v1857, %v1856
      %v1884 = vpack.c.b16 %v1859, %v1858
      %v1885 = vpack.c.b16 %v1861, %v1860
      %v1886 = vpack.c.b16 %v1863, %v1862
      %v1887 = vpack.c.b16 %v1865, %v1864
      %v1888 = vpack.c.b16 %v1867, %v1866
      %v1889 = vpack.c.b16 %v1869, %v1868
      %v1890 = vpack.c.b16 %v1871, %v1870
      %v1891 = vpack.c.b16 %v1872, %v1872
      %v1892 = vrot.slane %v1873, 1
      %v1893 = vrot.slane %v1874, 1
      %v1894 = vsel %vm1454, %v1892, %v1893
      %v1895 = vrot.slane %v1875, 1
      %v1896 = vsel %vm1454, %v1893, %v1895
      %v1897 = vrot.slane %v1876, 1
      %v1898 = vsel %vm1454, %v1895, %v1897
      %v1899 = vrot.slane %v1877, 1
      %v1900 = vsel %vm1454, %v1897, %v1899
      %v1901 = vrot.slane %v1878, 1
      %v1902 = vsel %vm1454, %v1899, %v1901
      %v1903 = vrot.slane %v1879, 1
      %v1904 = vsel %vm1454, %v1901, %v1903
      %v1905 = vrot.slane %v1880, 1
      %v1906 = vsel %vm1454, %v1903, %v1905
      %v1907 = vrot.slane %v1881, 1
      %v1908 = vsel %vm1454, %v1905, %v1907
      %v1909 = vrot.slane %v1882, 1
      %v1910 = vsel %vm1454, %v1907, %v1909
      %v1911 = vrot.slane %v1883, 1
      %v1912 = vsel %vm1454, %v1909, %v1911
      %v1913 = vrot.slane %v1884, 1
      %v1914 = vsel %vm1454, %v1911, %v1913
      %v1915 = vrot.slane %v1885, 1
      %v1916 = vsel %vm1454, %v1913, %v1915
      %v1917 = vrot.slane %v1886, 1
      %v1918 = vsel %vm1454, %v1915, %v1917
      %v1919 = vrot.slane %v1887, 1
      %v1920 = vsel %vm1454, %v1917, %v1919
      %v1921 = vrot.slane %v1888, 1
      %v1922 = vsel %vm1454, %v1919, %v1921
      %v1923 = vrot.slane %v1889, 1
      %v1924 = vsel %vm1454, %v1921, %v1923
      %v1925 = vrot.slane %v1890, 1
      %v1926 = vsel %vm1454, %v1923, %v1925
      %v1927 = vrot.slane %v1891, 1
      %v1928 = vsel %vm1454, %v1925, %v1927
      %v1931 = vunpack.c.l.b16 %v1797
      %v1932 = vunpack.c.l.b16 %v1798
      %v1933 = vpack.c.b16 %v1932, %v1931
      %v1936 = vsel %vm509, %v1894, 0
      %v1939 = vsel %vm509, %v1896, 0
      %v1942 = vsel %vm509, %v1898, 0
      %v1945 = vsel %vm509, %v1900, 0
      %v1948 = vsel %vm509, %v1902, 0
      %v1951 = vsel %vm509, %v1904, 0
      %v1954 = vsel %vm509, %v1906, 0
      %v1957 = vsel %vm509, %v1908, 0
      %v1960 = vsel %vm509, %v1910, 0
      %v1963 = vsel %vm509, %v1912, 0
      %v1966 = vsel %vm509, %v1914, 0
      %v1969 = vsel %vm509, %v1916, 0
      %v1972 = vsel %vm509, %v1918, 0
      %v1975 = vsel %vm509, %v1920, 0
      %v1978 = vsel %vm509, %v1922, 0
      %v1981 = vsel %vm509, %v1924, 0
      %v1984 = vsel %vm509, %v1926, 0
      %v1987 = vsel %vm509, %v1928, 0
      %1989 = vmatpush.bf16.msra.mxu0 0
      %1990 = vmatpush.bf16.msra.mxu0 0
      %1991 = vmatpush.bf16.msra.mxu0 0
      %1992 = vmatpush.bf16.msra.mxu0 0
      %1993 = vmatpush.bf16.msra.mxu0 0
      %1994 = vmatpush.bf16.msra.mxu0 0
      %1995 = vmatpush.bf16.msra.mxu0 0
      %1996 = vmatpush.bf16.msra.mxu0 %v1933
      %1997 = vmatmul.bf16.gmra.mxu0 %v1936
      %v1998 = vpop.f32.mrf.mxu0
      %v1999 = vadd.f32 0.0, %v1998
      %v2000 = vpop.f32.mrf.mxu0
      %v2001 = vadd.f32 0.0, %v2000
      %2002 = vmatmul.bf16.gmra.mxu0 %v1939
      %v2003 = vpop.f32.mrf.mxu0
      %v2004 = vadd.f32 0.0, %v2003
      %v2005 = vpop.f32.mrf.mxu0
      %v2006 = vadd.f32 0.0, %v2005
      %2007 = vmatmul.bf16.gmra.mxu0 %v1942
      %v2008 = vpop.f32.mrf.mxu0
      %v2009 = vadd.f32 0.0, %v2008
      %v2010 = vpop.f32.mrf.mxu0
      %v2011 = vadd.f32 0.0, %v2010
      %2012 = vmatmul.bf16.gmra.mxu0 %v1945
      %v2013 = vpop.f32.mrf.mxu0
      %v2014 = vadd.f32 0.0, %v2013
      %v2015 = vpop.f32.mrf.mxu0
      %v2016 = vadd.f32 0.0, %v2015
      %2017 = vmatmul.bf16.gmra.mxu0 %v1948
      %v2018 = vpop.f32.mrf.mxu0
      %v2019 = vadd.f32 0.0, %v2018
      %v2020 = vpop.f32.mrf.mxu0
      %v2021 = vadd.f32 0.0, %v2020
      %2022 = vmatmul.bf16.gmra.mxu0 %v1951
      %v2023 = vpop.f32.mrf.mxu0
      %v2024 = vadd.f32 0.0, %v2023
      %v2025 = vpop.f32.mrf.mxu0
      %v2026 = vadd.f32 0.0, %v2025
      %2027 = vmatmul.bf16.gmra.mxu0 %v1954
      %v2028 = vpop.f32.mrf.mxu0
      %v2029 = vadd.f32 0.0, %v2028
      %v2030 = vpop.f32.mrf.mxu0
      %v2031 = vadd.f32 0.0, %v2030
      %2032 = vmatmul.bf16.gmra.mxu0 %v1957
      %v2033 = vpop.f32.mrf.mxu0
      %v2034 = vadd.f32 0.0, %v2033
      %v2035 = vpop.f32.mrf.mxu0
      %v2036 = vadd.f32 0.0, %v2035
      %2037 = vmatmul.bf16.gmra.mxu0 %v1960
      %v2038 = vpop.f32.mrf.mxu0
      %v2039 = vadd.f32 0.0, %v2038
      %v2040 = vpop.f32.mrf.mxu0
      %v2041 = vadd.f32 0.0, %v2040
      %2042 = vmatmul.bf16.gmra.mxu0 %v1963
      %v2043 = vpop.f32.mrf.mxu0
      %v2044 = vadd.f32 0.0, %v2043
      %v2045 = vpop.f32.mrf.mxu0
      %v2046 = vadd.f32 0.0, %v2045
      %2047 = vmatmul.bf16.gmra.mxu0 %v1966
      %v2048 = vpop.f32.mrf.mxu0
      %v2049 = vadd.f32 0.0, %v2048
      %v2050 = vpop.f32.mrf.mxu0
      %v2051 = vadd.f32 0.0, %v2050
      %2052 = vmatmul.bf16.gmra.mxu0 %v1969
      %v2053 = vpop.f32.mrf.mxu0
      %v2054 = vadd.f32 0.0, %v2053
      %v2055 = vpop.f32.mrf.mxu0
      %v2056 = vadd.f32 0.0, %v2055
      %2057 = vmatmul.bf16.gmra.mxu0 %v1972
      %v2058 = vpop.f32.mrf.mxu0
      %v2059 = vadd.f32 0.0, %v2058
      %v2060 = vpop.f32.mrf.mxu0
      %v2061 = vadd.f32 0.0, %v2060
      %2062 = vmatmul.bf16.gmra.mxu0 %v1975
      %v2063 = vpop.f32.mrf.mxu0
      %v2064 = vadd.f32 0.0, %v2063
      %v2065 = vpop.f32.mrf.mxu0
      %v2066 = vadd.f32 0.0, %v2065
      %2067 = vmatmul.bf16.gmra.mxu0 %v1978
      %v2068 = vpop.f32.mrf.mxu0
      %v2069 = vadd.f32 0.0, %v2068
      %v2070 = vpop.f32.mrf.mxu0
      %v2071 = vadd.f32 0.0, %v2070
      %2072 = vmatmul.bf16.gmra.mxu0 %v1981
      %v2073 = vpop.f32.mrf.mxu0
      %v2074 = vadd.f32 0.0, %v2073
      %v2075 = vpop.f32.mrf.mxu0
      %v2076 = vadd.f32 0.0, %v2075
      %2077 = vmatmul.bf16.gmra.mxu0 %v1984
      %v2078 = vpop.f32.mrf.mxu0
      %v2079 = vadd.f32 0.0, %v2078
      %v2080 = vpop.f32.mrf.mxu0
      %v2081 = vadd.f32 0.0, %v2080
      %2082 = vmatmul.bf16.gmra.mxu0 %v1987
      %v2083 = vpop.f32.mrf.mxu0
      %v2084 = vadd.f32 0.0, %v2083
      %v2085 = vpop.f32.mrf.mxu0
      %v2086 = vadd.f32 0.0, %v2085
      %2087 = vdwg.mxu0
      %v2088 = vadd.f32 %v1760, %v1999
      %v2089 = vadd.f32 %v1761, %v2001
      %v2090 = vadd.f32 %v1762, %v2004
      %v2091 = vadd.f32 %v1763, %v2006
      %v2092 = vadd.f32 %v1764, %v2009
      %v2093 = vadd.f32 %v1765, %v2011
      %v2094 = vadd.f32 %v1766, %v2014
      %v2095 = vadd.f32 %v1767, %v2016
      %v2096 = vadd.f32 %v1768, %v2019
      %v2097 = vadd.f32 %v1769, %v2021
      %v2098 = vadd.f32 %v1770, %v2024
      %v2099 = vadd.f32 %v1771, %v2026
      %v2100 = vadd.f32 %v1772, %v2029
      %v2101 = vadd.f32 %v1773, %v2031
      %v2102 = vadd.f32 %v1774, %v2034
      %v2103 = vadd.f32 %v1775, %v2036
      %v2104 = vadd.f32 %v1776, %v2039
      %v2105 = vadd.f32 %v1777, %v2041
      %v2106 = vadd.f32 %v1778, %v2044
      %v2107 = vadd.f32 %v1779, %v2046
      %v2108 = vadd.f32 %v1780, %v2049
      %v2109 = vadd.f32 %v1781, %v2051
      %v2110 = vadd.f32 %v1782, %v2054
      %v2111 = vadd.f32 %v1783, %v2056
      %v2112 = vadd.f32 %v1784, %v2059
      %v2113 = vadd.f32 %v1785, %v2061
      %v2114 = vadd.f32 %v1786, %v2064
      %v2115 = vadd.f32 %v1787, %v2066
      %v2116 = vadd.f32 %v1788, %v2069
      %v2117 = vadd.f32 %v1789, %v2071
      %v2118 = vadd.f32 %v1790, %v2074
      %v2119 = vadd.f32 %v1791, %v2076
      %v2120 = vadd.f32 %v1792, %v2079
      %v2121 = vadd.f32 %v1793, %v2081
      %v2122 = vadd.f32 %v1794, %v2084
      %v2123 = vadd.f32 %v1795, %v2086
      %2124 = vst.msk [vmem:[#allocation2] sm:$0xff] %vm699, %v2088
      %2125 = vst.msk [vmem:[#allocation2 + $0x8] sm:$0xff] %vm699, %v2089
      %2126 = vst.msk [vmem:[#allocation2 + $0x10] sm:$0xff] %vm699, %v2090
      %2127 = vst.msk [vmem:[#allocation2 + $0x18] sm:$0xff] %vm699, %v2091
      %2128 = vst.msk [vmem:[#allocation2 + $0x20] sm:$0xff] %vm699, %v2092
      %2129 = vst.msk [vmem:[#allocation2 + $0x28] sm:$0xff] %vm699, %v2093
      %2130 = vst.msk [vmem:[#allocation2 + $0x30] sm:$0xff] %vm699, %v2094
      %2131 = vst.msk [vmem:[#allocation2 + $0x38] sm:$0xff] %vm699, %v2095
      %2132 = vst.msk [vmem:[#allocation2 + $0x40] sm:$0xff] %vm699, %v2096
      %2133 = vst.msk [vmem:[#allocation2 + $0x48] sm:$0xff] %vm699, %v2097
      %2134 = vst.msk [vmem:[#allocation2 + $0x50] sm:$0xff] %vm699, %v2098
      %2135 = vst.msk [vmem:[#allocation2 + $0x58] sm:$0xff] %vm699, %v2099
      %2136 = vst.msk [vmem:[#allocation2 + $0x60] sm:$0xff] %vm699, %v2100
      %2137 = vst.msk [vmem:[#allocation2 + $0x68] sm:$0xff] %vm699, %v2101
      %2138 = vst.msk [vmem:[#allocation2 + $0x70] sm:$0xff] %vm699, %v2102
      %2139 = vst.msk [vmem:[#allocation2 + $0x78] sm:$0xff] %vm699, %v2103
      %2140 = vst.msk [vmem:[#allocation2 + $0x80] sm:$0xff] %vm699, %v2104
      %2141 = vst.msk [vmem:[#allocation2 + $0x88] sm:$0xff] %vm699, %v2105
      %2142 = vst.msk [vmem:[#allocation2 + $0x90] sm:$0xff] %vm699, %v2106
      %2143 = vst.msk [vmem:[#allocation2 + $0x98] sm:$0xff] %vm699, %v2107
      %2144 = vst.msk [vmem:[#allocation2 + $0xa0] sm:$0xff] %vm699, %v2108
      %2145 = vst.msk [vmem:[#allocation2 + $0xa8] sm:$0xff] %vm699, %v2109
      %2146 = vst.msk [vmem:[#allocation2 + $0xb0] sm:$0xff] %vm699, %v2110
      %2147 = vst.msk [vmem:[#allocation2 + $0xb8] sm:$0xff] %vm699, %v2111
      %2148 = vst.msk [vmem:[#allocation2 + $0xc0] sm:$0xff] %vm699, %v2112
      %2149 = vst.msk [vmem:[#allocation2 + $0xc8] sm:$0xff] %vm699, %v2113
      %2150 = vst.msk [vmem:[#allocation2 + $0xd0] sm:$0xff] %vm699, %v2114
      %2151 = vst.msk [vmem:[#allocation2 + $0xd8] sm:$0xff] %vm699, %v2115
      %2152 = vst.msk [vmem:[#allocation2 + $0xe0] sm:$0xff] %vm699, %v2116
      %2153 = vst.msk [vmem:[#allocation2 + $0xe8] sm:$0xff] %vm699, %v2117
      %2154 = vst.msk [vmem:[#allocation2 + $0xf0] sm:$0xff] %vm699, %v2118
      %2155 = vst.msk [vmem:[#allocation2 + $0xf8] sm:$0xff] %vm699, %v2119
      %2156 = vst.msk [vmem:[#allocation2 + $0x100] sm:$0xff] %vm699, %v2120
      %2157 = vst.msk [vmem:[#allocation2 + $0x108] sm:$0xff] %vm699, %v2121
      %2158 = vst.msk [vmem:[#allocation2 + $0x110] sm:$0xff] %vm699, %v2122
      %2159 = vst.msk [vmem:[#allocation2 + $0x118] sm:$0xff] %vm699, %v2123
      %v2160 = vld [vmem:[%s273 + $0x8] sm:$0xe]
      %v2161 = vld [vmem:[%s273 + $0xc] sm:$0xf]
      %v2162 = vld [vmem:[%s273 + $0x10] sm:$0xf]
      %v2163 = vld [vmem:[%s273 + $0x14] sm:$0xf]
      %v2164 = vld [vmem:[%s273 + $0x18] sm:$0xf]
      %v2165 = vld [vmem:[%s273 + $0x1c] sm:$0xf]
      %v2166 = vld [vmem:[%s273 + $0x20] sm:$0xf]
      %v2167 = vld [vmem:[%s273 + $0x24] sm:$0xf]
      %v2168 = vld [vmem:[%s273 + $0x28] sm:$0xf]
      %v2169 = vld [vmem:[%s273 + $0x2c] sm:$0xf]
      %v2170 = vld [vmem:[%s273 + $0x30] sm:$0xf]
      %v2171 = vld [vmem:[%s273 + $0x34] sm:$0xf]
      %v2172 = vld [vmem:[%s273 + $0x38] sm:$0xf]
      %v2173 = vld [vmem:[%s273 + $0x3c] sm:$0xf]
      %v2174 = vld [vmem:[%s273 + $0x40] sm:$0xf]
      %v2175 = vld [vmem:[%s273 + $0x44] sm:$0xf]
      %v2176 = vld [vmem:[%s273 + $0x48] sm:$0xf]
      %v2177 = vld [vmem:[%s273 + $0x4c] sm:$0xf]
      %v2178 = vld [vmem:[%s273 + $0x50] sm:$0xf]
      %v2179 = vld [vmem:[%s273 + $0x54] sm:$0xf]
      %v2180 = vld [vmem:[%s273 + $0x58] sm:$0xf]
      %v2181 = vld [vmem:[%s273 + $0x5c] sm:$0xf]
      %v2182 = vld [vmem:[%s273 + $0x60] sm:$0xf]
      %v2183 = vld [vmem:[%s273 + $0x64] sm:$0xf]
      %v2184 = vld [vmem:[%s273 + $0x68] sm:$0xf]
      %v2185 = vld [vmem:[%s273 + $0x6c] sm:$0xf]
      %v2186 = vld [vmem:[%s273 + $0x70] sm:$0xf]
      %v2187 = vld [vmem:[%s273 + $0x74] sm:$0xf]
      %v2188 = vld [vmem:[%s273 + $0x78] sm:$0xf]
      %v2189 = vld [vmem:[%s273 + $0x7c] sm:$0xf]
      %v2190 = vld [vmem:[%s273 + $0x80] sm:$0xf]
      %v2191 = vld [vmem:[%s273 + $0x84] sm:$0xf]
      %v2192 = vld [vmem:[%s273 + $0x88] sm:$0xf]
      %v2193 = vld [vmem:[%s273 + $0x8c] sm:$0xf]
      %v2194 = vld [vmem:[%s273 + $0x90] sm:$0xf]
      %v2195 = vld [vmem:[%s273 + $0x94] sm:$0xf]
      %v2196 = vld [vmem:[%s273 + $0x98] sm:$0x3]
      %v2197 = vld [vmem:[#allocation2] sm:$0xff]
      %v2198 = vld [vmem:[#allocation2 + $0x8] sm:$0xff]
      %v2199 = vld [vmem:[#allocation2 + $0x10] sm:$0xff]
      %v2200 = vld [vmem:[#allocation2 + $0x18] sm:$0xff]
      %v2201 = vld [vmem:[#allocation2 + $0x20] sm:$0xff]
      %v2202 = vld [vmem:[#allocation2 + $0x28] sm:$0xff]
      %v2203 = vld [vmem:[#allocation2 + $0x30] sm:$0xff]
      %v2204 = vld [vmem:[#allocation2 + $0x38] sm:$0xff]
      %v2205 = vld [vmem:[#allocation2 + $0x40] sm:$0xff]
      %v2206 = vld [vmem:[#allocation2 + $0x48] sm:$0xff]
      %v2207 = vld [vmem:[#allocation2 + $0x50] sm:$0xff]
      %v2208 = vld [vmem:[#allocation2 + $0x58] sm:$0xff]
      %v2209 = vld [vmem:[#allocation2 + $0x60] sm:$0xff]
      %v2210 = vld [vmem:[#allocation2 + $0x68] sm:$0xff]
      %v2211 = vld [vmem:[#allocation2 + $0x70] sm:$0xff]
      %v2212 = vld [vmem:[#allocation2 + $0x78] sm:$0xff]
      %v2213 = vld [vmem:[#allocation2 + $0x80] sm:$0xff]
      %v2214 = vld [vmem:[#allocation2 + $0x88] sm:$0xff]
      %v2215 = vld [vmem:[#allocation2 + $0x90] sm:$0xff]
      %v2216 = vld [vmem:[#allocation2 + $0x98] sm:$0xff]
      %v2217 = vld [vmem:[#allocation2 + $0xa0] sm:$0xff]
      %v2218 = vld [vmem:[#allocation2 + $0xa8] sm:$0xff]
      %v2219 = vld [vmem:[#allocation2 + $0xb0] sm:$0xff]
      %v2220 = vld [vmem:[#allocation2 + $0xb8] sm:$0xff]
      %v2221 = vld [vmem:[#allocation2 + $0xc0] sm:$0xff]
      %v2222 = vld [vmem:[#allocation2 + $0xc8] sm:$0xff]
      %v2223 = vld [vmem:[#allocation2 + $0xd0] sm:$0xff]
      %v2224 = vld [vmem:[#allocation2 + $0xd8] sm:$0xff]
      %v2225 = vld [vmem:[#allocation2 + $0xe0] sm:$0xff]
      %v2226 = vld [vmem:[#allocation2 + $0xe8] sm:$0xff]
      %v2227 = vld [vmem:[#allocation2 + $0xf0] sm:$0xff]
      %v2228 = vld [vmem:[#allocation2 + $0xf8] sm:$0xff]
      %v2229 = vld [vmem:[#allocation2 + $0x100] sm:$0xff]
      %v2230 = vld [vmem:[#allocation2 + $0x108] sm:$0xff]
      %v2231 = vld [vmem:[#allocation2 + $0x110] sm:$0xff]
      %v2232 = vld [vmem:[#allocation2 + $0x118] sm:$0xff]
      %s2233 = scalar_lea.vmem %s281, 32
      %v2234 = vld [vmem:[%s2233] sm:$0xf]
      %v2235 = vld [vmem:[%s2233 + $0x4] sm:$0xf]
      %v2273 = vunpack.c.l.b16 %v2160
      %v2274 = vunpack.c.l.b16 %v2161
      %v2275 = vunpack.c.l.b16 %v2162
      %v2276 = vunpack.c.l.b16 %v2163
      %v2277 = vunpack.c.l.b16 %v2164
      %v2278 = vunpack.c.l.b16 %v2165
      %v2279 = vunpack.c.l.b16 %v2166
      %v2280 = vunpack.c.l.b16 %v2167
      %v2281 = vunpack.c.l.b16 %v2168
      %v2282 = vunpack.c.l.b16 %v2169
      %v2283 = vunpack.c.l.b16 %v2170
      %v2284 = vunpack.c.l.b16 %v2171
      %v2285 = vunpack.c.l.b16 %v2172
      %v2286 = vunpack.c.l.b16 %v2173
      %v2287 = vunpack.c.l.b16 %v2174
      %v2288 = vunpack.c.l.b16 %v2175
      %v2289 = vunpack.c.l.b16 %v2176
      %v2290 = vunpack.c.l.b16 %v2177
      %v2291 = vunpack.c.l.b16 %v2178
      %v2292 = vunpack.c.l.b16 %v2179
      %v2293 = vunpack.c.l.b16 %v2180
      %v2294 = vunpack.c.l.b16 %v2181
      %v2295 = vunpack.c.l.b16 %v2182
      %v2296 = vunpack.c.l.b16 %v2183
      %v2297 = vunpack.c.l.b16 %v2184
      %v2298 = vunpack.c.l.b16 %v2185
      %v2299 = vunpack.c.l.b16 %v2186
      %v2300 = vunpack.c.l.b16 %v2187
      %v2301 = vunpack.c.l.b16 %v2188
      %v2302 = vunpack.c.l.b16 %v2189
      %v2303 = vunpack.c.l.b16 %v2190
      %v2304 = vunpack.c.l.b16 %v2191
      %v2305 = vunpack.c.l.b16 %v2192
      %v2306 = vunpack.c.l.b16 %v2193
      %v2307 = vunpack.c.l.b16 %v2194
      %v2308 = vunpack.c.l.b16 %v2195
      %v2309 = vunpack.c.l.b16 %v2196
      %v2310 = vpack.c.b16 %v2274, %v2273
      %v2311 = vpack.c.b16 %v2276, %v2275
      %v2312 = vpack.c.b16 %v2278, %v2277
      %v2313 = vpack.c.b16 %v2280, %v2279
      %v2314 = vpack.c.b16 %v2282, %v2281
      %v2315 = vpack.c.b16 %v2284, %v2283
      %v2316 = vpack.c.b16 %v2286, %v2285
      %v2317 = vpack.c.b16 %v2288, %v2287
      %v2318 = vpack.c.b16 %v2290, %v2289
      %v2319 = vpack.c.b16 %v2292, %v2291
      %v2320 = vpack.c.b16 %v2294, %v2293
      %v2321 = vpack.c.b16 %v2296, %v2295
      %v2322 = vpack.c.b16 %v2298, %v2297
      %v2323 = vpack.c.b16 %v2300, %v2299
      %v2324 = vpack.c.b16 %v2302, %v2301
      %v2325 = vpack.c.b16 %v2304, %v2303
      %v2326 = vpack.c.b16 %v2306, %v2305
      %v2327 = vpack.c.b16 %v2308, %v2307
      %v2328 = vpack.c.b16 %v2309, %v2309
      %vm2329 = vsmask.f32 6400
      %v2331 = vshrl.u32 %v2310, 16
      %v2333 = vrot.slane %v2331, 1
      %v2334 = vshll.u32 %v2310, 16
      %v2336 = vrot.slane %v2334, 2
      %v2337 = vor.u32 %v2333, %v2336
      %v2339 = vshrl.u32 %v2311, 16
      %v2341 = vrot.slane %v2339, 1
      %v2342 = vshll.u32 %v2311, 16
      %v2344 = vrot.slane %v2342, 2
      %v2345 = vor.u32 %v2341, %v2344
      %v2346 = vsel %vm2329, %v2337, %v2345
      %v2348 = vshrl.u32 %v2312, 16
      %v2350 = vrot.slane %v2348, 1
      %v2351 = vshll.u32 %v2312, 16
      %v2353 = vrot.slane %v2351, 2
      %v2354 = vor.u32 %v2350, %v2353
      %v2355 = vsel %vm2329, %v2345, %v2354
      %v2357 = vshrl.u32 %v2313, 16
      %v2359 = vrot.slane %v2357, 1
      %v2360 = vshll.u32 %v2313, 16
      %v2362 = vrot.slane %v2360, 2
      %v2363 = vor.u32 %v2359, %v2362
      %v2364 = vsel %vm2329, %v2354, %v2363
      %v2366 = vshrl.u32 %v2314, 16
      %v2368 = vrot.slane %v2366, 1
      %v2369 = vshll.u32 %v2314, 16
      %v2371 = vrot.slane %v2369, 2
      %v2372 = vor.u32 %v2368, %v2371
      %v2373 = vsel %vm2329, %v2363, %v2372
      %v2375 = vshrl.u32 %v2315, 16
      %v2377 = vrot.slane %v2375, 1
      %v2378 = vshll.u32 %v2315, 16
      %v2380 = vrot.slane %v2378, 2
      %v2381 = vor.u32 %v2377, %v2380
      %v2382 = vsel %vm2329, %v2372, %v2381
      %v2384 = vshrl.u32 %v2316, 16
      %v2386 = vrot.slane %v2384, 1
      %v2387 = vshll.u32 %v2316, 16
      %v2389 = vrot.slane %v2387, 2
      %v2390 = vor.u32 %v2386, %v2389
      %v2391 = vsel %vm2329, %v2381, %v2390
      %v2393 = vshrl.u32 %v2317, 16
      %v2395 = vrot.slane %v2393, 1
      %v2396 = vshll.u32 %v2317, 16
      %v2398 = vrot.slane %v2396, 2
      %v2399 = vor.u32 %v2395, %v2398
      %v2400 = vsel %vm2329, %v2390, %v2399
      %v2402 = vshrl.u32 %v2318, 16
      %v2404 = vrot.slane %v2402, 1
      %v2405 = vshll.u32 %v2318, 16
      %v2407 = vrot.slane %v2405, 2
      %v2408 = vor.u32 %v2404, %v2407
      %v2409 = vsel %vm2329, %v2399, %v2408
      %v2411 = vshrl.u32 %v2319, 16
      %v2413 = vrot.slane %v2411, 1
      %v2414 = vshll.u32 %v2319, 16
      %v2416 = vrot.slane %v2414, 2
      %v2417 = vor.u32 %v2413, %v2416
      %v2418 = vsel %vm2329, %v2408, %v2417
      %v2420 = vshrl.u32 %v2320, 16
      %v2422 = vrot.slane %v2420, 1
      %v2423 = vshll.u32 %v2320, 16
      %v2425 = vrot.slane %v2423, 2
      %v2426 = vor.u32 %v2422, %v2425
      %v2427 = vsel %vm2329, %v2417, %v2426
      %v2429 = vshrl.u32 %v2321, 16
      %v2431 = vrot.slane %v2429, 1
      %v2432 = vshll.u32 %v2321, 16
      %v2434 = vrot.slane %v2432, 2
      %v2435 = vor.u32 %v2431, %v2434
      %v2436 = vsel %vm2329, %v2426, %v2435
      %v2438 = vshrl.u32 %v2322, 16
      %v2440 = vrot.slane %v2438, 1
      %v2441 = vshll.u32 %v2322, 16
      %v2443 = vrot.slane %v2441, 2
      %v2444 = vor.u32 %v2440, %v2443
      %v2445 = vsel %vm2329, %v2435, %v2444
      %v2447 = vshrl.u32 %v2323, 16
      %v2449 = vrot.slane %v2447, 1
      %v2450 = vshll.u32 %v2323, 16
      %v2452 = vrot.slane %v2450, 2
      %v2453 = vor.u32 %v2449, %v2452
      %v2454 = vsel %vm2329, %v2444, %v2453
      %v2456 = vshrl.u32 %v2324, 16
      %v2458 = vrot.slane %v2456, 1
      %v2459 = vshll.u32 %v2324, 16
      %v2461 = vrot.slane %v2459, 2
      %v2462 = vor.u32 %v2458, %v2461
      %v2463 = vsel %vm2329, %v2453, %v2462
      %v2465 = vshrl.u32 %v2325, 16
      %v2467 = vrot.slane %v2465, 1
      %v2468 = vshll.u32 %v2325, 16
      %v2470 = vrot.slane %v2468, 2
      %v2471 = vor.u32 %v2467, %v2470
      %v2472 = vsel %vm2329, %v2462, %v2471
      %v2474 = vshrl.u32 %v2326, 16
      %v2476 = vrot.slane %v2474, 1
      %v2477 = vshll.u32 %v2326, 16
      %v2479 = vrot.slane %v2477, 2
      %v2480 = vor.u32 %v2476, %v2479
      %v2481 = vsel %vm2329, %v2471, %v2480
      %v2483 = vshrl.u32 %v2327, 16
      %v2485 = vrot.slane %v2483, 1
      %v2486 = vshll.u32 %v2327, 16
      %v2488 = vrot.slane %v2486, 2
      %v2489 = vor.u32 %v2485, %v2488
      %v2490 = vsel %vm2329, %v2480, %v2489
      %v2492 = vshrl.u32 %v2328, 16
      %v2494 = vrot.slane %v2492, 1
      %v2495 = vshll.u32 %v2328, 16
      %v2497 = vrot.slane %v2495, 2
      %v2498 = vor.u32 %v2494, %v2497
      %v2499 = vsel %vm2329, %v2489, %v2498
      %v2502 = vunpack.c.l.b16 %v2234
      %v2503 = vunpack.c.l.b16 %v2235
      %v2504 = vpack.c.b16 %v2503, %v2502
      %v2507 = vsel %vm509, %v2346, 0
      %v2510 = vsel %vm509, %v2355, 0
      %v2513 = vsel %vm509, %v2364, 0
      %v2516 = vsel %vm509, %v2373, 0
      %v2519 = vsel %vm509, %v2382, 0
      %v2522 = vsel %vm509, %v2391, 0
      %v2525 = vsel %vm509, %v2400, 0
      %v2528 = vsel %vm509, %v2409, 0
      %v2531 = vsel %vm509, %v2418, 0
      %v2534 = vsel %vm509, %v2427, 0
      %v2537 = vsel %vm509, %v2436, 0
      %v2540 = vsel %vm509, %v2445, 0
      %v2543 = vsel %vm509, %v2454, 0
      %v2546 = vsel %vm509, %v2463, 0
      %v2549 = vsel %vm509, %v2472, 0
      %v2552 = vsel %vm509, %v2481, 0
      %v2555 = vsel %vm509, %v2490, 0
      %v2558 = vsel %vm509, %v2499, 0
      %2560 = vmatpush.bf16.msra.mxu0 0
      %2561 = vmatpush.bf16.msra.mxu0 0
      %2562 = vmatpush.bf16.msra.mxu0 0
      %2563 = vmatpush.bf16.msra.mxu0 0
      %2564 = vmatpush.bf16.msra.mxu0 0
      %2565 = vmatpush.bf16.msra.mxu0 0
      %2566 = vmatpush.bf16.msra.mxu0 0
      %2567 = vmatpush.bf16.msra.mxu0 %v2504
      %2568 = vmatmul.bf16.gmra.mxu0 %v2507
      %v2569 = vpop.f32.mrf.mxu0
      %v2570 = vadd.f32 0.0, %v2569
      %v2571 = vpop.f32.mrf.mxu0
      %v2572 = vadd.f32 0.0, %v2571
      %2573 = vmatmul.bf16.gmra.mxu0 %v2510
      %v2574 = vpop.f32.mrf.mxu0
      %v2575 = vadd.f32 0.0, %v2574
      %v2576 = vpop.f32.mrf.mxu0
      %v2577 = vadd.f32 0.0, %v2576
      %2578 = vmatmul.bf16.gmra.mxu0 %v2513
      %v2579 = vpop.f32.mrf.mxu0
      %v2580 = vadd.f32 0.0, %v2579
      %v2581 = vpop.f32.mrf.mxu0
      %v2582 = vadd.f32 0.0, %v2581
      %2583 = vmatmul.bf16.gmra.mxu0 %v2516
      %v2584 = vpop.f32.mrf.mxu0
      %v2585 = vadd.f32 0.0, %v2584
      %v2586 = vpop.f32.mrf.mxu0
      %v2587 = vadd.f32 0.0, %v2586
      %2588 = vmatmul.bf16.gmra.mxu0 %v2519
      %v2589 = vpop.f32.mrf.mxu0
      %v2590 = vadd.f32 0.0, %v2589
      %v2591 = vpop.f32.mrf.mxu0
      %v2592 = vadd.f32 0.0, %v2591
      %2593 = vmatmul.bf16.gmra.mxu0 %v2522
      %v2594 = vpop.f32.mrf.mxu0
      %v2595 = vadd.f32 0.0, %v2594
      %v2596 = vpop.f32.mrf.mxu0
      %v2597 = vadd.f32 0.0, %v2596
      %2598 = vmatmul.bf16.gmra.mxu0 %v2525
      %v2599 = vpop.f32.mrf.mxu0
      %v2600 = vadd.f32 0.0, %v2599
      %v2601 = vpop.f32.mrf.mxu0
      %v2602 = vadd.f32 0.0, %v2601
      %2603 = vmatmul.bf16.gmra.mxu0 %v2528
      %v2604 = vpop.f32.mrf.mxu0
      %v2605 = vadd.f32 0.0, %v2604
      %v2606 = vpop.f32.mrf.mxu0
      %v2607 = vadd.f32 0.0, %v2606
      %2608 = vmatmul.bf16.gmra.mxu0 %v2531
      %v2609 = vpop.f32.mrf.mxu0
      %v2610 = vadd.f32 0.0, %v2609
      %v2611 = vpop.f32.mrf.mxu0
      %v2612 = vadd.f32 0.0, %v2611
      %2613 = vmatmul.bf16.gmra.mxu0 %v2534
      %v2614 = vpop.f32.mrf.mxu0
      %v2615 = vadd.f32 0.0, %v2614
      %v2616 = vpop.f32.mrf.mxu0
      %v2617 = vadd.f32 0.0, %v2616
      %2618 = vmatmul.bf16.gmra.mxu0 %v2537
      %v2619 = vpop.f32.mrf.mxu0
      %v2620 = vadd.f32 0.0, %v2619
      %v2621 = vpop.f32.mrf.mxu0
      %v2622 = vadd.f32 0.0, %v2621
      %2623 = vmatmul.bf16.gmra.mxu0 %v2540
      %v2624 = vpop.f32.mrf.mxu0
      %v2625 = vadd.f32 0.0, %v2624
      %v2626 = vpop.f32.mrf.mxu0
      %v2627 = vadd.f32 0.0, %v2626
      %2628 = vmatmul.bf16.gmra.mxu0 %v2543
      %v2629 = vpop.f32.mrf.mxu0
      %v2630 = vadd.f32 0.0, %v2629
      %v2631 = vpop.f32.mrf.mxu0
      %v2632 = vadd.f32 0.0, %v2631
      %2633 = vmatmul.bf16.gmra.mxu0 %v2546
      %v2634 = vpop.f32.mrf.mxu0
      %v2635 = vadd.f32 0.0, %v2634
      %v2636 = vpop.f32.mrf.mxu0
      %v2637 = vadd.f32 0.0, %v2636
      %2638 = vmatmul.bf16.gmra.mxu0 %v2549
      %v2639 = vpop.f32.mrf.mxu0
      %v2640 = vadd.f32 0.0, %v2639
      %v2641 = vpop.f32.mrf.mxu0
      %v2642 = vadd.f32 0.0, %v2641
      %2643 = vmatmul.bf16.gmra.mxu0 %v2552
      %v2644 = vpop.f32.mrf.mxu0
      %v2645 = vadd.f32 0.0, %v2644
      %v2646 = vpop.f32.mrf.mxu0
      %v2647 = vadd.f32 0.0, %v2646
      %2648 = vmatmul.bf16.gmra.mxu0 %v2555
      %v2649 = vpop.f32.mrf.mxu0
      %v2650 = vadd.f32 0.0, %v2649
      %v2651 = vpop.f32.mrf.mxu0
      %v2652 = vadd.f32 0.0, %v2651
      %2653 = vmatmul.bf16.gmra.mxu0 %v2558
      %v2654 = vpop.f32.mrf.mxu0
      %v2655 = vadd.f32 0.0, %v2654
      %v2656 = vpop.f32.mrf.mxu0
      %v2657 = vadd.f32 0.0, %v2656
      %2658 = vdwg.mxu0
      %v2659 = vadd.f32 %v2197, %v2570
      %v2660 = vadd.f32 %v2198, %v2572
      %v2661 = vadd.f32 %v2199, %v2575
      %v2662 = vadd.f32 %v2200, %v2577
      %v2663 = vadd.f32 %v2201, %v2580
      %v2664 = vadd.f32 %v2202, %v2582
      %v2665 = vadd.f32 %v2203, %v2585
      %v2666 = vadd.f32 %v2204, %v2587
      %v2667 = vadd.f32 %v2205, %v2590
      %v2668 = vadd.f32 %v2206, %v2592
      %v2669 = vadd.f32 %v2207, %v2595
      %v2670 = vadd.f32 %v2208, %v2597
      %v2671 = vadd.f32 %v2209, %v2600
      %v2672 = vadd.f32 %v2210, %v2602
      %v2673 = vadd.f32 %v2211, %v2605
      %v2674 = vadd.f32 %v2212, %v2607
      %v2675 = vadd.f32 %v2213, %v2610
      %v2676 = vadd.f32 %v2214, %v2612
      %v2677 = vadd.f32 %v2215, %v2615
      %v2678 = vadd.f32 %v2216, %v2617
      %v2679 = vadd.f32 %v2217, %v2620
      %v2680 = vadd.f32 %v2218, %v2622
      %v2681 = vadd.f32 %v2219, %v2625
      %v2682 = vadd.f32 %v2220, %v2627
      %v2683 = vadd.f32 %v2221, %v2630
      %v2684 = vadd.f32 %v2222, %v2632
      %v2685 = vadd.f32 %v2223, %v2635
      %v2686 = vadd.f32 %v2224, %v2637
      %v2687 = vadd.f32 %v2225, %v2640
      %v2688 = vadd.f32 %v2226, %v2642
      %v2689 = vadd.f32 %v2227, %v2645
      %v2690 = vadd.f32 %v2228, %v2647
      %v2691 = vadd.f32 %v2229, %v2650
      %v2692 = vadd.f32 %v2230, %v2652
      %v2693 = vadd.f32 %v2231, %v2655
      %v2694 = vadd.f32 %v2232, %v2657
      %2695 = vst.msk [vmem:[#allocation2] sm:$0xff] %vm699, %v2659
      %2696 = vst.msk [vmem:[#allocation2 + $0x8] sm:$0xff] %vm699, %v2660
      %2697 = vst.msk [vmem:[#allocation2 + $0x10] sm:$0xff] %vm699, %v2661
      %2698 = vst.msk [vmem:[#allocation2 + $0x18] sm:$0xff] %vm699, %v2662
      %2699 = vst.msk [vmem:[#allocation2 + $0x20] sm:$0xff] %vm699, %v2663
      %2700 = vst.msk [vmem:[#allocation2 + $0x28] sm:$0xff] %vm699, %v2664
      %2701 = vst.msk [vmem:[#allocation2 + $0x30] sm:$0xff] %vm699, %v2665
      %2702 = vst.msk [vmem:[#allocation2 + $0x38] sm:$0xff] %vm699, %v2666
      %2703 = vst.msk [vmem:[#allocation2 + $0x40] sm:$0xff] %vm699, %v2667
      %2704 = vst.msk [vmem:[#allocation2 + $0x48] sm:$0xff] %vm699, %v2668
      %2705 = vst.msk [vmem:[#allocation2 + $0x50] sm:$0xff] %vm699, %v2669
      %2706 = vst.msk [vmem:[#allocation2 + $0x58] sm:$0xff] %vm699, %v2670
      %2707 = vst.msk [vmem:[#allocation2 + $0x60] sm:$0xff] %vm699, %v2671
      %2708 = vst.msk [vmem:[#allocation2 + $0x68] sm:$0xff] %vm699, %v2672
      %2709 = vst.msk [vmem:[#allocation2 + $0x70] sm:$0xff] %vm699, %v2673
      %2710 = vst.msk [vmem:[#allocation2 + $0x78] sm:$0xff] %vm699, %v2674
      %2711 = vst.msk [vmem:[#allocation2 + $0x80] sm:$0xff] %vm699, %v2675
      %2712 = vst.msk [vmem:[#allocation2 + $0x88] sm:$0xff] %vm699, %v2676
      %2713 = vst.msk [vmem:[#allocation2 + $0x90] sm:$0xff] %vm699, %v2677
      %2714 = vst.msk [vmem:[#allocation2 + $0x98] sm:$0xff] %vm699, %v2678
      %2715 = vst.msk [vmem:[#allocation2 + $0xa0] sm:$0xff] %vm699, %v2679
      %2716 = vst.msk [vmem:[#allocation2 + $0xa8] sm:$0xff] %vm699, %v2680
      %2717 = vst.msk [vmem:[#allocation2 + $0xb0] sm:$0xff] %vm699, %v2681
      %2718 = vst.msk [vmem:[#allocation2 + $0xb8] sm:$0xff] %vm699, %v2682
      %2719 = vst.msk [vmem:[#allocation2 + $0xc0] sm:$0xff] %vm699, %v2683
      %2720 = vst.msk [vmem:[#allocation2 + $0xc8] sm:$0xff] %vm699, %v2684
      %2721 = vst.msk [vmem:[#allocation2 + $0xd0] sm:$0xff] %vm699, %v2685
      %2722 = vst.msk [vmem:[#allocation2 + $0xd8] sm:$0xff] %vm699, %v2686
      %2723 = vst.msk [vmem:[#allocation2 + $0xe0] sm:$0xff] %vm699, %v2687
      %2724 = vst.msk [vmem:[#allocation2 + $0xe8] sm:$0xff] %vm699, %v2688
      %2725 = vst.msk [vmem:[#allocation2 + $0xf0] sm:$0xff] %vm699, %v2689
      %2726 = vst.msk [vmem:[#allocation2 + $0xf8] sm:$0xff] %vm699, %v2690
      %2727 = vst.msk [vmem:[#allocation2 + $0x100] sm:$0xff] %vm699, %v2691
      %2728 = vst.msk [vmem:[#allocation2 + $0x108] sm:$0xff] %vm699, %v2692
      %2729 = vst.msk [vmem:[#allocation2 + $0x110] sm:$0xff] %vm699, %v2693
      %2730 = vst.msk [vmem:[#allocation2 + $0x118] sm:$0xff] %vm699, %v2694
      %v2731 = vld [vmem:[%s273 + $0x8] sm:$0xc]
      %v2732 = vld [vmem:[%s273 + $0xc] sm:$0xf]
      %v2733 = vld [vmem:[%s273 + $0x10] sm:$0xf]
      %v2734 = vld [vmem:[%s273 + $0x14] sm:$0xf]
      %v2735 = vld [vmem:[%s273 + $0x18] sm:$0xf]
      %v2736 = vld [vmem:[%s273 + $0x1c] sm:$0xf]
      %v2737 = vld [vmem:[%s273 + $0x20] sm:$0xf]
      %v2738 = vld [vmem:[%s273 + $0x24] sm:$0xf]
      %v2739 = vld [vmem:[%s273 + $0x28] sm:$0xf]
      %v2740 = vld [vmem:[%s273 + $0x2c] sm:$0xf]
      %v2741 = vld [vmem:[%s273 + $0x30] sm:$0xf]
      %v2742 = vld [vmem:[%s273 + $0x34] sm:$0xf]
      %v2743 = vld [vmem:[%s273 + $0x38] sm:$0xf]
      %v2744 = vld [vmem:[%s273 + $0x3c] sm:$0xf]
      %v2745 = vld [vmem:[%s273 + $0x40] sm:$0xf]
      %v2746 = vld [vmem:[%s273 + $0x44] sm:$0xf]
      %v2747 = vld [vmem:[%s273 + $0x48] sm:$0xf]
      %v2748 = vld [vmem:[%s273 + $0x4c] sm:$0xf]
      %v2749 = vld [vmem:[%s273 + $0x50] sm:$0xf]
      %v2750 = vld [vmem:[%s273 + $0x54] sm:$0xf]
      %v2751 = vld [vmem:[%s273 + $0x58] sm:$0xf]
      %v2752 = vld [vmem:[%s273 + $0x5c] sm:$0xf]
      %v2753 = vld [vmem:[%s273 + $0x60] sm:$0xf]
      %v2754 = vld [vmem:[%s273 + $0x64] sm:$0xf]
      %v2755 = vld [vmem:[%s273 + $0x68] sm:$0xf]
      %v2756 = vld [vmem:[%s273 + $0x6c] sm:$0xf]
      %v2757 = vld [vmem:[%s273 + $0x70] sm:$0xf]
      %v2758 = vld [vmem:[%s273 + $0x74] sm:$0xf]
      %v2759 = vld [vmem:[%s273 + $0x78] sm:$0xf]
      %v2760 = vld [vmem:[%s273 + $0x7c] sm:$0xf]
      %v2761 = vld [vmem:[%s273 + $0x80] sm:$0xf]
      %v2762 = vld [vmem:[%s273 + $0x84] sm:$0xf]
      %v2763 = vld [vmem:[%s273 + $0x88] sm:$0xf]
      %v2764 = vld [vmem:[%s273 + $0x8c] sm:$0xf]
      %v2765 = vld [vmem:[%s273 + $0x90] sm:$0xf]
      %v2766 = vld [vmem:[%s273 + $0x94] sm:$0xf]
      %v2767 = vld [vmem:[%s273 + $0x98] sm:$0x3]
      %v2768 = vld [vmem:[#allocation2] sm:$0xff]
      %v2769 = vld [vmem:[#allocation2 + $0x8] sm:$0xff]
      %v2770 = vld [vmem:[#allocation2 + $0x10] sm:$0xff]
      %v2771 = vld [vmem:[#allocation2 + $0x18] sm:$0xff]
      %v2772 = vld [vmem:[#allocation2 + $0x20] sm:$0xff]
      %v2773 = vld [vmem:[#allocation2 + $0x28] sm:$0xff]
      %v2774 = vld [vmem:[#allocation2 + $0x30] sm:$0xff]
      %v2775 = vld [vmem:[#allocation2 + $0x38] sm:$0xff]
      %v2776 = vld [vmem:[#allocation2 + $0x40] sm:$0xff]
      %v2777 = vld [vmem:[#allocation2 + $0x48] sm:$0xff]
      %v2778 = vld [vmem:[#allocation2 + $0x50] sm:$0xff]
      %v2779 = vld [vmem:[#allocation2 + $0x58] sm:$0xff]
      %v2780 = vld [vmem:[#allocation2 + $0x60] sm:$0xff]
      %v2781 = vld [vmem:[#allocation2 + $0x68] sm:$0xff]
      %v2782 = vld [vmem:[#allocation2 + $0x70] sm:$0xff]
      %v2783 = vld [vmem:[#allocation2 + $0x78] sm:$0xff]
      %v2784 = vld [vmem:[#allocation2 + $0x80] sm:$0xff]
      %v2785 = vld [vmem:[#allocation2 + $0x88] sm:$0xff]
      %v2786 = vld [vmem:[#allocation2 + $0x90] sm:$0xff]
      %v2787 = vld [vmem:[#allocation2 + $0x98] sm:$0xff]
      %v2788 = vld [vmem:[#allocation2 + $0xa0] sm:$0xff]
      %v2789 = vld [vmem:[#allocation2 + $0xa8] sm:$0xff]
      %v2790 = vld [vmem:[#allocation2 + $0xb0] sm:$0xff]
      %v2791 = vld [vmem:[#allocation2 + $0xb8] sm:$0xff]
      %v2792 = vld [vmem:[#allocation2 + $0xc0] sm:$0xff]
      %v2793 = vld [vmem:[#allocation2 + $0xc8] sm:$0xff]
      %v2794 = vld [vmem:[#allocation2 + $0xd0] sm:$0xff]
      %v2795 = vld [vmem:[#allocation2 + $0xd8] sm:$0xff]
      %v2796 = vld [vmem:[#allocation2 + $0xe0] sm:$0xff]
      %v2797 = vld [vmem:[#allocation2 + $0xe8] sm:$0xff]
      %v2798 = vld [vmem:[#allocation2 + $0xf0] sm:$0xff]
      %v2799 = vld [vmem:[#allocation2 + $0xf8] sm:$0xff]
      %v2800 = vld [vmem:[#allocation2 + $0x100] sm:$0xff]
      %v2801 = vld [vmem:[#allocation2 + $0x108] sm:$0xff]
      %v2802 = vld [vmem:[#allocation2 + $0x110] sm:$0xff]
      %v2803 = vld [vmem:[#allocation2 + $0x118] sm:$0xff]
      %s2804 = scalar_lea.vmem %s281, 40
      %v2805 = vld [vmem:[%s2804] sm:$0xf]
      %v2806 = vld [vmem:[%s2804 + $0x4] sm:$0xf]
      %v2844 = vunpack.c.l.b16 %v2731
      %v2845 = vunpack.c.l.b16 %v2732
      %v2846 = vunpack.c.l.b16 %v2733
      %v2847 = vunpack.c.l.b16 %v2734
      %v2848 = vunpack.c.l.b16 %v2735
      %v2849 = vunpack.c.l.b16 %v2736
      %v2850 = vunpack.c.l.b16 %v2737
      %v2851 = vunpack.c.l.b16 %v2738
      %v2852 = vunpack.c.l.b16 %v2739
      %v2853 = vunpack.c.l.b16 %v2740
      %v2854 = vunpack.c.l.b16 %v2741
      %v2855 = vunpack.c.l.b16 %v2742
      %v2856 = vunpack.c.l.b16 %v2743
      %v2857 = vunpack.c.l.b16 %v2744
      %v2858 = vunpack.c.l.b16 %v2745
      %v2859 = vunpack.c.l.b16 %v2746
      %v2860 = vunpack.c.l.b16 %v2747
      %v2861 = vunpack.c.l.b16 %v2748
      %v2862 = vunpack.c.l.b16 %v2749
      %v2863 = vunpack.c.l.b16 %v2750
      %v2864 = vunpack.c.l.b16 %v2751
      %v2865 = vunpack.c.l.b16 %v2752
      %v2866 = vunpack.c.l.b16 %v2753
      %v2867 = vunpack.c.l.b16 %v2754
      %v2868 = vunpack.c.l.b16 %v2755
      %v2869 = vunpack.c.l.b16 %v2756
      %v2870 = vunpack.c.l.b16 %v2757
      %v2871 = vunpack.c.l.b16 %v2758
      %v2872 = vunpack.c.l.b16 %v2759
      %v2873 = vunpack.c.l.b16 %v2760
      %v2874 = vunpack.c.l.b16 %v2761
      %v2875 = vunpack.c.l.b16 %v2762
      %v2876 = vunpack.c.l.b16 %v2763
      %v2877 = vunpack.c.l.b16 %v2764
      %v2878 = vunpack.c.l.b16 %v2765
      %v2879 = vunpack.c.l.b16 %v2766
      %v2880 = vunpack.c.l.b16 %v2767
      %v2881 = vpack.c.b16 %v2845, %v2844
      %v2882 = vpack.c.b16 %v2847, %v2846
      %v2883 = vpack.c.b16 %v2849, %v2848
      %v2884 = vpack.c.b16 %v2851, %v2850
      %v2885 = vpack.c.b16 %v2853, %v2852
      %v2886 = vpack.c.b16 %v2855, %v2854
      %v2887 = vpack.c.b16 %v2857, %v2856
      %v2888 = vpack.c.b16 %v2859, %v2858
      %v2889 = vpack.c.b16 %v2861, %v2860
      %v2890 = vpack.c.b16 %v2863, %v2862
      %v2891 = vpack.c.b16 %v2865, %v2864
      %v2892 = vpack.c.b16 %v2867, %v2866
      %v2893 = vpack.c.b16 %v2869, %v2868
      %v2894 = vpack.c.b16 %v2871, %v2870
      %v2895 = vpack.c.b16 %v2873, %v2872
      %v2896 = vpack.c.b16 %v2875, %v2874
      %v2897 = vpack.c.b16 %v2877, %v2876
      %v2898 = vpack.c.b16 %v2879, %v2878
      %v2899 = vpack.c.b16 %v2880, %v2880
      %vm2900 = vcmask 1045504
      %v2901 = vrot.slane %v2881, 2
      %v2902 = vrot.slane %v2882, 2
      %v2903 = vsel %vm2900, %v2901, %v2902
      %v2904 = vrot.slane %v2883, 2
      %v2905 = vsel %vm2900, %v2902, %v2904
      %v2906 = vrot.slane %v2884, 2
      %v2907 = vsel %vm2900, %v2904, %v2906
      %v2908 = vrot.slane %v2885, 2
      %v2909 = vsel %vm2900, %v2906, %v2908
      %v2910 = vrot.slane %v2886, 2
      %v2911 = vsel %vm2900, %v2908, %v2910
      %v2912 = vrot.slane %v2887, 2
      %v2913 = vsel %vm2900, %v2910, %v2912
      %v2914 = vrot.slane %v2888, 2
      %v2915 = vsel %vm2900, %v2912, %v2914
      %v2916 = vrot.slane %v2889, 2
      %v2917 = vsel %vm2900, %v2914, %v2916
      %v2918 = vrot.slane %v2890, 2
      %v2919 = vsel %vm2900, %v2916, %v2918
      %v2920 = vrot.slane %v2891, 2
      %v2921 = vsel %vm2900, %v2918, %v2920
      %v2922 = vrot.slane %v2892, 2
      %v2923 = vsel %vm2900, %v2920, %v2922
      %v2924 = vrot.slane %v2893, 2
      %v2925 = vsel %vm2900, %v2922, %v2924
      %v2926 = vrot.slane %v2894, 2
      %v2927 = vsel %vm2900, %v2924, %v2926
      %v2928 = vrot.slane %v2895, 2
      %v2929 = vsel %vm2900, %v2926, %v2928
      %v2930 = vrot.slane %v2896, 2
      %v2931 = vsel %vm2900, %v2928, %v2930
      %v2932 = vrot.slane %v2897, 2
      %v2933 = vsel %vm2900, %v2930, %v2932
      %v2934 = vrot.slane %v2898, 2
      %v2935 = vsel %vm2900, %v2932, %v2934
      %v2936 = vrot.slane %v2899, 2
      %v2937 = vsel %vm2900, %v2934, %v2936
      %v2940 = vunpack.c.l.b16 %v2805
      %v2941 = vunpack.c.l.b16 %v2806
      %v2942 = vpack.c.b16 %v2941, %v2940
      %v2945 = vsel %vm509, %v2903, 0
      %v2948 = vsel %vm509, %v2905, 0
      %v2951 = vsel %vm509, %v2907, 0
      %v2954 = vsel %vm509, %v2909, 0
      %v2957 = vsel %vm509, %v2911, 0
      %v2960 = vsel %vm509, %v2913, 0
      %v2963 = vsel %vm509, %v2915, 0
      %v2966 = vsel %vm509, %v2917, 0
      %v2969 = vsel %vm509, %v2919, 0
      %v2972 = vsel %vm509, %v2921, 0
      %v2975 = vsel %vm509, %v2923, 0
      %v2978 = vsel %vm509, %v2925, 0
      %v2981 = vsel %vm509, %v2927, 0
      %v2984 = vsel %vm509, %v2929, 0
      %v2987 = vsel %vm509, %v2931, 0
      %v2990 = vsel %vm509, %v2933, 0
      %v2993 = vsel %vm509, %v2935, 0
      %v2996 = vsel %vm509, %v2937, 0
      %2998 = vmatpush.bf16.msra.mxu0 0
      %2999 = vmatpush.bf16.msra.mxu0 0
      %3000 = vmatpush.bf16.msra.mxu0 0
      %3001 = vmatpush.bf16.msra.mxu0 0
      %3002 = vmatpush.bf16.msra.mxu0 0
      %3003 = vmatpush.bf16.msra.mxu0 0
      %3004 = vmatpush.bf16.msra.mxu0 0
      %3005 = vmatpush.bf16.msra.mxu0 %v2942
      %3006 = vmatmul.bf16.gmra.mxu0 %v2945
      %v3007 = vpop.f32.mrf.mxu0
      %v3008 = vadd.f32 0.0, %v3007
      %v3009 = vpop.f32.mrf.mxu0
      %v3010 = vadd.f32 0.0, %v3009
      %3011 = vmatmul.bf16.gmra.mxu0 %v2948
      %v3012 = vpop.f32.mrf.mxu0
      %v3013 = vadd.f32 0.0, %v3012
      %v3014 = vpop.f32.mrf.mxu0
      %v3015 = vadd.f32 0.0, %v3014
      %3016 = vmatmul.bf16.gmra.mxu0 %v2951
      %v3017 = vpop.f32.mrf.mxu0
      %v3018 = vadd.f32 0.0, %v3017
      %v3019 = vpop.f32.mrf.mxu0
      %v3020 = vadd.f32 0.0, %v3019
      %3021 = vmatmul.bf16.gmra.mxu0 %v2954
      %v3022 = vpop.f32.mrf.mxu0
      %v3023 = vadd.f32 0.0, %v3022
      %v3024 = vpop.f32.mrf.mxu0
      %v3025 = vadd.f32 0.0, %v3024
      %3026 = vmatmul.bf16.gmra.mxu0 %v2957
      %v3027 = vpop.f32.mrf.mxu0
      %v3028 = vadd.f32 0.0, %v3027
      %v3029 = vpop.f32.mrf.mxu0
      %v3030 = vadd.f32 0.0, %v3029
      %3031 = vmatmul.bf16.gmra.mxu0 %v2960
      %v3032 = vpop.f32.mrf.mxu0
      %v3033 = vadd.f32 0.0, %v3032
      %v3034 = vpop.f32.mrf.mxu0
      %v3035 = vadd.f32 0.0, %v3034
      %3036 = vmatmul.bf16.gmra.mxu0 %v2963
      %v3037 = vpop.f32.mrf.mxu0
      %v3038 = vadd.f32 0.0, %v3037
      %v3039 = vpop.f32.mrf.mxu0
      %v3040 = vadd.f32 0.0, %v3039
      %3041 = vmatmul.bf16.gmra.mxu0 %v2966
      %v3042 = vpop.f32.mrf.mxu0
      %v3043 = vadd.f32 0.0, %v3042
      %v3044 = vpop.f32.mrf.mxu0
      %v3045 = vadd.f32 0.0, %v3044
      %3046 = vmatmul.bf16.gmra.mxu0 %v2969
      %v3047 = vpop.f32.mrf.mxu0
      %v3048 = vadd.f32 0.0, %v3047
      %v3049 = vpop.f32.mrf.mxu0
      %v3050 = vadd.f32 0.0, %v3049
      %3051 = vmatmul.bf16.gmra.mxu0 %v2972
      %v3052 = vpop.f32.mrf.mxu0
      %v3053 = vadd.f32 0.0, %v3052
      %v3054 = vpop.f32.mrf.mxu0
      %v3055 = vadd.f32 0.0, %v3054
      %3056 = vmatmul.bf16.gmra.mxu0 %v2975
      %v3057 = vpop.f32.mrf.mxu0
      %v3058 = vadd.f32 0.0, %v3057
      %v3059 = vpop.f32.mrf.mxu0
      %v3060 = vadd.f32 0.0, %v3059
      %3061 = vmatmul.bf16.gmra.mxu0 %v2978
      %v3062 = vpop.f32.mrf.mxu0
      %v3063 = vadd.f32 0.0, %v3062
      %v3064 = vpop.f32.mrf.mxu0
      %v3065 = vadd.f32 0.0, %v3064
      %3066 = vmatmul.bf16.gmra.mxu0 %v2981
      %v3067 = vpop.f32.mrf.mxu0
      %v3068 = vadd.f32 0.0, %v3067
      %v3069 = vpop.f32.mrf.mxu0
      %v3070 = vadd.f32 0.0, %v3069
      %3071 = vmatmul.bf16.gmra.mxu0 %v2984
      %v3072 = vpop.f32.mrf.mxu0
      %v3073 = vadd.f32 0.0, %v3072
      %v3074 = vpop.f32.mrf.mxu0
      %v3075 = vadd.f32 0.0, %v3074
      %3076 = vmatmul.bf16.gmra.mxu0 %v2987
      %v3077 = vpop.f32.mrf.mxu0
      %v3078 = vadd.f32 0.0, %v3077
      %v3079 = vpop.f32.mrf.mxu0
      %v3080 = vadd.f32 0.0, %v3079
      %3081 = vmatmul.bf16.gmra.mxu0 %v2990
      %v3082 = vpop.f32.mrf.mxu0
      %v3083 = vadd.f32 0.0, %v3082
      %v3084 = vpop.f32.mrf.mxu0
      %v3085 = vadd.f32 0.0, %v3084
      %3086 = vmatmul.bf16.gmra.mxu0 %v2993
      %v3087 = vpop.f32.mrf.mxu0
      %v3088 = vadd.f32 0.0, %v3087
      %v3089 = vpop.f32.mrf.mxu0
      %v3090 = vadd.f32 0.0, %v3089
      %3091 = vmatmul.bf16.gmra.mxu0 %v2996
      %v3092 = vpop.f32.mrf.mxu0
      %v3093 = vadd.f32 0.0, %v3092
      %v3094 = vpop.f32.mrf.mxu0
      %v3095 = vadd.f32 0.0, %v3094
      %3096 = vdwg.mxu0
      %v3097 = vadd.f32 %v2768, %v3008
      %v3098 = vadd.f32 %v2769, %v3010
      %v3099 = vadd.f32 %v2770, %v3013
      %v3100 = vadd.f32 %v2771, %v3015
      %v3101 = vadd.f32 %v2772, %v3018
      %v3102 = vadd.f32 %v2773, %v3020
      %v3103 = vadd.f32 %v2774, %v3023
      %v3104 = vadd.f32 %v2775, %v3025
      %v3105 = vadd.f32 %v2776, %v3028
      %v3106 = vadd.f32 %v2777, %v3030
      %v3107 = vadd.f32 %v2778, %v3033
      %v3108 = vadd.f32 %v2779, %v3035
      %v3109 = vadd.f32 %v2780, %v3038
      %v3110 = vadd.f32 %v2781, %v3040
      %v3111 = vadd.f32 %v2782, %v3043
      %v3112 = vadd.f32 %v2783, %v3045
      %v3113 = vadd.f32 %v2784, %v3048
      %v3114 = vadd.f32 %v2785, %v3050
      %v3115 = vadd.f32 %v2786, %v3053
      %v3116 = vadd.f32 %v2787, %v3055
      %v3117 = vadd.f32 %v2788, %v3058
      %v3118 = vadd.f32 %v2789, %v3060
      %v3119 = vadd.f32 %v2790, %v3063
      %v3120 = vadd.f32 %v2791, %v3065
      %v3121 = vadd.f32 %v2792, %v3068
      %v3122 = vadd.f32 %v2793, %v3070
      %v3123 = vadd.f32 %v2794, %v3073
      %v3124 = vadd.f32 %v2795, %v3075
      %v3125 = vadd.f32 %v2796, %v3078
      %v3126 = vadd.f32 %v2797, %v3080
      %v3127 = vadd.f32 %v2798, %v3083
      %v3128 = vadd.f32 %v2799, %v3085
      %v3129 = vadd.f32 %v2800, %v3088
      %v3130 = vadd.f32 %v2801, %v3090
      %v3131 = vadd.f32 %v2802, %v3093
      %v3132 = vadd.f32 %v2803, %v3095
      %3133 = vst.msk [vmem:[#allocation2] sm:$0xff] %vm699, %v3097
      %3134 = vst.msk [vmem:[#allocation2 + $0x8] sm:$0xff] %vm699, %v3098
      %3135 = vst.msk [vmem:[#allocation2 + $0x10] sm:$0xff] %vm699, %v3099
      %3136 = vst.msk [vmem:[#allocation2 + $0x18] sm:$0xff] %vm699, %v3100
      %3137 = vst.msk [vmem:[#allocation2 + $0x20] sm:$0xff] %vm699, %v3101
      %3138 = vst.msk [vmem:[#allocation2 + $0x28] sm:$0xff] %vm699, %v3102
      %3139 = vst.msk [vmem:[#allocation2 + $0x30] sm:$0xff] %vm699, %v3103
      %3140 = vst.msk [vmem:[#allocation2 + $0x38] sm:$0xff] %vm699, %v3104
      %3141 = vst.msk [vmem:[#allocation2 + $0x40] sm:$0xff] %vm699, %v3105
      %3142 = vst.msk [vmem:[#allocation2 + $0x48] sm:$0xff] %vm699, %v3106
      %3143 = vst.msk [vmem:[#allocation2 + $0x50] sm:$0xff] %vm699, %v3107
      %3144 = vst.msk [vmem:[#allocation2 + $0x58] sm:$0xff] %vm699, %v3108
      %3145 = vst.msk [vmem:[#allocation2 + $0x60] sm:$0xff] %vm699, %v3109
      %3146 = vst.msk [vmem:[#allocation2 + $0x68] sm:$0xff] %vm699, %v3110
      %3147 = vst.msk [vmem:[#allocation2 + $0x70] sm:$0xff] %vm699, %v3111
      %3148 = vst.msk [vmem:[#allocation2 + $0x78] sm:$0xff] %vm699, %v3112
      %3149 = vst.msk [vmem:[#allocation2 + $0x80] sm:$0xff] %vm699, %v3113
      %3150 = vst.msk [vmem:[#allocation2 + $0x88] sm:$0xff] %vm699, %v3114
      %3151 = vst.msk [vmem:[#allocation2 + $0x90] sm:$0xff] %vm699, %v3115
      %3152 = vst.msk [vmem:[#allocation2 + $0x98] sm:$0xff] %vm699, %v3116
      %3153 = vst.msk [vmem:[#allocation2 + $0xa0] sm:$0xff] %vm699, %v3117
      %3154 = vst.msk [vmem:[#allocation2 + $0xa8] sm:$0xff] %vm699, %v3118
      %3155 = vst.msk [vmem:[#allocation2 + $0xb0] sm:$0xff] %vm699, %v3119
      %3156 = vst.msk [vmem:[#allocation2 + $0xb8] sm:$0xff] %vm699, %v3120
      %3157 = vst.msk [vmem:[#allocation2 + $0xc0] sm:$0xff] %vm699, %v3121
      %3158 = vst.msk [vmem:[#allocation2 + $0xc8] sm:$0xff] %vm699, %v3122
      %3159 = vst.msk [vmem:[#allocation2 + $0xd0] sm:$0xff] %vm699, %v3123
      %3160 = vst.msk [vmem:[#allocation2 + $0xd8] sm:$0xff] %vm699, %v3124
      %3161 = vst.msk [vmem:[#allocation2 + $0xe0] sm:$0xff] %vm699, %v3125
      %3162 = vst.msk [vmem:[#allocation2 + $0xe8] sm:$0xff] %vm699, %v3126
      %3163 = vst.msk [vmem:[#allocation2 + $0xf0] sm:$0xff] %vm699, %v3127
      %3164 = vst.msk [vmem:[#allocation2 + $0xf8] sm:$0xff] %vm699, %v3128
      %3165 = vst.msk [vmem:[#allocation2 + $0x100] sm:$0xff] %vm699, %v3129
      %3166 = vst.msk [vmem:[#allocation2 + $0x108] sm:$0xff] %vm699, %v3130
      %3167 = vst.msk [vmem:[#allocation2 + $0x110] sm:$0xff] %vm699, %v3131
      %3168 = vst.msk [vmem:[#allocation2 + $0x118] sm:$0xff] %vm699, %v3132
      %v3169 = vld [vmem:[%s273 + $0x10] sm:$0xc]
      %v3170 = vld [vmem:[%s273 + $0x14] sm:$0xf]
      %v3171 = vld [vmem:[%s273 + $0x18] sm:$0xf]
      %v3172 = vld [vmem:[%s273 + $0x1c] sm:$0xf]
      %v3173 = vld [vmem:[%s273 + $0x20] sm:$0xf]
      %v3174 = vld [vmem:[%s273 + $0x24] sm:$0xf]
      %v3175 = vld [vmem:[%s273 + $0x28] sm:$0xf]
      %v3176 = vld [vmem:[%s273 + $0x2c] sm:$0xf]
      %v3177 = vld [vmem:[%s273 + $0x30] sm:$0xf]
      %v3178 = vld [vmem:[%s273 + $0x34] sm:$0xf]
      %v3179 = vld [vmem:[%s273 + $0x38] sm:$0xf]
      %v3180 = vld [vmem:[%s273 + $0x3c] sm:$0xf]
      %v3181 = vld [vmem:[%s273 + $0x40] sm:$0xf]
      %v3182 = vld [vmem:[%s273 + $0x44] sm:$0xf]
      %v3183 = vld [vmem:[%s273 + $0x48] sm:$0xf]
      %v3184 = vld [vmem:[%s273 + $0x4c] sm:$0xf]
      %v3185 = vld [vmem:[%s273 + $0x50] sm:$0xf]
      %v3186 = vld [vmem:[%s273 + $0x54] sm:$0xf]
      %v3187 = vld [vmem:[%s273 + $0x58] sm:$0xf]
      %v3188 = vld [vmem:[%s273 + $0x5c] sm:$0xf]
      %v3189 = vld [vmem:[%s273 + $0x60] sm:$0xf]
      %v3190 = vld [vmem:[%s273 + $0x64] sm:$0xf]
      %v3191 = vld [vmem:[%s273 + $0x68] sm:$0xf]
      %v3192 = vld [vmem:[%s273 + $0x6c] sm:$0xf]
      %v3193 = vld [vmem:[%s273 + $0x70] sm:$0xf]
      %v3194 = vld [vmem:[%s273 + $0x74] sm:$0xf]
      %v3195 = vld [vmem:[%s273 + $0x78] sm:$0xf]
      %v3196 = vld [vmem:[%s273 + $0x7c] sm:$0xf]
      %v3197 = vld [vmem:[%s273 + $0x80] sm:$0xf]
      %v3198 = vld [vmem:[%s273 + $0x84] sm:$0xf]
      %v3199 = vld [vmem:[%s273 + $0x88] sm:$0xf]
      %v3200 = vld [vmem:[%s273 + $0x8c] sm:$0xf]
      %v3201 = vld [vmem:[%s273 + $0x90] sm:$0xf]
      %v3202 = vld [vmem:[%s273 + $0x94] sm:$0xf]
      %v3203 = vld [vmem:[%s273 + $0x98] sm:$0xf]
      %v3204 = vld [vmem:[%s273 + $0x9c] sm:$0xf]
      %v3205 = vld [vmem:[%s273 + $0xa0] sm:$0x3]
      %v3206 = vld [vmem:[#allocation2] sm:$0xff]
      %v3207 = vld [vmem:[#allocation2 + $0x8] sm:$0xff]
      %v3208 = vld [vmem:[#allocation2 + $0x10] sm:$0xff]
      %v3209 = vld [vmem:[#allocation2 + $0x18] sm:$0xff]
      %v3210 = vld [vmem:[#allocation2 + $0x20] sm:$0xff]
      %v3211 = vld [vmem:[#allocation2 + $0x28] sm:$0xff]
      %v3212 = vld [vmem:[#allocation2 + $0x30] sm:$0xff]
      %v3213 = vld [vmem:[#allocation2 + $0x38] sm:$0xff]
      %v3214 = vld [vmem:[#allocation2 + $0x40] sm:$0xff]
      %v3215 = vld [vmem:[#allocation2 + $0x48] sm:$0xff]
      %v3216 = vld [vmem:[#allocation2 + $0x50] sm:$0xff]
      %v3217 = vld [vmem:[#allocation2 + $0x58] sm:$0xff]
      %v3218 = vld [vmem:[#allocation2 + $0x60] sm:$0xff]
      %v3219 = vld [vmem:[#allocation2 + $0x68] sm:$0xff]
      %v3220 = vld [vmem:[#allocation2 + $0x70] sm:$0xff]
      %v3221 = vld [vmem:[#allocation2 + $0x78] sm:$0xff]
      %v3222 = vld [vmem:[#allocation2 + $0x80] sm:$0xff]
      %v3223 = vld [vmem:[#allocation2 + $0x88] sm:$0xff]
      %v3224 = vld [vmem:[#allocation2 + $0x90] sm:$0xff]
      %v3225 = vld [vmem:[#allocation2 + $0x98] sm:$0xff]
      %v3226 = vld [vmem:[#allocation2 + $0xa0] sm:$0xff]
      %v3227 = vld [vmem:[#allocation2 + $0xa8] sm:$0xff]
      %v3228 = vld [vmem:[#allocation2 + $0xb0] sm:$0xff]
      %v3229 = vld [vmem:[#allocation2 + $0xb8] sm:$0xff]
      %v3230 = vld [vmem:[#allocation2 + $0xc0] sm:$0xff]
      %v3231 = vld [vmem:[#allocation2 + $0xc8] sm:$0xff]
      %v3232 = vld [vmem:[#allocation2 + $0xd0] sm:$0xff]
      %v3233 = vld [vmem:[#allocation2 + $0xd8] sm:$0xff]
      %v3234 = vld [vmem:[#allocation2 + $0xe0] sm:$0xff]
      %v3235 = vld [vmem:[#allocation2 + $0xe8] sm:$0xff]
      %v3236 = vld [vmem:[#allocation2 + $0xf0] sm:$0xff]
      %v3237 = vld [vmem:[#allocation2 + $0xf8] sm:$0xff]
      %v3238 = vld [vmem:[#allocation2 + $0x100] sm:$0xff]
      %v3239 = vld [vmem:[#allocation2 + $0x108] sm:$0xff]
      %v3240 = vld [vmem:[#allocation2 + $0x110] sm:$0xff]
      %v3241 = vld [vmem:[#allocation2 + $0x118] sm:$0xff]
      %s3242 = scalar_lea.vmem %s281, 48
      %v3243 = vld [vmem:[%s3242] sm:$0xf]
      %v3244 = vld [vmem:[%s3242 + $0x4] sm:$0xf]
      %v3282 = vunpack.c.l.b16 %v3169
      %v3283 = vunpack.c.l.b16 %v3170
      %v3284 = vunpack.c.l.b16 %v3171
      %v3285 = vunpack.c.l.b16 %v3172
      %v3286 = vunpack.c.l.b16 %v3173
      %v3287 = vunpack.c.l.b16 %v3174
      %v3288 = vunpack.c.l.b16 %v3175
      %v3289 = vunpack.c.l.b16 %v3176
      %v3290 = vunpack.c.l.b16 %v3177
      %v3291 = vunpack.c.l.b16 %v3178
      %v3292 = vunpack.c.l.b16 %v3179
      %v3293 = vunpack.c.l.b16 %v3180
      %v3294 = vunpack.c.l.b16 %v3181
      %v3295 = vunpack.c.l.b16 %v3182
      %v3296 = vunpack.c.l.b16 %v3183
      %v3297 = vunpack.c.l.b16 %v3184
      %v3298 = vunpack.c.l.b16 %v3185
      %v3299 = vunpack.c.l.b16 %v3186
      %v3300 = vunpack.c.l.b16 %v3187
      %v3301 = vunpack.c.l.b16 %v3188
      %v3302 = vunpack.c.l.b16 %v3189
      %v3303 = vunpack.c.l.b16 %v3190
      %v3304 = vunpack.c.l.b16 %v3191
      %v3305 = vunpack.c.l.b16 %v3192
      %v3306 = vunpack.c.l.b16 %v3193
      %v3307 = vunpack.c.l.b16 %v3194
      %v3308 = vunpack.c.l.b16 %v3195
      %v3309 = vunpack.c.l.b16 %v3196
      %v3310 = vunpack.c.l.b16 %v3197
      %v3311 = vunpack.c.l.b16 %v3198
      %v3312 = vunpack.c.l.b16 %v3199
      %v3313 = vunpack.c.l.b16 %v3200
      %v3314 = vunpack.c.l.b16 %v3201
      %v3315 = vunpack.c.l.b16 %v3202
      %v3316 = vunpack.c.l.b16 %v3203
      %v3317 = vunpack.c.l.b16 %v3204
      %v3318 = vunpack.c.l.b16 %v3205
      %v3319 = vpack.c.b16 %v3283, %v3282
      %v3320 = vpack.c.b16 %v3285, %v3284
      %v3321 = vpack.c.b16 %v3287, %v3286
      %v3322 = vpack.c.b16 %v3289, %v3288
      %v3323 = vpack.c.b16 %v3291, %v3290
      %v3324 = vpack.c.b16 %v3293, %v3292
      %v3325 = vpack.c.b16 %v3295, %v3294
      %v3326 = vpack.c.b16 %v3297, %v3296
      %v3327 = vpack.c.b16 %v3299, %v3298
      %v3328 = vpack.c.b16 %v3301, %v3300
      %v3329 = vpack.c.b16 %v3303, %v3302
      %v3330 = vpack.c.b16 %v3305, %v3304
      %v3331 = vpack.c.b16 %v3307, %v3306
      %v3332 = vpack.c.b16 %v3309, %v3308
      %v3333 = vpack.c.b16 %v3311, %v3310
      %v3334 = vpack.c.b16 %v3313, %v3312
      %v3335 = vpack.c.b16 %v3315, %v3314
      %v3336 = vpack.c.b16 %v3317, %v3316
      %v3337 = vpack.c.b16 %v3318, %v3318
      %v3338 = vrot.slane %v3319, 2
      %v3339 = vrot.slane %v3320, 2
      %v3340 = vsel %vm2900, %v3338, %v3339
      %v3341 = vrot.slane %v3321, 2
      %v3342 = vsel %vm2900, %v3339, %v3341
      %v3343 = vrot.slane %v3322, 2
      %v3344 = vsel %vm2900, %v3341, %v3343
      %v3345 = vrot.slane %v3323, 2
      %v3346 = vsel %vm2900, %v3343, %v3345
      %v3347 = vrot.slane %v3324, 2
      %v3348 = vsel %vm2900, %v3345, %v3347
      %v3349 = vrot.slane %v3325, 2
      %v3350 = vsel %vm2900, %v3347, %v3349
      %v3351 = vrot.slane %v3326, 2
      %v3352 = vsel %vm2900, %v3349, %v3351
      %v3353 = vrot.slane %v3327, 2
      %v3354 = vsel %vm2900, %v3351, %v3353
      %v3355 = vrot.slane %v3328, 2
      %v3356 = vsel %vm2900, %v3353, %v3355
      %v3357 = vrot.slane %v3329, 2
      %v3358 = vsel %vm2900, %v3355, %v3357
      %v3359 = vrot.slane %v3330, 2
      %v3360 = vsel %vm2900, %v3357, %v3359
      %v3361 = vrot.slane %v3331, 2
      %v3362 = vsel %vm2900, %v3359, %v3361
      %v3363 = vrot.slane %v3332, 2
      %v3364 = vsel %vm2900, %v3361, %v3363
      %v3365 = vrot.slane %v3333, 2
      %v3366 = vsel %vm2900, %v3363, %v3365
      %v3367 = vrot.slane %v3334, 2
      %v3368 = vsel %vm2900, %v3365, %v3367
      %v3369 = vrot.slane %v3335, 2
      %v3370 = vsel %vm2900, %v3367, %v3369
      %v3371 = vrot.slane %v3336, 2
      %v3372 = vsel %vm2900, %v3369, %v3371
      %v3373 = vrot.slane %v3337, 2
      %v3374 = vsel %vm2900, %v3371, %v3373
      %v3377 = vunpack.c.l.b16 %v3243
      %v3378 = vunpack.c.l.b16 %v3244
      %v3379 = vpack.c.b16 %v3378, %v3377
      %v3382 = vsel %vm509, %v3340, 0
      %v3385 = vsel %vm509, %v3342, 0
      %v3388 = vsel %vm509, %v3344, 0
      %v3391 = vsel %vm509, %v3346, 0
      %v3394 = vsel %vm509, %v3348, 0
      %v3397 = vsel %vm509, %v3350, 0
      %v3400 = vsel %vm509, %v3352, 0
      %v3403 = vsel %vm509, %v3354, 0
      %v3406 = vsel %vm509, %v3356, 0
      %v3409 = vsel %vm509, %v3358, 0
      %v3412 = vsel %vm509, %v3360, 0
      %v3415 = vsel %vm509, %v3362, 0
      %v3418 = vsel %vm509, %v3364, 0
      %v3421 = vsel %vm509, %v3366, 0
      %v3424 = vsel %vm509, %v3368, 0
      %v3427 = vsel %vm509, %v3370, 0
      %v3430 = vsel %vm509, %v3372, 0
      %v3433 = vsel %vm509, %v3374, 0
      %3435 = vmatpush.bf16.msra.mxu0 0
      %3436 = vmatpush.bf16.msra.mxu0 0
      %3437 = vmatpush.bf16.msra.mxu0 0
      %3438 = vmatpush.bf16.msra.mxu0 0
      %3439 = vmatpush.bf16.msra.mxu0 0
      %3440 = vmatpush.bf16.msra.mxu0 0
      %3441 = vmatpush.bf16.msra.mxu0 0
      %3442 = vmatpush.bf16.msra.mxu0 %v3379
      %3443 = vmatmul.bf16.gmra.mxu0 %v3382
      %v3444 = vpop.f32.mrf.mxu0
      %v3445 = vadd.f32 0.0, %v3444
      %v3446 = vpop.f32.mrf.mxu0
      %v3447 = vadd.f32 0.0, %v3446
      %3448 = vmatmul.bf16.gmra.mxu0 %v3385
      %v3449 = vpop.f32.mrf.mxu0
      %v3450 = vadd.f32 0.0, %v3449
      %v3451 = vpop.f32.mrf.mxu0
      %v3452 = vadd.f32 0.0, %v3451
      %3453 = vmatmul.bf16.gmra.mxu0 %v3388
      %v3454 = vpop.f32.mrf.mxu0
      %v3455 = vadd.f32 0.0, %v3454
      %v3456 = vpop.f32.mrf.mxu0
      %v3457 = vadd.f32 0.0, %v3456
      %3458 = vmatmul.bf16.gmra.mxu0 %v3391
      %v3459 = vpop.f32.mrf.mxu0
      %v3460 = vadd.f32 0.0, %v3459
      %v3461 = vpop.f32.mrf.mxu0
      %v3462 = vadd.f32 0.0, %v3461
      %3463 = vmatmul.bf16.gmra.mxu0 %v3394
      %v3464 = vpop.f32.mrf.mxu0
      %v3465 = vadd.f32 0.0, %v3464
      %v3466 = vpop.f32.mrf.mxu0
      %v3467 = vadd.f32 0.0, %v3466
      %3468 = vmatmul.bf16.gmra.mxu0 %v3397
      %v3469 = vpop.f32.mrf.mxu0
      %v3470 = vadd.f32 0.0, %v3469
      %v3471 = vpop.f32.mrf.mxu0
      %v3472 = vadd.f32 0.0, %v3471
      %3473 = vmatmul.bf16.gmra.mxu0 %v3400
      %v3474 = vpop.f32.mrf.mxu0
      %v3475 = vadd.f32 0.0, %v3474
      %v3476 = vpop.f32.mrf.mxu0
      %v3477 = vadd.f32 0.0, %v3476
      %3478 = vmatmul.bf16.gmra.mxu0 %v3403
      %v3479 = vpop.f32.mrf.mxu0
      %v3480 = vadd.f32 0.0, %v3479
      %v3481 = vpop.f32.mrf.mxu0
      %v3482 = vadd.f32 0.0, %v3481
      %3483 = vmatmul.bf16.gmra.mxu0 %v3406
      %v3484 = vpop.f32.mrf.mxu0
      %v3485 = vadd.f32 0.0, %v3484
      %v3486 = vpop.f32.mrf.mxu0
      %v3487 = vadd.f32 0.0, %v3486
      %3488 = vmatmul.bf16.gmra.mxu0 %v3409
      %v3489 = vpop.f32.mrf.mxu0
      %v3490 = vadd.f32 0.0, %v3489
      %v3491 = vpop.f32.mrf.mxu0
      %v3492 = vadd.f32 0.0, %v3491
      %3493 = vmatmul.bf16.gmra.mxu0 %v3412
      %v3494 = vpop.f32.mrf.mxu0
      %v3495 = vadd.f32 0.0, %v3494
      %v3496 = vpop.f32.mrf.mxu0
      %v3497 = vadd.f32 0.0, %v3496
      %3498 = vmatmul.bf16.gmra.mxu0 %v3415
      %v3499 = vpop.f32.mrf.mxu0
      %v3500 = vadd.f32 0.0, %v3499
      %v3501 = vpop.f32.mrf.mxu0
      %v3502 = vadd.f32 0.0, %v3501
      %3503 = vmatmul.bf16.gmra.mxu0 %v3418
      %v3504 = vpop.f32.mrf.mxu0
      %v3505 = vadd.f32 0.0, %v3504
      %v3506 = vpop.f32.mrf.mxu0
      %v3507 = vadd.f32 0.0, %v3506
      %3508 = vmatmul.bf16.gmra.mxu0 %v3421
      %v3509 = vpop.f32.mrf.mxu0
      %v3510 = vadd.f32 0.0, %v3509
      %v3511 = vpop.f32.mrf.mxu0
      %v3512 = vadd.f32 0.0, %v3511
      %3513 = vmatmul.bf16.gmra.mxu0 %v3424
      %v3514 = vpop.f32.mrf.mxu0
      %v3515 = vadd.f32 0.0, %v3514
      %v3516 = vpop.f32.mrf.mxu0
      %v3517 = vadd.f32 0.0, %v3516
      %3518 = vmatmul.bf16.gmra.mxu0 %v3427
      %v3519 = vpop.f32.mrf.mxu0
      %v3520 = vadd.f32 0.0, %v3519
      %v3521 = vpop.f32.mrf.mxu0
      %v3522 = vadd.f32 0.0, %v3521
      %3523 = vmatmul.bf16.gmra.mxu0 %v3430
      %v3524 = vpop.f32.mrf.mxu0
      %v3525 = vadd.f32 0.0, %v3524
      %v3526 = vpop.f32.mrf.mxu0
      %v3527 = vadd.f32 0.0, %v3526
      %3528 = vmatmul.bf16.gmra.mxu0 %v3433
      %v3529 = vpop.f32.mrf.mxu0
      %v3530 = vadd.f32 0.0, %v3529
      %v3531 = vpop.f32.mrf.mxu0
      %v3532 = vadd.f32 0.0, %v3531
      %3533 = vdwg.mxu0
      %v3534 = vadd.f32 %v3206, %v3445
      %v3535 = vadd.f32 %v3207, %v3447
      %v3536 = vadd.f32 %v3208, %v3450
      %v3537 = vadd.f32 %v3209, %v3452
      %v3538 = vadd.f32 %v3210, %v3455
      %v3539 = vadd.f32 %v3211, %v3457
      %v3540 = vadd.f32 %v3212, %v3460
      %v3541 = vadd.f32 %v3213, %v3462
      %v3542 = vadd.f32 %v3214, %v3465
      %v3543 = vadd.f32 %v3215, %v3467
      %v3544 = vadd.f32 %v3216, %v3470
      %v3545 = vadd.f32 %v3217, %v3472
      %v3546 = vadd.f32 %v3218, %v3475
      %v3547 = vadd.f32 %v3219, %v3477
      %v3548 = vadd.f32 %v3220, %v3480
      %v3549 = vadd.f32 %v3221, %v3482
      %v3550 = vadd.f32 %v3222, %v3485
      %v3551 = vadd.f32 %v3223, %v3487
      %v3552 = vadd.f32 %v3224, %v3490
      %v3553 = vadd.f32 %v3225, %v3492
      %v3554 = vadd.f32 %v3226, %v3495
      %v3555 = vadd.f32 %v3227, %v3497
      %v3556 = vadd.f32 %v3228, %v3500
      %v3557 = vadd.f32 %v3229, %v3502
      %v3558 = vadd.f32 %v3230, %v3505
      %v3559 = vadd.f32 %v3231, %v3507
      %v3560 = vadd.f32 %v3232, %v3510
      %v3561 = vadd.f32 %v3233, %v3512
      %v3562 = vadd.f32 %v3234, %v3515
      %v3563 = vadd.f32 %v3235, %v3517
      %v3564 = vadd.f32 %v3236, %v3520
      %v3565 = vadd.f32 %v3237, %v3522
      %v3566 = vadd.f32 %v3238, %v3525
      %v3567 = vadd.f32 %v3239, %v3527
      %v3568 = vadd.f32 %v3240, %v3530
      %v3569 = vadd.f32 %v3241, %v3532
      %3570 = vst.msk [vmem:[#allocation2] sm:$0xff] %vm699, %v3534
      %3571 = vst.msk [vmem:[#allocation2 + $0x8] sm:$0xff] %vm699, %v3535
      %3572 = vst.msk [vmem:[#allocation2 + $0x10] sm:$0xff] %vm699, %v3536
      %3573 = vst.msk [vmem:[#allocation2 + $0x18] sm:$0xff] %vm699, %v3537
      %3574 = vst.msk [vmem:[#allocation2 + $0x20] sm:$0xff] %vm699, %v3538
      %3575 = vst.msk [vmem:[#allocation2 + $0x28] sm:$0xff] %vm699, %v3539
      %3576 = vst.msk [vmem:[#allocation2 + $0x30] sm:$0xff] %vm699, %v3540
      %3577 = vst.msk [vmem:[#allocation2 + $0x38] sm:$0xff] %vm699, %v3541
      %3578 = vst.msk [vmem:[#allocation2 + $0x40] sm:$0xff] %vm699, %v3542
      %3579 = vst.msk [vmem:[#allocation2 + $0x48] sm:$0xff] %vm699, %v3543
      %3580 = vst.msk [vmem:[#allocation2 + $0x50] sm:$0xff] %vm699, %v3544
      %3581 = vst.msk [vmem:[#allocation2 + $0x58] sm:$0xff] %vm699, %v3545
      %3582 = vst.msk [vmem:[#allocation2 + $0x60] sm:$0xff] %vm699, %v3546
      %3583 = vst.msk [vmem:[#allocation2 + $0x68] sm:$0xff] %vm699, %v3547
      %3584 = vst.msk [vmem:[#allocation2 + $0x70] sm:$0xff] %vm699, %v3548
      %3585 = vst.msk [vmem:[#allocation2 + $0x78] sm:$0xff] %vm699, %v3549
      %3586 = vst.msk [vmem:[#allocation2 + $0x80] sm:$0xff] %vm699, %v3550
      %3587 = vst.msk [vmem:[#allocation2 + $0x88] sm:$0xff] %vm699, %v3551
      %3588 = vst.msk [vmem:[#allocation2 + $0x90] sm:$0xff] %vm699, %v3552
      %3589 = vst.msk [vmem:[#allocation2 + $0x98] sm:$0xff] %vm699, %v3553
      %3590 = vst.msk [vmem:[#allocation2 + $0xa0] sm:$0xff] %vm699, %v3554
      %3591 = vst.msk [vmem:[#allocation2 + $0xa8] sm:$0xff] %vm699, %v3555
      %3592 = vst.msk [vmem:[#allocation2 + $0xb0] sm:$0xff] %vm699, %v3556
      %3593 = vst.msk [vmem:[#allocation2 + $0xb8] sm:$0xff] %vm699, %v3557
      %3594 = vst.msk [vmem:[#allocation2 + $0xc0] sm:$0xff] %vm699, %v3558
      %3595 = vst.msk [vmem:[#allocation2 + $0xc8] sm:$0xff] %vm699, %v3559
      %3596 = vst.msk [vmem:[#allocation2 + $0xd0] sm:$0xff] %vm699, %v3560
      %3597 = vst.msk [vmem:[#allocation2 + $0xd8] sm:$0xff] %vm699, %v3561
      %3598 = vst.msk [vmem:[#allocation2 + $0xe0] sm:$0xff] %vm699, %v3562
      %3599 = vst.msk [vmem:[#allocation2 + $0xe8] sm:$0xff] %vm699, %v3563
      %3600 = vst.msk [vmem:[#allocation2 + $0xf0] sm:$0xff] %vm699, %v3564
      %3601 = vst.msk [vmem:[#allocation2 + $0xf8] sm:$0xff] %vm699, %v3565
      %3602 = vst.msk [vmem:[#allocation2 + $0x100] sm:$0xff] %vm699, %v3566
      %3603 = vst.msk [vmem:[#allocation2 + $0x108] sm:$0xff] %vm699, %v3567
      %3604 = vst.msk [vmem:[#allocation2 + $0x110] sm:$0xff] %vm699, %v3568
      %3605 = vst.msk [vmem:[#allocation2 + $0x118] sm:$0xff] %vm699, %v3569
      %v3606 = vld [vmem:[%s273 + $0x10] sm:$0xc]
      %v3607 = vld [vmem:[%s273 + $0x14] sm:$0xf]
      %v3608 = vld [vmem:[%s273 + $0x18] sm:$0xf]
      %v3609 = vld [vmem:[%s273 + $0x1c] sm:$0xf]
      %v3610 = vld [vmem:[%s273 + $0x20] sm:$0xf]
      %v3611 = vld [vmem:[%s273 + $0x24] sm:$0xf]
      %v3612 = vld [vmem:[%s273 + $0x28] sm:$0xf]
      %v3613 = vld [vmem:[%s273 + $0x2c] sm:$0xf]
      %v3614 = vld [vmem:[%s273 + $0x30] sm:$0xf]
      %v3615 = vld [vmem:[%s273 + $0x34] sm:$0xf]
      %v3616 = vld [vmem:[%s273 + $0x38] sm:$0xf]
      %v3617 = vld [vmem:[%s273 + $0x3c] sm:$0xf]
      %v3618 = vld [vmem:[%s273 + $0x40] sm:$0xf]
      %v3619 = vld [vmem:[%s273 + $0x44] sm:$0xf]
      %v3620 = vld [vmem:[%s273 + $0x48] sm:$0xf]
      %v3621 = vld [vmem:[%s273 + $0x4c] sm:$0xf]
      %v3622 = vld [vmem:[%s273 + $0x50] sm:$0xf]
      %v3623 = vld [vmem:[%s273 + $0x54] sm:$0xf]
      %v3624 = vld [vmem:[%s273 + $0x58] sm:$0xf]
      %v3625 = vld [vmem:[%s273 + $0x5c] sm:$0xf]
      %v3626 = vld [vmem:[%s273 + $0x60] sm:$0xf]
      %v3627 = vld [vmem:[%s273 + $0x64] sm:$0xf]
      %v3628 = vld [vmem:[%s273 + $0x68] sm:$0xf]
      %v3629 = vld [vmem:[%s273 + $0x6c] sm:$0xf]
      %v3630 = vld [vmem:[%s273 + $0x70] sm:$0xf]
      %v3631 = vld [vmem:[%s273 + $0x74] sm:$0xf]
      %v3632 = vld [vmem:[%s273 + $0x78] sm:$0xf]
      %v3633 = vld [vmem:[%s273 + $0x7c] sm:$0xf]
      %v3634 = vld [vmem:[%s273 + $0x80] sm:$0xf]
      %v3635 = vld [vmem:[%s273 + $0x84] sm:$0xf]
      %v3636 = vld [vmem:[%s273 + $0x88] sm:$0xf]
      %v3637 = vld [vmem:[%s273 + $0x8c] sm:$0xf]
      %v3638 = vld [vmem:[%s273 + $0x90] sm:$0xf]
      %v3639 = vld [vmem:[%s273 + $0x94] sm:$0xf]
      %v3640 = vld [vmem:[%s273 + $0x98] sm:$0xf]
      %v3641 = vld [vmem:[%s273 + $0x9c] sm:$0xf]
      %v3642 = vld [vmem:[%s273 + $0xa0] sm:$0x7]
      %v3643 = vld [vmem:[#allocation2] sm:$0xff]
      %v3644 = vld [vmem:[#allocation2 + $0x8] sm:$0xff]
      %v3645 = vld [vmem:[#allocation2 + $0x10] sm:$0xff]
      %v3646 = vld [vmem:[#allocation2 + $0x18] sm:$0xff]
      %v3647 = vld [vmem:[#allocation2 + $0x20] sm:$0xff]
      %v3648 = vld [vmem:[#allocation2 + $0x28] sm:$0xff]
      %v3649 = vld [vmem:[#allocation2 + $0x30] sm:$0xff]
      %v3650 = vld [vmem:[#allocation2 + $0x38] sm:$0xff]
      %v3651 = vld [vmem:[#allocation2 + $0x40] sm:$0xff]
      %v3652 = vld [vmem:[#allocation2 + $0x48] sm:$0xff]
      %v3653 = vld [vmem:[#allocation2 + $0x50] sm:$0xff]
      %v3654 = vld [vmem:[#allocation2 + $0x58] sm:$0xff]
      %v3655 = vld [vmem:[#allocation2 + $0x60] sm:$0xff]
      %v3656 = vld [vmem:[#allocation2 + $0x68] sm:$0xff]
      %v3657 = vld [vmem:[#allocation2 + $0x70] sm:$0xff]
      %v3658 = vld [vmem:[#allocation2 + $0x78] sm:$0xff]
      %v3659 = vld [vmem:[#allocation2 + $0x80] sm:$0xff]
      %v3660 = vld [vmem:[#allocation2 + $0x88] sm:$0xff]
      %v3661 = vld [vmem:[#allocation2 + $0x90] sm:$0xff]
      %v3662 = vld [vmem:[#allocation2 + $0x98] sm:$0xff]
      %v3663 = vld [vmem:[#allocation2 + $0xa0] sm:$0xff]
      %v3664 = vld [vmem:[#allocation2 + $0xa8] sm:$0xff]
      %v3665 = vld [vmem:[#allocation2 + $0xb0] sm:$0xff]
      %v3666 = vld [vmem:[#allocation2 + $0xb8] sm:$0xff]
      %v3667 = vld [vmem:[#allocation2 + $0xc0] sm:$0xff]
      %v3668 = vld [vmem:[#allocation2 + $0xc8] sm:$0xff]
      %v3669 = vld [vmem:[#allocation2 + $0xd0] sm:$0xff]
      %v3670 = vld [vmem:[#allocation2 + $0xd8] sm:$0xff]
      %v3671 = vld [vmem:[#allocation2 + $0xe0] sm:$0xff]
      %v3672 = vld [vmem:[#allocation2 + $0xe8] sm:$0xff]
      %v3673 = vld [vmem:[#allocation2 + $0xf0] sm:$0xff]
      %v3674 = vld [vmem:[#allocation2 + $0xf8] sm:$0xff]
      %v3675 = vld [vmem:[#allocation2 + $0x100] sm:$0xff]
      %v3676 = vld [vmem:[#allocation2 + $0x108] sm:$0xff]
      %v3677 = vld [vmem:[#allocation2 + $0x110] sm:$0xff]
      %v3678 = vld [vmem:[#allocation2 + $0x118] sm:$0xff]
      %s3679 = scalar_lea.vmem %s281, 56
      %v3680 = vld [vmem:[%s3679] sm:$0xf]
      %v3681 = vld [vmem:[%s3679 + $0x4] sm:$0xf]
      %v3719 = vunpack.c.l.b16 %v3606
      %v3720 = vunpack.c.l.b16 %v3607
      %v3721 = vunpack.c.l.b16 %v3608
      %v3722 = vunpack.c.l.b16 %v3609
      %v3723 = vunpack.c.l.b16 %v3610
      %v3724 = vunpack.c.l.b16 %v3611
      %v3725 = vunpack.c.l.b16 %v3612
      %v3726 = vunpack.c.l.b16 %v3613
      %v3727 = vunpack.c.l.b16 %v3614
      %v3728 = vunpack.c.l.b16 %v3615
      %v3729 = vunpack.c.l.b16 %v3616
      %v3730 = vunpack.c.l.b16 %v3617
      %v3731 = vunpack.c.l.b16 %v3618
      %v3732 = vunpack.c.l.b16 %v3619
      %v3733 = vunpack.c.l.b16 %v3620
      %v3734 = vunpack.c.l.b16 %v3621
      %v3735 = vunpack.c.l.b16 %v3622
      %v3736 = vunpack.c.l.b16 %v3623
      %v3737 = vunpack.c.l.b16 %v3624
      %v3738 = vunpack.c.l.b16 %v3625
      %v3739 = vunpack.c.l.b16 %v3626
      %v3740 = vunpack.c.l.b16 %v3627
      %v3741 = vunpack.c.l.b16 %v3628
      %v3742 = vunpack.c.l.b16 %v3629
      %v3743 = vunpack.c.l.b16 %v3630
      %v3744 = vunpack.c.l.b16 %v3631
      %v3745 = vunpack.c.l.b16 %v3632
      %v3746 = vunpack.c.l.b16 %v3633
      %v3747 = vunpack.c.l.b16 %v3634
      %v3748 = vunpack.c.l.b16 %v3635
      %v3749 = vunpack.c.l.b16 %v3636
      %v3750 = vunpack.c.l.b16 %v3637
      %v3751 = vunpack.c.l.b16 %v3638
      %v3752 = vunpack.c.l.b16 %v3639
      %v3753 = vunpack.c.l.b16 %v3640
      %v3754 = vunpack.c.l.b16 %v3641
      %v3755 = vunpack.c.l.b16 %v3642
      %v3756 = vpack.c.b16 %v3720, %v3719
      %v3757 = vpack.c.b16 %v3722, %v3721
      %v3758 = vpack.c.b16 %v3724, %v3723
      %v3759 = vpack.c.b16 %v3726, %v3725
      %v3760 = vpack.c.b16 %v3728, %v3727
      %v3761 = vpack.c.b16 %v3730, %v3729
      %v3762 = vpack.c.b16 %v3732, %v3731
      %v3763 = vpack.c.b16 %v3734, %v3733
      %v3764 = vpack.c.b16 %v3736, %v3735
      %v3765 = vpack.c.b16 %v3738, %v3737
      %v3766 = vpack.c.b16 %v3740, %v3739
      %v3767 = vpack.c.b16 %v3742, %v3741
      %v3768 = vpack.c.b16 %v3744, %v3743
      %v3769 = vpack.c.b16 %v3746, %v3745
      %v3770 = vpack.c.b16 %v3748, %v3747
      %v3771 = vpack.c.b16 %v3750, %v3749
      %v3772 = vpack.c.b16 %v3752, %v3751
      %v3773 = vpack.c.b16 %v3754, %v3753
      %v3774 = vpack.c.b16 %v3755, %v3755
      %vm3775 = vsmask.f32 5376
      %v3777 = vshrl.u32 %v3756, 16
      %v3779 = vrot.slane %v3777, 2
      %v3780 = vshll.u32 %v3756, 16
      %v3782 = vrot.slane %v3780, 3
      %v3783 = vor.u32 %v3779, %v3782
      %v3785 = vshrl.u32 %v3757, 16
      %v3787 = vrot.slane %v3785, 2
      %v3788 = vshll.u32 %v3757, 16
      %v3790 = vrot.slane %v3788, 3
      %v3791 = vor.u32 %v3787, %v3790
      %v3792 = vsel %vm3775, %v3783, %v3791
      %v3794 = vshrl.u32 %v3758, 16
      %v3796 = vrot.slane %v3794, 2
      %v3797 = vshll.u32 %v3758, 16
      %v3799 = vrot.slane %v3797, 3
      %v3800 = vor.u32 %v3796, %v3799
      %v3801 = vsel %vm3775, %v3791, %v3800
      %v3803 = vshrl.u32 %v3759, 16
      %v3805 = vrot.slane %v3803, 2
      %v3806 = vshll.u32 %v3759, 16
      %v3808 = vrot.slane %v3806, 3
      %v3809 = vor.u32 %v3805, %v3808
      %v3810 = vsel %vm3775, %v3800, %v3809
      %v3812 = vshrl.u32 %v3760, 16
      %v3814 = vrot.slane %v3812, 2
      %v3815 = vshll.u32 %v3760, 16
      %v3817 = vrot.slane %v3815, 3
      %v3818 = vor.u32 %v3814, %v3817
      %v3819 = vsel %vm3775, %v3809, %v3818
      %v3821 = vshrl.u32 %v3761, 16
      %v3823 = vrot.slane %v3821, 2
      %v3824 = vshll.u32 %v3761, 16
      %v3826 = vrot.slane %v3824, 3
      %v3827 = vor.u32 %v3823, %v3826
      %v3828 = vsel %vm3775, %v3818, %v3827
      %v3830 = vshrl.u32 %v3762, 16
      %v3832 = vrot.slane %v3830, 2
      %v3833 = vshll.u32 %v3762, 16
      %v3835 = vrot.slane %v3833, 3
      %v3836 = vor.u32 %v3832, %v3835
      %v3837 = vsel %vm3775, %v3827, %v3836
      %v3839 = vshrl.u32 %v3763, 16
      %v3841 = vrot.slane %v3839, 2
      %v3842 = vshll.u32 %v3763, 16
      %v3844 = vrot.slane %v3842, 3
      %v3845 = vor.u32 %v3841, %v3844
      %v3846 = vsel %vm3775, %v3836, %v3845
      %v3848 = vshrl.u32 %v3764, 16
      %v3850 = vrot.slane %v3848, 2
      %v3851 = vshll.u32 %v3764, 16
      %v3853 = vrot.slane %v3851, 3
      %v3854 = vor.u32 %v3850, %v3853
      %v3855 = vsel %vm3775, %v3845, %v3854
      %v3857 = vshrl.u32 %v3765, 16
      %v3859 = vrot.slane %v3857, 2
      %v3860 = vshll.u32 %v3765, 16
      %v3862 = vrot.slane %v3860, 3
      %v3863 = vor.u32 %v3859, %v3862
      %v3864 = vsel %vm3775, %v3854, %v3863
      %v3866 = vshrl.u32 %v3766, 16
      %v3868 = vrot.slane %v3866, 2
      %v3869 = vshll.u32 %v3766, 16
      %v3871 = vrot.slane %v3869, 3
      %v3872 = vor.u32 %v3868, %v3871
      %v3873 = vsel %vm3775, %v3863, %v3872
      %v3875 = vshrl.u32 %v3767, 16
      %v3877 = vrot.slane %v3875, 2
      %v3878 = vshll.u32 %v3767, 16
      %v3880 = vrot.slane %v3878, 3
      %v3881 = vor.u32 %v3877, %v3880
      %v3882 = vsel %vm3775, %v3872, %v3881
      %v3884 = vshrl.u32 %v3768, 16
      %v3886 = vrot.slane %v3884, 2
      %v3887 = vshll.u32 %v3768, 16
      %v3889 = vrot.slane %v3887, 3
      %v3890 = vor.u32 %v3886, %v3889
      %v3891 = vsel %vm3775, %v3881, %v3890
      %v3893 = vshrl.u32 %v3769, 16
      %v3895 = vrot.slane %v3893, 2
      %v3896 = vshll.u32 %v3769, 16
      %v3898 = vrot.slane %v3896, 3
      %v3899 = vor.u32 %v3895, %v3898
      %v3900 = vsel %vm3775, %v3890, %v3899
      %v3902 = vshrl.u32 %v3770, 16
      %v3904 = vrot.slane %v3902, 2
      %v3905 = vshll.u32 %v3770, 16
      %v3907 = vrot.slane %v3905, 3
      %v3908 = vor.u32 %v3904, %v3907
      %v3909 = vsel %vm3775, %v3899, %v3908
      %v3911 = vshrl.u32 %v3771, 16
      %v3913 = vrot.slane %v3911, 2
      %v3914 = vshll.u32 %v3771, 16
      %v3916 = vrot.slane %v3914, 3
      %v3917 = vor.u32 %v3913, %v3916
      %v3918 = vsel %vm3775, %v3908, %v3917
      %v3920 = vshrl.u32 %v3772, 16
      %v3922 = vrot.slane %v3920, 2
      %v3923 = vshll.u32 %v3772, 16
      %v3925 = vrot.slane %v3923, 3
      %v3926 = vor.u32 %v3922, %v3925
      %v3927 = vsel %vm3775, %v3917, %v3926
      %v3929 = vshrl.u32 %v3773, 16
      %v3931 = vrot.slane %v3929, 2
      %v3932 = vshll.u32 %v3773, 16
      %v3934 = vrot.slane %v3932, 3
      %v3935 = vor.u32 %v3931, %v3934
      %v3936 = vsel %vm3775, %v3926, %v3935
      %v3938 = vshrl.u32 %v3774, 16
      %v3940 = vrot.slane %v3938, 2
      %v3941 = vshll.u32 %v3774, 16
      %v3943 = vrot.slane %v3941, 3
      %v3944 = vor.u32 %v3940, %v3943
      %v3945 = vsel %vm3775, %v3935, %v3944
      %v3948 = vunpack.c.l.b16 %v3680
      %v3949 = vunpack.c.l.b16 %v3681
      %v3950 = vpack.c.b16 %v3949, %v3948
      %v3953 = vsel %vm509, %v3792, 0
      %v3956 = vsel %vm509, %v3801, 0
      %v3959 = vsel %vm509, %v3810, 0
      %v3962 = vsel %vm509, %v3819, 0
      %v3965 = vsel %vm509, %v3828, 0
      %v3968 = vsel %vm509, %v3837, 0
      %v3971 = vsel %vm509, %v3846, 0
      %v3974 = vsel %vm509, %v3855, 0
      %v3977 = vsel %vm509, %v3864, 0
      %v3980 = vsel %vm509, %v3873, 0
      %v3983 = vsel %vm509, %v3882, 0
      %v3986 = vsel %vm509, %v3891, 0
      %v3989 = vsel %vm509, %v3900, 0
      %v3992 = vsel %vm509, %v3909, 0
      %v3995 = vsel %vm509, %v3918, 0
      %v3998 = vsel %vm509, %v3927, 0
      %v4001 = vsel %vm509, %v3936, 0
      %v4004 = vsel %vm509, %v3945, 0
      %4006 = vmatpush.bf16.msra.mxu0 0
      %4007 = vmatpush.bf16.msra.mxu0 0
      %4008 = vmatpush.bf16.msra.mxu0 0
      %4009 = vmatpush.bf16.msra.mxu0 0
      %4010 = vmatpush.bf16.msra.mxu0 0
      %4011 = vmatpush.bf16.msra.mxu0 0
      %4012 = vmatpush.bf16.msra.mxu0 0
      %4013 = vmatpush.bf16.msra.mxu0 %v3950
      %4014 = vmatmul.bf16.gmra.mxu0 %v3953
      %v4015 = vpop.f32.mrf.mxu0
      %v4016 = vadd.f32 0.0, %v4015
      %v4017 = vpop.f32.mrf.mxu0
      %v4018 = vadd.f32 0.0, %v4017
      %4019 = vmatmul.bf16.gmra.mxu0 %v3956
      %v4020 = vpop.f32.mrf.mxu0
      %v4021 = vadd.f32 0.0, %v4020
      %v4022 = vpop.f32.mrf.mxu0
      %v4023 = vadd.f32 0.0, %v4022
      %4024 = vmatmul.bf16.gmra.mxu0 %v3959
      %v4025 = vpop.f32.mrf.mxu0
      %v4026 = vadd.f32 0.0, %v4025
      %v4027 = vpop.f32.mrf.mxu0
      %v4028 = vadd.f32 0.0, %v4027
      %4029 = vmatmul.bf16.gmra.mxu0 %v3962
      %v4030 = vpop.f32.mrf.mxu0
      %v4031 = vadd.f32 0.0, %v4030
      %v4032 = vpop.f32.mrf.mxu0
      %v4033 = vadd.f32 0.0, %v4032
      %4034 = vmatmul.bf16.gmra.mxu0 %v3965
      %v4035 = vpop.f32.mrf.mxu0
      %v4036 = vadd.f32 0.0, %v4035
      %v4037 = vpop.f32.mrf.mxu0
      %v4038 = vadd.f32 0.0, %v4037
      %4039 = vmatmul.bf16.gmra.mxu0 %v3968
      %v4040 = vpop.f32.mrf.mxu0
      %v4041 = vadd.f32 0.0, %v4040
      %v4042 = vpop.f32.mrf.mxu0
      %v4043 = vadd.f32 0.0, %v4042
      %4044 = vmatmul.bf16.gmra.mxu0 %v3971
      %v4045 = vpop.f32.mrf.mxu0
      %v4046 = vadd.f32 0.0, %v4045
      %v4047 = vpop.f32.mrf.mxu0
      %v4048 = vadd.f32 0.0, %v4047
      %4049 = vmatmul.bf16.gmra.mxu0 %v3974
      %v4050 = vpop.f32.mrf.mxu0
      %v4051 = vadd.f32 0.0, %v4050
      %v4052 = vpop.f32.mrf.mxu0
      %v4053 = vadd.f32 0.0, %v4052
      %4054 = vmatmul.bf16.gmra.mxu0 %v3977
      %v4055 = vpop.f32.mrf.mxu0
      %v4056 = vadd.f32 0.0, %v4055
      %v4057 = vpop.f32.mrf.mxu0
      %v4058 = vadd.f32 0.0, %v4057
      %4059 = vmatmul.bf16.gmra.mxu0 %v3980
      %v4060 = vpop.f32.mrf.mxu0
      %v4061 = vadd.f32 0.0, %v4060
      %v4062 = vpop.f32.mrf.mxu0
      %v4063 = vadd.f32 0.0, %v4062
      %4064 = vmatmul.bf16.gmra.mxu0 %v3983
      %v4065 = vpop.f32.mrf.mxu0
      %v4066 = vadd.f32 0.0, %v4065
      %v4067 = vpop.f32.mrf.mxu0
      %v4068 = vadd.f32 0.0, %v4067
      %4069 = vmatmul.bf16.gmra.mxu0 %v3986
      %v4070 = vpop.f32.mrf.mxu0
      %v4071 = vadd.f32 0.0, %v4070
      %v4072 = vpop.f32.mrf.mxu0
      %v4073 = vadd.f32 0.0, %v4072
      %4074 = vmatmul.bf16.gmra.mxu0 %v3989
      %v4075 = vpop.f32.mrf.mxu0
      %v4076 = vadd.f32 0.0, %v4075
      %v4077 = vpop.f32.mrf.mxu0
      %v4078 = vadd.f32 0.0, %v4077
      %4079 = vmatmul.bf16.gmra.mxu0 %v3992
      %v4080 = vpop.f32.mrf.mxu0
      %v4081 = vadd.f32 0.0, %v4080
      %v4082 = vpop.f32.mrf.mxu0
      %v4083 = vadd.f32 0.0, %v4082
      %4084 = vmatmul.bf16.gmra.mxu0 %v3995
      %v4085 = vpop.f32.mrf.mxu0
      %v4086 = vadd.f32 0.0, %v4085
      %v4087 = vpop.f32.mrf.mxu0
      %v4088 = vadd.f32 0.0, %v4087
      %4089 = vmatmul.bf16.gmra.mxu0 %v3998
      %v4090 = vpop.f32.mrf.mxu0
      %v4091 = vadd.f32 0.0, %v4090
      %v4092 = vpop.f32.mrf.mxu0
      %v4093 = vadd.f32 0.0, %v4092
      %4094 = vmatmul.bf16.gmra.mxu0 %v4001
      %v4095 = vpop.f32.mrf.mxu0
      %v4096 = vadd.f32 0.0, %v4095
      %v4097 = vpop.f32.mrf.mxu0
      %v4098 = vadd.f32 0.0, %v4097
      %4099 = vmatmul.bf16.gmra.mxu0 %v4004
      %v4100 = vpop.f32.mrf.mxu0
      %v4101 = vadd.f32 0.0, %v4100
      %v4102 = vpop.f32.mrf.mxu0
      %v4103 = vadd.f32 0.0, %v4102
      %4104 = vdwg.mxu0
      %v4105 = vadd.f32 %v3643, %v4016
      %v4106 = vadd.f32 %v3644, %v4018
      %v4107 = vadd.f32 %v3645, %v4021
      %v4108 = vadd.f32 %v3646, %v4023
      %v4109 = vadd.f32 %v3647, %v4026
      %v4110 = vadd.f32 %v3648, %v4028
      %v4111 = vadd.f32 %v3649, %v4031
      %v4112 = vadd.f32 %v3650, %v4033
      %v4113 = vadd.f32 %v3651, %v4036
      %v4114 = vadd.f32 %v3652, %v4038
      %v4115 = vadd.f32 %v3653, %v4041
      %v4116 = vadd.f32 %v3654, %v4043
      %v4117 = vadd.f32 %v3655, %v4046
      %v4118 = vadd.f32 %v3656, %v4048
      %v4119 = vadd.f32 %v3657, %v4051
      %v4120 = vadd.f32 %v3658, %v4053
      %v4121 = vadd.f32 %v3659, %v4056
      %v4122 = vadd.f32 %v3660, %v4058
      %v4123 = vadd.f32 %v3661, %v4061
      %v4124 = vadd.f32 %v3662, %v4063
      %v4125 = vadd.f32 %v3663, %v4066
      %v4126 = vadd.f32 %v3664, %v4068
      %v4127 = vadd.f32 %v3665, %v4071
      %v4128 = vadd.f32 %v3666, %v4073
      %v4129 = vadd.f32 %v3667, %v4076
      %v4130 = vadd.f32 %v3668, %v4078
      %v4131 = vadd.f32 %v3669, %v4081
      %v4132 = vadd.f32 %v3670, %v4083
      %v4133 = vadd.f32 %v3671, %v4086
      %v4134 = vadd.f32 %v3672, %v4088
      %v4135 = vadd.f32 %v3673, %v4091
      %v4136 = vadd.f32 %v3674, %v4093
      %v4137 = vadd.f32 %v3675, %v4096
      %v4138 = vadd.f32 %v3676, %v4098
      %v4139 = vadd.f32 %v3677, %v4101
      %v4140 = vadd.f32 %v3678, %v4103
      %4141 = vst.msk [vmem:[#allocation2] sm:$0xff] %vm699, %v4105
      %4142 = vst.msk [vmem:[#allocation2 + $0x8] sm:$0xff] %vm699, %v4106
      %4143 = vst.msk [vmem:[#allocation2 + $0x10] sm:$0xff] %vm699, %v4107
      %4144 = vst.msk [vmem:[#allocation2 + $0x18] sm:$0xff] %vm699, %v4108
      %4145 = vst.msk [vmem:[#allocation2 + $0x20] sm:$0xff] %vm699, %v4109
      %4146 = vst.msk [vmem:[#allocation2 + $0x28] sm:$0xff] %vm699, %v4110
      %4147 = vst.msk [vmem:[#allocation2 + $0x30] sm:$0xff] %vm699, %v4111
      %4148 = vst.msk [vmem:[#allocation2 + $0x38] sm:$0xff] %vm699, %v4112
      %4149 = vst.msk [vmem:[#allocation2 + $0x40] sm:$0xff] %vm699, %v4113
      %4150 = vst.msk [vmem:[#allocation2 + $0x48] sm:$0xff] %vm699, %v4114
      %4151 = vst.msk [vmem:[#allocation2 + $0x50] sm:$0xff] %vm699, %v4115
      %4152 = vst.msk [vmem:[#allocation2 + $0x58] sm:$0xff] %vm699, %v4116
      %4153 = vst.msk [vmem:[#allocation2 + $0x60] sm:$0xff] %vm699, %v4117
      %4154 = vst.msk [vmem:[#allocation2 + $0x68] sm:$0xff] %vm699, %v4118
      %4155 = vst.msk [vmem:[#allocation2 + $0x70] sm:$0xff] %vm699, %v4119
      %4156 = vst.msk [vmem:[#allocation2 + $0x78] sm:$0xff] %vm699, %v4120
      %4157 = vst.msk [vmem:[#allocation2 + $0x80] sm:$0xff] %vm699, %v4121
      %4158 = vst.msk [vmem:[#allocation2 + $0x88] sm:$0xff] %vm699, %v4122
      %4159 = vst.msk [vmem:[#allocation2 + $0x90] sm:$0xff] %vm699, %v4123
      %4160 = vst.msk [vmem:[#allocation2 + $0x98] sm:$0xff] %vm699, %v4124
      %4161 = vst.msk [vmem:[#allocation2 + $0xa0] sm:$0xff] %vm699, %v4125
      %4162 = vst.msk [vmem:[#allocation2 + $0xa8] sm:$0xff] %vm699, %v4126
      %4163 = vst.msk [vmem:[#allocation2 + $0xb0] sm:$0xff] %vm699, %v4127
      %4164 = vst.msk [vmem:[#allocation2 + $0xb8] sm:$0xff] %vm699, %v4128
      %4165 = vst.msk [vmem:[#allocation2 + $0xc0] sm:$0xff] %vm699, %v4129
      %4166 = vst.msk [vmem:[#allocation2 + $0xc8] sm:$0xff] %vm699, %v4130
      %4167 = vst.msk [vmem:[#allocation2 + $0xd0] sm:$0xff] %vm699, %v4131
      %4168 = vst.msk [vmem:[#allocation2 + $0xd8] sm:$0xff] %vm699, %v4132
      %4169 = vst.msk [vmem:[#allocation2 + $0xe0] sm:$0xff] %vm699, %v4133
      %4170 = vst.msk [vmem:[#allocation2 + $0xe8] sm:$0xff] %vm699, %v4134
      %4171 = vst.msk [vmem:[#allocation2 + $0xf0] sm:$0xff] %vm699, %v4135
      %4172 = vst.msk [vmem:[#allocation2 + $0xf8] sm:$0xff] %vm699, %v4136
      %4173 = vst.msk [vmem:[#allocation2 + $0x100] sm:$0xff] %vm699, %v4137
      %4174 = vst.msk [vmem:[#allocation2 + $0x108] sm:$0xff] %vm699, %v4138
      %4175 = vst.msk [vmem:[#allocation2 + $0x110] sm:$0xff] %vm699, %v4139
      %4176 = vst.msk [vmem:[#allocation2 + $0x118] sm:$0xff] %vm699, %v4140
      %v4177 = vld [vmem:[%s273 + $0x10] sm:$0x8]
      %v4178 = vld [vmem:[%s273 + $0x14] sm:$0xf]
      %v4179 = vld [vmem:[%s273 + $0x18] sm:$0xf]
      %v4180 = vld [vmem:[%s273 + $0x1c] sm:$0xf]
      %v4181 = vld [vmem:[%s273 + $0x20] sm:$0xf]
      %v4182 = vld [vmem:[%s273 + $0x24] sm:$0xf]
      %v4183 = vld [vmem:[%s273 + $0x28] sm:$0xf]
      %v4184 = vld [vmem:[%s273 + $0x2c] sm:$0xf]
      %v4185 = vld [vmem:[%s273 + $0x30] sm:$0xf]
      %v4186 = vld [vmem:[%s273 + $0x34] sm:$0xf]
      %v4187 = vld [vmem:[%s273 + $0x38] sm:$0xf]
      %v4188 = vld [vmem:[%s273 + $0x3c] sm:$0xf]
      %v4189 = vld [vmem:[%s273 + $0x40] sm:$0xf]
      %v4190 = vld [vmem:[%s273 + $0x44] sm:$0xf]
      %v4191 = vld [vmem:[%s273 + $0x48] sm:$0xf]
      %v4192 = vld [vmem:[%s273 + $0x4c] sm:$0xf]
      %v4193 = vld [vmem:[%s273 + $0x50] sm:$0xf]
      %v4194 = vld [vmem:[%s273 + $0x54] sm:$0xf]
      %v4195 = vld [vmem:[%s273 + $0x58] sm:$0xf]
      %v4196 = vld [vmem:[%s273 + $0x5c] sm:$0xf]
      %v4197 = vld [vmem:[%s273 + $0x60] sm:$0xf]
      %v4198 = vld [vmem:[%s273 + $0x64] sm:$0xf]
      %v4199 = vld [vmem:[%s273 + $0x68] sm:$0xf]
      %v4200 = vld [vmem:[%s273 + $0x6c] sm:$0xf]
      %v4201 = vld [vmem:[%s273 + $0x70] sm:$0xf]
      %v4202 = vld [vmem:[%s273 + $0x74] sm:$0xf]
      %v4203 = vld [vmem:[%s273 + $0x78] sm:$0xf]
      %v4204 = vld [vmem:[%s273 + $0x7c] sm:$0xf]
      %v4205 = vld [vmem:[%s273 + $0x80] sm:$0xf]
      %v4206 = vld [vmem:[%s273 + $0x84] sm:$0xf]
      %v4207 = vld [vmem:[%s273 + $0x88] sm:$0xf]
      %v4208 = vld [vmem:[%s273 + $0x8c] sm:$0xf]
      %v4209 = vld [vmem:[%s273 + $0x90] sm:$0xf]
      %v4210 = vld [vmem:[%s273 + $0x94] sm:$0xf]
      %v4211 = vld [vmem:[%s273 + $0x98] sm:$0xf]
      %v4212 = vld [vmem:[%s273 + $0x9c] sm:$0xf]
      %v4213 = vld [vmem:[%s273 + $0xa0] sm:$0x7]
      %v4214 = vld [vmem:[#allocation2] sm:$0xff]
      %v4215 = vld [vmem:[#allocation2 + $0x8] sm:$0xff]
      %v4216 = vld [vmem:[#allocation2 + $0x10] sm:$0xff]
      %v4217 = vld [vmem:[#allocation2 + $0x18] sm:$0xff]
      %v4218 = vld [vmem:[#allocation2 + $0x20] sm:$0xff]
      %v4219 = vld [vmem:[#allocation2 + $0x28] sm:$0xff]
      %v4220 = vld [vmem:[#allocation2 + $0x30] sm:$0xff]
      %v4221 = vld [vmem:[#allocation2 + $0x38] sm:$0xff]
      %v4222 = vld [vmem:[#allocation2 + $0x40] sm:$0xff]
      %v4223 = vld [vmem:[#allocation2 + $0x48] sm:$0xff]
      %v4224 = vld [vmem:[#allocation2 + $0x50] sm:$0xff]
      %v4225 = vld [vmem:[#allocation2 + $0x58] sm:$0xff]
      %v4226 = vld [vmem:[#allocation2 + $0x60] sm:$0xff]
      %v4227 = vld [vmem:[#allocation2 + $0x68] sm:$0xff]
      %v4228 = vld [vmem:[#allocation2 + $0x70] sm:$0xff]
      %v4229 = vld [vmem:[#allocation2 + $0x78] sm:$0xff]
      %v4230 = vld [vmem:[#allocation2 + $0x80] sm:$0xff]
      %v4231 = vld [vmem:[#allocation2 + $0x88] sm:$0xff]
      %v4232 = vld [vmem:[#allocation2 + $0x90] sm:$0xff]
      %v4233 = vld [vmem:[#allocation2 + $0x98] sm:$0xff]
      %v4234 = vld [vmem:[#allocation2 + $0xa0] sm:$0xff]
      %v4235 = vld [vmem:[#allocation2 + $0xa8] sm:$0xff]
      %v4236 = vld [vmem:[#allocation2 + $0xb0] sm:$0xff]
      %v4237 = vld [vmem:[#allocation2 + $0xb8] sm:$0xff]
      %v4238 = vld [vmem:[#allocation2 + $0xc0] sm:$0xff]
      %v4239 = vld [vmem:[#allocation2 + $0xc8] sm:$0xff]
      %v4240 = vld [vmem:[#allocation2 + $0xd0] sm:$0xff]
      %v4241 = vld [vmem:[#allocation2 + $0xd8] sm:$0xff]
      %v4242 = vld [vmem:[#allocation2 + $0xe0] sm:$0xff]
      %v4243 = vld [vmem:[#allocation2 + $0xe8] sm:$0xff]
      %v4244 = vld [vmem:[#allocation2 + $0xf0] sm:$0xff]
      %v4245 = vld [vmem:[#allocation2 + $0xf8] sm:$0xff]
      %v4246 = vld [vmem:[#allocation2 + $0x100] sm:$0xff]
      %v4247 = vld [vmem:[#allocation2 + $0x108] sm:$0xff]
      %v4248 = vld [vmem:[#allocation2 + $0x110] sm:$0xff]
      %v4249 = vld [vmem:[#allocation2 + $0x118] sm:$0xff]
      %s4250 = scalar_lea.vmem %s281, 64
      %v4251 = vld [vmem:[%s4250] sm:$0xf]
      %v4252 = vld [vmem:[%s4250 + $0x4] sm:$0xf]
      %v4290 = vunpack.c.l.b16 %v4177
      %v4291 = vunpack.c.l.b16 %v4178
      %v4292 = vunpack.c.l.b16 %v4179
      %v4293 = vunpack.c.l.b16 %v4180
      %v4294 = vunpack.c.l.b16 %v4181
      %v4295 = vunpack.c.l.b16 %v4182
      %v4296 = vunpack.c.l.b16 %v4183
      %v4297 = vunpack.c.l.b16 %v4184
      %v4298 = vunpack.c.l.b16 %v4185
      %v4299 = vunpack.c.l.b16 %v4186
      %v4300 = vunpack.c.l.b16 %v4187
      %v4301 = vunpack.c.l.b16 %v4188
      %v4302 = vunpack.c.l.b16 %v4189
      %v4303 = vunpack.c.l.b16 %v4190
      %v4304 = vunpack.c.l.b16 %v4191
      %v4305 = vunpack.c.l.b16 %v4192
      %v4306 = vunpack.c.l.b16 %v4193
      %v4307 = vunpack.c.l.b16 %v4194
      %v4308 = vunpack.c.l.b16 %v4195
      %v4309 = vunpack.c.l.b16 %v4196
      %v4310 = vunpack.c.l.b16 %v4197
      %v4311 = vunpack.c.l.b16 %v4198
      %v4312 = vunpack.c.l.b16 %v4199
      %v4313 = vunpack.c.l.b16 %v4200
      %v4314 = vunpack.c.l.b16 %v4201
      %v4315 = vunpack.c.l.b16 %v4202
      %v4316 = vunpack.c.l.b16 %v4203
      %v4317 = vunpack.c.l.b16 %v4204
      %v4318 = vunpack.c.l.b16 %v4205
      %v4319 = vunpack.c.l.b16 %v4206
      %v4320 = vunpack.c.l.b16 %v4207
      %v4321 = vunpack.c.l.b16 %v4208
      %v4322 = vunpack.c.l.b16 %v4209
      %v4323 = vunpack.c.l.b16 %v4210
      %v4324 = vunpack.c.l.b16 %v4211
      %v4325 = vunpack.c.l.b16 %v4212
      %v4326 = vunpack.c.l.b16 %v4213
      %v4327 = vpack.c.b16 %v4291, %v4290
      %v4328 = vpack.c.b16 %v4293, %v4292
      %v4329 = vpack.c.b16 %v4295, %v4294
      %v4330 = vpack.c.b16 %v4297, %v4296
      %v4331 = vpack.c.b16 %v4299, %v4298
      %v4332 = vpack.c.b16 %v4301, %v4300
      %v4333 = vpack.c.b16 %v4303, %v4302
      %v4334 = vpack.c.b16 %v4305, %v4304
      %v4335 = vpack.c.b16 %v4307, %v4306
      %v4336 = vpack.c.b16 %v4309, %v4308
      %v4337 = vpack.c.b16 %v4311, %v4310
      %v4338 = vpack.c.b16 %v4313, %v4312
      %v4339 = vpack.c.b16 %v4315, %v4314
      %v4340 = vpack.c.b16 %v4317, %v4316
      %v4341 = vpack.c.b16 %v4319, %v4318
      %v4342 = vpack.c.b16 %v4321, %v4320
      %v4343 = vpack.c.b16 %v4323, %v4322
      %v4344 = vpack.c.b16 %v4325, %v4324
      %v4345 = vpack.c.b16 %v4326, %v4326
      %vm4346 = vcmask 1044480
      %v4347 = vrot.slane %v4327, 3
      %v4348 = vrot.slane %v4328, 3
      %v4349 = vsel %vm4346, %v4347, %v4348
      %v4350 = vrot.slane %v4329, 3
      %v4351 = vsel %vm4346, %v4348, %v4350
      %v4352 = vrot.slane %v4330, 3
      %v4353 = vsel %vm4346, %v4350, %v4352
      %v4354 = vrot.slane %v4331, 3
      %v4355 = vsel %vm4346, %v4352, %v4354
      %v4356 = vrot.slane %v4332, 3
      %v4357 = vsel %vm4346, %v4354, %v4356
      %v4358 = vrot.slane %v4333, 3
      %v4359 = vsel %vm4346, %v4356, %v4358
      %v4360 = vrot.slane %v4334, 3
      %v4361 = vsel %vm4346, %v4358, %v4360
      %v4362 = vrot.slane %v4335, 3
      %v4363 = vsel %vm4346, %v4360, %v4362
      %v4364 = vrot.slane %v4336, 3
      %v4365 = vsel %vm4346, %v4362, %v4364
      %v4366 = vrot.slane %v4337, 3
      %v4367 = vsel %vm4346, %v4364, %v4366
      %v4368 = vrot.slane %v4338, 3
      %v4369 = vsel %vm4346, %v4366, %v4368
      %v4370 = vrot.slane %v4339, 3
      %v4371 = vsel %vm4346, %v4368, %v4370
      %v4372 = vrot.slane %v4340, 3
      %v4373 = vsel %vm4346, %v4370, %v4372
      %v4374 = vrot.slane %v4341, 3
      %v4375 = vsel %vm4346, %v4372, %v4374
      %v4376 = vrot.slane %v4342, 3
      %v4377 = vsel %vm4346, %v4374, %v4376
      %v4378 = vrot.slane %v4343, 3
      %v4379 = vsel %vm4346, %v4376, %v4378
      %v4380 = vrot.slane %v4344, 3
      %v4381 = vsel %vm4346, %v4378, %v4380
      %v4382 = vrot.slane %v4345, 3
      %v4383 = vsel %vm4346, %v4380, %v4382
      %v4386 = vunpack.c.l.b16 %v4251
      %v4387 = vunpack.c.l.b16 %v4252
      %v4388 = vpack.c.b16 %v4387, %v4386
      %v4391 = vsel %vm509, %v4349, 0
      %v4394 = vsel %vm509, %v4351, 0
      %v4397 = vsel %vm509, %v4353, 0
      %v4400 = vsel %vm509, %v4355, 0
      %v4403 = vsel %vm509, %v4357, 0
      %v4406 = vsel %vm509, %v4359, 0
      %v4409 = vsel %vm509, %v4361, 0
      %v4412 = vsel %vm509, %v4363, 0
      %v4415 = vsel %vm509, %v4365, 0
      %v4418 = vsel %vm509, %v4367, 0
      %v4421 = vsel %vm509, %v4369, 0
      %v4424 = vsel %vm509, %v4371, 0
      %v4427 = vsel %vm509, %v4373, 0
      %v4430 = vsel %vm509, %v4375, 0
      %v4433 = vsel %vm509, %v4377, 0
      %v4436 = vsel %vm509, %v4379, 0
      %v4439 = vsel %vm509, %v4381, 0
      %v4442 = vsel %vm509, %v4383, 0
      %4444 = vmatpush.bf16.msra.mxu0 0
      %4445 = vmatpush.bf16.msra.mxu0 0
      %4446 = vmatpush.bf16.msra.mxu0 0
      %4447 = vmatpush.bf16.msra.mxu0 0
      %4448 = vmatpush.bf16.msra.mxu0 0
      %4449 = vmatpush.bf16.msra.mxu0 0
      %4450 = vmatpush.bf16.msra.mxu0 0
      %4451 = vmatpush.bf16.msra.mxu0 %v4388
      %4452 = vmatmul.bf16.gmra.mxu0 %v4391
      %v4453 = vpop.f32.mrf.mxu0
      %v4454 = vadd.f32 0.0, %v4453
      %v4455 = vpop.f32.mrf.mxu0
      %v4456 = vadd.f32 0.0, %v4455
      %4457 = vmatmul.bf16.gmra.mxu0 %v4394
      %v4458 = vpop.f32.mrf.mxu0
      %v4459 = vadd.f32 0.0, %v4458
      %v4460 = vpop.f32.mrf.mxu0
      %v4461 = vadd.f32 0.0, %v4460
      %4462 = vmatmul.bf16.gmra.mxu0 %v4397
      %v4463 = vpop.f32.mrf.mxu0
      %v4464 = vadd.f32 0.0, %v4463
      %v4465 = vpop.f32.mrf.mxu0
      %v4466 = vadd.f32 0.0, %v4465
      %4467 = vmatmul.bf16.gmra.mxu0 %v4400
      %v4468 = vpop.f32.mrf.mxu0
      %v4469 = vadd.f32 0.0, %v4468
      %v4470 = vpop.f32.mrf.mxu0
      %v4471 = vadd.f32 0.0, %v4470
      %4472 = vmatmul.bf16.gmra.mxu0 %v4403
      %v4473 = vpop.f32.mrf.mxu0
      %v4474 = vadd.f32 0.0, %v4473
      %v4475 = vpop.f32.mrf.mxu0
      %v4476 = vadd.f32 0.0, %v4475
      %4477 = vmatmul.bf16.gmra.mxu0 %v4406
      %v4478 = vpop.f32.mrf.mxu0
      %v4479 = vadd.f32 0.0, %v4478
      %v4480 = vpop.f32.mrf.mxu0
      %v4481 = vadd.f32 0.0, %v4480
      %4482 = vmatmul.bf16.gmra.mxu0 %v4409
      %v4483 = vpop.f32.mrf.mxu0
      %v4484 = vadd.f32 0.0, %v4483
      %v4485 = vpop.f32.mrf.mxu0
      %v4486 = vadd.f32 0.0, %v4485
      %4487 = vmatmul.bf16.gmra.mxu0 %v4412
      %v4488 = vpop.f32.mrf.mxu0
      %v4489 = vadd.f32 0.0, %v4488
      %v4490 = vpop.f32.mrf.mxu0
      %v4491 = vadd.f32 0.0, %v4490
      %4492 = vmatmul.bf16.gmra.mxu0 %v4415
      %v4493 = vpop.f32.mrf.mxu0
      %v4494 = vadd.f32 0.0, %v4493
      %v4495 = vpop.f32.mrf.mxu0
      %v4496 = vadd.f32 0.0, %v4495
      %4497 = vmatmul.bf16.gmra.mxu0 %v4418
      %v4498 = vpop.f32.mrf.mxu0
      %v4499 = vadd.f32 0.0, %v4498
      %v4500 = vpop.f32.mrf.mxu0
      %v4501 = vadd.f32 0.0, %v4500
      %4502 = vmatmul.bf16.gmra.mxu0 %v4421
      %v4503 = vpop.f32.mrf.mxu0
      %v4504 = vadd.f32 0.0, %v4503
      %v4505 = vpop.f32.mrf.mxu0
      %v4506 = vadd.f32 0.0, %v4505
      %4507 = vmatmul.bf16.gmra.mxu0 %v4424
      %v4508 = vpop.f32.mrf.mxu0
      %v4509 = vadd.f32 0.0, %v4508
      %v4510 = vpop.f32.mrf.mxu0
      %v4511 = vadd.f32 0.0, %v4510
      %4512 = vmatmul.bf16.gmra.mxu0 %v4427
      %v4513 = vpop.f32.mrf.mxu0
      %v4514 = vadd.f32 0.0, %v4513
      %v4515 = vpop.f32.mrf.mxu0
      %v4516 = vadd.f32 0.0, %v4515
      %4517 = vmatmul.bf16.gmra.mxu0 %v4430
      %v4518 = vpop.f32.mrf.mxu0
      %v4519 = vadd.f32 0.0, %v4518
      %v4520 = vpop.f32.mrf.mxu0
      %v4521 = vadd.f32 0.0, %v4520
      %4522 = vmatmul.bf16.gmra.mxu0 %v4433
      %v4523 = vpop.f32.mrf.mxu0
      %v4524 = vadd.f32 0.0, %v4523
      %v4525 = vpop.f32.mrf.mxu0
      %v4526 = vadd.f32 0.0, %v4525
      %4527 = vmatmul.bf16.gmra.mxu0 %v4436
      %v4528 = vpop.f32.mrf.mxu0
      %v4529 = vadd.f32 0.0, %v4528
      %v4530 = vpop.f32.mrf.mxu0
      %v4531 = vadd.f32 0.0, %v4530
      %4532 = vmatmul.bf16.gmra.mxu0 %v4439
      %v4533 = vpop.f32.mrf.mxu0
      %v4534 = vadd.f32 0.0, %v4533
      %v4535 = vpop.f32.mrf.mxu0
      %v4536 = vadd.f32 0.0, %v4535
      %4537 = vmatmul.bf16.gmra.mxu0 %v4442
      %v4538 = vpop.f32.mrf.mxu0
      %v4539 = vadd.f32 0.0, %v4538
      %v4540 = vpop.f32.mrf.mxu0
      %v4541 = vadd.f32 0.0, %v4540
      %4542 = vdwg.mxu0
      %v4543 = vadd.f32 %v4214, %v4454
      %v4544 = vadd.f32 %v4215, %v4456
      %v4545 = vadd.f32 %v4216, %v4459
      %v4546 = vadd.f32 %v4217, %v4461
      %v4547 = vadd.f32 %v4218, %v4464
      %v4548 = vadd.f32 %v4219, %v4466
      %v4549 = vadd.f32 %v4220, %v4469
      %v4550 = vadd.f32 %v4221, %v4471
      %v4551 = vadd.f32 %v4222, %v4474
      %v4552 = vadd.f32 %v4223, %v4476
      %v4553 = vadd.f32 %v4224, %v4479
      %v4554 = vadd.f32 %v4225, %v4481
      %v4555 = vadd.f32 %v4226, %v4484
      %v4556 = vadd.f32 %v4227, %v4486
      %v4557 = vadd.f32 %v4228, %v4489
      %v4558 = vadd.f32 %v4229, %v4491
      %v4559 = vadd.f32 %v4230, %v4494
      %v4560 = vadd.f32 %v4231, %v4496
      %v4561 = vadd.f32 %v4232, %v4499
      %v4562 = vadd.f32 %v4233, %v4501
      %v4563 = vadd.f32 %v4234, %v4504
      %v4564 = vadd.f32 %v4235, %v4506
      %v4565 = vadd.f32 %v4236, %v4509
      %v4566 = vadd.f32 %v4237, %v4511
      %v4567 = vadd.f32 %v4238, %v4514
      %v4568 = vadd.f32 %v4239, %v4516
      %v4569 = vadd.f32 %v4240, %v4519
      %v4570 = vadd.f32 %v4241, %v4521
      %v4571 = vadd.f32 %v4242, %v4524
      %v4572 = vadd.f32 %v4243, %v4526
      %v4573 = vadd.f32 %v4244, %v4529
      %v4574 = vadd.f32 %v4245, %v4531
      %v4575 = vadd.f32 %v4246, %v4534
      %v4576 = vadd.f32 %v4247, %v4536
      %v4577 = vadd.f32 %v4248, %v4539
      %v4578 = vadd.f32 %v4249, %v4541
      %4579 = vst.msk [vmem:[#allocation2] sm:$0xff] %vm699, %v4543
      %4580 = vst.msk [vmem:[#allocation2 + $0x8] sm:$0xff] %vm699, %v4544
      %4581 = vst.msk [vmem:[#allocation2 + $0x10] sm:$0xff] %vm699, %v4545
      %4582 = vst.msk [vmem:[#allocation2 + $0x18] sm:$0xff] %vm699, %v4546
      %4583 = vst.msk [vmem:[#allocation2 + $0x20] sm:$0xff] %vm699, %v4547
      %4584 = vst.msk [vmem:[#allocation2 + $0x28] sm:$0xff] %vm699, %v4548
      %4585 = vst.msk [vmem:[#allocation2 + $0x30] sm:$0xff] %vm699, %v4549
      %4586 = vst.msk [vmem:[#allocation2 + $0x38] sm:$0xff] %vm699, %v4550
      %4587 = vst.msk [vmem:[#allocation2 + $0x40] sm:$0xff] %vm699, %v4551
      %4588 = vst.msk [vmem:[#allocation2 + $0x48] sm:$0xff] %vm699, %v4552
      %4589 = vst.msk [vmem:[#allocation2 + $0x50] sm:$0xff] %vm699, %v4553
      %4590 = vst.msk [vmem:[#allocation2 + $0x58] sm:$0xff] %vm699, %v4554
      %4591 = vst.msk [vmem:[#allocation2 + $0x60] sm:$0xff] %vm699, %v4555
      %4592 = vst.msk [vmem:[#allocation2 + $0x68] sm:$0xff] %vm699, %v4556
      %4593 = vst.msk [vmem:[#allocation2 + $0x70] sm:$0xff] %vm699, %v4557
      %4594 = vst.msk [vmem:[#allocation2 + $0x78] sm:$0xff] %vm699, %v4558
      %4595 = vst.msk [vmem:[#allocation2 + $0x80] sm:$0xff] %vm699, %v4559
      %4596 = vst.msk [vmem:[#allocation2 + $0x88] sm:$0xff] %vm699, %v4560
      %4597 = vst.msk [vmem:[#allocation2 + $0x90] sm:$0xff] %vm699, %v4561
      %4598 = vst.msk [vmem:[#allocation2 + $0x98] sm:$0xff] %vm699, %v4562
      %4599 = vst.msk [vmem:[#allocation2 + $0xa0] sm:$0xff] %vm699, %v4563
      %4600 = vst.msk [vmem:[#allocation2 + $0xa8] sm:$0xff] %vm699, %v4564
      %4601 = vst.msk [vmem:[#allocation2 + $0xb0] sm:$0xff] %vm699, %v4565
      %4602 = vst.msk [vmem:[#allocation2 + $0xb8] sm:$0xff] %vm699, %v4566
      %4603 = vst.msk [vmem:[#allocation2 + $0xc0] sm:$0xff] %vm699, %v4567
      %4604 = vst.msk [vmem:[#allocation2 + $0xc8] sm:$0xff] %vm699, %v4568
      %4605 = vst.msk [vmem:[#allocation2 + $0xd0] sm:$0xff] %vm699, %v4569
      %4606 = vst.msk [vmem:[#allocation2 + $0xd8] sm:$0xff] %vm699, %v4570
      %4607 = vst.msk [vmem:[#allocation2 + $0xe0] sm:$0xff] %vm699, %v4571
      %4608 = vst.msk [vmem:[#allocation2 + $0xe8] sm:$0xff] %vm699, %v4572
      %4609 = vst.msk [vmem:[#allocation2 + $0xf0] sm:$0xff] %vm699, %v4573
      %4610 = vst.msk [vmem:[#allocation2 + $0xf8] sm:$0xff] %vm699, %v4574
      %4611 = vst.msk [vmem:[#allocation2 + $0x100] sm:$0xff] %vm699, %v4575
      %4612 = vst.msk [vmem:[#allocation2 + $0x108] sm:$0xff] %vm699, %v4576
      %4613 = vst.msk [vmem:[#allocation2 + $0x110] sm:$0xff] %vm699, %v4577
      %4614 = vst.msk [vmem:[#allocation2 + $0x118] sm:$0xff] %vm699, %v4578
      // Predicated region
      $region41: #{discriminator_forward.3} parent=35 // pred_check
        %p4615 = pneg %p298
      $region42: #{discriminator_forward.3} parent=35 // pred_check_branch
        %4617 = sbr.rel (%p4615) target = $region44
      $region43: #{discriminator_forward.3} parent=35 // pred_region
        %v4618 = vld [vmem:[%s285] sm:$0x1]
        %v4620 = vperm.slane %v4618, 0
        %v4622 = vld [vmem:[%s288] sm:$0x1]
        %v4624 = vperm.slane %v4622, 0
        %v4626 = vld [vmem:[#allocation2] ss:$2 sm:$0xff]
        %v4627 = vmul.f32 %v4626, %v4620
        %v4628 = vadd.f32 %v4627, %v4624
        %s4629 = scalar_lea.vmem [#allocation2], 1
        %v4630 = vld [vmem:[%s4629] ss:$2 sm:$0xff]
        %v4631 = vmul.f32 %v4630, %v4620
        %v4632 = vadd.f32 %v4631, %v4624
        %s4633 = scalar_lea.vmem [#allocation2], 18
        %v4634 = vld [vmem:[%s4633] ss:$2 sm:$0xff]
        %v4635 = vmul.f32 %v4634, %v4620
        %v4636 = vadd.f32 %v4635, %v4624
        %s4637 = scalar_lea.vmem [#allocation2], 19
        %v4638 = vld [vmem:[%s4637] ss:$2 sm:$0xff]
        %v4639 = vmul.f32 %v4638, %v4620
        %v4640 = vadd.f32 %v4639, %v4624
        %v4641 = vmax.f32 %v4628, %v4632
        %v4642 = vmax.f32 %v4636, %v4640
        %v4643 = vmax.f32 %v4641, %v4642
        %v4644 = vmax.f32 %v4643, 0.0
        %v4645 = vpack.c.bf16 %v4644, %v4644
        %vm4646 = vcmask 257024
        %4647 = vst.msk [vmem:[%s296] sm:$0xf] %vm4646, %v4645
        %s4648 = scalar_lea.vmem [#allocation2], 36
        %v4649 = vld [vmem:[%s4648] ss:$2 sm:$0xff]
        %v4650 = vmul.f32 %v4649, %v4620
        %v4651 = vadd.f32 %v4650, %v4624
        %s4652 = scalar_lea.vmem [#allocation2], 37
        %v4653 = vld [vmem:[%s4652] ss:$2 sm:$0xff]
        %v4654 = vmul.f32 %v4653, %v4620
        %v4655 = vadd.f32 %v4654, %v4624
        %s4656 = scalar_lea.vmem [#allocation2], 54
        %v4657 = vld [vmem:[%s4656] ss:$2 sm:$0xff]
        %v4658 = vmul.f32 %v4657, %v4620
        %v4659 = vadd.f32 %v4658, %v4624
        %s4660 = scalar_lea.vmem [#allocation2], 55
        %v4661 = vld [vmem:[%s4660] ss:$2 sm:$0xff]
        %v4662 = vmul.f32 %v4661, %v4620
        %v4663 = vadd.f32 %v4662, %v4624
        %v4664 = vmax.f32 %v4651, %v4655
        %v4665 = vmax.f32 %v4659, %v4663
        %v4666 = vmax.f32 %v4664, %v4665
        %v4667 = vmax.f32 %v4666, 0.0
        %v4668 = vpack.c.bf16 %v4667, %v4667
        %s4669 = scalar_lea.vmem %s296, 4
        %4670 = vst.msk [vmem:[%s4669] sm:$0xf] %vm4646, %v4668
        %s4671 = scalar_lea.vmem [#allocation2], 72
        %v4672 = vld [vmem:[%s4671] ss:$2 sm:$0xff]
        %v4673 = vmul.f32 %v4672, %v4620
        %v4674 = vadd.f32 %v4673, %v4624
        %s4675 = scalar_lea.vmem [#allocation2], 73
        %v4676 = vld [vmem:[%s4675] ss:$2 sm:$0xff]
        %v4677 = vmul.f32 %v4676, %v4620
        %v4678 = vadd.f32 %v4677, %v4624
        %s4679 = scalar_lea.vmem [#allocation2], 90
        %v4680 = vld [vmem:[%s4679] ss:$2 sm:$0xff]
        %v4681 = vmul.f32 %v4680, %v4620
        %v4682 = vadd.f32 %v4681, %v4624
        %s4683 = scalar_lea.vmem [#allocation2], 91
        %v4684 = vld [vmem:[%s4683] ss:$2 sm:$0xff]
        %v4685 = vmul.f32 %v4684, %v4620
        %v4686 = vadd.f32 %v4685, %v4624
        %v4687 = vmax.f32 %v4674, %v4678
        %v4688 = vmax.f32 %v4682, %v4686
        %v4689 = vmax.f32 %v4687, %v4688
        %v4690 = vmax.f32 %v4689, 0.0
        %v4691 = vpack.c.bf16 %v4690, %v4690
        %s4692 = scalar_lea.vmem %s296, 8
        %4693 = vst.msk [vmem:[%s4692] sm:$0xf] %vm4646, %v4691
        %s4694 = scalar_lea.vmem [#allocation2], 108
        %v4695 = vld [vmem:[%s4694] ss:$2 sm:$0xff]
        %v4696 = vmul.f32 %v4695, %v4620
        %v4697 = vadd.f32 %v4696, %v4624
        %s4698 = scalar_lea.vmem [#allocation2], 109
        %v4699 = vld [vmem:[%s4698] ss:$2 sm:$0xff]
        %v4700 = vmul.f32 %v4699, %v4620
        %v4701 = vadd.f32 %v4700, %v4624
        %s4702 = scalar_lea.vmem [#allocation2], 126
        %v4703 = vld [vmem:[%s4702] ss:$2 sm:$0xff]
        %v4704 = vmul.f32 %v4703, %v4620
        %v4705 = vadd.f32 %v4704, %v4624
        %s4706 = scalar_lea.vmem [#allocation2], 127
        %v4707 = vld [vmem:[%s4706] ss:$2 sm:$0xff]
        %v4708 = vmul.f32 %v4707, %v4620
        %v4709 = vadd.f32 %v4708, %v4624
        %v4710 = vmax.f32 %v4697, %v4701
        %v4711 = vmax.f32 %v4705, %v4709
        %v4712 = vmax.f32 %v4710, %v4711
        %v4713 = vmax.f32 %v4712, 0.0
        %v4714 = vpack.c.bf16 %v4713, %v4713
        %s4715 = scalar_lea.vmem %s296, 12
        %4716 = vst.msk [vmem:[%s4715] sm:$0xf] %vm4646, %v4714
        %s4717 = scalar_lea.vmem [#allocation2], 144
        %v4718 = vld [vmem:[%s4717] ss:$2 sm:$0xff]
        %v4719 = vmul.f32 %v4718, %v4620
        %v4720 = vadd.f32 %v4719, %v4624
        %s4721 = scalar_lea.vmem [#allocation2], 145
        %v4722 = vld [vmem:[%s4721] ss:$2 sm:$0xff]
        %v4723 = vmul.f32 %v4722, %v4620
        %v4724 = vadd.f32 %v4723, %v4624
        %s4725 = scalar_lea.vmem [#allocation2], 162
        %v4726 = vld [vmem:[%s4725] ss:$2 sm:$0xff]
        %v4727 = vmul.f32 %v4726, %v4620
        %v4728 = vadd.f32 %v4727, %v4624
        %s4729 = scalar_lea.vmem [#allocation2], 163
        %v4730 = vld [vmem:[%s4729] ss:$2 sm:$0xff]
        %v4731 = vmul.f32 %v4730, %v4620
        %v4732 = vadd.f32 %v4731, %v4624
        %v4733 = vmax.f32 %v4720, %v4724
        %v4734 = vmax.f32 %v4728, %v4732
        %v4735 = vmax.f32 %v4733, %v4734
        %v4736 = vmax.f32 %v4735, 0.0
        %v4737 = vpack.c.bf16 %v4736, %v4736
        %s4738 = scalar_lea.vmem %s296, 16
        %4739 = vst.msk [vmem:[%s4738] sm:$0xf] %vm4646, %v4737
        %s4740 = scalar_lea.vmem [#allocation2], 180
        %v4741 = vld [vmem:[%s4740] ss:$2 sm:$0xff]
        %v4742 = vmul.f32 %v4741, %v4620
        %v4743 = vadd.f32 %v4742, %v4624
        %s4744 = scalar_lea.vmem [#allocation2], 181
        %v4745 = vld [vmem:[%s4744] ss:$2 sm:$0xff]
        %v4746 = vmul.f32 %v4745, %v4620
        %v4747 = vadd.f32 %v4746, %v4624
        %s4748 = scalar_lea.vmem [#allocation2], 198
        %v4749 = vld [vmem:[%s4748] ss:$2 sm:$0xff]
        %v4750 = vmul.f32 %v4749, %v4620
        %v4751 = vadd.f32 %v4750, %v4624
        %s4752 = scalar_lea.vmem [#allocation2], 199
        %v4753 = vld [vmem:[%s4752] ss:$2 sm:$0xff]
        %v4754 = vmul.f32 %v4753, %v4620
        %v4755 = vadd.f32 %v4754, %v4624
        %v4756 = vmax.f32 %v4743, %v4747
        %v4757 = vmax.f32 %v4751, %v4755
        %v4758 = vmax.f32 %v4756, %v4757
        %v4759 = vmax.f32 %v4758, 0.0
        %v4760 = vpack.c.bf16 %v4759, %v4759
        %s4761 = scalar_lea.vmem %s296, 20
        %4762 = vst.msk [vmem:[%s4761] sm:$0xf] %vm4646, %v4760
        %s4763 = scalar_lea.vmem [#allocation2], 216
        %v4764 = vld [vmem:[%s4763] ss:$2 sm:$0xff]
        %v4765 = vmul.f32 %v4764, %v4620
        %v4766 = vadd.f32 %v4765, %v4624
        %s4767 = scalar_lea.vmem [#allocation2], 217
        %v4768 = vld [vmem:[%s4767] ss:$2 sm:$0xff]
        %v4769 = vmul.f32 %v4768, %v4620
        %v4770 = vadd.f32 %v4769, %v4624
        %s4771 = scalar_lea.vmem [#allocation2], 234
        %v4772 = vld [vmem:[%s4771] ss:$2 sm:$0xff]
        %v4773 = vmul.f32 %v4772, %v4620
        %v4774 = vadd.f32 %v4773, %v4624
        %s4775 = scalar_lea.vmem [#allocation2], 235
        %v4776 = vld [vmem:[%s4775] ss:$2 sm:$0xff]
        %v4777 = vmul.f32 %v4776, %v4620
        %v4778 = vadd.f32 %v4777, %v4624
        %v4779 = vmax.f32 %v4766, %v4770
        %v4780 = vmax.f32 %v4774, %v4778
        %v4781 = vmax.f32 %v4779, %v4780
        %v4782 = vmax.f32 %v4781, 0.0
        %v4783 = vpack.c.bf16 %v4782, %v4782
        %s4784 = scalar_lea.vmem %s296, 24
        %4785 = vst.msk [vmem:[%s4784] sm:$0xf] %vm4646, %v4783
        %s4786 = scalar_lea.vmem [#allocation2], 252
        %v4787 = vld [vmem:[%s4786] ss:$2 sm:$0xff]
        %v4788 = vmul.f32 %v4787, %v4620
        %v4789 = vadd.f32 %v4788, %v4624
        %s4790 = scalar_lea.vmem [#allocation2], 253
        %v4791 = vld [vmem:[%s4790] ss:$2 sm:$0xff]
        %v4792 = vmul.f32 %v4791, %v4620
        %v4793 = vadd.f32 %v4792, %v4624
        %s4794 = scalar_lea.vmem [#allocation2], 270
        %v4795 = vld [vmem:[%s4794] ss:$2 sm:$0xff]
        %v4796 = vmul.f32 %v4795, %v4620
        %v4797 = vadd.f32 %v4796, %v4624
        %s4798 = scalar_lea.vmem [#allocation2], 271
        %v4799 = vld [vmem:[%s4798] ss:$2 sm:$0xff]
        %v4800 = vmul.f32 %v4799, %v4620
        %v4801 = vadd.f32 %v4800, %v4624
        %v4802 = vmax.f32 %v4789, %v4793
        %v4803 = vmax.f32 %v4797, %v4801
        %v4804 = vmax.f32 %v4802, %v4803
        %v4805 = vmax.f32 %v4804, 0.0
        %v4806 = vpack.c.bf16 %v4805, %v4805
        %s4807 = scalar_lea.vmem %s296, 28
        %4808 = vst.msk [vmem:[%s4807] sm:$0xf] %vm4646, %v4806
      $region44: #{discriminator_forward.3} parent=35 // pred_fallthru
        _
      %p4809 = scmp.lt.s32.totalorder %s20, 1
      %s4810 = scalar_select %p4809, %s20, 1
      %p4811 = scmp.lt.s32.totalorder %s21, 0
      %s4812 = scalar_select %p4811, %s21, 0
      %s4813 = smul.addr %s4810, 8
      %s4814 = sadd.s32 %s4812, %s4813
      %s4815 = smul.addr %s4814, 4
      %s4816 = scalar_lea.vmem %s4, %s4815
      // Predicated region
      $region45: #{discriminator_forward.3} parent=35 // pred_check
        %p4817 = pneg %p162
      $region46: #{discriminator_forward.3} parent=35 // pred_check_branch
        %4819 = sbr.rel (%p4817) target = $region48
      $region47: #{discriminator_forward.3} parent=35 // pred_region
        _
      $region48: #{discriminator_forward.3} parent=35 // pred_fallthru
        _
    $region36: #{discriminator_forward.3} parent=5 // pred_fallthru
      _
    %p4820 = scmp.le.s32.totalorder 2, %s10
    // Predicated region
    $region49: #{discriminator_forward.3} parent=5 // pred_check
      %p4821 = pneg %p4820
    $region50: #{discriminator_forward.3} parent=5 // pred_check_branch
      %4823 = sbr.rel (%p4821) target = $region52
    $region51: #{discriminator_forward.3} parent=5 // pred_region
      %s4824 = ssub.s32 %s10, 2
      // Predicated region
      $region53: #{discriminator_forward.3} parent=51 // pred_check
        %p4825 = pneg %p168
      $region54: #{discriminator_forward.3} parent=51 // pred_check_branch
        %4827 = sbr.rel (%p4825) target = $region56
      $region55: #{discriminator_forward.3} parent=51 // pred_region
        %p4828 = scmp.lt.s32.totalorder %s23, 1
        %s4829 = scalar_select %p4828, %s23, 1
        %p4830 = scmp.lt.s32.totalorder %s24, 0
        %s4831 = scalar_select %p4830, %s24, 0
        %s4832 = smul.addr %s4829, 8
        %s4833 = sadd.s32 %s4831, %s4832
        %s4834 = smul.addr %s4833, 4
        %s4835 = scalar_lea.vmem %s4, %s4834
      $region56: #{discriminator_forward.3} parent=51 // pred_fallthru
        _
    $region52: #{discriminator_forward.3} parent=5 // pred_fallthru
      _
  $region6: #{discriminator_forward.3} parent=0 // loop_footer
    %s14 = sadd.s32 1, %s10
  $region7: #{discriminator_forward.3} parent=0 // loop_footer_branch
    %9 = sbr.rel target = $region3
  $region8: #{discriminator_forward.3} parent=0 // loop_exit
    _

</llo_original>
